<compile_context>
chip_gen: v6e
topology: v6e:2x2x1
jax: 0.10.0
libtpu: 0.0.40
codegen_flags: <defaults>
</compile_context>

<pallas_src>
import functools

import jax
import jax.numpy as jnp
import numpy as np
from jax.experimental import pallas as pl
from jax.experimental.pallas import tpu as pltpu

_HIGHEST = jax.lax.Precision.HIGHEST


# -----------------------------------------------------------------------------
# Fused kernel: MXU distances -> bit-packed top-K selection -> one-hot MXU gather
# -----------------------------------------------------------------------------
def _knn_group_kernel(qaug_ref, vaug_ref, vals_ref, out_ref, idx_ref, *,
                      nsample, idx_row, idx_bits):
    # qaug_ref: (Mq, 8)        augmented query rows [-2x,-2y,-2z,|q|^2,1,0,0,0]
    # vaug_ref: (8, Ns)        augmented support rows [x,y,z,1,|s|^2,0,0,0]
    # vals_ref: (Cv_pad, Ns)   support xyz | features | lane-index row | zero pad
    # out_ref:  (K, Cv_pad, Mq) gathered values, k-major, lane-dense
    # idx_ref:  (K, Mq)        int32 neighbour indices, lane-dense
    K = nsample
    q_aug = qaug_ref[...]                                  # (Mq, 8)
    v_aug = vaug_ref[...]                                  # (8, Ns)
    vals = vals_ref[...]                                   # (Cv_pad, Ns)
    Mq = q_aug.shape[0]
    Ns = vals.shape[1]

    # |q - s|^2 for every (query, support) pair on the MXU.
    score = jax.lax.dot_general(
        q_aug, v_aug, (((1,), (0,)), ((), ())),
        preferred_element_type=jnp.float32, precision=_HIGHEST)      # (Mq, Ns)
    score = jnp.maximum(score, 0.0)      # guard tiny negative rounding residue

    # Pack the lane index into the low mantissa bits: one min per k then yields a
    # unique winner (value + index) per query row.  All packed values stay finite
    # non-negative floats, so float ordering == bit-pattern ordering.
    iota_n = jax.lax.broadcasted_iota(jnp.int32, (Mq, Ns), 1)
    keep_mask = jnp.int32(-(1 << idx_bits))                # == ~((1<<idx_bits)-1)
    packed = (pltpu.bitcast(score, jnp.int32) & keep_mask) | iota_n
    work = pltpu.bitcast(packed, jnp.float32)
    masked_val = jnp.float32(np.finfo(np.float32).max)

    idx_rows = []
    for k in range(K):                   # nsample is small -> static unroll
        m = jnp.min(work, axis=1, keepdims=True)           # (Mq, 1): single XLU reduction
        onehot = work == m                                  # exactly one lane per query
        # Gather xyz | features | lane-index for every query on the MXU:
        #   (Cv_pad, Ns) x (Mq, Ns)^T -> (Cv_pad, Mq); exact (one-hot, f32, HIGHEST).
        gathered = jax.lax.dot_general(
            vals, onehot.astype(jnp.float32), (((1,), (1,)), ((), ())),
            preferred_element_type=jnp.float32, precision=_HIGHEST)
        out_ref[k] = gathered
        idx_rows.append(
            (gathered[idx_row:idx_row + 1, :] + 0.5).astype(jnp.int32))  # (1, Mq)
        work = jnp.where(onehot, masked_val, work)          # retire the winner
    idx_ref[...] = jnp.concatenate(idx_rows, axis=0)        # (K, Mq) dense store


# -----------------------------------------------------------------------------
# pallas_call wrapper
# -----------------------------------------------------------------------------
def _round_up(x, m):
    return -(-x // m) * m


def _knn_group_pallas(query_xyz, support_xyz, features, nsample):
    """Returns (grouped (B, Cv_pad, Nq, K) f32, idx (B, Nq, K) int32).

    grouped rows: [0:3] support xyz, [3:3+C] features, [3+C] lane index, then pad.
    """
    B, Nq, _ = query_xyz.shape
    Bs, Ns, _ = support_xyz.shape
    assert Bs == B
    K = int(nsample)
    assert 0 < K <= Ns

    f32 = jnp.float32
    sup_cf = jnp.swapaxes(support_xyz.astype(f32), 1, 2)             # (B, 3, Ns)

    rows = [sup_cf]
    if features is not None:
        assert features.shape[0] == B and features.shape[-1] == Ns, \
            "features must be (B, C, Ns) descriptors of the support points"
        rows.append(features.astype(f32))
    idx_row = sum(r.shape[1] for r in rows)                          # lane-index row
    rows.append(jnp.broadcast_to(jnp.arange(Ns, dtype=f32)[None, None, :], (B, 1, Ns)))
    vals = jnp.concatenate(rows, axis=1)                             # (B, idx_row+1, Ns)
    Cv_pad = _round_up(vals.shape[1], 8)                             # sublane-dense stores
    if Cv_pad != vals.shape[1]:
        vals = jnp.pad(vals, ((0, 0), (0, Cv_pad - vals.shape[1]), (0, 0)))

    # Augmented support rows for the MXU distance matmul.
    s_sq = jnp.sum(sup_cf * sup_cf, axis=1, keepdims=True)           # (B, 1, Ns)
    v_aug = jnp.concatenate(
        [sup_cf, jnp.ones((B, 1, Ns), f32), s_sq, jnp.zeros((B, 3, Ns), f32)],
        axis=1)                                                      # (B, 8, Ns)

    # Augmented queries, padded to whole 128-query tiles (fixed Mq keeps vreg
    # pressure bounded and output stores lane-dense for any Nq).
    Mq = 128
    Nq_pad = _round_up(Nq, Mq)
    q = query_xyz.astype(f32)
    if Nq_pad != Nq:
        q = jnp.pad(q, ((0, 0), (0, Nq_pad - Nq), (0, 0)))
    q_sq = jnp.sum(q * q, axis=-1, keepdims=True)                    # (B, Nq_pad, 1)
    q_aug = jnp.concatenate(
        [-2.0 * q, q_sq, jnp.ones((B, Nq_pad, 1), f32), jnp.zeros((B, Nq_pad, 3), f32)],
        axis=-1)                                                     # (B, Nq_pad, 8)

    grid = (B, Nq_pad // Mq)
    idx_bits = max((Ns - 1).bit_length(), 1)
    kernel = functools.partial(_knn_group_kernel, nsample=K,
                               idx_row=idx_row, idx_bits=idx_bits)

    grouped, idx = pl.pallas_call(
        kernel,
        grid=grid,
        in_specs=[
            pl.BlockSpec((None, Mq, 8), lambda b, m: (b, m, 0)),         # q_aug
            pl.BlockSpec((None, 8, Ns), lambda b, m: (b, 0, 0)),         # v_aug
            pl.BlockSpec((None, Cv_pad, Ns), lambda b, m: (b, 0, 0)),    # vals
        ],
        out_specs=(
            pl.BlockSpec((None, K, Cv_pad, Mq), lambda b, m: (b, 0, 0, m)),
            pl.BlockSpec((None, K, Mq), lambda b, m: (b, 0, m)),
        ),
        out_shape=(
            jax.ShapeDtypeStruct((B, K, Cv_pad, Nq_pad), jnp.float32),
            jax.ShapeDtypeStruct((B, K, Nq_pad), jnp.int32),
        ),
        compiler_params=pltpu.CompilerParams(
            dimension_semantics=("parallel", "parallel")),
    )(q_aug, v_aug, vals)

    # k-major / lane-dense kernel layout -> PyTorch layout (pure XLA plumbing).
    grouped = jnp.transpose(grouped, (0, 2, 3, 1))[:, :, :Nq]        # (B, Cv_pad, Nq, K)
    idx = jnp.transpose(idx, (0, 2, 1))[:, :Nq]                      # (B, Nq, K)
    return grouped, idx


def knn_group(query_xyz, support_xyz, features=None, *, nsample,
              relative_xyz=True, normalize_dp=False, return_only_idx=False):
    """JAX/Pallas equivalent of KNNGroup.forward.

    query_xyz:   (B, Nq, 3)  points that receive a neighbourhood each
    support_xyz: (B, Ns, 3)  points that are searched / gathered from
    features:    (B, C, Ns)  optional per-support-point descriptors
    Returns (grouped_xyz (B,3,Nq,K), grouped_features (B,C,Nq,K) | None),
    or idx (B, Nq, K) int32 when return_only_idx.
    """
    grouped, idx = _knn_group_pallas(query_xyz, support_xyz, features, nsample)
    if return_only_idx:
        return idx
    grouped_xyz = grouped[:, :3]
    if relative_xyz:
        grouped_xyz = grouped_xyz - jnp.swapaxes(query_xyz.astype(jnp.float32), 1, 2)[..., None]
    if normalize_dp:
        nrm = jnp.sqrt(jnp.sum(grouped_xyz ** 2, axis=1))            # (B, Nq, K)
        denom = jnp.maximum(jnp.max(nrm, axis=(1, 2)), 1e-12)        # epsilon guard
        grouped_xyz = grouped_xyz / denom[:, None, None, None]
    if features is not None:
        C = features.shape[1]
        grouped_features = grouped[:, 3:3 + C]
    else:
        grouped_features = None
    return grouped_xyz, grouped_features


# -----------------------------------------------------------------------------
# Demo + correctness check against a pure-JAX reference
# -----------------------------------------------------------------------------
if __name__ == "__main__":
    B, Nq, Ns, C, K = 2, 64, 128, 16, 8

    key = jax.random.PRNGKey(0)
    kq, ks, kf = jax.random.split(key, 3)
    query_xyz = jax.random.normal(kq, (B, Nq, 3), dtype=jnp.float32)
    support_xyz = jax.random.normal(ks, (B, Ns, 3), dtype=jnp.float32)
    features = jax.random.normal(kf, (B, C, Ns), dtype=jnp.float32)

    grouped_xyz, grouped_feat = knn_group(query_xyz, support_xyz, features, nsample=K)
    idx = knn_group(query_xyz, support_xyz, features, nsample=K, return_only_idx=True)
    grouped_xyz, grouped_feat, idx = jax.block_until_ready(
        (grouped_xyz, grouped_feat, idx))

    assert grouped_xyz.shape == (B, 3, Nq, K)
    assert grouped_feat.shape == (B, C, Nq, K)
    assert idx.shape == (B, Nq, K) and idx.dtype == jnp.int32

    # (1) KNN selection: distances of the chosen neighbours must match the K
    #     smallest reference distances (tolerant to near-ties: the kernel
    #     truncates the low ceil(log2(Ns)) mantissa bits for its index tie-break).
    d2 = jnp.sum((query_xyz[:, :, None, :] - support_xyz[:, None, :, :]) ** 2, -1)  # (B,Nq,Ns)
    ref_vals = -jax.lax.top_k(-d2, K)[0]                             # ascending
    got_vals = jnp.take_along_axis(d2, idx, axis=2)                  # kernel order (ascending)
    np.testing.assert_allclose(np.asarray(got_vals), np.asarray(ref_vals),
                               rtol=1e-3, atol=1e-3)

    idx_np = np.asarray(idx)
    assert idx_np.min() >= 0 and idx_np.max() < Ns
    srt = np.sort(idx_np, axis=-1)
    assert np.all(srt[..., 1:] != srt[..., :-1]), "duplicate neighbour index"

    # (2) gather + relative-xyz math must be (near-)exact for the chosen indices.
    g_xyz_ref = jax.vmap(lambda s, i: s[i])(support_xyz, idx)        # (B,Nq,K,3)
    g_xyz_ref = (jnp.transpose(g_xyz_ref, (0, 3, 1, 2))
                 - jnp.swapaxes(query_xyz, 1, 2)[..., None])         # (B,3,Nq,K)
    g_feat_ref = jax.vmap(lambda f, i: f[:, i])(features, idx)       # (B,C,Nq,K)
    np.testing.assert_allclose(np.asarray(grouped_xyz), np.asarray(g_xyz_ref),
                               rtol=1e-5, atol=1e-5)
    np.testing.assert_allclose(np.asarray(grouped_feat), np.asarray(g_feat_ref),
                               rtol=1e-5, atol=1e-5)

    print("KERNEL_OK")
</pallas_src>

<mosaic_0001>
module attributes {stable_mosaic.version = 11 : i64} {
  func.func @_knn_group_kernel(%arg0: i32, %arg1: i32, %arg2: memref<1x128x8xf32, #tpu.memory_space<vmem>>, %arg3: memref<1x8x128xf32, #tpu.memory_space<vmem>>, %arg4: memref<1x24x128xf32, #tpu.memory_space<vmem>>, %arg5: memref<1x8x24x128xf32, #tpu.memory_space<vmem>>, %arg6: memref<1x8x128xi32, #tpu.memory_space<vmem>>) attributes {dimension_semantics = [#tpu.dimension_semantics<parallel>, #tpu.dimension_semantics<parallel>], iteration_bounds = array<i64: 2, 1>, scalar_prefetch = 0 : i64, scratch_operands = 0 : i64, tpu.core_type = #tpu.core_type<tc>, window_params = [{transform_indices = @transform_0, window_bounds = array<i64: 1, 128, 8>}, {transform_indices = @transform_1, window_bounds = array<i64: 1, 8, 128>}, {transform_indices = @transform_2, window_bounds = array<i64: 1, 24, 128>}, {transform_indices = @transform_3, window_bounds = array<i64: 1, 8, 24, 128>}, {transform_indices = @transform_4, window_bounds = array<i64: 1, 8, 128>}]} {
    %c0 = arith.constant 0 : index
    %c0_0 = arith.constant 0 : index
    %c0_1 = arith.constant 0 : index
    %0 = vector.load %arg2[%c0, %c0_0, %c0_1] : memref<1x128x8xf32, #tpu.memory_space<vmem>>, vector<1x128x8xf32>
    %1 = vector.shape_cast %0 : vector<1x128x8xf32> to vector<128x8xf32>
    %c0_2 = arith.constant 0 : index
    %c0_3 = arith.constant 0 : index
    %c0_4 = arith.constant 0 : index
    %2 = vector.load %arg3[%c0_2, %c0_3, %c0_4] : memref<1x8x128xf32, #tpu.memory_space<vmem>>, vector<1x8x128xf32>
    %3 = vector.shape_cast %2 : vector<1x8x128xf32> to vector<8x128xf32>
    %c0_5 = arith.constant 0 : index
    %c0_6 = arith.constant 0 : index
    %c0_7 = arith.constant 0 : index
    %4 = vector.load %arg4[%c0_5, %c0_6, %c0_7] : memref<1x24x128xf32, #tpu.memory_space<vmem>>, vector<1x24x128xf32>
    %5 = vector.shape_cast %4 : vector<1x24x128xf32> to vector<24x128xf32>
    %cst = arith.constant dense<0.000000e+00> : vector<128x128xf32>
    %6 = tpu.matmul %1, %3, %cst {dimension_numbers = #tpu.dot_dimension_numbers<[1], [0], [0], [1], [0, 0, 1, 1], [], []>, precision = #tpu.contract_precision<fp32>} : vector<128x8xf32>, vector<8x128xf32>, vector<128x128xf32> -> vector<128x128xf32>
    %cst_8 = arith.constant 0.000000e+00 : f32
    %7 = vector.broadcast %cst_8 : f32 to vector<128x128xf32>
    %8 = arith.maximumf %6, %7 : vector<128x128xf32>
    %9 = tpu.iota {dimensions = array<i32: 1>} : vector<128x128xi32>
    %10 = tpu.bitcast %8 : vector<128x128xf32> -> vector<128x128xi32>
    %c-128_i32 = arith.constant -128 : i32
    %11 = vector.broadcast %c-128_i32 : i32 to vector<128x128xi32>
    %12 = arith.andi %10, %11 : vector<128x128xi32>
    %13 = arith.ori %12, %9 : vector<128x128xi32>
    %14 = tpu.bitcast %13 : vector<128x128xi32> -> vector<128x128xf32>
    %cst_9 = arith.constant dense<0x7F800000> : vector<128xf32>
    %15 = vector.multi_reduction <minimumf>, %14, %cst_9 [1] : vector<128x128xf32> to vector<128xf32>
    %16 = vector.shape_cast %15 : vector<128xf32> to vector<128x1xf32>
    %17 = vector.broadcast %16 : vector<128x1xf32> to vector<128x128xf32>
    %18 = arith.cmpf oeq, %14, %17 : vector<128x128xf32>
    %19 = arith.extui %18 : vector<128x128xi1> to vector<128x128xi32>
    %20 = arith.sitofp %19 : vector<128x128xi32> to vector<128x128xf32>
    %cst_10 = arith.constant dense<0.000000e+00> : vector<24x128xf32>
    %21 = tpu.matmul %5, %20, %cst_10 {dimension_numbers = #tpu.dot_dimension_numbers<[1], [1], [0], [0], [0, 0, 1, 0], [], []>, precision = #tpu.contract_precision<fp32>} : vector<24x128xf32>, vector<128x128xf32>, vector<24x128xf32> -> vector<24x128xf32>
    %c0_11 = arith.constant 0 : index
    %c0_12 = arith.constant 0 : index
    %c0_13 = arith.constant 0 : index
    %c0_14 = arith.constant 0 : index
    %22 = vector.load %arg5[%c0_11, %c0_12, %c0_13, %c0_14] : memref<1x8x24x128xf32, #tpu.memory_space<vmem>>, vector<1x1x24x128xf32>
    %23 = vector.shape_cast %22 : vector<1x1x24x128xf32> to vector<24x128xf32>
    %24 = vector.shape_cast %21 : vector<24x128xf32> to vector<1x1x24x128xf32>
    tpu.vector_store %arg5[%c0_11, %c0_12, %c0_13, %c0_14], %24 {strides = array<i32>} : memref<1x8x24x128xf32, #tpu.memory_space<vmem>>, vector<1x1x24x128xf32>,
    %25 = vector.extract_strided_slice %21 {offsets = [19, 0], sizes = [1, 128], strides = [1, 1]} : vector<24x128xf32> to vector<1x128xf32>
    %cst_15 = arith.constant 5.000000e-01 : f32
    %26 = vector.broadcast %cst_15 : f32 to vector<1x128xf32>
    %27 = arith.addf %25, %26 : vector<1x128xf32>
    %28 = arith.fptosi %27 : vector<1x128xf32> to vector<1x128xi32>
    %cst_16 = arith.constant 3.40282347E+38 : f32
    %29 = vector.broadcast %cst_16 : f32 to vector<128x128xf32>
    %30 = arith.select %18, %29, %14 : vector<128x128xi1>, vector<128x128xf32>
    %cst_17 = arith.constant dense<0x7F800000> : vector<128xf32>
    %31 = vector.multi_reduction <minimumf>, %30, %cst_17 [1] : vector<128x128xf32> to vector<128xf32>
    %32 = vector.shape_cast %31 : vector<128xf32> to vector<128x1xf32>
    %33 = vector.broadcast %32 : vector<128x1xf32> to vector<128x128xf32>
    %34 = arith.cmpf oeq, %30, %33 : vector<128x128xf32>
    %35 = arith.extui %34 : vector<128x128xi1> to vector<128x128xi32>
    %36 = arith.sitofp %35 : vector<128x128xi32> to vector<128x128xf32>
    %cst_18 = arith.constant dense<0.000000e+00> : vector<24x128xf32>
    %37 = tpu.matmul %5, %36, %cst_18 {dimension_numbers = #tpu.dot_dimension_numbers<[1], [1], [0], [0], [0, 0, 1, 0], [], []>, precision = #tpu.contract_precision<fp32>} : vector<24x128xf32>, vector<128x128xf32>, vector<24x128xf32> -> vector<24x128xf32>
    %c0_19 = arith.constant 0 : index
    %c1 = arith.constant 1 : index
    %c0_20 = arith.constant 0 : index
    %c0_21 = arith.constant 0 : index
    %38 = vector.load %arg5[%c0_19, %c1, %c0_20, %c0_21] : memref<1x8x24x128xf32, #tpu.memory_space<vmem>>, vector<1x1x24x128xf32>
    %39 = vector.shape_cast %38 : vector<1x1x24x128xf32> to vector<24x128xf32>
    %40 = vector.shape_cast %37 : vector<24x128xf32> to vector<1x1x24x128xf32>
    tpu.vector_store %arg5[%c0_19, %c1, %c0_20, %c0_21], %40 {strides = array<i32>} : memref<1x8x24x128xf32, #tpu.memory_space<vmem>>, vector<1x1x24x128xf32>,
    %41 = vector.extract_strided_slice %37 {offsets = [19, 0], sizes = [1, 128], strides = [1, 1]} : vector<24x128xf32> to vector<1x128xf32>
    %cst_22 = arith.constant 5.000000e-01 : f32
    %42 = vector.broadcast %cst_22 : f32 to vector<1x128xf32>
    %43 = arith.addf %41, %42 : vector<1x128xf32>
    %44 = arith.fptosi %43 : vector<1x128xf32> to vector<1x128xi32>
    %cst_23 = arith.constant 3.40282347E+38 : f32
    %45 = vector.broadcast %cst_23 : f32 to vector<128x128xf32>
    %46 = arith.select %34, %45, %30 : vector<128x128xi1>, vector<128x128xf32>
    %cst_24 = arith.constant dense<0x7F800000> : vector<128xf32>
    %47 = vector.multi_reduction <minimumf>, %46, %cst_24 [1] : vector<128x128xf32> to vector<128xf32>
    %48 = vector.shape_cast %47 : vector<128xf32> to vector<128x1xf32>
    %49 = vector.broadcast %48 : vector<128x1xf32> to vector<128x128xf32>
    %50 = arith.cmpf oeq, %46, %49 : vector<128x128xf32>
    %51 = arith.extui %50 : vector<128x128xi1> to vector<128x128xi32>
    %52 = arith.sitofp %51 : vector<128x128xi32> to vector<128x128xf32>
    %cst_25 = arith.constant dense<0.000000e+00> : vector<24x128xf32>
    %53 = tpu.matmul %5, %52, %cst_25 {dimension_numbers = #tpu.dot_dimension_numbers<[1], [1], [0], [0], [0, 0, 1, 0], [], []>, precision = #tpu.contract_precision<fp32>} : vector<24x128xf32>, vector<128x128xf32>, vector<24x128xf32> -> vector<24x128xf32>
    %c0_26 = arith.constant 0 : index
    %c2 = arith.constant 2 : index
    %c0_27 = arith.constant 0 : index
    %c0_28 = arith.constant 0 : index
    %54 = vector.load %arg5[%c0_26, %c2, %c0_27, %c0_28] : memref<1x8x24x128xf32, #tpu.memory_space<vmem>>, vector<1x1x24x128xf32>
    %55 = vector.shape_cast %54 : vector<1x1x24x128xf32> to vector<24x128xf32>
    %56 = vector.shape_cast %53 : vector<24x128xf32> to vector<1x1x24x128xf32>
    tpu.vector_store %arg5[%c0_26, %c2, %c0_27, %c0_28], %56 {strides = array<i32>} : memref<1x8x24x128xf32, #tpu.memory_space<vmem>>, vector<1x1x24x128xf32>,
    %57 = vector.extract_strided_slice %53 {offsets = [19, 0], sizes = [1, 128], strides = [1, 1]} : vector<24x128xf32> to vector<1x128xf32>
    %cst_29 = arith.constant 5.000000e-01 : f32
    %58 = vector.broadcast %cst_29 : f32 to vector<1x128xf32>
    %59 = arith.addf %57, %58 : vector<1x128xf32>
    %60 = arith.fptosi %59 : vector<1x128xf32> to vector<1x128xi32>
    %cst_30 = arith.constant 3.40282347E+38 : f32
    %61 = vector.broadcast %cst_30 : f32 to vector<128x128xf32>
    %62 = arith.select %50, %61, %46 : vector<128x128xi1>, vector<128x128xf32>
    %cst_31 = arith.constant dense<0x7F800000> : vector<128xf32>
    %63 = vector.multi_reduction <minimumf>, %62, %cst_31 [1] : vector<128x128xf32> to vector<128xf32>
    %64 = vector.shape_cast %63 : vector<128xf32> to vector<128x1xf32>
    %65 = vector.broadcast %64 : vector<128x1xf32> to vector<128x128xf32>
    %66 = arith.cmpf oeq, %62, %65 : vector<128x128xf32>
    %67 = arith.extui %66 : vector<128x128xi1> to vector<128x128xi32>
    %68 = arith.sitofp %67 : vector<128x128xi32> to vector<128x128xf32>
    %cst_32 = arith.constant dense<0.000000e+00> : vector<24x128xf32>
    %69 = tpu.matmul %5, %68, %cst_32 {dimension_numbers = #tpu.dot_dimension_numbers<[1], [1], [0], [0], [0, 0, 1, 0], [], []>, precision = #tpu.contract_precision<fp32>} : vector<24x128xf32>, vector<128x128xf32>, vector<24x128xf32> -> vector<24x128xf32>
    %c0_33 = arith.constant 0 : index
    %c3 = arith.constant 3 : index
    %c0_34 = arith.constant 0 : index
    %c0_35 = arith.constant 0 : index
    %70 = vector.load %arg5[%c0_33, %c3, %c0_34, %c0_35] : memref<1x8x24x128xf32, #tpu.memory_space<vmem>>, vector<1x1x24x128xf32>
    %71 = vector.shape_cast %70 : vector<1x1x24x128xf32> to vector<24x128xf32>
    %72 = vector.shape_cast %69 : vector<24x128xf32> to vector<1x1x24x128xf32>
    tpu.vector_store %arg5[%c0_33, %c3, %c0_34, %c0_35], %72 {strides = array<i32>} : memref<1x8x24x128xf32, #tpu.memory_space<vmem>>, vector<1x1x24x128xf32>,
    %73 = vector.extract_strided_slice %69 {offsets = [19, 0], sizes = [1, 128], strides = [1, 1]} : vector<24x128xf32> to vector<1x128xf32>
    %cst_36 = arith.constant 5.000000e-01 : f32
    %74 = vector.broadcast %cst_36 : f32 to vector<1x128xf32>
    %75 = arith.addf %73, %74 : vector<1x128xf32>
    %76 = arith.fptosi %75 : vector<1x128xf32> to vector<1x128xi32>
    %cst_37 = arith.constant 3.40282347E+38 : f32
    %77 = vector.broadcast %cst_37 : f32 to vector<128x128xf32>
    %78 = arith.select %66, %77, %62 : vector<128x128xi1>, vector<128x128xf32>
    %cst_38 = arith.constant dense<0x7F800000> : vector<128xf32>
    %79 = vector.multi_reduction <minimumf>, %78, %cst_38 [1] : vector<128x128xf32> to vector<128xf32>
    %80 = vector.shape_cast %79 : vector<128xf32> to vector<128x1xf32>
    %81 = vector.broadcast %80 : vector<128x1xf32> to vector<128x128xf32>
    %82 = arith.cmpf oeq, %78, %81 : vector<128x128xf32>
    %83 = arith.extui %82 : vector<128x128xi1> to vector<128x128xi32>
    %84 = arith.sitofp %83 : vector<128x128xi32> to vector<128x128xf32>
    %cst_39 = arith.constant dense<0.000000e+00> : vector<24x128xf32>
    %85 = tpu.matmul %5, %84, %cst_39 {dimension_numbers = #tpu.dot_dimension_numbers<[1], [1], [0], [0], [0, 0, 1, 0], [], []>, precision = #tpu.contract_precision<fp32>} : vector<24x128xf32>, vector<128x128xf32>, vector<24x128xf32> -> vector<24x128xf32>
    %c0_40 = arith.constant 0 : index
    %c4 = arith.constant 4 : index
    %c0_41 = arith.constant 0 : index
    %c0_42 = arith.constant 0 : index
    %86 = vector.load %arg5[%c0_40, %c4, %c0_41, %c0_42] : memref<1x8x24x128xf32, #tpu.memory_space<vmem>>, vector<1x1x24x128xf32>
    %87 = vector.shape_cast %86 : vector<1x1x24x128xf32> to vector<24x128xf32>
    %88 = vector.shape_cast %85 : vector<24x128xf32> to vector<1x1x24x128xf32>
    tpu.vector_store %arg5[%c0_40, %c4, %c0_41, %c0_42], %88 {strides = array<i32>} : memref<1x8x24x128xf32, #tpu.memory_space<vmem>>, vector<1x1x24x128xf32>,
    %89 = vector.extract_strided_slice %85 {offsets = [19, 0], sizes = [1, 128], strides = [1, 1]} : vector<24x128xf32> to vector<1x128xf32>
    %cst_43 = arith.constant 5.000000e-01 : f32
    %90 = vector.broadcast %cst_43 : f32 to vector<1x128xf32>
    %91 = arith.addf %89, %90 : vector<1x128xf32>
    %92 = arith.fptosi %91 : vector<1x128xf32> to vector<1x128xi32>
    %cst_44 = arith.constant 3.40282347E+38 : f32
    %93 = vector.broadcast %cst_44 : f32 to vector<128x128xf32>
    %94 = arith.select %82, %93, %78 : vector<128x128xi1>, vector<128x128xf32>
    %cst_45 = arith.constant dense<0x7F800000> : vector<128xf32>
    %95 = vector.multi_reduction <minimumf>, %94, %cst_45 [1] : vector<128x128xf32> to vector<128xf32>
    %96 = vector.shape_cast %95 : vector<128xf32> to vector<128x1xf32>
    %97 = vector.broadcast %96 : vector<128x1xf32> to vector<128x128xf32>
    %98 = arith.cmpf oeq, %94, %97 : vector<128x128xf32>
    %99 = arith.extui %98 : vector<128x128xi1> to vector<128x128xi32>
    %100 = arith.sitofp %99 : vector<128x128xi32> to vector<128x128xf32>
    %cst_46 = arith.constant dense<0.000000e+00> : vector<24x128xf32>
    %101 = tpu.matmul %5, %100, %cst_46 {dimension_numbers = #tpu.dot_dimension_numbers<[1], [1], [0], [0], [0, 0, 1, 0], [], []>, precision = #tpu.contract_precision<fp32>} : vector<24x128xf32>, vector<128x128xf32>, vector<24x128xf32> -> vector<24x128xf32>
    %c0_47 = arith.constant 0 : index
    %c5 = arith.constant 5 : index
    %c0_48 = arith.constant 0 : index
    %c0_49 = arith.constant 0 : index
    %102 = vector.load %arg5[%c0_47, %c5, %c0_48, %c0_49] : memref<1x8x24x128xf32, #tpu.memory_space<vmem>>, vector<1x1x24x128xf32>
    %103 = vector.shape_cast %102 : vector<1x1x24x128xf32> to vector<24x128xf32>
    %104 = vector.shape_cast %101 : vector<24x128xf32> to vector<1x1x24x128xf32>
    tpu.vector_store %arg5[%c0_47, %c5, %c0_48, %c0_49], %104 {strides = array<i32>} : memref<1x8x24x128xf32, #tpu.memory_space<vmem>>, vector<1x1x24x128xf32>,
    %105 = vector.extract_strided_slice %101 {offsets = [19, 0], sizes = [1, 128], strides = [1, 1]} : vector<24x128xf32> to vector<1x128xf32>
    %cst_50 = arith.constant 5.000000e-01 : f32
    %106 = vector.broadcast %cst_50 : f32 to vector<1x128xf32>
    %107 = arith.addf %105, %106 : vector<1x128xf32>
    %108 = arith.fptosi %107 : vector<1x128xf32> to vector<1x128xi32>
    %cst_51 = arith.constant 3.40282347E+38 : f32
    %109 = vector.broadcast %cst_51 : f32 to vector<128x128xf32>
    %110 = arith.select %98, %109, %94 : vector<128x128xi1>, vector<128x128xf32>
    %cst_52 = arith.constant dense<0x7F800000> : vector<128xf32>
    %111 = vector.multi_reduction <minimumf>, %110, %cst_52 [1] : vector<128x128xf32> to vector<128xf32>
    %112 = vector.shape_cast %111 : vector<128xf32> to vector<128x1xf32>
    %113 = vector.broadcast %112 : vector<128x1xf32> to vector<128x128xf32>
    %114 = arith.cmpf oeq, %110, %113 : vector<128x128xf32>
    %115 = arith.extui %114 : vector<128x128xi1> to vector<128x128xi32>
    %116 = arith.sitofp %115 : vector<128x128xi32> to vector<128x128xf32>
    %cst_53 = arith.constant dense<0.000000e+00> : vector<24x128xf32>
    %117 = tpu.matmul %5, %116, %cst_53 {dimension_numbers = #tpu.dot_dimension_numbers<[1], [1], [0], [0], [0, 0, 1, 0], [], []>, precision = #tpu.contract_precision<fp32>} : vector<24x128xf32>, vector<128x128xf32>, vector<24x128xf32> -> vector<24x128xf32>
    %c0_54 = arith.constant 0 : index
    %c6 = arith.constant 6 : index
    %c0_55 = arith.constant 0 : index
    %c0_56 = arith.constant 0 : index
    %118 = vector.load %arg5[%c0_54, %c6, %c0_55, %c0_56] : memref<1x8x24x128xf32, #tpu.memory_space<vmem>>, vector<1x1x24x128xf32>
    %119 = vector.shape_cast %118 : vector<1x1x24x128xf32> to vector<24x128xf32>
    %120 = vector.shape_cast %117 : vector<24x128xf32> to vector<1x1x24x128xf32>
    tpu.vector_store %arg5[%c0_54, %c6, %c0_55, %c0_56], %120 {strides = array<i32>} : memref<1x8x24x128xf32, #tpu.memory_space<vmem>>, vector<1x1x24x128xf32>,
    %121 = vector.extract_strided_slice %117 {offsets = [19, 0], sizes = [1, 128], strides = [1, 1]} : vector<24x128xf32> to vector<1x128xf32>
    %cst_57 = arith.constant 5.000000e-01 : f32
    %122 = vector.broadcast %cst_57 : f32 to vector<1x128xf32>
    %123 = arith.addf %121, %122 : vector<1x128xf32>
    %124 = arith.fptosi %123 : vector<1x128xf32> to vector<1x128xi32>
    %cst_58 = arith.constant 3.40282347E+38 : f32
    %125 = vector.broadcast %cst_58 : f32 to vector<128x128xf32>
    %126 = arith.select %114, %125, %110 : vector<128x128xi1>, vector<128x128xf32>
    %cst_59 = arith.constant dense<0x7F800000> : vector<128xf32>
    %127 = vector.multi_reduction <minimumf>, %126, %cst_59 [1] : vector<128x128xf32> to vector<128xf32>
    %128 = vector.shape_cast %127 : vector<128xf32> to vector<128x1xf32>
    %129 = vector.broadcast %128 : vector<128x1xf32> to vector<128x128xf32>
    %130 = arith.cmpf oeq, %126, %129 : vector<128x128xf32>
    %131 = arith.extui %130 : vector<128x128xi1> to vector<128x128xi32>
    %132 = arith.sitofp %131 : vector<128x128xi32> to vector<128x128xf32>
    %cst_60 = arith.constant dense<0.000000e+00> : vector<24x128xf32>
    %133 = tpu.matmul %5, %132, %cst_60 {dimension_numbers = #tpu.dot_dimension_numbers<[1], [1], [0], [0], [0, 0, 1, 0], [], []>, precision = #tpu.contract_precision<fp32>} : vector<24x128xf32>, vector<128x128xf32>, vector<24x128xf32> -> vector<24x128xf32>
    %c0_61 = arith.constant 0 : index
    %c7 = arith.constant 7 : index
    %c0_62 = arith.constant 0 : index
    %c0_63 = arith.constant 0 : index
    %134 = vector.load %arg5[%c0_61, %c7, %c0_62, %c0_63] : memref<1x8x24x128xf32, #tpu.memory_space<vmem>>, vector<1x1x24x128xf32>
    %135 = vector.shape_cast %134 : vector<1x1x24x128xf32> to vector<24x128xf32>
    %136 = vector.shape_cast %133 : vector<24x128xf32> to vector<1x1x24x128xf32>
    tpu.vector_store %arg5[%c0_61, %c7, %c0_62, %c0_63], %136 {strides = array<i32>} : memref<1x8x24x128xf32, #tpu.memory_space<vmem>>, vector<1x1x24x128xf32>,
    %137 = vector.extract_strided_slice %133 {offsets = [19, 0], sizes = [1, 128], strides = [1, 1]} : vector<24x128xf32> to vector<1x128xf32>
    %cst_64 = arith.constant 5.000000e-01 : f32
    %138 = vector.broadcast %cst_64 : f32 to vector<1x128xf32>
    %139 = arith.addf %137, %138 : vector<1x128xf32>
    %140 = arith.fptosi %139 : vector<1x128xf32> to vector<1x128xi32>
    %141 = tpu.concatenate %28, %44, %60, %76, %92, %108, %124, %140 in 0 : vector<1x128xi32>, vector<1x128xi32>, vector<1x128xi32>, vector<1x128xi32>, vector<1x128xi32>, vector<1x128xi32>, vector<1x128xi32>, vector<1x128xi32> -> vector<8x128xi32>
    %c0_65 = arith.constant 0 : index
    %c0_66 = arith.constant 0 : index
    %c0_67 = arith.constant 0 : index
    %142 = vector.load %arg6[%c0_65, %c0_66, %c0_67] : memref<1x8x128xi32, #tpu.memory_space<vmem>>, vector<1x8x128xi32>
    %143 = vector.shape_cast %142 : vector<1x8x128xi32> to vector<8x128xi32>
    %144 = vector.shape_cast %141 : vector<8x128xi32> to vector<1x8x128xi32>
    tpu.vector_store %arg6[%c0_65, %c0_66, %c0_67], %144 {strides = array<i32>} : memref<1x8x128xi32, #tpu.memory_space<vmem>>, vector<1x8x128xi32>,
    return
  }
  func.func @transform_0(%arg0: i32, %arg1: i32) -> (i32, i32, i32) {
    %c0_i32 = arith.constant 0 : i32
    %c0_i32_0 = arith.constant 0 : i32
    return %arg0, %arg1, %c0_i32 : i32, i32, i32
  }
  func.func @transform_1(%arg0: i32, %arg1: i32) -> (i32, i32, i32) {
    %c0_i32 = arith.constant 0 : i32
    %c0_i32_0 = arith.constant 0 : i32
    %c0_i32_1 = arith.constant 0 : i32
    return %arg0, %c0_i32, %c0_i32_0 : i32, i32, i32
  }
  func.func @transform_2(%arg0: i32, %arg1: i32) -> (i32, i32, i32) {
    %c0_i32 = arith.constant 0 : i32
    %c0_i32_0 = arith.constant 0 : i32
    %c0_i32_1 = arith.constant 0 : i32
    return %arg0, %c0_i32, %c0_i32_0 : i32, i32, i32
  }
  func.func @transform_3(%arg0: i32, %arg1: i32) -> (i32, i32, i32, i32) {
    %c0_i32 = arith.constant 0 : i32
    %c0_i32_0 = arith.constant 0 : i32
    %c0_i32_1 = arith.constant 0 : i32
    return %arg0, %c0_i32, %c0_i32_0, %arg1 : i32, i32, i32, i32
  }
  func.func @transform_4(%arg0: i32, %arg1: i32) -> (i32, i32, i32) {
    %c0_i32 = arith.constant 0 : i32
    %c0_i32_0 = arith.constant 0 : i32
    return %arg0, %c0_i32, %arg1 : i32, i32, i32
  }
}

</mosaic_0001>

<llo_original>
// kernel: tpu_custom_call.1
$region0: #{tpu_custom_call.1}
  #allocation0 [shape = 'u32[]', space=smem, size = 0x4, offset = 0x4, fixed_abs, tag = 'smem constant byte address 0x4 - core index']
  #allocation1 [shape = 'u32[144,128]{1,0:T(1,128)}', space=vmem, size = 0x12000, scoped, tag = 'internal scratch']
  %s0 = inlined_call_operand.vmem [shape: f32[2,128,8], index: 0, kind: input, shape index: {}]
  %s1 = inlined_call_operand.vmem [shape: f32[2,8,128], index: 1, kind: input, shape index: {}]
  %s2 = inlined_call_operand.vmem [shape: f32[2,24,128], index: 2, kind: input, shape index: {}]
  %s3 = inlined_call_operand.hbm [shape: f32[2,8,24,128], index: 3, kind: output, shape index: {0}]
  %s4 = inlined_call_operand.hbm [shape: s32[2,8,128], index: 4, kind: output, shape index: {1}]
  %5 = xla_tuple %s3, %s4
  %s6 = sld [smem:[#allocation0]]
  $region53: #{tpu_custom_call.1} parent=0
    _
  %s8 = ssub.s32 1, %s6
  %s9 = scalar_select 0, %s8, %s6
  $region1: #{tpu_custom_call.1} parent=0
    #allocation2 [shape = 'u8[196608]{0}', space=vmem, size = 0x30000, scoped, tag = 'output window, operand 0']
    #allocation3 [shape = 's32[2]{0}', space=sflag, size = 0x8, scoped, tag = 'scoped memory for tpu_custom_call.1']
    #allocation4 [shape = 'u8[8192]{0}', space=vmem, size = 0x2000, scoped, tag = 'output window, operand 1']
    #allocation5 [shape = 's32[2]{0}', space=sflag, size = 0x8, scoped, tag = 'scoped memory for tpu_custom_call.1']
    %10 = vsyncpa [#allocation3], 0
    %s11 = scalar_lea.sflag [#allocation3], 1
    %12 = vsyncpa %s11, 0
    %13 = vsyncpa [#allocation5], 0
    %s14 = scalar_lea.sflag [#allocation5], 1
    %15 = vsyncpa %s14, 0
    loop: start=0, step=1, limit=4
    $region2: #{tpu_custom_call.1} parent=1 // loop_pre_header
      _
    $region3: #{tpu_custom_call.1} parent=1 // loop_header
      %s17 = sphi 0, %s21
      %p18 = scmp.ge.s32.totalorder %s17, 4
      %s24 = sphi 0, %s36
      %s25 = sphi 0, %s32
      %s26 = sphi 0, %s24
      %s27 = sphi 0, %s25
      %s28 = sphi 0, %s26
      %s29 = sphi 0, %s27
      %s41 = sphi 0, %s43
      %s44 = sphi 0, %s41
      %s45 = sphi 0, %s44
      %s61 = sphi 0, %s45
      %s67 = sphi 0, %s69
      %s70 = sphi 0, %s67
      %s71 = sphi 0, %s70
      %s87 = sphi 0, %s71
      %s93 = sphi 0, %s95
      %s96 = sphi 0, %s93
      %s97 = sphi 0, %s96
      %s113 = sphi 0, %s97
      %s121 = sphi 0, %s123
      %s124 = sphi 0, %s121
      %s125 = sphi 0, %s124
      %s141 = sphi 0, %s125
      %s149 = sphi 0, %s151
      %s152 = sphi 0, %s149
      %s153 = sphi 0, %s152
      %s169 = sphi 0, %s153
    $region4: #{tpu_custom_call.1} parent=1 // loop_header_branch
      %20 = sbr.rel (%p18) target = $region8
    $region5: #{tpu_custom_call.1} parent=1 // loop_body
      %s22 = ssub.s32 %s17, 1
      %s23 = ssub.s32 %s17, 2
      %s30 = sadd.s32 1, %s25
      %p31 = scmp.ge.s32.totalorder %s30, 1
      %s32 = scalar_select %p31, 0, %s30
      %s33 = sadd.s32 1, %s24
      %s34 = scalar_select %p31, %s33, %s24
      %p35 = scmp.ge.s32.totalorder %s34, 2
      %s36 = scalar_select %p35, 0, %s34
      %s37 = ssub.s32 %s24, %s36
      %s38 = ssub.s32 %s25, %s32
      %s39 = sor.u32 %s37, %s38
      %p40 = scmp.eq.s32.totalorder %s39, 0
      %s42 = sadd.s32 %s41, 1
      %s43 = scalar_select %p40, %s41, %s42
      %p46 = pneg %p40
      %p47 = scmp.eq.s32.totalorder %s17, 1
      %p48 = por %p46, %p47
      %p49 = scmp.ne.s32.totalorder %s41, %s44
      %p50 = scmp.eq.s32.totalorder %s17, 0
      %p51 = por %p49, %p50
      %p52 = scmp.ne.s32.totalorder %s41, %s44
      %p53 = scmp.eq.s32.totalorder %s22, 1
      %p54 = por %p52, %p53
      %p55 = scmp.ne.s32.totalorder %s44, %s45
      %p56 = scmp.eq.s32.totalorder %s22, 0
      %p57 = por %p55, %p56
      %p58 = scmp.ne.s32.totalorder %s44, %s45
      %p59 = scmp.eq.s32.totalorder %s23, 1
      %p60 = por %p58, %p59
      %p62 = scmp.ne.s32.totalorder %s45, %s61
      %p63 = scmp.eq.s32.totalorder %s23, 0
      %p64 = por %p62, %p63
      %s65 = ssub.s32 %s24, %s36
      %p66 = scmp.eq.s32.totalorder %s65, 0
      %s68 = sadd.s32 %s67, 1
      %s69 = scalar_select %p66, %s67, %s68
      %p72 = pneg %p66
      %p73 = scmp.eq.s32.totalorder %s17, 1
      %p74 = por %p72, %p73
      %p75 = scmp.ne.s32.totalorder %s67, %s70
      %p76 = scmp.eq.s32.totalorder %s17, 0
      %p77 = por %p75, %p76
      %p78 = scmp.ne.s32.totalorder %s67, %s70
      %p79 = scmp.eq.s32.totalorder %s22, 1
      %p80 = por %p78, %p79
      %p81 = scmp.ne.s32.totalorder %s70, %s71
      %p82 = scmp.eq.s32.totalorder %s22, 0
      %p83 = por %p81, %p82
      %p84 = scmp.ne.s32.totalorder %s70, %s71
      %p85 = scmp.eq.s32.totalorder %s23, 1
      %p86 = por %p84, %p85
      %p88 = scmp.ne.s32.totalorder %s71, %s87
      %p89 = scmp.eq.s32.totalorder %s23, 0
      %p90 = por %p88, %p89
      %s91 = ssub.s32 %s24, %s36
      %p92 = scmp.eq.s32.totalorder %s91, 0
      %s94 = sadd.s32 %s93, 1
      %s95 = scalar_select %p92, %s93, %s94
      %p98 = pneg %p92
      %p99 = scmp.eq.s32.totalorder %s17, 1
      %p100 = por %p98, %p99
      %p101 = scmp.ne.s32.totalorder %s93, %s96
      %p102 = scmp.eq.s32.totalorder %s17, 0
      %p103 = por %p101, %p102
      %p104 = scmp.ne.s32.totalorder %s93, %s96
      %p105 = scmp.eq.s32.totalorder %s22, 1
      %p106 = por %p104, %p105
      %p107 = scmp.ne.s32.totalorder %s96, %s97
      %p108 = scmp.eq.s32.totalorder %s22, 0
      %p109 = por %p107, %p108
      %p110 = scmp.ne.s32.totalorder %s96, %s97
      %p111 = scmp.eq.s32.totalorder %s23, 1
      %p112 = por %p110, %p111
      %p114 = scmp.ne.s32.totalorder %s97, %s113
      %p115 = scmp.eq.s32.totalorder %s23, 0
      %p116 = por %p114, %p115
      %s117 = ssub.s32 %s24, %s36
      %s118 = ssub.s32 %s25, %s32
      %s119 = sor.u32 %s117, %s118
      %p120 = scmp.eq.s32.totalorder %s119, 0
      %s122 = sadd.s32 %s121, 1
      %s123 = scalar_select %p120, %s121, %s122
      %p126 = pneg %p120
      %p127 = scmp.eq.s32.totalorder %s17, 1
      %p128 = por %p126, %p127
      %p129 = scmp.ne.s32.totalorder %s121, %s124
      %p130 = scmp.eq.s32.totalorder %s17, 0
      %p131 = por %p129, %p130
      %p132 = scmp.ne.s32.totalorder %s121, %s124
      %p133 = scmp.eq.s32.totalorder %s22, 1
      %p134 = por %p132, %p133
      %p135 = scmp.ne.s32.totalorder %s124, %s125
      %p136 = scmp.eq.s32.totalorder %s22, 0
      %p137 = por %p135, %p136
      %p138 = scmp.ne.s32.totalorder %s124, %s125
      %p139 = scmp.eq.s32.totalorder %s23, 1
      %p140 = por %p138, %p139
      %p142 = scmp.ne.s32.totalorder %s125, %s141
      %p143 = scmp.eq.s32.totalorder %s23, 0
      %p144 = por %p142, %p143
      %s145 = ssub.s32 %s24, %s36
      %s146 = ssub.s32 %s25, %s32
      %s147 = sor.u32 %s145, %s146
      %p148 = scmp.eq.s32.totalorder %s147, 0
      %s150 = sadd.s32 %s149, 1
      %s151 = scalar_select %p148, %s149, %s150
      %p154 = pneg %p148
      %p155 = scmp.eq.s32.totalorder %s17, 1
      %p156 = por %p154, %p155
      %p157 = scmp.ne.s32.totalorder %s149, %s152
      %p158 = scmp.eq.s32.totalorder %s17, 0
      %p159 = por %p157, %p158
      %p160 = scmp.ne.s32.totalorder %s149, %s152
      %p161 = scmp.eq.s32.totalorder %s22, 1
      %p162 = por %p160, %p161
      %p163 = scmp.ne.s32.totalorder %s152, %s153
      %p164 = scmp.eq.s32.totalorder %s22, 0
      %p165 = por %p163, %p164
      %p166 = scmp.ne.s32.totalorder %s152, %s153
      %p167 = scmp.eq.s32.totalorder %s23, 1
      %p168 = por %p166, %p167
      %p170 = scmp.ne.s32.totalorder %s153, %s169
      %p171 = scmp.eq.s32.totalorder %s23, 0
      %p172 = por %p170, %p171
      %p173 = scmp.le.s32.totalorder 1, %s17
      %p174 = scmp.lt.s32.totalorder %s17, 3
      %p175 = pnand %p173, %p174
      %p176 = pneg %p175
      // Predicated region
      $region9: #{tpu_custom_call.1} parent=5 // pred_check
        _
      $region10: #{tpu_custom_call.1} parent=5 // pred_check_branch
        %178 = sbr.rel (%p175) target = $region12
      $region11: #{tpu_custom_call.1} parent=5 // pred_region
        %s179 = ssub.s32 %s17, 1
      $region12: #{tpu_custom_call.1} parent=5 // pred_fallthru
        _
      %p180 = scmp.lt.s32.totalorder %s17, 2
      // Predicated region
      $region13: #{tpu_custom_call.1} parent=5 // pred_check
        %p181 = pneg %p180
      $region14: #{tpu_custom_call.1} parent=5 // pred_check_branch
        %183 = sbr.rel (%p181) target = $region16
      $region15: #{tpu_custom_call.1} parent=5 // pred_region
        // Predicated region
        $region17: #{tpu_custom_call.1} parent=15 // pred_check
          %p184 = pneg %p51
        $region18: #{tpu_custom_call.1} parent=15 // pred_check_branch
          %186 = sbr.rel (%p184) target = $region20
        $region19: #{tpu_custom_call.1} parent=15 // pred_region
          %s187 = smul.u32 16, %s25
          %p188 = scmp.lt.s32.totalorder %s24, 1
          %s189 = scalar_select %p188, %s24, 1
          %p190 = scmp.lt.s32.totalorder %s187, 15
          %s191 = scalar_select %p190, %s187, 15
          %s192 = smul.addr %s189, 16
          %s193 = sadd.s32 %s191, %s192
          %s194 = smul.addr %s193, 8
          %s195 = scalar_lea.vmem %s0, %s194
          %s196 = smul.u32 16, %s25
        $region20: #{tpu_custom_call.1} parent=15 // pred_fallthru
          _
        // Predicated region
        $region21: #{tpu_custom_call.1} parent=15 // pred_check
          %p197 = pneg %p77
        $region22: #{tpu_custom_call.1} parent=15 // pred_check_branch
          %199 = sbr.rel (%p197) target = $region24
        $region23: #{tpu_custom_call.1} parent=15 // pred_region
          %p200 = scmp.lt.s32.totalorder %s24, 1
          %s201 = scalar_select %p200, %s24, 1
          %s202 = smul.addr %s201, 8
          %s203 = scalar_lea.vmem %s1, %s202
        $region24: #{tpu_custom_call.1} parent=15 // pred_fallthru
          _
        // Predicated region
        $region25: #{tpu_custom_call.1} parent=15 // pred_check
          %p204 = pneg %p103
        $region26: #{tpu_custom_call.1} parent=15 // pred_check_branch
          %206 = sbr.rel (%p204) target = $region28
        $region27: #{tpu_custom_call.1} parent=15 // pred_region
          %p207 = scmp.lt.s32.totalorder %s24, 1
          %s208 = scalar_select %p207, %s24, 1
          %s209 = smul.addr %s208, 3
          %s210 = smul.addr %s209, 8
          %s211 = scalar_lea.vmem %s2, %s210
        $region28: #{tpu_custom_call.1} parent=15 // pred_fallthru
          _
      $region16: #{tpu_custom_call.1} parent=5 // pred_fallthru
        _
      %p212 = scmp.le.s32.totalorder 1, %s17
      %p213 = scmp.lt.s32.totalorder %s17, 3
      %p214 = pnand %p212, %p213
      %p215 = pneg %p214
      // Predicated region
      $region29: #{tpu_custom_call.1} parent=5 // pred_check
        _
      $region30: #{tpu_custom_call.1} parent=5 // pred_check_branch
        %217 = sbr.rel (%p214) target = $region32
      $region31: #{tpu_custom_call.1} parent=5 // pred_region
        %s218 = ssub.s32 %s17, 1
        %s219 = smul.u32 16, %s27
        %p220 = scmp.lt.s32.totalorder %s26, 1
        %s221 = scalar_select %p220, %s26, 1
        %p222 = scmp.lt.s32.totalorder %s219, 15
        %s223 = scalar_select %p222, %s219, 15
        %s224 = smul.addr %s221, 16
        %s225 = sadd.s32 %s223, %s224
        %s226 = smul.addr %s225, 8
        %s227 = scalar_lea.vmem %s0, %s226
        %p228 = pneg %p57
        %p229 = pneg %p54
        %p230 = scmp.lt.s32.totalorder %s26, 1
        %s231 = scalar_select %p230, %s26, 1
        %s232 = smul.addr %s231, 8
        %s233 = scalar_lea.vmem %s1, %s232
        %p234 = pneg %p83
        %p235 = pneg %p80
        %p236 = scmp.lt.s32.totalorder %s26, 1
        %s237 = scalar_select %p236, %s26, 1
        %s238 = smul.addr %s237, 3
        %s239 = smul.addr %s238, 8
        %s240 = scalar_lea.vmem %s2, %s239
        %p241 = pneg %p109
        %p242 = pneg %p106
        %p243 = pneg %p137
        %p244 = pneg %p134
        %s245 = sand.u32 %s124, 1
        %s246 = scalar_lea.sflag [#allocation3], %s245
        %s247 = sand.u32 %s124, 1
        %s248 = smul.addr %s247, 192
        %s249 = scalar_lea.vmem [#allocation2], %s248
        %p250 = pneg %p165
        %p251 = pneg %p162
        %s252 = sand.u32 %s152, 1
        %s253 = scalar_lea.sflag [#allocation5], %s252
        %s254 = sand.u32 %s152, 1
        %s255 = smul.addr %s254, 8
        %s256 = scalar_lea.vmem [#allocation4], %s255
        %s257 = smul.u32 16, %s27
        %p258 = scmp.lt.s32.totalorder %s26, 1
        %s259 = scalar_select %p258, %s26, 1
        %p260 = scmp.lt.s32.totalorder %s257, 15
        %s261 = scalar_select %p260, %s257, 15
        %s262 = smul.addr %s259, 16
        %s263 = sadd.s32 %s261, %s262
        %s264 = smul.addr %s263, 8
        %s265 = scalar_lea.vmem %s0, %s264
        %s266 = smul.u32 16, %s27
        %p267 = scmp.lt.s32.totalorder %s26, 1
        %s268 = scalar_select %p267, %s26, 1
        %s269 = smul.addr %s268, 8
        %s270 = scalar_lea.vmem %s1, %s269
        %p271 = scmp.lt.s32.totalorder %s26, 1
        %s272 = scalar_select %p271, %s26, 1
        %s273 = smul.addr %s272, 3
        %s274 = smul.addr %s273, 8
        %s275 = scalar_lea.vmem %s2, %s274
        %v276 = vld [vmem:[%s265] sm:$0xff]
        %v277 = vld [vmem:[%s265 + $0x8] sm:$0xff]
        %v278 = vld [vmem:[%s265 + $0x10] sm:$0xff]
        %v279 = vld [vmem:[%s265 + $0x18] sm:$0xff]
        %v280 = vld [vmem:[%s265 + $0x20] sm:$0xff]
        %v281 = vld [vmem:[%s265 + $0x28] sm:$0xff]
        %v282 = vld [vmem:[%s265 + $0x30] sm:$0xff]
        %v283 = vld [vmem:[%s265 + $0x38] sm:$0xff]
        %v284 = vld [vmem:[%s265 + $0x40] sm:$0xff]
        %v285 = vld [vmem:[%s265 + $0x48] sm:$0xff]
        %v286 = vld [vmem:[%s265 + $0x50] sm:$0xff]
        %v287 = vld [vmem:[%s265 + $0x58] sm:$0xff]
        %v288 = vld [vmem:[%s265 + $0x60] sm:$0xff]
        %v289 = vld [vmem:[%s265 + $0x68] sm:$0xff]
        %v290 = vld [vmem:[%s265 + $0x70] sm:$0xff]
        %v291 = vld [vmem:[%s265 + $0x78] sm:$0xff]
        %v292 = vld [vmem:[%s270] sm:$0xff]
        %v293 = vld [vmem:[%s275] sm:$0xff]
        %v294 = vld [vmem:[%s275 + $0x8] sm:$0xff]
        %v295 = vld [vmem:[%s275 + $0x10] sm:$0xff]
        %vm296 = vcmask 64512
        %v298 = vsel %vm296, %v276, 0
        %v301 = vsel %vm296, %v277, 0
        %v304 = vsel %vm296, %v278, 0
        %v307 = vsel %vm296, %v279, 0
        %v310 = vsel %vm296, %v280, 0
        %v313 = vsel %vm296, %v281, 0
        %v316 = vsel %vm296, %v282, 0
        %v319 = vsel %vm296, %v283, 0
        %v322 = vsel %vm296, %v284, 0
        %v325 = vsel %vm296, %v285, 0
        %v328 = vsel %vm296, %v286, 0
        %v331 = vsel %vm296, %v287, 0
        %v334 = vsel %vm296, %v288, 0
        %v337 = vsel %vm296, %v289, 0
        %v340 = vsel %vm296, %v290, 0
        %v343 = vsel %vm296, %v291, 0
        %345 = vmatprep.subr.mxu0 0.0
        %346 = vmatpush1.msra.mxu0 0.0
        %347 = vmatprep.subr.mxu0 0.0
        %348 = vmatpush1.msra.mxu0 0.0
        %349 = vmatprep.subr.mxu0 0.0
        %350 = vmatpush1.msra.mxu0 0.0
        %351 = vmatprep.subr.mxu0 0.0
        %352 = vmatpush1.msra.mxu0 0.0
        %353 = vmatprep.subr.mxu0 0.0
        %354 = vmatpush1.msra.mxu0 0.0
        %355 = vmatprep.subr.mxu0 0.0
        %356 = vmatpush1.msra.mxu0 0.0
        %357 = vmatprep.subr.mxu0 0.0
        %358 = vmatpush1.msra.mxu0 0.0
        %359 = vmatprep.subr.mxu0 0.0
        %360 = vmatpush1.msra.mxu0 0.0
        %361 = vmatprep.subr.mxu0 0.0
        %362 = vmatpush1.msra.mxu0 0.0
        %363 = vmatprep.subr.mxu0 0.0
        %364 = vmatpush1.msra.mxu0 0.0
        %365 = vmatprep.subr.mxu0 0.0
        %366 = vmatpush1.msra.mxu0 0.0
        %367 = vmatprep.subr.mxu0 0.0
        %368 = vmatpush1.msra.mxu0 0.0
        %369 = vmatprep.subr.mxu0 0.0
        %370 = vmatpush1.msra.mxu0 0.0
        %371 = vmatprep.subr.mxu0 0.0
        %372 = vmatpush1.msra.mxu0 0.0
        %373 = vmatprep.subr.mxu0 0.0
        %374 = vmatpush1.msra.mxu0 0.0
        %375 = vmatprep.subr.mxu0 0.0
        %v376 = vand.u32 %v292, 4294901760
        %377 = vmatpush1.msra.mxu0 %v376
        %378 = vmatprep.subr.mxu0 0.0
        %379 = vmatpush2.msra.mxu0 0.0
        %380 = vmatprep.subr.mxu0 0.0
        %381 = vmatpush2.msra.mxu0 0.0
        %382 = vmatprep.subr.mxu0 0.0
        %383 = vmatpush2.msra.mxu0 0.0
        %384 = vmatprep.subr.mxu0 0.0
        %385 = vmatpush2.msra.mxu0 0.0
        %386 = vmatprep.subr.mxu0 0.0
        %387 = vmatpush2.msra.mxu0 0.0
        %388 = vmatprep.subr.mxu0 0.0
        %389 = vmatpush2.msra.mxu0 0.0
        %390 = vmatprep.subr.mxu0 0.0
        %391 = vmatpush2.msra.mxu0 0.0
        %392 = vmatprep.subr.mxu0 0.0
        %393 = vmatpush2.msra.mxu0 0.0
        %394 = vmatprep.subr.mxu0 0.0
        %395 = vmatpush2.msra.mxu0 0.0
        %396 = vmatprep.subr.mxu0 0.0
        %397 = vmatpush2.msra.mxu0 0.0
        %398 = vmatprep.subr.mxu0 0.0
        %399 = vmatpush2.msra.mxu0 0.0
        %400 = vmatprep.subr.mxu0 0.0
        %401 = vmatpush2.msra.mxu0 0.0
        %402 = vmatprep.subr.mxu0 0.0
        %403 = vmatpush2.msra.mxu0 0.0
        %404 = vmatprep.subr.mxu0 0.0
        %405 = vmatpush2.msra.mxu0 0.0
        %406 = vmatprep.subr.mxu0 0.0
        %407 = vmatpush2.msra.mxu0 0.0
        %408 = vmatprep.subr.mxu0 0.0
        %409 = vmatpush2.msra.mxu0 0.0
        %410 = vmatprep.mubr.f32.mxu0 0.0
        %v411 = vand.u32 %v298, 4294901760
        %v412 = vsub.f32 %v298, %v411
        %v413 = vand.u32 %v412, 4294901760
        %v414 = vsub.f32 %v412, %v413
        %v415 = vand.u32 %v414, 4294901760
        %416 = vmatmul.mubr.f32.gmra.mxu0 %v415
        %v417 = vpop.f32.mrf.mxu0
        %v418 = vadd.f32 0.0, %v417
        %v419 = vpop.f32.mrf.mxu0
        %420 = vmatprep.mubr.f32.mxu0 0.0
        %v421 = vand.u32 %v301, 4294901760
        %v422 = vsub.f32 %v301, %v421
        %v423 = vand.u32 %v422, 4294901760
        %v424 = vsub.f32 %v422, %v423
        %v425 = vand.u32 %v424, 4294901760
        %426 = vmatmul.mubr.f32.gmra.mxu0 %v425
        %v427 = vpop.f32.mrf.mxu0
        %v428 = vadd.f32 0.0, %v427
        %v429 = vpop.f32.mrf.mxu0
        %430 = vmatprep.mubr.f32.mxu0 0.0
        %v431 = vand.u32 %v304, 4294901760
        %v432 = vsub.f32 %v304, %v431
        %v433 = vand.u32 %v432, 4294901760
        %v434 = vsub.f32 %v432, %v433
        %v435 = vand.u32 %v434, 4294901760
        %436 = vmatmul.mubr.f32.gmra.mxu0 %v435
        %v437 = vpop.f32.mrf.mxu0
        %v438 = vadd.f32 0.0, %v437
        %v439 = vpop.f32.mrf.mxu0
        %440 = vmatprep.mubr.f32.mxu0 0.0
        %v441 = vand.u32 %v307, 4294901760
        %v442 = vsub.f32 %v307, %v441
        %v443 = vand.u32 %v442, 4294901760
        %v444 = vsub.f32 %v442, %v443
        %v445 = vand.u32 %v444, 4294901760
        %446 = vmatmul.mubr.f32.gmra.mxu0 %v445
        %v447 = vpop.f32.mrf.mxu0
        %v448 = vadd.f32 0.0, %v447
        %v449 = vpop.f32.mrf.mxu0
        %450 = vmatprep.mubr.f32.mxu0 0.0
        %v451 = vand.u32 %v310, 4294901760
        %v452 = vsub.f32 %v310, %v451
        %v453 = vand.u32 %v452, 4294901760
        %v454 = vsub.f32 %v452, %v453
        %v455 = vand.u32 %v454, 4294901760
        %456 = vmatmul.mubr.f32.gmra.mxu0 %v455
        %v457 = vpop.f32.mrf.mxu0
        %v458 = vadd.f32 0.0, %v457
        %v459 = vpop.f32.mrf.mxu0
        %460 = vmatprep.mubr.f32.mxu0 0.0
        %v461 = vand.u32 %v313, 4294901760
        %v462 = vsub.f32 %v313, %v461
        %v463 = vand.u32 %v462, 4294901760
        %v464 = vsub.f32 %v462, %v463
        %v465 = vand.u32 %v464, 4294901760
        %466 = vmatmul.mubr.f32.gmra.mxu0 %v465
        %v467 = vpop.f32.mrf.mxu0
        %v468 = vadd.f32 0.0, %v467
        %v469 = vpop.f32.mrf.mxu0
        %470 = vmatprep.mubr.f32.mxu0 0.0
        %v471 = vand.u32 %v316, 4294901760
        %v472 = vsub.f32 %v316, %v471
        %v473 = vand.u32 %v472, 4294901760
        %v474 = vsub.f32 %v472, %v473
        %v475 = vand.u32 %v474, 4294901760
        %476 = vmatmul.mubr.f32.gmra.mxu0 %v475
        %v477 = vpop.f32.mrf.mxu0
        %v478 = vadd.f32 0.0, %v477
        %v479 = vpop.f32.mrf.mxu0
        %480 = vmatprep.mubr.f32.mxu0 0.0
        %v481 = vand.u32 %v319, 4294901760
        %v482 = vsub.f32 %v319, %v481
        %v483 = vand.u32 %v482, 4294901760
        %v484 = vsub.f32 %v482, %v483
        %v485 = vand.u32 %v484, 4294901760
        %486 = vmatmul.mubr.f32.gmra.mxu0 %v485
        %v487 = vpop.f32.mrf.mxu0
        %v488 = vadd.f32 0.0, %v487
        %v489 = vpop.f32.mrf.mxu0
        %490 = vmatprep.mubr.f32.mxu0 0.0
        %v491 = vand.u32 %v322, 4294901760
        %v492 = vsub.f32 %v322, %v491
        %v493 = vand.u32 %v492, 4294901760
        %v494 = vsub.f32 %v492, %v493
        %v495 = vand.u32 %v494, 4294901760
        %496 = vmatmul.mubr.f32.gmra.mxu0 %v495
        %v497 = vpop.f32.mrf.mxu0
        %v498 = vadd.f32 0.0, %v497
        %v499 = vpop.f32.mrf.mxu0
        %500 = vmatprep.mubr.f32.mxu0 0.0
        %v501 = vand.u32 %v325, 4294901760
        %v502 = vsub.f32 %v325, %v501
        %v503 = vand.u32 %v502, 4294901760
        %v504 = vsub.f32 %v502, %v503
        %v505 = vand.u32 %v504, 4294901760
        %506 = vmatmul.mubr.f32.gmra.mxu0 %v505
        %v507 = vpop.f32.mrf.mxu0
        %v508 = vadd.f32 0.0, %v507
        %v509 = vpop.f32.mrf.mxu0
        %510 = vmatprep.mubr.f32.mxu0 0.0
        %v511 = vand.u32 %v328, 4294901760
        %v512 = vsub.f32 %v328, %v511
        %v513 = vand.u32 %v512, 4294901760
        %v514 = vsub.f32 %v512, %v513
        %v515 = vand.u32 %v514, 4294901760
        %516 = vmatmul.mubr.f32.gmra.mxu0 %v515
        %v517 = vpop.f32.mrf.mxu0
        %v518 = vadd.f32 0.0, %v517
        %v519 = vpop.f32.mrf.mxu0
        %520 = vmatprep.mubr.f32.mxu0 0.0
        %v521 = vand.u32 %v331, 4294901760
        %v522 = vsub.f32 %v331, %v521
        %v523 = vand.u32 %v522, 4294901760
        %v524 = vsub.f32 %v522, %v523
        %v525 = vand.u32 %v524, 4294901760
        %526 = vmatmul.mubr.f32.gmra.mxu0 %v525
        %v527 = vpop.f32.mrf.mxu0
        %v528 = vadd.f32 0.0, %v527
        %v529 = vpop.f32.mrf.mxu0
        %530 = vmatprep.mubr.f32.mxu0 0.0
        %v531 = vand.u32 %v334, 4294901760
        %v532 = vsub.f32 %v334, %v531
        %v533 = vand.u32 %v532, 4294901760
        %v534 = vsub.f32 %v532, %v533
        %v535 = vand.u32 %v534, 4294901760
        %536 = vmatmul.mubr.f32.gmra.mxu0 %v535
        %v537 = vpop.f32.mrf.mxu0
        %v538 = vadd.f32 0.0, %v537
        %v539 = vpop.f32.mrf.mxu0
        %540 = vmatprep.mubr.f32.mxu0 0.0
        %v541 = vand.u32 %v337, 4294901760
        %v542 = vsub.f32 %v337, %v541
        %v543 = vand.u32 %v542, 4294901760
        %v544 = vsub.f32 %v542, %v543
        %v545 = vand.u32 %v544, 4294901760
        %546 = vmatmul.mubr.f32.gmra.mxu0 %v545
        %v547 = vpop.f32.mrf.mxu0
        %v548 = vadd.f32 0.0, %v547
        %v549 = vpop.f32.mrf.mxu0
        %550 = vmatprep.mubr.f32.mxu0 0.0
        %v551 = vand.u32 %v340, 4294901760
        %v552 = vsub.f32 %v340, %v551
        %v553 = vand.u32 %v552, 4294901760
        %v554 = vsub.f32 %v552, %v553
        %v555 = vand.u32 %v554, 4294901760
        %556 = vmatmul.mubr.f32.gmra.mxu0 %v555
        %v557 = vpop.f32.mrf.mxu0
        %v558 = vadd.f32 0.0, %v557
        %v559 = vpop.f32.mrf.mxu0
        %560 = vmatprep.mubr.f32.mxu0 0.0
        %v561 = vand.u32 %v343, 4294901760
        %v562 = vsub.f32 %v343, %v561
        %v563 = vand.u32 %v562, 4294901760
        %v564 = vsub.f32 %v562, %v563
        %v565 = vand.u32 %v564, 4294901760
        %566 = vmatmul.mubr.f32.gmra.mxu0 %v565
        %v567 = vpop.f32.mrf.mxu0
        %v568 = vadd.f32 0.0, %v567
        %v569 = vpop.f32.mrf.mxu0
        %570 = vdwg.mxu0
        %571 = vmatprep.subr.mxu0 0.0
        %572 = vmatpush1.msra.mxu0 0.0
        %573 = vmatprep.subr.mxu0 0.0
        %574 = vmatpush1.msra.mxu0 0.0
        %575 = vmatprep.subr.mxu0 0.0
        %576 = vmatpush1.msra.mxu0 0.0
        %577 = vmatprep.subr.mxu0 0.0
        %578 = vmatpush1.msra.mxu0 0.0
        %579 = vmatprep.subr.mxu0 0.0
        %580 = vmatpush1.msra.mxu0 0.0
        %581 = vmatprep.subr.mxu0 0.0
        %582 = vmatpush1.msra.mxu0 0.0
        %583 = vmatprep.subr.mxu0 0.0
        %584 = vmatpush1.msra.mxu0 0.0
        %585 = vmatprep.subr.mxu0 0.0
        %586 = vmatpush1.msra.mxu0 0.0
        %587 = vmatprep.subr.mxu0 0.0
        %588 = vmatpush1.msra.mxu0 0.0
        %589 = vmatprep.subr.mxu0 0.0
        %590 = vmatpush1.msra.mxu0 0.0
        %591 = vmatprep.subr.mxu0 0.0
        %592 = vmatpush1.msra.mxu0 0.0
        %593 = vmatprep.subr.mxu0 0.0
        %594 = vmatpush1.msra.mxu0 0.0
        %595 = vmatprep.subr.mxu0 0.0
        %596 = vmatpush1.msra.mxu0 0.0
        %597 = vmatprep.subr.mxu0 0.0
        %598 = vmatpush1.msra.mxu0 0.0
        %599 = vmatprep.subr.mxu0 0.0
        %600 = vmatpush1.msra.mxu0 0.0
        %601 = vmatprep.subr.mxu0 0.0
        %v602 = vand.u32 %v292, 4294901760
        %v603 = vsub.f32 %v292, %v602
        %v604 = vand.u32 %v603, 4294901760
        %v605 = vsub.f32 %v603, %v604
        %v606 = vand.u32 %v605, 4294901760
        %607 = vmatpush1.msra.mxu0 %v606
        %608 = vmatprep.subr.mxu0 0.0
        %609 = vmatpush2.msra.mxu0 0.0
        %610 = vmatprep.subr.mxu0 0.0
        %611 = vmatpush2.msra.mxu0 0.0
        %612 = vmatprep.subr.mxu0 0.0
        %613 = vmatpush2.msra.mxu0 0.0
        %614 = vmatprep.subr.mxu0 0.0
        %615 = vmatpush2.msra.mxu0 0.0
        %616 = vmatprep.subr.mxu0 0.0
        %617 = vmatpush2.msra.mxu0 0.0
        %618 = vmatprep.subr.mxu0 0.0
        %619 = vmatpush2.msra.mxu0 0.0
        %620 = vmatprep.subr.mxu0 0.0
        %621 = vmatpush2.msra.mxu0 0.0
        %622 = vmatprep.subr.mxu0 0.0
        %623 = vmatpush2.msra.mxu0 0.0
        %624 = vmatprep.subr.mxu0 0.0
        %625 = vmatpush2.msra.mxu0 0.0
        %626 = vmatprep.subr.mxu0 0.0
        %627 = vmatpush2.msra.mxu0 0.0
        %628 = vmatprep.subr.mxu0 0.0
        %629 = vmatpush2.msra.mxu0 0.0
        %630 = vmatprep.subr.mxu0 0.0
        %631 = vmatpush2.msra.mxu0 0.0
        %632 = vmatprep.subr.mxu0 0.0
        %633 = vmatpush2.msra.mxu0 0.0
        %634 = vmatprep.subr.mxu0 0.0
        %635 = vmatpush2.msra.mxu0 0.0
        %636 = vmatprep.subr.mxu0 0.0
        %637 = vmatpush2.msra.mxu0 0.0
        %638 = vmatprep.subr.mxu0 0.0
        %639 = vmatpush2.msra.mxu0 0.0
        %640 = vmatprep.mubr.f32.mxu0 0.0
        %v641 = vand.u32 %v298, 4294901760
        %642 = vmatmul.mubr.f32.gmra.mxu0 %v641
        %v643 = vpop.f32.mrf.mxu0
        %v644 = vadd.f32 %v418, %v643
        %v645 = vpop.f32.mrf.mxu0
        %646 = vmatprep.mubr.f32.mxu0 0.0
        %v647 = vand.u32 %v301, 4294901760
        %648 = vmatmul.mubr.f32.gmra.mxu0 %v647
        %v649 = vpop.f32.mrf.mxu0
        %v650 = vadd.f32 %v428, %v649
        %v651 = vpop.f32.mrf.mxu0
        %652 = vmatprep.mubr.f32.mxu0 0.0
        %v653 = vand.u32 %v304, 4294901760
        %654 = vmatmul.mubr.f32.gmra.mxu0 %v653
        %v655 = vpop.f32.mrf.mxu0
        %v656 = vadd.f32 %v438, %v655
        %v657 = vpop.f32.mrf.mxu0
        %658 = vmatprep.mubr.f32.mxu0 0.0
        %v659 = vand.u32 %v307, 4294901760
        %660 = vmatmul.mubr.f32.gmra.mxu0 %v659
        %v661 = vpop.f32.mrf.mxu0
        %v662 = vadd.f32 %v448, %v661
        %v663 = vpop.f32.mrf.mxu0
        %664 = vmatprep.mubr.f32.mxu0 0.0
        %v665 = vand.u32 %v310, 4294901760
        %666 = vmatmul.mubr.f32.gmra.mxu0 %v665
        %v667 = vpop.f32.mrf.mxu0
        %v668 = vadd.f32 %v458, %v667
        %v669 = vpop.f32.mrf.mxu0
        %670 = vmatprep.mubr.f32.mxu0 0.0
        %v671 = vand.u32 %v313, 4294901760
        %672 = vmatmul.mubr.f32.gmra.mxu0 %v671
        %v673 = vpop.f32.mrf.mxu0
        %v674 = vadd.f32 %v468, %v673
        %v675 = vpop.f32.mrf.mxu0
        %676 = vmatprep.mubr.f32.mxu0 0.0
        %v677 = vand.u32 %v316, 4294901760
        %678 = vmatmul.mubr.f32.gmra.mxu0 %v677
        %v679 = vpop.f32.mrf.mxu0
        %v680 = vadd.f32 %v478, %v679
        %v681 = vpop.f32.mrf.mxu0
        %682 = vmatprep.mubr.f32.mxu0 0.0
        %v683 = vand.u32 %v319, 4294901760
        %684 = vmatmul.mubr.f32.gmra.mxu0 %v683
        %v685 = vpop.f32.mrf.mxu0
        %v686 = vadd.f32 %v488, %v685
        %v687 = vpop.f32.mrf.mxu0
        %688 = vmatprep.mubr.f32.mxu0 0.0
        %v689 = vand.u32 %v322, 4294901760
        %690 = vmatmul.mubr.f32.gmra.mxu0 %v689
        %v691 = vpop.f32.mrf.mxu0
        %v692 = vadd.f32 %v498, %v691
        %v693 = vpop.f32.mrf.mxu0
        %694 = vmatprep.mubr.f32.mxu0 0.0
        %v695 = vand.u32 %v325, 4294901760
        %696 = vmatmul.mubr.f32.gmra.mxu0 %v695
        %v697 = vpop.f32.mrf.mxu0
        %v698 = vadd.f32 %v508, %v697
        %v699 = vpop.f32.mrf.mxu0
        %700 = vmatprep.mubr.f32.mxu0 0.0
        %v701 = vand.u32 %v328, 4294901760
        %702 = vmatmul.mubr.f32.gmra.mxu0 %v701
        %v703 = vpop.f32.mrf.mxu0
        %v704 = vadd.f32 %v518, %v703
        %v705 = vpop.f32.mrf.mxu0
        %706 = vmatprep.mubr.f32.mxu0 0.0
        %v707 = vand.u32 %v331, 4294901760
        %708 = vmatmul.mubr.f32.gmra.mxu0 %v707
        %v709 = vpop.f32.mrf.mxu0
        %v710 = vadd.f32 %v528, %v709
        %v711 = vpop.f32.mrf.mxu0
        %712 = vmatprep.mubr.f32.mxu0 0.0
        %v713 = vand.u32 %v334, 4294901760
        %714 = vmatmul.mubr.f32.gmra.mxu0 %v713
        %v715 = vpop.f32.mrf.mxu0
        %v716 = vadd.f32 %v538, %v715
        %v717 = vpop.f32.mrf.mxu0
        %718 = vmatprep.mubr.f32.mxu0 0.0
        %v719 = vand.u32 %v337, 4294901760
        %720 = vmatmul.mubr.f32.gmra.mxu0 %v719
        %v721 = vpop.f32.mrf.mxu0
        %v722 = vadd.f32 %v548, %v721
        %v723 = vpop.f32.mrf.mxu0
        %724 = vmatprep.mubr.f32.mxu0 0.0
        %v725 = vand.u32 %v340, 4294901760
        %726 = vmatmul.mubr.f32.gmra.mxu0 %v725
        %v727 = vpop.f32.mrf.mxu0
        %v728 = vadd.f32 %v558, %v727
        %v729 = vpop.f32.mrf.mxu0
        %730 = vmatprep.mubr.f32.mxu0 0.0
        %v731 = vand.u32 %v343, 4294901760
        %732 = vmatmul.mubr.f32.gmra.mxu0 %v731
        %v733 = vpop.f32.mrf.mxu0
        %v734 = vadd.f32 %v568, %v733
        %v735 = vpop.f32.mrf.mxu0
        %736 = vdwg.mxu0
        %737 = vmatprep.subr.mxu0 0.0
        %738 = vmatpush1.msra.mxu0 0.0
        %739 = vmatprep.subr.mxu0 0.0
        %740 = vmatpush1.msra.mxu0 0.0
        %741 = vmatprep.subr.mxu0 0.0
        %742 = vmatpush1.msra.mxu0 0.0
        %743 = vmatprep.subr.mxu0 0.0
        %744 = vmatpush1.msra.mxu0 0.0
        %745 = vmatprep.subr.mxu0 0.0
        %746 = vmatpush1.msra.mxu0 0.0
        %747 = vmatprep.subr.mxu0 0.0
        %748 = vmatpush1.msra.mxu0 0.0
        %749 = vmatprep.subr.mxu0 0.0
        %750 = vmatpush1.msra.mxu0 0.0
        %751 = vmatprep.subr.mxu0 0.0
        %752 = vmatpush1.msra.mxu0 0.0
        %753 = vmatprep.subr.mxu0 0.0
        %754 = vmatpush1.msra.mxu0 0.0
        %755 = vmatprep.subr.mxu0 0.0
        %756 = vmatpush1.msra.mxu0 0.0
        %757 = vmatprep.subr.mxu0 0.0
        %758 = vmatpush1.msra.mxu0 0.0
        %759 = vmatprep.subr.mxu0 0.0
        %760 = vmatpush1.msra.mxu0 0.0
        %761 = vmatprep.subr.mxu0 0.0
        %762 = vmatpush1.msra.mxu0 0.0
        %763 = vmatprep.subr.mxu0 0.0
        %764 = vmatpush1.msra.mxu0 0.0
        %765 = vmatprep.subr.mxu0 0.0
        %766 = vmatpush1.msra.mxu0 0.0
        %767 = vmatprep.subr.mxu0 0.0
        %v768 = vand.u32 %v292, 4294901760
        %v769 = vsub.f32 %v292, %v768
        %770 = vmatpush1.msra.mxu0 %v769
        %771 = vmatprep.subr.mxu0 0.0
        %772 = vmatpush2.msra.mxu0 0.0
        %773 = vmatprep.subr.mxu0 0.0
        %774 = vmatpush2.msra.mxu0 0.0
        %775 = vmatprep.subr.mxu0 0.0
        %776 = vmatpush2.msra.mxu0 0.0
        %777 = vmatprep.subr.mxu0 0.0
        %778 = vmatpush2.msra.mxu0 0.0
        %779 = vmatprep.subr.mxu0 0.0
        %780 = vmatpush2.msra.mxu0 0.0
        %781 = vmatprep.subr.mxu0 0.0
        %782 = vmatpush2.msra.mxu0 0.0
        %783 = vmatprep.subr.mxu0 0.0
        %784 = vmatpush2.msra.mxu0 0.0
        %785 = vmatprep.subr.mxu0 0.0
        %786 = vmatpush2.msra.mxu0 0.0
        %787 = vmatprep.subr.mxu0 0.0
        %788 = vmatpush2.msra.mxu0 0.0
        %789 = vmatprep.subr.mxu0 0.0
        %790 = vmatpush2.msra.mxu0 0.0
        %791 = vmatprep.subr.mxu0 0.0
        %792 = vmatpush2.msra.mxu0 0.0
        %793 = vmatprep.subr.mxu0 0.0
        %794 = vmatpush2.msra.mxu0 0.0
        %795 = vmatprep.subr.mxu0 0.0
        %796 = vmatpush2.msra.mxu0 0.0
        %797 = vmatprep.subr.mxu0 0.0
        %798 = vmatpush2.msra.mxu0 0.0
        %799 = vmatprep.subr.mxu0 0.0
        %800 = vmatpush2.msra.mxu0 0.0
        %801 = vmatprep.subr.mxu0 0.0
        %802 = vmatpush2.msra.mxu0 0.0
        %803 = vmatprep.mubr.f32.mxu0 0.0
        %v804 = vand.u32 %v298, 4294901760
        %v805 = vsub.f32 %v298, %v804
        %806 = vmatmul.mubr.f32.gmra.mxu0 %v805
        %v807 = vpop.f32.mrf.mxu0
        %v808 = vadd.f32 %v644, %v807
        %v809 = vpop.f32.mrf.mxu0
        %810 = vmatprep.mubr.f32.mxu0 0.0
        %v811 = vand.u32 %v301, 4294901760
        %v812 = vsub.f32 %v301, %v811
        %813 = vmatmul.mubr.f32.gmra.mxu0 %v812
        %v814 = vpop.f32.mrf.mxu0
        %v815 = vadd.f32 %v650, %v814
        %v816 = vpop.f32.mrf.mxu0
        %817 = vmatprep.mubr.f32.mxu0 0.0
        %v818 = vand.u32 %v304, 4294901760
        %v819 = vsub.f32 %v304, %v818
        %820 = vmatmul.mubr.f32.gmra.mxu0 %v819
        %v821 = vpop.f32.mrf.mxu0
        %v822 = vadd.f32 %v656, %v821
        %v823 = vpop.f32.mrf.mxu0
        %824 = vmatprep.mubr.f32.mxu0 0.0
        %v825 = vand.u32 %v307, 4294901760
        %v826 = vsub.f32 %v307, %v825
        %827 = vmatmul.mubr.f32.gmra.mxu0 %v826
        %v828 = vpop.f32.mrf.mxu0
        %v829 = vadd.f32 %v662, %v828
        %v830 = vpop.f32.mrf.mxu0
        %831 = vmatprep.mubr.f32.mxu0 0.0
        %v832 = vand.u32 %v310, 4294901760
        %v833 = vsub.f32 %v310, %v832
        %834 = vmatmul.mubr.f32.gmra.mxu0 %v833
        %v835 = vpop.f32.mrf.mxu0
        %v836 = vadd.f32 %v668, %v835
        %v837 = vpop.f32.mrf.mxu0
        %838 = vmatprep.mubr.f32.mxu0 0.0
        %v839 = vand.u32 %v313, 4294901760
        %v840 = vsub.f32 %v313, %v839
        %841 = vmatmul.mubr.f32.gmra.mxu0 %v840
        %v842 = vpop.f32.mrf.mxu0
        %v843 = vadd.f32 %v674, %v842
        %v844 = vpop.f32.mrf.mxu0
        %845 = vmatprep.mubr.f32.mxu0 0.0
        %v846 = vand.u32 %v316, 4294901760
        %v847 = vsub.f32 %v316, %v846
        %848 = vmatmul.mubr.f32.gmra.mxu0 %v847
        %v849 = vpop.f32.mrf.mxu0
        %v850 = vadd.f32 %v680, %v849
        %v851 = vpop.f32.mrf.mxu0
        %852 = vmatprep.mubr.f32.mxu0 0.0
        %v853 = vand.u32 %v319, 4294901760
        %v854 = vsub.f32 %v319, %v853
        %855 = vmatmul.mubr.f32.gmra.mxu0 %v854
        %v856 = vpop.f32.mrf.mxu0
        %v857 = vadd.f32 %v686, %v856
        %v858 = vpop.f32.mrf.mxu0
        %859 = vmatprep.mubr.f32.mxu0 0.0
        %v860 = vand.u32 %v322, 4294901760
        %v861 = vsub.f32 %v322, %v860
        %862 = vmatmul.mubr.f32.gmra.mxu0 %v861
        %v863 = vpop.f32.mrf.mxu0
        %v864 = vadd.f32 %v692, %v863
        %v865 = vpop.f32.mrf.mxu0
        %866 = vmatprep.mubr.f32.mxu0 0.0
        %v867 = vand.u32 %v325, 4294901760
        %v868 = vsub.f32 %v325, %v867
        %869 = vmatmul.mubr.f32.gmra.mxu0 %v868
        %v870 = vpop.f32.mrf.mxu0
        %v871 = vadd.f32 %v698, %v870
        %v872 = vpop.f32.mrf.mxu0
        %873 = vmatprep.mubr.f32.mxu0 0.0
        %v874 = vand.u32 %v328, 4294901760
        %v875 = vsub.f32 %v328, %v874
        %876 = vmatmul.mubr.f32.gmra.mxu0 %v875
        %v877 = vpop.f32.mrf.mxu0
        %v878 = vadd.f32 %v704, %v877
        %v879 = vpop.f32.mrf.mxu0
        %880 = vmatprep.mubr.f32.mxu0 0.0
        %v881 = vand.u32 %v331, 4294901760
        %v882 = vsub.f32 %v331, %v881
        %883 = vmatmul.mubr.f32.gmra.mxu0 %v882
        %v884 = vpop.f32.mrf.mxu0
        %v885 = vadd.f32 %v710, %v884
        %v886 = vpop.f32.mrf.mxu0
        %887 = vmatprep.mubr.f32.mxu0 0.0
        %v888 = vand.u32 %v334, 4294901760
        %v889 = vsub.f32 %v334, %v888
        %890 = vmatmul.mubr.f32.gmra.mxu0 %v889
        %v891 = vpop.f32.mrf.mxu0
        %v892 = vadd.f32 %v716, %v891
        %v893 = vpop.f32.mrf.mxu0
        %894 = vmatprep.mubr.f32.mxu0 0.0
        %v895 = vand.u32 %v337, 4294901760
        %v896 = vsub.f32 %v337, %v895
        %897 = vmatmul.mubr.f32.gmra.mxu0 %v896
        %v898 = vpop.f32.mrf.mxu0
        %v899 = vadd.f32 %v722, %v898
        %v900 = vpop.f32.mrf.mxu0
        %901 = vmatprep.mubr.f32.mxu0 0.0
        %v902 = vand.u32 %v340, 4294901760
        %v903 = vsub.f32 %v340, %v902
        %904 = vmatmul.mubr.f32.gmra.mxu0 %v903
        %v905 = vpop.f32.mrf.mxu0
        %v906 = vadd.f32 %v728, %v905
        %v907 = vpop.f32.mrf.mxu0
        %908 = vmatprep.mubr.f32.mxu0 0.0
        %v909 = vand.u32 %v343, 4294901760
        %v910 = vsub.f32 %v343, %v909
        %911 = vmatmul.mubr.f32.gmra.mxu0 %v910
        %v912 = vpop.f32.mrf.mxu0
        %v913 = vadd.f32 %v734, %v912
        %v914 = vpop.f32.mrf.mxu0
        %915 = vdwg.mxu0
        %916 = vmatprep.subr.mxu0 0.0
        %917 = vmatpush1.msra.mxu0 0.0
        %918 = vmatprep.subr.mxu0 0.0
        %919 = vmatpush1.msra.mxu0 0.0
        %920 = vmatprep.subr.mxu0 0.0
        %921 = vmatpush1.msra.mxu0 0.0
        %922 = vmatprep.subr.mxu0 0.0
        %923 = vmatpush1.msra.mxu0 0.0
        %924 = vmatprep.subr.mxu0 0.0
        %925 = vmatpush1.msra.mxu0 0.0
        %926 = vmatprep.subr.mxu0 0.0
        %927 = vmatpush1.msra.mxu0 0.0
        %928 = vmatprep.subr.mxu0 0.0
        %929 = vmatpush1.msra.mxu0 0.0
        %930 = vmatprep.subr.mxu0 0.0
        %931 = vmatpush1.msra.mxu0 0.0
        %932 = vmatprep.subr.mxu0 0.0
        %933 = vmatpush1.msra.mxu0 0.0
        %934 = vmatprep.subr.mxu0 0.0
        %935 = vmatpush1.msra.mxu0 0.0
        %936 = vmatprep.subr.mxu0 0.0
        %937 = vmatpush1.msra.mxu0 0.0
        %938 = vmatprep.subr.mxu0 0.0
        %939 = vmatpush1.msra.mxu0 0.0
        %940 = vmatprep.subr.mxu0 0.0
        %941 = vmatpush1.msra.mxu0 0.0
        %942 = vmatprep.subr.mxu0 0.0
        %943 = vmatpush1.msra.mxu0 0.0
        %944 = vmatprep.subr.mxu0 0.0
        %945 = vmatpush1.msra.mxu0 0.0
        %946 = vmatprep.subr.mxu0 0.0
        %v947 = vand.u32 %v292, 4294901760
        %948 = vmatpush1.msra.mxu0 %v947
        %949 = vmatprep.subr.mxu0 0.0
        %950 = vmatpush2.msra.mxu0 0.0
        %951 = vmatprep.subr.mxu0 0.0
        %952 = vmatpush2.msra.mxu0 0.0
        %953 = vmatprep.subr.mxu0 0.0
        %954 = vmatpush2.msra.mxu0 0.0
        %955 = vmatprep.subr.mxu0 0.0
        %956 = vmatpush2.msra.mxu0 0.0
        %957 = vmatprep.subr.mxu0 0.0
        %958 = vmatpush2.msra.mxu0 0.0
        %959 = vmatprep.subr.mxu0 0.0
        %960 = vmatpush2.msra.mxu0 0.0
        %961 = vmatprep.subr.mxu0 0.0
        %962 = vmatpush2.msra.mxu0 0.0
        %963 = vmatprep.subr.mxu0 0.0
        %964 = vmatpush2.msra.mxu0 0.0
        %965 = vmatprep.subr.mxu0 0.0
        %966 = vmatpush2.msra.mxu0 0.0
        %967 = vmatprep.subr.mxu0 0.0
        %968 = vmatpush2.msra.mxu0 0.0
        %969 = vmatprep.subr.mxu0 0.0
        %970 = vmatpush2.msra.mxu0 0.0
        %971 = vmatprep.subr.mxu0 0.0
        %972 = vmatpush2.msra.mxu0 0.0
        %973 = vmatprep.subr.mxu0 0.0
        %974 = vmatpush2.msra.mxu0 0.0
        %975 = vmatprep.subr.mxu0 0.0
        %976 = vmatpush2.msra.mxu0 0.0
        %977 = vmatprep.subr.mxu0 0.0
        %978 = vmatpush2.msra.mxu0 0.0
        %979 = vmatprep.subr.mxu0 0.0
        %980 = vmatpush2.msra.mxu0 0.0
        %981 = vmatprep.mubr.f32.mxu0 0.0
        %v982 = vand.u32 %v298, 4294901760
        %v983 = vsub.f32 %v298, %v982
        %v984 = vand.u32 %v983, 4294901760
        %985 = vmatmul.mubr.f32.gmra.mxu0 %v984
        %v986 = vpop.f32.mrf.mxu0
        %v987 = vadd.f32 %v808, %v986
        %v988 = vpop.f32.mrf.mxu0
        %989 = vmatprep.mubr.f32.mxu0 0.0
        %v990 = vand.u32 %v301, 4294901760
        %v991 = vsub.f32 %v301, %v990
        %v992 = vand.u32 %v991, 4294901760
        %993 = vmatmul.mubr.f32.gmra.mxu0 %v992
        %v994 = vpop.f32.mrf.mxu0
        %v995 = vadd.f32 %v815, %v994
        %v996 = vpop.f32.mrf.mxu0
        %997 = vmatprep.mubr.f32.mxu0 0.0
        %v998 = vand.u32 %v304, 4294901760
        %v999 = vsub.f32 %v304, %v998
        %v1000 = vand.u32 %v999, 4294901760
        %1001 = vmatmul.mubr.f32.gmra.mxu0 %v1000
        %v1002 = vpop.f32.mrf.mxu0
        %v1003 = vadd.f32 %v822, %v1002
        %v1004 = vpop.f32.mrf.mxu0
        %1005 = vmatprep.mubr.f32.mxu0 0.0
        %v1006 = vand.u32 %v307, 4294901760
        %v1007 = vsub.f32 %v307, %v1006
        %v1008 = vand.u32 %v1007, 4294901760
        %1009 = vmatmul.mubr.f32.gmra.mxu0 %v1008
        %v1010 = vpop.f32.mrf.mxu0
        %v1011 = vadd.f32 %v829, %v1010
        %v1012 = vpop.f32.mrf.mxu0
        %1013 = vmatprep.mubr.f32.mxu0 0.0
        %v1014 = vand.u32 %v310, 4294901760
        %v1015 = vsub.f32 %v310, %v1014
        %v1016 = vand.u32 %v1015, 4294901760
        %1017 = vmatmul.mubr.f32.gmra.mxu0 %v1016
        %v1018 = vpop.f32.mrf.mxu0
        %v1019 = vadd.f32 %v836, %v1018
        %v1020 = vpop.f32.mrf.mxu0
        %1021 = vmatprep.mubr.f32.mxu0 0.0
        %v1022 = vand.u32 %v313, 4294901760
        %v1023 = vsub.f32 %v313, %v1022
        %v1024 = vand.u32 %v1023, 4294901760
        %1025 = vmatmul.mubr.f32.gmra.mxu0 %v1024
        %v1026 = vpop.f32.mrf.mxu0
        %v1027 = vadd.f32 %v843, %v1026
        %v1028 = vpop.f32.mrf.mxu0
        %1029 = vmatprep.mubr.f32.mxu0 0.0
        %v1030 = vand.u32 %v316, 4294901760
        %v1031 = vsub.f32 %v316, %v1030
        %v1032 = vand.u32 %v1031, 4294901760
        %1033 = vmatmul.mubr.f32.gmra.mxu0 %v1032
        %v1034 = vpop.f32.mrf.mxu0
        %v1035 = vadd.f32 %v850, %v1034
        %v1036 = vpop.f32.mrf.mxu0
        %1037 = vmatprep.mubr.f32.mxu0 0.0
        %v1038 = vand.u32 %v319, 4294901760
        %v1039 = vsub.f32 %v319, %v1038
        %v1040 = vand.u32 %v1039, 4294901760
        %1041 = vmatmul.mubr.f32.gmra.mxu0 %v1040
        %v1042 = vpop.f32.mrf.mxu0
        %v1043 = vadd.f32 %v857, %v1042
        %v1044 = vpop.f32.mrf.mxu0
        %1045 = vmatprep.mubr.f32.mxu0 0.0
        %v1046 = vand.u32 %v322, 4294901760
        %v1047 = vsub.f32 %v322, %v1046
        %v1048 = vand.u32 %v1047, 4294901760
        %1049 = vmatmul.mubr.f32.gmra.mxu0 %v1048
        %v1050 = vpop.f32.mrf.mxu0
        %v1051 = vadd.f32 %v864, %v1050
        %v1052 = vpop.f32.mrf.mxu0
        %1053 = vmatprep.mubr.f32.mxu0 0.0
        %v1054 = vand.u32 %v325, 4294901760
        %v1055 = vsub.f32 %v325, %v1054
        %v1056 = vand.u32 %v1055, 4294901760
        %1057 = vmatmul.mubr.f32.gmra.mxu0 %v1056
        %v1058 = vpop.f32.mrf.mxu0
        %v1059 = vadd.f32 %v871, %v1058
        %v1060 = vpop.f32.mrf.mxu0
        %1061 = vmatprep.mubr.f32.mxu0 0.0
        %v1062 = vand.u32 %v328, 4294901760
        %v1063 = vsub.f32 %v328, %v1062
        %v1064 = vand.u32 %v1063, 4294901760
        %1065 = vmatmul.mubr.f32.gmra.mxu0 %v1064
        %v1066 = vpop.f32.mrf.mxu0
        %v1067 = vadd.f32 %v878, %v1066
        %v1068 = vpop.f32.mrf.mxu0
        %1069 = vmatprep.mubr.f32.mxu0 0.0
        %v1070 = vand.u32 %v331, 4294901760
        %v1071 = vsub.f32 %v331, %v1070
        %v1072 = vand.u32 %v1071, 4294901760
        %1073 = vmatmul.mubr.f32.gmra.mxu0 %v1072
        %v1074 = vpop.f32.mrf.mxu0
        %v1075 = vadd.f32 %v885, %v1074
        %v1076 = vpop.f32.mrf.mxu0
        %1077 = vmatprep.mubr.f32.mxu0 0.0
        %v1078 = vand.u32 %v334, 4294901760
        %v1079 = vsub.f32 %v334, %v1078
        %v1080 = vand.u32 %v1079, 4294901760
        %1081 = vmatmul.mubr.f32.gmra.mxu0 %v1080
        %v1082 = vpop.f32.mrf.mxu0
        %v1083 = vadd.f32 %v892, %v1082
        %v1084 = vpop.f32.mrf.mxu0
        %1085 = vmatprep.mubr.f32.mxu0 0.0
        %v1086 = vand.u32 %v337, 4294901760
        %v1087 = vsub.f32 %v337, %v1086
        %v1088 = vand.u32 %v1087, 4294901760
        %1089 = vmatmul.mubr.f32.gmra.mxu0 %v1088
        %v1090 = vpop.f32.mrf.mxu0
        %v1091 = vadd.f32 %v899, %v1090
        %v1092 = vpop.f32.mrf.mxu0
        %1093 = vmatprep.mubr.f32.mxu0 0.0
        %v1094 = vand.u32 %v340, 4294901760
        %v1095 = vsub.f32 %v340, %v1094
        %v1096 = vand.u32 %v1095, 4294901760
        %1097 = vmatmul.mubr.f32.gmra.mxu0 %v1096
        %v1098 = vpop.f32.mrf.mxu0
        %v1099 = vadd.f32 %v906, %v1098
        %v1100 = vpop.f32.mrf.mxu0
        %1101 = vmatprep.mubr.f32.mxu0 0.0
        %v1102 = vand.u32 %v343, 4294901760
        %v1103 = vsub.f32 %v343, %v1102
        %v1104 = vand.u32 %v1103, 4294901760
        %1105 = vmatmul.mubr.f32.gmra.mxu0 %v1104
        %v1106 = vpop.f32.mrf.mxu0
        %v1107 = vadd.f32 %v913, %v1106
        %v1108 = vpop.f32.mrf.mxu0
        %1109 = vdwg.mxu0
        %1110 = vmatprep.subr.mxu0 0.0
        %1111 = vmatpush1.msra.mxu0 0.0
        %1112 = vmatprep.subr.mxu0 0.0
        %1113 = vmatpush1.msra.mxu0 0.0
        %1114 = vmatprep.subr.mxu0 0.0
        %1115 = vmatpush1.msra.mxu0 0.0
        %1116 = vmatprep.subr.mxu0 0.0
        %1117 = vmatpush1.msra.mxu0 0.0
        %1118 = vmatprep.subr.mxu0 0.0
        %1119 = vmatpush1.msra.mxu0 0.0
        %1120 = vmatprep.subr.mxu0 0.0
        %1121 = vmatpush1.msra.mxu0 0.0
        %1122 = vmatprep.subr.mxu0 0.0
        %1123 = vmatpush1.msra.mxu0 0.0
        %1124 = vmatprep.subr.mxu0 0.0
        %1125 = vmatpush1.msra.mxu0 0.0
        %1126 = vmatprep.subr.mxu0 0.0
        %1127 = vmatpush1.msra.mxu0 0.0
        %1128 = vmatprep.subr.mxu0 0.0
        %1129 = vmatpush1.msra.mxu0 0.0
        %1130 = vmatprep.subr.mxu0 0.0
        %1131 = vmatpush1.msra.mxu0 0.0
        %1132 = vmatprep.subr.mxu0 0.0
        %1133 = vmatpush1.msra.mxu0 0.0
        %1134 = vmatprep.subr.mxu0 0.0
        %1135 = vmatpush1.msra.mxu0 0.0
        %1136 = vmatprep.subr.mxu0 0.0
        %1137 = vmatpush1.msra.mxu0 0.0
        %1138 = vmatprep.subr.mxu0 0.0
        %1139 = vmatpush1.msra.mxu0 0.0
        %1140 = vmatprep.subr.mxu0 0.0
        %v1141 = vand.u32 %v292, 4294901760
        %v1142 = vsub.f32 %v292, %v1141
        %v1143 = vand.u32 %v1142, 4294901760
        %1144 = vmatpush1.msra.mxu0 %v1143
        %1145 = vmatprep.subr.mxu0 0.0
        %1146 = vmatpush2.msra.mxu0 0.0
        %1147 = vmatprep.subr.mxu0 0.0
        %1148 = vmatpush2.msra.mxu0 0.0
        %1149 = vmatprep.subr.mxu0 0.0
        %1150 = vmatpush2.msra.mxu0 0.0
        %1151 = vmatprep.subr.mxu0 0.0
        %1152 = vmatpush2.msra.mxu0 0.0
        %1153 = vmatprep.subr.mxu0 0.0
        %1154 = vmatpush2.msra.mxu0 0.0
        %1155 = vmatprep.subr.mxu0 0.0
        %1156 = vmatpush2.msra.mxu0 0.0
        %1157 = vmatprep.subr.mxu0 0.0
        %1158 = vmatpush2.msra.mxu0 0.0
        %1159 = vmatprep.subr.mxu0 0.0
        %1160 = vmatpush2.msra.mxu0 0.0
        %1161 = vmatprep.subr.mxu0 0.0
        %1162 = vmatpush2.msra.mxu0 0.0
        %1163 = vmatprep.subr.mxu0 0.0
        %1164 = vmatpush2.msra.mxu0 0.0
        %1165 = vmatprep.subr.mxu0 0.0
        %1166 = vmatpush2.msra.mxu0 0.0
        %1167 = vmatprep.subr.mxu0 0.0
        %1168 = vmatpush2.msra.mxu0 0.0
        %1169 = vmatprep.subr.mxu0 0.0
        %1170 = vmatpush2.msra.mxu0 0.0
        %1171 = vmatprep.subr.mxu0 0.0
        %1172 = vmatpush2.msra.mxu0 0.0
        %1173 = vmatprep.subr.mxu0 0.0
        %1174 = vmatpush2.msra.mxu0 0.0
        %1175 = vmatprep.subr.mxu0 0.0
        %1176 = vmatpush2.msra.mxu0 0.0
        %1177 = vmatprep.mubr.f32.mxu0 0.0
        %v1178 = vand.u32 %v298, 4294901760
        %1179 = vmatmul.mubr.f32.gmra.mxu0 %v1178
        %v1180 = vpop.f32.mrf.mxu0
        %v1181 = vadd.f32 %v987, %v1180
        %v1182 = vpop.f32.mrf.mxu0
        %1183 = vmatprep.mubr.f32.mxu0 0.0
        %v1184 = vand.u32 %v301, 4294901760
        %1185 = vmatmul.mubr.f32.gmra.mxu0 %v1184
        %v1186 = vpop.f32.mrf.mxu0
        %v1187 = vadd.f32 %v995, %v1186
        %v1188 = vpop.f32.mrf.mxu0
        %1189 = vmatprep.mubr.f32.mxu0 0.0
        %v1190 = vand.u32 %v304, 4294901760
        %1191 = vmatmul.mubr.f32.gmra.mxu0 %v1190
        %v1192 = vpop.f32.mrf.mxu0
        %v1193 = vadd.f32 %v1003, %v1192
        %v1194 = vpop.f32.mrf.mxu0
        %1195 = vmatprep.mubr.f32.mxu0 0.0
        %v1196 = vand.u32 %v307, 4294901760
        %1197 = vmatmul.mubr.f32.gmra.mxu0 %v1196
        %v1198 = vpop.f32.mrf.mxu0
        %v1199 = vadd.f32 %v1011, %v1198
        %v1200 = vpop.f32.mrf.mxu0
        %1201 = vmatprep.mubr.f32.mxu0 0.0
        %v1202 = vand.u32 %v310, 4294901760
        %1203 = vmatmul.mubr.f32.gmra.mxu0 %v1202
        %v1204 = vpop.f32.mrf.mxu0
        %v1205 = vadd.f32 %v1019, %v1204
        %v1206 = vpop.f32.mrf.mxu0
        %1207 = vmatprep.mubr.f32.mxu0 0.0
        %v1208 = vand.u32 %v313, 4294901760
        %1209 = vmatmul.mubr.f32.gmra.mxu0 %v1208
        %v1210 = vpop.f32.mrf.mxu0
        %v1211 = vadd.f32 %v1027, %v1210
        %v1212 = vpop.f32.mrf.mxu0
        %1213 = vmatprep.mubr.f32.mxu0 0.0
        %v1214 = vand.u32 %v316, 4294901760
        %1215 = vmatmul.mubr.f32.gmra.mxu0 %v1214
        %v1216 = vpop.f32.mrf.mxu0
        %v1217 = vadd.f32 %v1035, %v1216
        %v1218 = vpop.f32.mrf.mxu0
        %1219 = vmatprep.mubr.f32.mxu0 0.0
        %v1220 = vand.u32 %v319, 4294901760
        %1221 = vmatmul.mubr.f32.gmra.mxu0 %v1220
        %v1222 = vpop.f32.mrf.mxu0
        %v1223 = vadd.f32 %v1043, %v1222
        %v1224 = vpop.f32.mrf.mxu0
        %1225 = vmatprep.mubr.f32.mxu0 0.0
        %v1226 = vand.u32 %v322, 4294901760
        %1227 = vmatmul.mubr.f32.gmra.mxu0 %v1226
        %v1228 = vpop.f32.mrf.mxu0
        %v1229 = vadd.f32 %v1051, %v1228
        %v1230 = vpop.f32.mrf.mxu0
        %1231 = vmatprep.mubr.f32.mxu0 0.0
        %v1232 = vand.u32 %v325, 4294901760
        %1233 = vmatmul.mubr.f32.gmra.mxu0 %v1232
        %v1234 = vpop.f32.mrf.mxu0
        %v1235 = vadd.f32 %v1059, %v1234
        %v1236 = vpop.f32.mrf.mxu0
        %1237 = vmatprep.mubr.f32.mxu0 0.0
        %v1238 = vand.u32 %v328, 4294901760
        %1239 = vmatmul.mubr.f32.gmra.mxu0 %v1238
        %v1240 = vpop.f32.mrf.mxu0
        %v1241 = vadd.f32 %v1067, %v1240
        %v1242 = vpop.f32.mrf.mxu0
        %1243 = vmatprep.mubr.f32.mxu0 0.0
        %v1244 = vand.u32 %v331, 4294901760
        %1245 = vmatmul.mubr.f32.gmra.mxu0 %v1244
        %v1246 = vpop.f32.mrf.mxu0
        %v1247 = vadd.f32 %v1075, %v1246
        %v1248 = vpop.f32.mrf.mxu0
        %1249 = vmatprep.mubr.f32.mxu0 0.0
        %v1250 = vand.u32 %v334, 4294901760
        %1251 = vmatmul.mubr.f32.gmra.mxu0 %v1250
        %v1252 = vpop.f32.mrf.mxu0
        %v1253 = vadd.f32 %v1083, %v1252
        %v1254 = vpop.f32.mrf.mxu0
        %1255 = vmatprep.mubr.f32.mxu0 0.0
        %v1256 = vand.u32 %v337, 4294901760
        %1257 = vmatmul.mubr.f32.gmra.mxu0 %v1256
        %v1258 = vpop.f32.mrf.mxu0
        %v1259 = vadd.f32 %v1091, %v1258
        %v1260 = vpop.f32.mrf.mxu0
        %1261 = vmatprep.mubr.f32.mxu0 0.0
        %v1262 = vand.u32 %v340, 4294901760
        %1263 = vmatmul.mubr.f32.gmra.mxu0 %v1262
        %v1264 = vpop.f32.mrf.mxu0
        %v1265 = vadd.f32 %v1099, %v1264
        %v1266 = vpop.f32.mrf.mxu0
        %1267 = vmatprep.mubr.f32.mxu0 0.0
        %v1268 = vand.u32 %v343, 4294901760
        %1269 = vmatmul.mubr.f32.gmra.mxu0 %v1268
        %v1270 = vpop.f32.mrf.mxu0
        %v1271 = vadd.f32 %v1107, %v1270
        %v1272 = vpop.f32.mrf.mxu0
        %1273 = vdwg.mxu0
        %1274 = vmatprep.subr.mxu0 0.0
        %1275 = vmatpush1.msra.mxu0 0.0
        %1276 = vmatprep.subr.mxu0 0.0
        %1277 = vmatpush1.msra.mxu0 0.0
        %1278 = vmatprep.subr.mxu0 0.0
        %1279 = vmatpush1.msra.mxu0 0.0
        %1280 = vmatprep.subr.mxu0 0.0
        %1281 = vmatpush1.msra.mxu0 0.0
        %1282 = vmatprep.subr.mxu0 0.0
        %1283 = vmatpush1.msra.mxu0 0.0
        %1284 = vmatprep.subr.mxu0 0.0
        %1285 = vmatpush1.msra.mxu0 0.0
        %1286 = vmatprep.subr.mxu0 0.0
        %1287 = vmatpush1.msra.mxu0 0.0
        %1288 = vmatprep.subr.mxu0 0.0
        %1289 = vmatpush1.msra.mxu0 0.0
        %1290 = vmatprep.subr.mxu0 0.0
        %1291 = vmatpush1.msra.mxu0 0.0
        %1292 = vmatprep.subr.mxu0 0.0
        %1293 = vmatpush1.msra.mxu0 0.0
        %1294 = vmatprep.subr.mxu0 0.0
        %1295 = vmatpush1.msra.mxu0 0.0
        %1296 = vmatprep.subr.mxu0 0.0
        %1297 = vmatpush1.msra.mxu0 0.0
        %1298 = vmatprep.subr.mxu0 0.0
        %1299 = vmatpush1.msra.mxu0 0.0
        %1300 = vmatprep.subr.mxu0 0.0
        %1301 = vmatpush1.msra.mxu0 0.0
        %1302 = vmatprep.subr.mxu0 0.0
        %1303 = vmatpush1.msra.mxu0 0.0
        %1304 = vmatprep.subr.mxu0 0.0
        %v1305 = vand.u32 %v292, 4294901760
        %1306 = vmatpush1.msra.mxu0 %v1305
        %1307 = vmatprep.subr.mxu0 0.0
        %1308 = vmatpush2.msra.mxu0 0.0
        %1309 = vmatprep.subr.mxu0 0.0
        %1310 = vmatpush2.msra.mxu0 0.0
        %1311 = vmatprep.subr.mxu0 0.0
        %1312 = vmatpush2.msra.mxu0 0.0
        %1313 = vmatprep.subr.mxu0 0.0
        %1314 = vmatpush2.msra.mxu0 0.0
        %1315 = vmatprep.subr.mxu0 0.0
        %1316 = vmatpush2.msra.mxu0 0.0
        %1317 = vmatprep.subr.mxu0 0.0
        %1318 = vmatpush2.msra.mxu0 0.0
        %1319 = vmatprep.subr.mxu0 0.0
        %1320 = vmatpush2.msra.mxu0 0.0
        %1321 = vmatprep.subr.mxu0 0.0
        %1322 = vmatpush2.msra.mxu0 0.0
        %1323 = vmatprep.subr.mxu0 0.0
        %1324 = vmatpush2.msra.mxu0 0.0
        %1325 = vmatprep.subr.mxu0 0.0
        %1326 = vmatpush2.msra.mxu0 0.0
        %1327 = vmatprep.subr.mxu0 0.0
        %1328 = vmatpush2.msra.mxu0 0.0
        %1329 = vmatprep.subr.mxu0 0.0
        %1330 = vmatpush2.msra.mxu0 0.0
        %1331 = vmatprep.subr.mxu0 0.0
        %1332 = vmatpush2.msra.mxu0 0.0
        %1333 = vmatprep.subr.mxu0 0.0
        %1334 = vmatpush2.msra.mxu0 0.0
        %1335 = vmatprep.subr.mxu0 0.0
        %1336 = vmatpush2.msra.mxu0 0.0
        %1337 = vmatprep.subr.mxu0 0.0
        %1338 = vmatpush2.msra.mxu0 0.0
        %1339 = vmatprep.mubr.f32.mxu0 0.0
        %v1340 = vand.u32 %v298, 4294901760
        %1341 = vmatmul.mubr.f32.gmra.mxu0 %v1340
        %v1342 = vpop.f32.mrf.mxu0
        %v1343 = vadd.f32 %v1181, %v1342
        %v1344 = vpop.f32.mrf.mxu0
        %1345 = vmatprep.mubr.f32.mxu0 0.0
        %v1346 = vand.u32 %v301, 4294901760
        %1347 = vmatmul.mubr.f32.gmra.mxu0 %v1346
        %v1348 = vpop.f32.mrf.mxu0
        %v1349 = vadd.f32 %v1187, %v1348
        %v1350 = vpop.f32.mrf.mxu0
        %1351 = vmatprep.mubr.f32.mxu0 0.0
        %v1352 = vand.u32 %v304, 4294901760
        %1353 = vmatmul.mubr.f32.gmra.mxu0 %v1352
        %v1354 = vpop.f32.mrf.mxu0
        %v1355 = vadd.f32 %v1193, %v1354
        %v1356 = vpop.f32.mrf.mxu0
        %1357 = vmatprep.mubr.f32.mxu0 0.0
        %v1358 = vand.u32 %v307, 4294901760
        %1359 = vmatmul.mubr.f32.gmra.mxu0 %v1358
        %v1360 = vpop.f32.mrf.mxu0
        %v1361 = vadd.f32 %v1199, %v1360
        %v1362 = vpop.f32.mrf.mxu0
        %1363 = vmatprep.mubr.f32.mxu0 0.0
        %v1364 = vand.u32 %v310, 4294901760
        %1365 = vmatmul.mubr.f32.gmra.mxu0 %v1364
        %v1366 = vpop.f32.mrf.mxu0
        %v1367 = vadd.f32 %v1205, %v1366
        %v1368 = vpop.f32.mrf.mxu0
        %1369 = vmatprep.mubr.f32.mxu0 0.0
        %v1370 = vand.u32 %v313, 4294901760
        %1371 = vmatmul.mubr.f32.gmra.mxu0 %v1370
        %v1372 = vpop.f32.mrf.mxu0
        %v1373 = vadd.f32 %v1211, %v1372
        %v1374 = vpop.f32.mrf.mxu0
        %1375 = vmatprep.mubr.f32.mxu0 0.0
        %v1376 = vand.u32 %v316, 4294901760
        %1377 = vmatmul.mubr.f32.gmra.mxu0 %v1376
        %v1378 = vpop.f32.mrf.mxu0
        %v1379 = vadd.f32 %v1217, %v1378
        %v1380 = vpop.f32.mrf.mxu0
        %1381 = vmatprep.mubr.f32.mxu0 0.0
        %v1382 = vand.u32 %v319, 4294901760
        %1383 = vmatmul.mubr.f32.gmra.mxu0 %v1382
        %v1384 = vpop.f32.mrf.mxu0
        %v1385 = vadd.f32 %v1223, %v1384
        %v1386 = vpop.f32.mrf.mxu0
        %1387 = vmatprep.mubr.f32.mxu0 0.0
        %v1388 = vand.u32 %v322, 4294901760
        %1389 = vmatmul.mubr.f32.gmra.mxu0 %v1388
        %v1390 = vpop.f32.mrf.mxu0
        %v1391 = vadd.f32 %v1229, %v1390
        %v1392 = vpop.f32.mrf.mxu0
        %1393 = vmatprep.mubr.f32.mxu0 0.0
        %v1394 = vand.u32 %v325, 4294901760
        %1395 = vmatmul.mubr.f32.gmra.mxu0 %v1394
        %v1396 = vpop.f32.mrf.mxu0
        %v1397 = vadd.f32 %v1235, %v1396
        %v1398 = vpop.f32.mrf.mxu0
        %1399 = vmatprep.mubr.f32.mxu0 0.0
        %v1400 = vand.u32 %v328, 4294901760
        %1401 = vmatmul.mubr.f32.gmra.mxu0 %v1400
        %v1402 = vpop.f32.mrf.mxu0
        %v1403 = vadd.f32 %v1241, %v1402
        %v1404 = vpop.f32.mrf.mxu0
        %1405 = vmatprep.mubr.f32.mxu0 0.0
        %v1406 = vand.u32 %v331, 4294901760
        %1407 = vmatmul.mubr.f32.gmra.mxu0 %v1406
        %v1408 = vpop.f32.mrf.mxu0
        %v1409 = vadd.f32 %v1247, %v1408
        %v1410 = vpop.f32.mrf.mxu0
        %1411 = vmatprep.mubr.f32.mxu0 0.0
        %v1412 = vand.u32 %v334, 4294901760
        %1413 = vmatmul.mubr.f32.gmra.mxu0 %v1412
        %v1414 = vpop.f32.mrf.mxu0
        %v1415 = vadd.f32 %v1253, %v1414
        %v1416 = vpop.f32.mrf.mxu0
        %1417 = vmatprep.mubr.f32.mxu0 0.0
        %v1418 = vand.u32 %v337, 4294901760
        %1419 = vmatmul.mubr.f32.gmra.mxu0 %v1418
        %v1420 = vpop.f32.mrf.mxu0
        %v1421 = vadd.f32 %v1259, %v1420
        %v1422 = vpop.f32.mrf.mxu0
        %1423 = vmatprep.mubr.f32.mxu0 0.0
        %v1424 = vand.u32 %v340, 4294901760
        %1425 = vmatmul.mubr.f32.gmra.mxu0 %v1424
        %v1426 = vpop.f32.mrf.mxu0
        %v1427 = vadd.f32 %v1265, %v1426
        %v1428 = vpop.f32.mrf.mxu0
        %1429 = vmatprep.mubr.f32.mxu0 0.0
        %v1430 = vand.u32 %v343, 4294901760
        %1431 = vmatmul.mubr.f32.gmra.mxu0 %v1430
        %v1432 = vpop.f32.mrf.mxu0
        %v1433 = vadd.f32 %v1271, %v1432
        %v1434 = vpop.f32.mrf.mxu0
        %1435 = vdwg.mxu0
        %v1436 = vmax.f32 %v1343, 0.0
        %v1437 = vmax.f32 %v1349, 0.0
        %v1438 = vmax.f32 %v1355, 0.0
        %v1439 = vmax.f32 %v1361, 0.0
        %v1440 = vmax.f32 %v1367, 0.0
        %v1441 = vmax.f32 %v1373, 0.0
        %v1442 = vmax.f32 %v1379, 0.0
        %v1443 = vmax.f32 %v1385, 0.0
        %v1444 = vmax.f32 %v1391, 0.0
        %v1445 = vmax.f32 %v1397, 0.0
        %v1446 = vmax.f32 %v1403, 0.0
        %v1447 = vmax.f32 %v1409, 0.0
        %v1448 = vmax.f32 %v1415, 0.0
        %v1449 = vmax.f32 %v1421, 0.0
        %v1450 = vmax.f32 %v1427, 0.0
        %v1451 = vmax.f32 %v1433, 0.0
        %v1452 = vlaneseq
        %v1453 = vand.u32 %v1452, 127
        %v1470 = vand.u32 %v1436, 4294967168
        %v1471 = vand.u32 %v1437, 4294967168
        %v1472 = vand.u32 %v1438, 4294967168
        %v1473 = vand.u32 %v1439, 4294967168
        %v1474 = vand.u32 %v1440, 4294967168
        %v1475 = vand.u32 %v1441, 4294967168
        %v1476 = vand.u32 %v1442, 4294967168
        %v1477 = vand.u32 %v1443, 4294967168
        %v1478 = vand.u32 %v1444, 4294967168
        %v1479 = vand.u32 %v1445, 4294967168
        %v1480 = vand.u32 %v1446, 4294967168
        %v1481 = vand.u32 %v1447, 4294967168
        %v1482 = vand.u32 %v1448, 4294967168
        %v1483 = vand.u32 %v1449, 4294967168
        %v1484 = vand.u32 %v1450, 4294967168
        %v1485 = vand.u32 %v1451, 4294967168
        %v1486 = vor.u32 %v1470, %v1453
        %v1487 = vor.u32 %v1471, %v1453
        %v1488 = vor.u32 %v1472, %v1453
        %v1489 = vor.u32 %v1473, %v1453
        %v1490 = vor.u32 %v1474, %v1453
        %v1491 = vor.u32 %v1475, %v1453
        %v1492 = vor.u32 %v1476, %v1453
        %v1493 = vor.u32 %v1477, %v1453
        %v1494 = vor.u32 %v1478, %v1453
        %v1495 = vor.u32 %v1479, %v1453
        %v1496 = vor.u32 %v1480, %v1453
        %v1497 = vor.u32 %v1481, %v1453
        %v1498 = vor.u32 %v1482, %v1453
        %v1499 = vor.u32 %v1483, %v1453
        %v1500 = vor.u32 %v1484, %v1453
        %v1501 = vor.u32 %v1485, %v1453
        %1518 = vmin.xlane.f32.xlu0 %v1486
        %v1519 = vpop.xlane.xlu0 %1518
        %1520 = vmin.xlane.f32.xlu0 %v1487
        %v1521 = vpop.xlane.xlu0 %1520
        %1522 = vmin.xlane.f32.xlu0 %v1488
        %v1523 = vpop.xlane.xlu0 %1522
        %1524 = vmin.xlane.f32.xlu0 %v1489
        %v1525 = vpop.xlane.xlu0 %1524
        %1526 = vmin.xlane.f32.xlu0 %v1490
        %v1527 = vpop.xlane.xlu0 %1526
        %1528 = vmin.xlane.f32.xlu0 %v1491
        %v1529 = vpop.xlane.xlu0 %1528
        %1530 = vmin.xlane.f32.xlu0 %v1492
        %v1531 = vpop.xlane.xlu0 %1530
        %1532 = vmin.xlane.f32.xlu0 %v1493
        %v1533 = vpop.xlane.xlu0 %1532
        %1534 = vmin.xlane.f32.xlu0 %v1494
        %v1535 = vpop.xlane.xlu0 %1534
        %1536 = vmin.xlane.f32.xlu0 %v1495
        %v1537 = vpop.xlane.xlu0 %1536
        %1538 = vmin.xlane.f32.xlu0 %v1496
        %v1539 = vpop.xlane.xlu0 %1538
        %1540 = vmin.xlane.f32.xlu0 %v1497
        %v1541 = vpop.xlane.xlu0 %1540
        %1542 = vmin.xlane.f32.xlu0 %v1498
        %v1543 = vpop.xlane.xlu0 %1542
        %1544 = vmin.xlane.f32.xlu0 %v1499
        %v1545 = vpop.xlane.xlu0 %1544
        %1546 = vmin.xlane.f32.xlu0 %v1500
        %v1547 = vpop.xlane.xlu0 %1546
        %1548 = vmin.xlane.f32.xlu0 %v1501
        %v1549 = vpop.xlane.xlu0 %1548
        %vm1550 = vcmp.eq.f32.partialorder %v1486, %v1519
        %vm1551 = vcmp.eq.f32.partialorder %v1487, %v1521
        %vm1552 = vcmp.eq.f32.partialorder %v1488, %v1523
        %vm1553 = vcmp.eq.f32.partialorder %v1489, %v1525
        %vm1554 = vcmp.eq.f32.partialorder %v1490, %v1527
        %vm1555 = vcmp.eq.f32.partialorder %v1491, %v1529
        %vm1556 = vcmp.eq.f32.partialorder %v1492, %v1531
        %vm1557 = vcmp.eq.f32.partialorder %v1493, %v1533
        %vm1558 = vcmp.eq.f32.partialorder %v1494, %v1535
        %vm1559 = vcmp.eq.f32.partialorder %v1495, %v1537
        %vm1560 = vcmp.eq.f32.partialorder %v1496, %v1539
        %vm1561 = vcmp.eq.f32.partialorder %v1497, %v1541
        %vm1562 = vcmp.eq.f32.partialorder %v1498, %v1543
        %vm1563 = vcmp.eq.f32.partialorder %v1499, %v1545
        %vm1564 = vcmp.eq.f32.partialorder %v1500, %v1547
        %vm1565 = vcmp.eq.f32.partialorder %v1501, %v1549
        %v1566 = vsel %vm1550, 1, 0
        %v1567 = vsel %vm1551, 1, 0
        %v1568 = vsel %vm1552, 1, 0
        %v1569 = vsel %vm1553, 1, 0
        %v1570 = vsel %vm1554, 1, 0
        %v1571 = vsel %vm1555, 1, 0
        %v1572 = vsel %vm1556, 1, 0
        %v1573 = vsel %vm1557, 1, 0
        %v1574 = vsel %vm1558, 1, 0
        %v1575 = vsel %vm1559, 1, 0
        %v1576 = vsel %vm1560, 1, 0
        %v1577 = vsel %vm1561, 1, 0
        %v1578 = vsel %vm1562, 1, 0
        %v1579 = vsel %vm1563, 1, 0
        %v1580 = vsel %vm1564, 1, 0
        %v1581 = vsel %vm1565, 1, 0
        %v1582 = vcvt.s32.f32 %v1566
        %v1583 = vcvt.s32.f32 %v1567
        %v1584 = vcvt.s32.f32 %v1568
        %v1585 = vcvt.s32.f32 %v1569
        %v1586 = vcvt.s32.f32 %v1570
        %v1587 = vcvt.s32.f32 %v1571
        %v1588 = vcvt.s32.f32 %v1572
        %v1589 = vcvt.s32.f32 %v1573
        %v1590 = vcvt.s32.f32 %v1574
        %v1591 = vcvt.s32.f32 %v1575
        %v1592 = vcvt.s32.f32 %v1576
        %v1593 = vcvt.s32.f32 %v1577
        %v1594 = vcvt.s32.f32 %v1578
        %v1595 = vcvt.s32.f32 %v1579
        %v1596 = vcvt.s32.f32 %v1580
        %v1597 = vcvt.s32.f32 %v1581
        %1598 = vmatprep.subr.mxu0 0.0
        %v1599 = vand.u32 %v1597, 4294901760
        %1600 = vmatpush1.xpose.msra.mxu0 %v1599
        %1601 = vmatprep.subr.mxu0 0.0
        %v1602 = vand.u32 %v1596, 4294901760
        %1603 = vmatpush1.xpose.msra.mxu0 %v1602
        %1604 = vmatprep.subr.mxu0 0.0
        %v1605 = vand.u32 %v1595, 4294901760
        %1606 = vmatpush1.xpose.msra.mxu0 %v1605
        %1607 = vmatprep.subr.mxu0 0.0
        %v1608 = vand.u32 %v1594, 4294901760
        %1609 = vmatpush1.xpose.msra.mxu0 %v1608
        %1610 = vmatprep.subr.mxu0 0.0
        %v1611 = vand.u32 %v1593, 4294901760
        %1612 = vmatpush1.xpose.msra.mxu0 %v1611
        %1613 = vmatprep.subr.mxu0 0.0
        %v1614 = vand.u32 %v1592, 4294901760
        %1615 = vmatpush1.xpose.msra.mxu0 %v1614
        %1616 = vmatprep.subr.mxu0 0.0
        %v1617 = vand.u32 %v1591, 4294901760
        %1618 = vmatpush1.xpose.msra.mxu0 %v1617
        %1619 = vmatprep.subr.mxu0 0.0
        %v1620 = vand.u32 %v1590, 4294901760
        %1621 = vmatpush1.xpose.msra.mxu0 %v1620
        %1622 = vmatprep.subr.mxu0 0.0
        %v1623 = vand.u32 %v1589, 4294901760
        %1624 = vmatpush1.xpose.msra.mxu0 %v1623
        %1625 = vmatprep.subr.mxu0 0.0
        %v1626 = vand.u32 %v1588, 4294901760
        %1627 = vmatpush1.xpose.msra.mxu0 %v1626
        %1628 = vmatprep.subr.mxu0 0.0
        %v1629 = vand.u32 %v1587, 4294901760
        %1630 = vmatpush1.xpose.msra.mxu0 %v1629
        %1631 = vmatprep.subr.mxu0 0.0
        %v1632 = vand.u32 %v1586, 4294901760
        %1633 = vmatpush1.xpose.msra.mxu0 %v1632
        %1634 = vmatprep.subr.mxu0 0.0
        %v1635 = vand.u32 %v1585, 4294901760
        %1636 = vmatpush1.xpose.msra.mxu0 %v1635
        %1637 = vmatprep.subr.mxu0 0.0
        %v1638 = vand.u32 %v1584, 4294901760
        %1639 = vmatpush1.xpose.msra.mxu0 %v1638
        %1640 = vmatprep.subr.mxu0 0.0
        %v1641 = vand.u32 %v1583, 4294901760
        %1642 = vmatpush1.xpose.msra.mxu0 %v1641
        %1643 = vmatprep.subr.mxu0 0.0
        %v1644 = vand.u32 %v1582, 4294901760
        %1645 = vmatpush1.xpose.msra.mxu0 %v1644
        %1646 = vmatprep.subr.mxu0 0.0
        %1647 = vmatpush2.xpose.msra.mxu0 0.0
        %1648 = vmatprep.subr.mxu0 0.0
        %1649 = vmatpush2.xpose.msra.mxu0 0.0
        %1650 = vmatprep.subr.mxu0 0.0
        %1651 = vmatpush2.xpose.msra.mxu0 0.0
        %1652 = vmatprep.subr.mxu0 0.0
        %1653 = vmatpush2.xpose.msra.mxu0 0.0
        %1654 = vmatprep.subr.mxu0 0.0
        %1655 = vmatpush2.xpose.msra.mxu0 0.0
        %1656 = vmatprep.subr.mxu0 0.0
        %1657 = vmatpush2.xpose.msra.mxu0 0.0
        %1658 = vmatprep.subr.mxu0 0.0
        %1659 = vmatpush2.xpose.msra.mxu0 0.0
        %1660 = vmatprep.subr.mxu0 0.0
        %1661 = vmatpush2.xpose.msra.mxu0 0.0
        %1662 = vmatprep.subr.mxu0 0.0
        %1663 = vmatpush2.xpose.msra.mxu0 0.0
        %1664 = vmatprep.subr.mxu0 0.0
        %1665 = vmatpush2.xpose.msra.mxu0 0.0
        %1666 = vmatprep.subr.mxu0 0.0
        %1667 = vmatpush2.xpose.msra.mxu0 0.0
        %1668 = vmatprep.subr.mxu0 0.0
        %1669 = vmatpush2.xpose.msra.mxu0 0.0
        %1670 = vmatprep.subr.mxu0 0.0
        %1671 = vmatpush2.xpose.msra.mxu0 0.0
        %1672 = vmatprep.subr.mxu0 0.0
        %1673 = vmatpush2.xpose.msra.mxu0 0.0
        %1674 = vmatprep.subr.mxu0 0.0
        %1675 = vmatpush2.xpose.msra.mxu0 0.0
        %1676 = vmatprep.subr.mxu0 0.0
        %1677 = vmatpush2.xpose.msra.mxu0 0.0
        %1678 = vmatprep.mubr.f32.mxu0 0.0
        %v1679 = vand.u32 %v293, 4294901760
        %v1680 = vsub.f32 %v293, %v1679
        %v1681 = vand.u32 %v1680, 4294901760
        %v1682 = vsub.f32 %v1680, %v1681
        %v1683 = vand.u32 %v1682, 4294901760
        %1684 = vmatmul.mubr.f32.gmra.mxu0 %v1683
        %v1685 = vpop.f32.mrf.mxu0
        %v1686 = vadd.f32 0.0, %v1685
        %v1687 = vpop.f32.mrf.mxu0
        %1688 = vmatprep.mubr.f32.mxu0 0.0
        %v1689 = vand.u32 %v294, 4294901760
        %v1690 = vsub.f32 %v294, %v1689
        %v1691 = vand.u32 %v1690, 4294901760
        %v1692 = vsub.f32 %v1690, %v1691
        %v1693 = vand.u32 %v1692, 4294901760
        %1694 = vmatmul.mubr.f32.gmra.mxu0 %v1693
        %v1695 = vpop.f32.mrf.mxu0
        %v1696 = vadd.f32 0.0, %v1695
        %v1697 = vpop.f32.mrf.mxu0
        %1698 = vmatprep.mubr.f32.mxu0 0.0
        %v1699 = vand.u32 %v295, 4294901760
        %v1700 = vsub.f32 %v295, %v1699
        %v1701 = vand.u32 %v1700, 4294901760
        %v1702 = vsub.f32 %v1700, %v1701
        %v1703 = vand.u32 %v1702, 4294901760
        %1704 = vmatmul.mubr.f32.gmra.mxu0 %v1703
        %v1705 = vpop.f32.mrf.mxu0
        %v1706 = vadd.f32 0.0, %v1705
        %v1707 = vpop.f32.mrf.mxu0
        %1708 = vdwg.mxu0
        %1709 = vmatprep.subr.mxu0 0.0
        %v1710 = vand.u32 %v1597, 4294901760
        %v1711 = vsub.f32 %v1597, %v1710
        %v1712 = vand.u32 %v1711, 4294901760
        %v1713 = vsub.f32 %v1711, %v1712
        %v1714 = vand.u32 %v1713, 4294901760
        %1715 = vmatpush1.xpose.msra.mxu0 %v1714
        %1716 = vmatprep.subr.mxu0 0.0
        %v1717 = vand.u32 %v1596, 4294901760
        %v1718 = vsub.f32 %v1596, %v1717
        %v1719 = vand.u32 %v1718, 4294901760
        %v1720 = vsub.f32 %v1718, %v1719
        %v1721 = vand.u32 %v1720, 4294901760
        %1722 = vmatpush1.xpose.msra.mxu0 %v1721
        %1723 = vmatprep.subr.mxu0 0.0
        %v1724 = vand.u32 %v1595, 4294901760
        %v1725 = vsub.f32 %v1595, %v1724
        %v1726 = vand.u32 %v1725, 4294901760
        %v1727 = vsub.f32 %v1725, %v1726
        %v1728 = vand.u32 %v1727, 4294901760
        %1729 = vmatpush1.xpose.msra.mxu0 %v1728
        %1730 = vmatprep.subr.mxu0 0.0
        %v1731 = vand.u32 %v1594, 4294901760
        %v1732 = vsub.f32 %v1594, %v1731
        %v1733 = vand.u32 %v1732, 4294901760
        %v1734 = vsub.f32 %v1732, %v1733
        %v1735 = vand.u32 %v1734, 4294901760
        %1736 = vmatpush1.xpose.msra.mxu0 %v1735
        %1737 = vmatprep.subr.mxu0 0.0
        %v1738 = vand.u32 %v1593, 4294901760
        %v1739 = vsub.f32 %v1593, %v1738
        %v1740 = vand.u32 %v1739, 4294901760
        %v1741 = vsub.f32 %v1739, %v1740
        %v1742 = vand.u32 %v1741, 4294901760
        %1743 = vmatpush1.xpose.msra.mxu0 %v1742
        %1744 = vmatprep.subr.mxu0 0.0
        %v1745 = vand.u32 %v1592, 4294901760
        %v1746 = vsub.f32 %v1592, %v1745
        %v1747 = vand.u32 %v1746, 4294901760
        %v1748 = vsub.f32 %v1746, %v1747
        %v1749 = vand.u32 %v1748, 4294901760
        %1750 = vmatpush1.xpose.msra.mxu0 %v1749
        %1751 = vmatprep.subr.mxu0 0.0
        %v1752 = vand.u32 %v1591, 4294901760
        %v1753 = vsub.f32 %v1591, %v1752
        %v1754 = vand.u32 %v1753, 4294901760
        %v1755 = vsub.f32 %v1753, %v1754
        %v1756 = vand.u32 %v1755, 4294901760
        %1757 = vmatpush1.xpose.msra.mxu0 %v1756
        %1758 = vmatprep.subr.mxu0 0.0
        %v1759 = vand.u32 %v1590, 4294901760
        %v1760 = vsub.f32 %v1590, %v1759
        %v1761 = vand.u32 %v1760, 4294901760
        %v1762 = vsub.f32 %v1760, %v1761
        %v1763 = vand.u32 %v1762, 4294901760
        %1764 = vmatpush1.xpose.msra.mxu0 %v1763
        %1765 = vmatprep.subr.mxu0 0.0
        %v1766 = vand.u32 %v1589, 4294901760
        %v1767 = vsub.f32 %v1589, %v1766
        %v1768 = vand.u32 %v1767, 4294901760
        %v1769 = vsub.f32 %v1767, %v1768
        %v1770 = vand.u32 %v1769, 4294901760
        %1771 = vmatpush1.xpose.msra.mxu0 %v1770
        %1772 = vmatprep.subr.mxu0 0.0
        %v1773 = vand.u32 %v1588, 4294901760
        %v1774 = vsub.f32 %v1588, %v1773
        %v1775 = vand.u32 %v1774, 4294901760
        %v1776 = vsub.f32 %v1774, %v1775
        %v1777 = vand.u32 %v1776, 4294901760
        %1778 = vmatpush1.xpose.msra.mxu0 %v1777
        %1779 = vmatprep.subr.mxu0 0.0
        %v1780 = vand.u32 %v1587, 4294901760
        %v1781 = vsub.f32 %v1587, %v1780
        %v1782 = vand.u32 %v1781, 4294901760
        %v1783 = vsub.f32 %v1781, %v1782
        %v1784 = vand.u32 %v1783, 4294901760
        %1785 = vmatpush1.xpose.msra.mxu0 %v1784
        %1786 = vmatprep.subr.mxu0 0.0
        %v1787 = vand.u32 %v1586, 4294901760
        %v1788 = vsub.f32 %v1586, %v1787
        %v1789 = vand.u32 %v1788, 4294901760
        %v1790 = vsub.f32 %v1788, %v1789
        %v1791 = vand.u32 %v1790, 4294901760
        %1792 = vmatpush1.xpose.msra.mxu0 %v1791
        %1793 = vmatprep.subr.mxu0 0.0
        %v1794 = vand.u32 %v1585, 4294901760
        %v1795 = vsub.f32 %v1585, %v1794
        %v1796 = vand.u32 %v1795, 4294901760
        %v1797 = vsub.f32 %v1795, %v1796
        %v1798 = vand.u32 %v1797, 4294901760
        %1799 = vmatpush1.xpose.msra.mxu0 %v1798
        %1800 = vmatprep.subr.mxu0 0.0
        %v1801 = vand.u32 %v1584, 4294901760
        %v1802 = vsub.f32 %v1584, %v1801
        %v1803 = vand.u32 %v1802, 4294901760
        %v1804 = vsub.f32 %v1802, %v1803
        %v1805 = vand.u32 %v1804, 4294901760
        %1806 = vmatpush1.xpose.msra.mxu0 %v1805
        %1807 = vmatprep.subr.mxu0 0.0
        %v1808 = vand.u32 %v1583, 4294901760
        %v1809 = vsub.f32 %v1583, %v1808
        %v1810 = vand.u32 %v1809, 4294901760
        %v1811 = vsub.f32 %v1809, %v1810
        %v1812 = vand.u32 %v1811, 4294901760
        %1813 = vmatpush1.xpose.msra.mxu0 %v1812
        %1814 = vmatprep.subr.mxu0 0.0
        %v1815 = vand.u32 %v1582, 4294901760
        %v1816 = vsub.f32 %v1582, %v1815
        %v1817 = vand.u32 %v1816, 4294901760
        %v1818 = vsub.f32 %v1816, %v1817
        %v1819 = vand.u32 %v1818, 4294901760
        %1820 = vmatpush1.xpose.msra.mxu0 %v1819
        %1821 = vmatprep.subr.mxu0 0.0
        %1822 = vmatpush2.xpose.msra.mxu0 0.0
        %1823 = vmatprep.subr.mxu0 0.0
        %1824 = vmatpush2.xpose.msra.mxu0 0.0
        %1825 = vmatprep.subr.mxu0 0.0
        %1826 = vmatpush2.xpose.msra.mxu0 0.0
        %1827 = vmatprep.subr.mxu0 0.0
        %1828 = vmatpush2.xpose.msra.mxu0 0.0
        %1829 = vmatprep.subr.mxu0 0.0
        %1830 = vmatpush2.xpose.msra.mxu0 0.0
        %1831 = vmatprep.subr.mxu0 0.0
        %1832 = vmatpush2.xpose.msra.mxu0 0.0
        %1833 = vmatprep.subr.mxu0 0.0
        %1834 = vmatpush2.xpose.msra.mxu0 0.0
        %1835 = vmatprep.subr.mxu0 0.0
        %1836 = vmatpush2.xpose.msra.mxu0 0.0
        %1837 = vmatprep.subr.mxu0 0.0
        %1838 = vmatpush2.xpose.msra.mxu0 0.0
        %1839 = vmatprep.subr.mxu0 0.0
        %1840 = vmatpush2.xpose.msra.mxu0 0.0
        %1841 = vmatprep.subr.mxu0 0.0
        %1842 = vmatpush2.xpose.msra.mxu0 0.0
        %1843 = vmatprep.subr.mxu0 0.0
        %1844 = vmatpush2.xpose.msra.mxu0 0.0
        %1845 = vmatprep.subr.mxu0 0.0
        %1846 = vmatpush2.xpose.msra.mxu0 0.0
        %1847 = vmatprep.subr.mxu0 0.0
        %1848 = vmatpush2.xpose.msra.mxu0 0.0
        %1849 = vmatprep.subr.mxu0 0.0
        %1850 = vmatpush2.xpose.msra.mxu0 0.0
        %1851 = vmatprep.subr.mxu0 0.0
        %1852 = vmatpush2.xpose.msra.mxu0 0.0
        %1853 = vmatprep.mubr.f32.mxu0 0.0
        %v1854 = vand.u32 %v293, 4294901760
        %1855 = vmatmul.mubr.f32.gmra.mxu0 %v1854
        %v1856 = vpop.f32.mrf.mxu0
        %v1857 = vadd.f32 %v1686, %v1856
        %v1858 = vpop.f32.mrf.mxu0
        %1859 = vmatprep.mubr.f32.mxu0 0.0
        %v1860 = vand.u32 %v294, 4294901760
        %1861 = vmatmul.mubr.f32.gmra.mxu0 %v1860
        %v1862 = vpop.f32.mrf.mxu0
        %v1863 = vadd.f32 %v1696, %v1862
        %v1864 = vpop.f32.mrf.mxu0
        %1865 = vmatprep.mubr.f32.mxu0 0.0
        %v1866 = vand.u32 %v295, 4294901760
        %1867 = vmatmul.mubr.f32.gmra.mxu0 %v1866
        %v1868 = vpop.f32.mrf.mxu0
        %v1869 = vadd.f32 %v1706, %v1868
        %v1870 = vpop.f32.mrf.mxu0
        %1871 = vdwg.mxu0
        %1872 = vmatprep.subr.mxu0 0.0
        %v1873 = vand.u32 %v1597, 4294901760
        %v1874 = vsub.f32 %v1597, %v1873
        %1875 = vmatpush1.xpose.msra.mxu0 %v1874
        %1876 = vmatprep.subr.mxu0 0.0
        %v1877 = vand.u32 %v1596, 4294901760
        %v1878 = vsub.f32 %v1596, %v1877
        %1879 = vmatpush1.xpose.msra.mxu0 %v1878
        %1880 = vmatprep.subr.mxu0 0.0
        %v1881 = vand.u32 %v1595, 4294901760
        %v1882 = vsub.f32 %v1595, %v1881
        %1883 = vmatpush1.xpose.msra.mxu0 %v1882
        %1884 = vmatprep.subr.mxu0 0.0
        %v1885 = vand.u32 %v1594, 4294901760
        %v1886 = vsub.f32 %v1594, %v1885
        %1887 = vmatpush1.xpose.msra.mxu0 %v1886
        %1888 = vmatprep.subr.mxu0 0.0
        %v1889 = vand.u32 %v1593, 4294901760
        %v1890 = vsub.f32 %v1593, %v1889
        %1891 = vmatpush1.xpose.msra.mxu0 %v1890
        %1892 = vmatprep.subr.mxu0 0.0
        %v1893 = vand.u32 %v1592, 4294901760
        %v1894 = vsub.f32 %v1592, %v1893
        %1895 = vmatpush1.xpose.msra.mxu0 %v1894
        %1896 = vmatprep.subr.mxu0 0.0
        %v1897 = vand.u32 %v1591, 4294901760
        %v1898 = vsub.f32 %v1591, %v1897
        %1899 = vmatpush1.xpose.msra.mxu0 %v1898
        %1900 = vmatprep.subr.mxu0 0.0
        %v1901 = vand.u32 %v1590, 4294901760
        %v1902 = vsub.f32 %v1590, %v1901
        %1903 = vmatpush1.xpose.msra.mxu0 %v1902
        %1904 = vmatprep.subr.mxu0 0.0
        %v1905 = vand.u32 %v1589, 4294901760
        %v1906 = vsub.f32 %v1589, %v1905
        %1907 = vmatpush1.xpose.msra.mxu0 %v1906
        %1908 = vmatprep.subr.mxu0 0.0
        %v1909 = vand.u32 %v1588, 4294901760
        %v1910 = vsub.f32 %v1588, %v1909
        %1911 = vmatpush1.xpose.msra.mxu0 %v1910
        %1912 = vmatprep.subr.mxu0 0.0
        %v1913 = vand.u32 %v1587, 4294901760
        %v1914 = vsub.f32 %v1587, %v1913
        %1915 = vmatpush1.xpose.msra.mxu0 %v1914
        %1916 = vmatprep.subr.mxu0 0.0
        %v1917 = vand.u32 %v1586, 4294901760
        %v1918 = vsub.f32 %v1586, %v1917
        %1919 = vmatpush1.xpose.msra.mxu0 %v1918
        %1920 = vmatprep.subr.mxu0 0.0
        %v1921 = vand.u32 %v1585, 4294901760
        %v1922 = vsub.f32 %v1585, %v1921
        %1923 = vmatpush1.xpose.msra.mxu0 %v1922
        %1924 = vmatprep.subr.mxu0 0.0
        %v1925 = vand.u32 %v1584, 4294901760
        %v1926 = vsub.f32 %v1584, %v1925
        %1927 = vmatpush1.xpose.msra.mxu0 %v1926
        %1928 = vmatprep.subr.mxu0 0.0
        %v1929 = vand.u32 %v1583, 4294901760
        %v1930 = vsub.f32 %v1583, %v1929
        %1931 = vmatpush1.xpose.msra.mxu0 %v1930
        %1932 = vmatprep.subr.mxu0 0.0
        %v1933 = vand.u32 %v1582, 4294901760
        %v1934 = vsub.f32 %v1582, %v1933
        %1935 = vmatpush1.xpose.msra.mxu0 %v1934
        %1936 = vmatprep.subr.mxu0 0.0
        %1937 = vmatpush2.xpose.msra.mxu0 0.0
        %1938 = vmatprep.subr.mxu0 0.0
        %1939 = vmatpush2.xpose.msra.mxu0 0.0
        %1940 = vmatprep.subr.mxu0 0.0
        %1941 = vmatpush2.xpose.msra.mxu0 0.0
        %1942 = vmatprep.subr.mxu0 0.0
        %1943 = vmatpush2.xpose.msra.mxu0 0.0
        %1944 = vmatprep.subr.mxu0 0.0
        %1945 = vmatpush2.xpose.msra.mxu0 0.0
        %1946 = vmatprep.subr.mxu0 0.0
        %1947 = vmatpush2.xpose.msra.mxu0 0.0
        %1948 = vmatprep.subr.mxu0 0.0
        %1949 = vmatpush2.xpose.msra.mxu0 0.0
        %1950 = vmatprep.subr.mxu0 0.0
        %1951 = vmatpush2.xpose.msra.mxu0 0.0
        %1952 = vmatprep.subr.mxu0 0.0
        %1953 = vmatpush2.xpose.msra.mxu0 0.0
        %1954 = vmatprep.subr.mxu0 0.0
        %1955 = vmatpush2.xpose.msra.mxu0 0.0
        %1956 = vmatprep.subr.mxu0 0.0
        %1957 = vmatpush2.xpose.msra.mxu0 0.0
        %1958 = vmatprep.subr.mxu0 0.0
        %1959 = vmatpush2.xpose.msra.mxu0 0.0
        %1960 = vmatprep.subr.mxu0 0.0
        %1961 = vmatpush2.xpose.msra.mxu0 0.0
        %1962 = vmatprep.subr.mxu0 0.0
        %1963 = vmatpush2.xpose.msra.mxu0 0.0
        %1964 = vmatprep.subr.mxu0 0.0
        %1965 = vmatpush2.xpose.msra.mxu0 0.0
        %1966 = vmatprep.subr.mxu0 0.0
        %1967 = vmatpush2.xpose.msra.mxu0 0.0
        %1968 = vmatprep.mubr.f32.mxu0 0.0
        %v1969 = vand.u32 %v293, 4294901760
        %v1970 = vsub.f32 %v293, %v1969
        %1971 = vmatmul.mubr.f32.gmra.mxu0 %v1970
        %v1972 = vpop.f32.mrf.mxu0
        %v1973 = vadd.f32 %v1857, %v1972
        %v1974 = vpop.f32.mrf.mxu0
        %1975 = vmatprep.mubr.f32.mxu0 0.0
        %v1976 = vand.u32 %v294, 4294901760
        %v1977 = vsub.f32 %v294, %v1976
        %1978 = vmatmul.mubr.f32.gmra.mxu0 %v1977
        %v1979 = vpop.f32.mrf.mxu0
        %v1980 = vadd.f32 %v1863, %v1979
        %v1981 = vpop.f32.mrf.mxu0
        %1982 = vmatprep.mubr.f32.mxu0 0.0
        %v1983 = vand.u32 %v295, 4294901760
        %v1984 = vsub.f32 %v295, %v1983
        %1985 = vmatmul.mubr.f32.gmra.mxu0 %v1984
        %v1986 = vpop.f32.mrf.mxu0
        %v1987 = vadd.f32 %v1869, %v1986
        %v1988 = vpop.f32.mrf.mxu0
        %1989 = vdwg.mxu0
        %1990 = vmatprep.subr.mxu0 0.0
        %v1991 = vand.u32 %v1597, 4294901760
        %1992 = vmatpush1.xpose.msra.mxu0 %v1991
        %1993 = vmatprep.subr.mxu0 0.0
        %v1994 = vand.u32 %v1596, 4294901760
        %1995 = vmatpush1.xpose.msra.mxu0 %v1994
        %1996 = vmatprep.subr.mxu0 0.0
        %v1997 = vand.u32 %v1595, 4294901760
        %1998 = vmatpush1.xpose.msra.mxu0 %v1997
        %1999 = vmatprep.subr.mxu0 0.0
        %v2000 = vand.u32 %v1594, 4294901760
        %2001 = vmatpush1.xpose.msra.mxu0 %v2000
        %2002 = vmatprep.subr.mxu0 0.0
        %v2003 = vand.u32 %v1593, 4294901760
        %2004 = vmatpush1.xpose.msra.mxu0 %v2003
        %2005 = vmatprep.subr.mxu0 0.0
        %v2006 = vand.u32 %v1592, 4294901760
        %2007 = vmatpush1.xpose.msra.mxu0 %v2006
        %2008 = vmatprep.subr.mxu0 0.0
        %v2009 = vand.u32 %v1591, 4294901760
        %2010 = vmatpush1.xpose.msra.mxu0 %v2009
        %2011 = vmatprep.subr.mxu0 0.0
        %v2012 = vand.u32 %v1590, 4294901760
        %2013 = vmatpush1.xpose.msra.mxu0 %v2012
        %2014 = vmatprep.subr.mxu0 0.0
        %v2015 = vand.u32 %v1589, 4294901760
        %2016 = vmatpush1.xpose.msra.mxu0 %v2015
        %2017 = vmatprep.subr.mxu0 0.0
        %v2018 = vand.u32 %v1588, 4294901760
        %2019 = vmatpush1.xpose.msra.mxu0 %v2018
        %2020 = vmatprep.subr.mxu0 0.0
        %v2021 = vand.u32 %v1587, 4294901760
        %2022 = vmatpush1.xpose.msra.mxu0 %v2021
        %2023 = vmatprep.subr.mxu0 0.0
        %v2024 = vand.u32 %v1586, 4294901760
        %2025 = vmatpush1.xpose.msra.mxu0 %v2024
        %2026 = vmatprep.subr.mxu0 0.0
        %v2027 = vand.u32 %v1585, 4294901760
        %2028 = vmatpush1.xpose.msra.mxu0 %v2027
        %2029 = vmatprep.subr.mxu0 0.0
        %v2030 = vand.u32 %v1584, 4294901760
        %2031 = vmatpush1.xpose.msra.mxu0 %v2030
        %2032 = vmatprep.subr.mxu0 0.0
        %v2033 = vand.u32 %v1583, 4294901760
        %2034 = vmatpush1.xpose.msra.mxu0 %v2033
        %2035 = vmatprep.subr.mxu0 0.0
        %v2036 = vand.u32 %v1582, 4294901760
        %2037 = vmatpush1.xpose.msra.mxu0 %v2036
        %2038 = vmatprep.subr.mxu0 0.0
        %2039 = vmatpush2.xpose.msra.mxu0 0.0
        %2040 = vmatprep.subr.mxu0 0.0
        %2041 = vmatpush2.xpose.msra.mxu0 0.0
        %2042 = vmatprep.subr.mxu0 0.0
        %2043 = vmatpush2.xpose.msra.mxu0 0.0
        %2044 = vmatprep.subr.mxu0 0.0
        %2045 = vmatpush2.xpose.msra.mxu0 0.0
        %2046 = vmatprep.subr.mxu0 0.0
        %2047 = vmatpush2.xpose.msra.mxu0 0.0
        %2048 = vmatprep.subr.mxu0 0.0
        %2049 = vmatpush2.xpose.msra.mxu0 0.0
        %2050 = vmatprep.subr.mxu0 0.0
        %2051 = vmatpush2.xpose.msra.mxu0 0.0
        %2052 = vmatprep.subr.mxu0 0.0
        %2053 = vmatpush2.xpose.msra.mxu0 0.0
        %2054 = vmatprep.subr.mxu0 0.0
        %2055 = vmatpush2.xpose.msra.mxu0 0.0
        %2056 = vmatprep.subr.mxu0 0.0
        %2057 = vmatpush2.xpose.msra.mxu0 0.0
        %2058 = vmatprep.subr.mxu0 0.0
        %2059 = vmatpush2.xpose.msra.mxu0 0.0
        %2060 = vmatprep.subr.mxu0 0.0
        %2061 = vmatpush2.xpose.msra.mxu0 0.0
        %2062 = vmatprep.subr.mxu0 0.0
        %2063 = vmatpush2.xpose.msra.mxu0 0.0
        %2064 = vmatprep.subr.mxu0 0.0
        %2065 = vmatpush2.xpose.msra.mxu0 0.0
        %2066 = vmatprep.subr.mxu0 0.0
        %2067 = vmatpush2.xpose.msra.mxu0 0.0
        %2068 = vmatprep.subr.mxu0 0.0
        %2069 = vmatpush2.xpose.msra.mxu0 0.0
        %2070 = vmatprep.mubr.f32.mxu0 0.0
        %v2071 = vand.u32 %v293, 4294901760
        %v2072 = vsub.f32 %v293, %v2071
        %v2073 = vand.u32 %v2072, 4294901760
        %2074 = vmatmul.mubr.f32.gmra.mxu0 %v2073
        %v2075 = vpop.f32.mrf.mxu0
        %v2076 = vadd.f32 %v1973, %v2075
        %v2077 = vpop.f32.mrf.mxu0
        %2078 = vmatprep.mubr.f32.mxu0 0.0
        %v2079 = vand.u32 %v294, 4294901760
        %v2080 = vsub.f32 %v294, %v2079
        %v2081 = vand.u32 %v2080, 4294901760
        %2082 = vmatmul.mubr.f32.gmra.mxu0 %v2081
        %v2083 = vpop.f32.mrf.mxu0
        %v2084 = vadd.f32 %v1980, %v2083
        %v2085 = vpop.f32.mrf.mxu0
        %2086 = vmatprep.mubr.f32.mxu0 0.0
        %v2087 = vand.u32 %v295, 4294901760
        %v2088 = vsub.f32 %v295, %v2087
        %v2089 = vand.u32 %v2088, 4294901760
        %2090 = vmatmul.mubr.f32.gmra.mxu0 %v2089
        %v2091 = vpop.f32.mrf.mxu0
        %v2092 = vadd.f32 %v1987, %v2091
        %v2093 = vpop.f32.mrf.mxu0
        %2094 = vdwg.mxu0
        %2095 = vmatprep.subr.mxu0 0.0
        %v2096 = vand.u32 %v1597, 4294901760
        %v2097 = vsub.f32 %v1597, %v2096
        %v2098 = vand.u32 %v2097, 4294901760
        %2099 = vmatpush1.xpose.msra.mxu0 %v2098
        %2100 = vmatprep.subr.mxu0 0.0
        %v2101 = vand.u32 %v1596, 4294901760
        %v2102 = vsub.f32 %v1596, %v2101
        %v2103 = vand.u32 %v2102, 4294901760
        %2104 = vmatpush1.xpose.msra.mxu0 %v2103
        %2105 = vmatprep.subr.mxu0 0.0
        %v2106 = vand.u32 %v1595, 4294901760
        %v2107 = vsub.f32 %v1595, %v2106
        %v2108 = vand.u32 %v2107, 4294901760
        %2109 = vmatpush1.xpose.msra.mxu0 %v2108
        %2110 = vmatprep.subr.mxu0 0.0
        %v2111 = vand.u32 %v1594, 4294901760
        %v2112 = vsub.f32 %v1594, %v2111
        %v2113 = vand.u32 %v2112, 4294901760
        %2114 = vmatpush1.xpose.msra.mxu0 %v2113
        %2115 = vmatprep.subr.mxu0 0.0
        %v2116 = vand.u32 %v1593, 4294901760
        %v2117 = vsub.f32 %v1593, %v2116
        %v2118 = vand.u32 %v2117, 4294901760
        %2119 = vmatpush1.xpose.msra.mxu0 %v2118
        %2120 = vmatprep.subr.mxu0 0.0
        %v2121 = vand.u32 %v1592, 4294901760
        %v2122 = vsub.f32 %v1592, %v2121
        %v2123 = vand.u32 %v2122, 4294901760
        %2124 = vmatpush1.xpose.msra.mxu0 %v2123
        %2125 = vmatprep.subr.mxu0 0.0
        %v2126 = vand.u32 %v1591, 4294901760
        %v2127 = vsub.f32 %v1591, %v2126
        %v2128 = vand.u32 %v2127, 4294901760
        %2129 = vmatpush1.xpose.msra.mxu0 %v2128
        %2130 = vmatprep.subr.mxu0 0.0
        %v2131 = vand.u32 %v1590, 4294901760
        %v2132 = vsub.f32 %v1590, %v2131
        %v2133 = vand.u32 %v2132, 4294901760
        %2134 = vmatpush1.xpose.msra.mxu0 %v2133
        %2135 = vmatprep.subr.mxu0 0.0
        %v2136 = vand.u32 %v1589, 4294901760
        %v2137 = vsub.f32 %v1589, %v2136
        %v2138 = vand.u32 %v2137, 4294901760
        %2139 = vmatpush1.xpose.msra.mxu0 %v2138
        %2140 = vmatprep.subr.mxu0 0.0
        %v2141 = vand.u32 %v1588, 4294901760
        %v2142 = vsub.f32 %v1588, %v2141
        %v2143 = vand.u32 %v2142, 4294901760
        %2144 = vmatpush1.xpose.msra.mxu0 %v2143
        %2145 = vmatprep.subr.mxu0 0.0
        %v2146 = vand.u32 %v1587, 4294901760
        %v2147 = vsub.f32 %v1587, %v2146
        %v2148 = vand.u32 %v2147, 4294901760
        %2149 = vmatpush1.xpose.msra.mxu0 %v2148
        %2150 = vmatprep.subr.mxu0 0.0
        %v2151 = vand.u32 %v1586, 4294901760
        %v2152 = vsub.f32 %v1586, %v2151
        %v2153 = vand.u32 %v2152, 4294901760
        %2154 = vmatpush1.xpose.msra.mxu0 %v2153
        %2155 = vmatprep.subr.mxu0 0.0
        %v2156 = vand.u32 %v1585, 4294901760
        %v2157 = vsub.f32 %v1585, %v2156
        %v2158 = vand.u32 %v2157, 4294901760
        %2159 = vmatpush1.xpose.msra.mxu0 %v2158
        %2160 = vmatprep.subr.mxu0 0.0
        %v2161 = vand.u32 %v1584, 4294901760
        %v2162 = vsub.f32 %v1584, %v2161
        %v2163 = vand.u32 %v2162, 4294901760
        %2164 = vmatpush1.xpose.msra.mxu0 %v2163
        %2165 = vmatprep.subr.mxu0 0.0
        %v2166 = vand.u32 %v1583, 4294901760
        %v2167 = vsub.f32 %v1583, %v2166
        %v2168 = vand.u32 %v2167, 4294901760
        %2169 = vmatpush1.xpose.msra.mxu0 %v2168
        %2170 = vmatprep.subr.mxu0 0.0
        %v2171 = vand.u32 %v1582, 4294901760
        %v2172 = vsub.f32 %v1582, %v2171
        %v2173 = vand.u32 %v2172, 4294901760
        %2174 = vmatpush1.xpose.msra.mxu0 %v2173
        %2175 = vmatprep.subr.mxu0 0.0
        %2176 = vmatpush2.xpose.msra.mxu0 0.0
        %2177 = vmatprep.subr.mxu0 0.0
        %2178 = vmatpush2.xpose.msra.mxu0 0.0
        %2179 = vmatprep.subr.mxu0 0.0
        %2180 = vmatpush2.xpose.msra.mxu0 0.0
        %2181 = vmatprep.subr.mxu0 0.0
        %2182 = vmatpush2.xpose.msra.mxu0 0.0
        %2183 = vmatprep.subr.mxu0 0.0
        %2184 = vmatpush2.xpose.msra.mxu0 0.0
        %2185 = vmatprep.subr.mxu0 0.0
        %2186 = vmatpush2.xpose.msra.mxu0 0.0
        %2187 = vmatprep.subr.mxu0 0.0
        %2188 = vmatpush2.xpose.msra.mxu0 0.0
        %2189 = vmatprep.subr.mxu0 0.0
        %2190 = vmatpush2.xpose.msra.mxu0 0.0
        %2191 = vmatprep.subr.mxu0 0.0
        %2192 = vmatpush2.xpose.msra.mxu0 0.0
        %2193 = vmatprep.subr.mxu0 0.0
        %2194 = vmatpush2.xpose.msra.mxu0 0.0
        %2195 = vmatprep.subr.mxu0 0.0
        %2196 = vmatpush2.xpose.msra.mxu0 0.0
        %2197 = vmatprep.subr.mxu0 0.0
        %2198 = vmatpush2.xpose.msra.mxu0 0.0
        %2199 = vmatprep.subr.mxu0 0.0
        %2200 = vmatpush2.xpose.msra.mxu0 0.0
        %2201 = vmatprep.subr.mxu0 0.0
        %2202 = vmatpush2.xpose.msra.mxu0 0.0
        %2203 = vmatprep.subr.mxu0 0.0
        %2204 = vmatpush2.xpose.msra.mxu0 0.0
        %2205 = vmatprep.subr.mxu0 0.0
        %2206 = vmatpush2.xpose.msra.mxu0 0.0
        %2207 = vmatprep.mubr.f32.mxu0 0.0
        %v2208 = vand.u32 %v293, 4294901760
        %2209 = vmatmul.mubr.f32.gmra.mxu0 %v2208
        %v2210 = vpop.f32.mrf.mxu0
        %v2211 = vadd.f32 %v2076, %v2210
        %v2212 = vpop.f32.mrf.mxu0
        %2213 = vmatprep.mubr.f32.mxu0 0.0
        %v2214 = vand.u32 %v294, 4294901760
        %2215 = vmatmul.mubr.f32.gmra.mxu0 %v2214
        %v2216 = vpop.f32.mrf.mxu0
        %v2217 = vadd.f32 %v2084, %v2216
        %v2218 = vpop.f32.mrf.mxu0
        %2219 = vmatprep.mubr.f32.mxu0 0.0
        %v2220 = vand.u32 %v295, 4294901760
        %2221 = vmatmul.mubr.f32.gmra.mxu0 %v2220
        %v2222 = vpop.f32.mrf.mxu0
        %v2223 = vadd.f32 %v2092, %v2222
        %v2224 = vpop.f32.mrf.mxu0
        %2225 = vdwg.mxu0
        %2226 = vmatprep.subr.mxu0 0.0
        %v2227 = vand.u32 %v1597, 4294901760
        %2228 = vmatpush1.xpose.msra.mxu0 %v2227
        %2229 = vmatprep.subr.mxu0 0.0
        %v2230 = vand.u32 %v1596, 4294901760
        %2231 = vmatpush1.xpose.msra.mxu0 %v2230
        %2232 = vmatprep.subr.mxu0 0.0
        %v2233 = vand.u32 %v1595, 4294901760
        %2234 = vmatpush1.xpose.msra.mxu0 %v2233
        %2235 = vmatprep.subr.mxu0 0.0
        %v2236 = vand.u32 %v1594, 4294901760
        %2237 = vmatpush1.xpose.msra.mxu0 %v2236
        %2238 = vmatprep.subr.mxu0 0.0
        %v2239 = vand.u32 %v1593, 4294901760
        %2240 = vmatpush1.xpose.msra.mxu0 %v2239
        %2241 = vmatprep.subr.mxu0 0.0
        %v2242 = vand.u32 %v1592, 4294901760
        %2243 = vmatpush1.xpose.msra.mxu0 %v2242
        %2244 = vmatprep.subr.mxu0 0.0
        %v2245 = vand.u32 %v1591, 4294901760
        %2246 = vmatpush1.xpose.msra.mxu0 %v2245
        %2247 = vmatprep.subr.mxu0 0.0
        %v2248 = vand.u32 %v1590, 4294901760
        %2249 = vmatpush1.xpose.msra.mxu0 %v2248
        %2250 = vmatprep.subr.mxu0 0.0
        %v2251 = vand.u32 %v1589, 4294901760
        %2252 = vmatpush1.xpose.msra.mxu0 %v2251
        %2253 = vmatprep.subr.mxu0 0.0
        %v2254 = vand.u32 %v1588, 4294901760
        %2255 = vmatpush1.xpose.msra.mxu0 %v2254
        %2256 = vmatprep.subr.mxu0 0.0
        %v2257 = vand.u32 %v1587, 4294901760
        %2258 = vmatpush1.xpose.msra.mxu0 %v2257
        %2259 = vmatprep.subr.mxu0 0.0
        %v2260 = vand.u32 %v1586, 4294901760
        %2261 = vmatpush1.xpose.msra.mxu0 %v2260
        %2262 = vmatprep.subr.mxu0 0.0
        %v2263 = vand.u32 %v1585, 4294901760
        %2264 = vmatpush1.xpose.msra.mxu0 %v2263
        %2265 = vmatprep.subr.mxu0 0.0
        %v2266 = vand.u32 %v1584, 4294901760
        %2267 = vmatpush1.xpose.msra.mxu0 %v2266
        %2268 = vmatprep.subr.mxu0 0.0
        %v2269 = vand.u32 %v1583, 4294901760
        %2270 = vmatpush1.xpose.msra.mxu0 %v2269
        %2271 = vmatprep.subr.mxu0 0.0
        %v2272 = vand.u32 %v1582, 4294901760
        %2273 = vmatpush1.xpose.msra.mxu0 %v2272
        %2274 = vmatprep.subr.mxu0 0.0
        %2275 = vmatpush2.xpose.msra.mxu0 0.0
        %2276 = vmatprep.subr.mxu0 0.0
        %2277 = vmatpush2.xpose.msra.mxu0 0.0
        %2278 = vmatprep.subr.mxu0 0.0
        %2279 = vmatpush2.xpose.msra.mxu0 0.0
        %2280 = vmatprep.subr.mxu0 0.0
        %2281 = vmatpush2.xpose.msra.mxu0 0.0
        %2282 = vmatprep.subr.mxu0 0.0
        %2283 = vmatpush2.xpose.msra.mxu0 0.0
        %2284 = vmatprep.subr.mxu0 0.0
        %2285 = vmatpush2.xpose.msra.mxu0 0.0
        %2286 = vmatprep.subr.mxu0 0.0
        %2287 = vmatpush2.xpose.msra.mxu0 0.0
        %2288 = vmatprep.subr.mxu0 0.0
        %2289 = vmatpush2.xpose.msra.mxu0 0.0
        %2290 = vmatprep.subr.mxu0 0.0
        %2291 = vmatpush2.xpose.msra.mxu0 0.0
        %2292 = vmatprep.subr.mxu0 0.0
        %2293 = vmatpush2.xpose.msra.mxu0 0.0
        %2294 = vmatprep.subr.mxu0 0.0
        %2295 = vmatpush2.xpose.msra.mxu0 0.0
        %2296 = vmatprep.subr.mxu0 0.0
        %2297 = vmatpush2.xpose.msra.mxu0 0.0
        %2298 = vmatprep.subr.mxu0 0.0
        %2299 = vmatpush2.xpose.msra.mxu0 0.0
        %2300 = vmatprep.subr.mxu0 0.0
        %2301 = vmatpush2.xpose.msra.mxu0 0.0
        %2302 = vmatprep.subr.mxu0 0.0
        %2303 = vmatpush2.xpose.msra.mxu0 0.0
        %2304 = vmatprep.subr.mxu0 0.0
        %2305 = vmatpush2.xpose.msra.mxu0 0.0
        %2306 = vmatprep.mubr.f32.mxu0 0.0
        %v2307 = vand.u32 %v293, 4294901760
        %2308 = vmatmul.mubr.f32.gmra.mxu0 %v2307
        %v2309 = vpop.f32.mrf.mxu0
        %v2310 = vadd.f32 %v2211, %v2309
        %v2311 = vpop.f32.mrf.mxu0
        %2312 = vmatprep.mubr.f32.mxu0 0.0
        %v2313 = vand.u32 %v294, 4294901760
        %2314 = vmatmul.mubr.f32.gmra.mxu0 %v2313
        %v2315 = vpop.f32.mrf.mxu0
        %v2316 = vadd.f32 %v2217, %v2315
        %v2317 = vpop.f32.mrf.mxu0
        %2318 = vmatprep.mubr.f32.mxu0 0.0
        %v2319 = vand.u32 %v295, 4294901760
        %2320 = vmatmul.mubr.f32.gmra.mxu0 %v2319
        %v2321 = vpop.f32.mrf.mxu0
        %v2322 = vadd.f32 %v2223, %v2321
        %v2323 = vpop.f32.mrf.mxu0
        %2324 = vdwg.mxu0
        %2325 = vst [vmem:[%s249] sm:$0xff] %v2310
        %2326 = vst [vmem:[%s249 + $0x8] sm:$0xff] %v2316
        %2327 = vst [vmem:[%s249 + $0x10] sm:$0xff] %v2322
        %v2328 = vadd.f32 %v2322, 0.5
        %v2329 = vcvt.f32.s32.to.zero.pseudo %v2328
        %v2330 = vsel %vm1550, 3.4028235e+38, %v1486
        %v2331 = vsel %vm1551, 3.4028235e+38, %v1487
        %v2332 = vsel %vm1552, 3.4028235e+38, %v1488
        %v2333 = vsel %vm1553, 3.4028235e+38, %v1489
        %v2334 = vsel %vm1554, 3.4028235e+38, %v1490
        %v2335 = vsel %vm1555, 3.4028235e+38, %v1491
        %v2336 = vsel %vm1556, 3.4028235e+38, %v1492
        %v2337 = vsel %vm1557, 3.4028235e+38, %v1493
        %v2338 = vsel %vm1558, 3.4028235e+38, %v1494
        %v2339 = vsel %vm1559, 3.4028235e+38, %v1495
        %v2340 = vsel %vm1560, 3.4028235e+38, %v1496
        %v2341 = vsel %vm1561, 3.4028235e+38, %v1497
        %v2342 = vsel %vm1562, 3.4028235e+38, %v1498
        %v2343 = vsel %vm1563, 3.4028235e+38, %v1499
        %v2344 = vsel %vm1564, 3.4028235e+38, %v1500
        %v2345 = vsel %vm1565, 3.4028235e+38, %v1501
        %2346 = vmin.xlane.f32.xlu0 %v2330
        %v2347 = vpop.xlane.xlu0 %2346
        %2348 = vmin.xlane.f32.xlu0 %v2331
        %v2349 = vpop.xlane.xlu0 %2348
        %2350 = vmin.xlane.f32.xlu0 %v2332
        %v2351 = vpop.xlane.xlu0 %2350
        %2352 = vmin.xlane.f32.xlu0 %v2333
        %v2353 = vpop.xlane.xlu0 %2352
        %2354 = vmin.xlane.f32.xlu0 %v2334
        %v2355 = vpop.xlane.xlu0 %2354
        %2356 = vmin.xlane.f32.xlu0 %v2335
        %v2357 = vpop.xlane.xlu0 %2356
        %2358 = vmin.xlane.f32.xlu0 %v2336
        %v2359 = vpop.xlane.xlu0 %2358
        %2360 = vmin.xlane.f32.xlu0 %v2337
        %v2361 = vpop.xlane.xlu0 %2360
        %2362 = vmin.xlane.f32.xlu0 %v2338
        %v2363 = vpop.xlane.xlu0 %2362
        %2364 = vmin.xlane.f32.xlu0 %v2339
        %v2365 = vpop.xlane.xlu0 %2364
        %2366 = vmin.xlane.f32.xlu0 %v2340
        %v2367 = vpop.xlane.xlu0 %2366
        %2368 = vmin.xlane.f32.xlu0 %v2341
        %v2369 = vpop.xlane.xlu0 %2368
        %2370 = vmin.xlane.f32.xlu0 %v2342
        %v2371 = vpop.xlane.xlu0 %2370
        %2372 = vmin.xlane.f32.xlu0 %v2343
        %v2373 = vpop.xlane.xlu0 %2372
        %2374 = vmin.xlane.f32.xlu0 %v2344
        %v2375 = vpop.xlane.xlu0 %2374
        %2376 = vmin.xlane.f32.xlu0 %v2345
        %v2377 = vpop.xlane.xlu0 %2376
        %vm2378 = vcmp.eq.f32.partialorder %v2330, %v2347
        %vm2379 = vcmp.eq.f32.partialorder %v2331, %v2349
        %vm2380 = vcmp.eq.f32.partialorder %v2332, %v2351
        %vm2381 = vcmp.eq.f32.partialorder %v2333, %v2353
        %vm2382 = vcmp.eq.f32.partialorder %v2334, %v2355
        %vm2383 = vcmp.eq.f32.partialorder %v2335, %v2357
        %vm2384 = vcmp.eq.f32.partialorder %v2336, %v2359
        %vm2385 = vcmp.eq.f32.partialorder %v2337, %v2361
        %vm2386 = vcmp.eq.f32.partialorder %v2338, %v2363
        %vm2387 = vcmp.eq.f32.partialorder %v2339, %v2365
        %vm2388 = vcmp.eq.f32.partialorder %v2340, %v2367
        %vm2389 = vcmp.eq.f32.partialorder %v2341, %v2369
        %vm2390 = vcmp.eq.f32.partialorder %v2342, %v2371
        %vm2391 = vcmp.eq.f32.partialorder %v2343, %v2373
        %vm2392 = vcmp.eq.f32.partialorder %v2344, %v2375
        %vm2393 = vcmp.eq.f32.partialorder %v2345, %v2377
        %v2394 = vsel %vm2378, 1, 0
        %v2395 = vsel %vm2379, 1, 0
        %v2396 = vsel %vm2380, 1, 0
        %v2397 = vsel %vm2381, 1, 0
        %v2398 = vsel %vm2382, 1, 0
        %v2399 = vsel %vm2383, 1, 0
        %v2400 = vsel %vm2384, 1, 0
        %v2401 = vsel %vm2385, 1, 0
        %v2402 = vsel %vm2386, 1, 0
        %v2403 = vsel %vm2387, 1, 0
        %v2404 = vsel %vm2388, 1, 0
        %v2405 = vsel %vm2389, 1, 0
        %v2406 = vsel %vm2390, 1, 0
        %v2407 = vsel %vm2391, 1, 0
        %v2408 = vsel %vm2392, 1, 0
        %v2409 = vsel %vm2393, 1, 0
        %v2410 = vcvt.s32.f32 %v2394
        %v2411 = vcvt.s32.f32 %v2395
        %v2412 = vcvt.s32.f32 %v2396
        %v2413 = vcvt.s32.f32 %v2397
        %v2414 = vcvt.s32.f32 %v2398
        %v2415 = vcvt.s32.f32 %v2399
        %v2416 = vcvt.s32.f32 %v2400
        %v2417 = vcvt.s32.f32 %v2401
        %v2418 = vcvt.s32.f32 %v2402
        %v2419 = vcvt.s32.f32 %v2403
        %v2420 = vcvt.s32.f32 %v2404
        %v2421 = vcvt.s32.f32 %v2405
        %v2422 = vcvt.s32.f32 %v2406
        %v2423 = vcvt.s32.f32 %v2407
        %v2424 = vcvt.s32.f32 %v2408
        %v2425 = vcvt.s32.f32 %v2409
        %2426 = vmatprep.subr.mxu0 0.0
        %v2427 = vand.u32 %v2425, 4294901760
        %2428 = vmatpush1.xpose.msra.mxu0 %v2427
        %2429 = vmatprep.subr.mxu0 0.0
        %v2430 = vand.u32 %v2424, 4294901760
        %2431 = vmatpush1.xpose.msra.mxu0 %v2430
        %2432 = vmatprep.subr.mxu0 0.0
        %v2433 = vand.u32 %v2423, 4294901760
        %2434 = vmatpush1.xpose.msra.mxu0 %v2433
        %2435 = vmatprep.subr.mxu0 0.0
        %v2436 = vand.u32 %v2422, 4294901760
        %2437 = vmatpush1.xpose.msra.mxu0 %v2436
        %2438 = vmatprep.subr.mxu0 0.0
        %v2439 = vand.u32 %v2421, 4294901760
        %2440 = vmatpush1.xpose.msra.mxu0 %v2439
        %2441 = vmatprep.subr.mxu0 0.0
        %v2442 = vand.u32 %v2420, 4294901760
        %2443 = vmatpush1.xpose.msra.mxu0 %v2442
        %2444 = vmatprep.subr.mxu0 0.0
        %v2445 = vand.u32 %v2419, 4294901760
        %2446 = vmatpush1.xpose.msra.mxu0 %v2445
        %2447 = vmatprep.subr.mxu0 0.0
        %v2448 = vand.u32 %v2418, 4294901760
        %2449 = vmatpush1.xpose.msra.mxu0 %v2448
        %2450 = vmatprep.subr.mxu0 0.0
        %v2451 = vand.u32 %v2417, 4294901760
        %2452 = vmatpush1.xpose.msra.mxu0 %v2451
        %2453 = vmatprep.subr.mxu0 0.0
        %v2454 = vand.u32 %v2416, 4294901760
        %2455 = vmatpush1.xpose.msra.mxu0 %v2454
        %2456 = vmatprep.subr.mxu0 0.0
        %v2457 = vand.u32 %v2415, 4294901760
        %2458 = vmatpush1.xpose.msra.mxu0 %v2457
        %2459 = vmatprep.subr.mxu0 0.0
        %v2460 = vand.u32 %v2414, 4294901760
        %2461 = vmatpush1.xpose.msra.mxu0 %v2460
        %2462 = vmatprep.subr.mxu0 0.0
        %v2463 = vand.u32 %v2413, 4294901760
        %2464 = vmatpush1.xpose.msra.mxu0 %v2463
        %2465 = vmatprep.subr.mxu0 0.0
        %v2466 = vand.u32 %v2412, 4294901760
        %2467 = vmatpush1.xpose.msra.mxu0 %v2466
        %2468 = vmatprep.subr.mxu0 0.0
        %v2469 = vand.u32 %v2411, 4294901760
        %2470 = vmatpush1.xpose.msra.mxu0 %v2469
        %2471 = vmatprep.subr.mxu0 0.0
        %v2472 = vand.u32 %v2410, 4294901760
        %2473 = vmatpush1.xpose.msra.mxu0 %v2472
        %2474 = vmatprep.subr.mxu0 0.0
        %2475 = vmatpush2.xpose.msra.mxu0 0.0
        %2476 = vmatprep.subr.mxu0 0.0
        %2477 = vmatpush2.xpose.msra.mxu0 0.0
        %2478 = vmatprep.subr.mxu0 0.0
        %2479 = vmatpush2.xpose.msra.mxu0 0.0
        %2480 = vmatprep.subr.mxu0 0.0
        %2481 = vmatpush2.xpose.msra.mxu0 0.0
        %2482 = vmatprep.subr.mxu0 0.0
        %2483 = vmatpush2.xpose.msra.mxu0 0.0
        %2484 = vmatprep.subr.mxu0 0.0
        %2485 = vmatpush2.xpose.msra.mxu0 0.0
        %2486 = vmatprep.subr.mxu0 0.0
        %2487 = vmatpush2.xpose.msra.mxu0 0.0
        %2488 = vmatprep.subr.mxu0 0.0
        %2489 = vmatpush2.xpose.msra.mxu0 0.0
        %2490 = vmatprep.subr.mxu0 0.0
        %2491 = vmatpush2.xpose.msra.mxu0 0.0
        %2492 = vmatprep.subr.mxu0 0.0
        %2493 = vmatpush2.xpose.msra.mxu0 0.0
        %2494 = vmatprep.subr.mxu0 0.0
        %2495 = vmatpush2.xpose.msra.mxu0 0.0
        %2496 = vmatprep.subr.mxu0 0.0
        %2497 = vmatpush2.xpose.msra.mxu0 0.0
        %2498 = vmatprep.subr.mxu0 0.0
        %2499 = vmatpush2.xpose.msra.mxu0 0.0
        %2500 = vmatprep.subr.mxu0 0.0
        %2501 = vmatpush2.xpose.msra.mxu0 0.0
        %2502 = vmatprep.subr.mxu0 0.0
        %2503 = vmatpush2.xpose.msra.mxu0 0.0
        %2504 = vmatprep.subr.mxu0 0.0
        %2505 = vmatpush2.xpose.msra.mxu0 0.0
        %2506 = vmatprep.mubr.f32.mxu0 0.0
        %v2507 = vand.u32 %v293, 4294901760
        %v2508 = vsub.f32 %v293, %v2507
        %v2509 = vand.u32 %v2508, 4294901760
        %v2510 = vsub.f32 %v2508, %v2509
        %v2511 = vand.u32 %v2510, 4294901760
        %2512 = vmatmul.mubr.f32.gmra.mxu0 %v2511
        %v2513 = vpop.f32.mrf.mxu0
        %v2514 = vadd.f32 0.0, %v2513
        %v2515 = vpop.f32.mrf.mxu0
        %2516 = vmatprep.mubr.f32.mxu0 0.0
        %v2517 = vand.u32 %v294, 4294901760
        %v2518 = vsub.f32 %v294, %v2517
        %v2519 = vand.u32 %v2518, 4294901760
        %v2520 = vsub.f32 %v2518, %v2519
        %v2521 = vand.u32 %v2520, 4294901760
        %2522 = vmatmul.mubr.f32.gmra.mxu0 %v2521
        %v2523 = vpop.f32.mrf.mxu0
        %v2524 = vadd.f32 0.0, %v2523
        %v2525 = vpop.f32.mrf.mxu0
        %2526 = vmatprep.mubr.f32.mxu0 0.0
        %v2527 = vand.u32 %v295, 4294901760
        %v2528 = vsub.f32 %v295, %v2527
        %v2529 = vand.u32 %v2528, 4294901760
        %v2530 = vsub.f32 %v2528, %v2529
        %v2531 = vand.u32 %v2530, 4294901760
        %2532 = vmatmul.mubr.f32.gmra.mxu0 %v2531
        %v2533 = vpop.f32.mrf.mxu0
        %v2534 = vadd.f32 0.0, %v2533
        %v2535 = vpop.f32.mrf.mxu0
        %2536 = vdwg.mxu0
        %2537 = vmatprep.subr.mxu0 0.0
        %v2538 = vand.u32 %v2425, 4294901760
        %v2539 = vsub.f32 %v2425, %v2538
        %v2540 = vand.u32 %v2539, 4294901760
        %v2541 = vsub.f32 %v2539, %v2540
        %v2542 = vand.u32 %v2541, 4294901760
        %2543 = vmatpush1.xpose.msra.mxu0 %v2542
        %2544 = vmatprep.subr.mxu0 0.0
        %v2545 = vand.u32 %v2424, 4294901760
        %v2546 = vsub.f32 %v2424, %v2545
        %v2547 = vand.u32 %v2546, 4294901760
        %v2548 = vsub.f32 %v2546, %v2547
        %v2549 = vand.u32 %v2548, 4294901760
        %2550 = vmatpush1.xpose.msra.mxu0 %v2549
        %2551 = vmatprep.subr.mxu0 0.0
        %v2552 = vand.u32 %v2423, 4294901760
        %v2553 = vsub.f32 %v2423, %v2552
        %v2554 = vand.u32 %v2553, 4294901760
        %v2555 = vsub.f32 %v2553, %v2554
        %v2556 = vand.u32 %v2555, 4294901760
        %2557 = vmatpush1.xpose.msra.mxu0 %v2556
        %2558 = vmatprep.subr.mxu0 0.0
        %v2559 = vand.u32 %v2422, 4294901760
        %v2560 = vsub.f32 %v2422, %v2559
        %v2561 = vand.u32 %v2560, 4294901760
        %v2562 = vsub.f32 %v2560, %v2561
        %v2563 = vand.u32 %v2562, 4294901760
        %2564 = vmatpush1.xpose.msra.mxu0 %v2563
        %2565 = vmatprep.subr.mxu0 0.0
        %v2566 = vand.u32 %v2421, 4294901760
        %v2567 = vsub.f32 %v2421, %v2566
        %v2568 = vand.u32 %v2567, 4294901760
        %v2569 = vsub.f32 %v2567, %v2568
        %v2570 = vand.u32 %v2569, 4294901760
        %2571 = vmatpush1.xpose.msra.mxu0 %v2570
        %2572 = vmatprep.subr.mxu0 0.0
        %v2573 = vand.u32 %v2420, 4294901760
        %v2574 = vsub.f32 %v2420, %v2573
        %v2575 = vand.u32 %v2574, 4294901760
        %v2576 = vsub.f32 %v2574, %v2575
        %v2577 = vand.u32 %v2576, 4294901760
        %2578 = vmatpush1.xpose.msra.mxu0 %v2577
        %2579 = vmatprep.subr.mxu0 0.0
        %v2580 = vand.u32 %v2419, 4294901760
        %v2581 = vsub.f32 %v2419, %v2580
        %v2582 = vand.u32 %v2581, 4294901760
        %v2583 = vsub.f32 %v2581, %v2582
        %v2584 = vand.u32 %v2583, 4294901760
        %2585 = vmatpush1.xpose.msra.mxu0 %v2584
        %2586 = vmatprep.subr.mxu0 0.0
        %v2587 = vand.u32 %v2418, 4294901760
        %v2588 = vsub.f32 %v2418, %v2587
        %v2589 = vand.u32 %v2588, 4294901760
        %v2590 = vsub.f32 %v2588, %v2589
        %v2591 = vand.u32 %v2590, 4294901760
        %2592 = vmatpush1.xpose.msra.mxu0 %v2591
        %2593 = vmatprep.subr.mxu0 0.0
        %v2594 = vand.u32 %v2417, 4294901760
        %v2595 = vsub.f32 %v2417, %v2594
        %v2596 = vand.u32 %v2595, 4294901760
        %v2597 = vsub.f32 %v2595, %v2596
        %v2598 = vand.u32 %v2597, 4294901760
        %2599 = vmatpush1.xpose.msra.mxu0 %v2598
        %2600 = vmatprep.subr.mxu0 0.0
        %v2601 = vand.u32 %v2416, 4294901760
        %v2602 = vsub.f32 %v2416, %v2601
        %v2603 = vand.u32 %v2602, 4294901760
        %v2604 = vsub.f32 %v2602, %v2603
        %v2605 = vand.u32 %v2604, 4294901760
        %2606 = vmatpush1.xpose.msra.mxu0 %v2605
        %2607 = vmatprep.subr.mxu0 0.0
        %v2608 = vand.u32 %v2415, 4294901760
        %v2609 = vsub.f32 %v2415, %v2608
        %v2610 = vand.u32 %v2609, 4294901760
        %v2611 = vsub.f32 %v2609, %v2610
        %v2612 = vand.u32 %v2611, 4294901760
        %2613 = vmatpush1.xpose.msra.mxu0 %v2612
        %2614 = vmatprep.subr.mxu0 0.0
        %v2615 = vand.u32 %v2414, 4294901760
        %v2616 = vsub.f32 %v2414, %v2615
        %v2617 = vand.u32 %v2616, 4294901760
        %v2618 = vsub.f32 %v2616, %v2617
        %v2619 = vand.u32 %v2618, 4294901760
        %2620 = vmatpush1.xpose.msra.mxu0 %v2619
        %2621 = vmatprep.subr.mxu0 0.0
        %v2622 = vand.u32 %v2413, 4294901760
        %v2623 = vsub.f32 %v2413, %v2622
        %v2624 = vand.u32 %v2623, 4294901760
        %v2625 = vsub.f32 %v2623, %v2624
        %v2626 = vand.u32 %v2625, 4294901760
        %2627 = vmatpush1.xpose.msra.mxu0 %v2626
        %2628 = vmatprep.subr.mxu0 0.0
        %v2629 = vand.u32 %v2412, 4294901760
        %v2630 = vsub.f32 %v2412, %v2629
        %v2631 = vand.u32 %v2630, 4294901760
        %v2632 = vsub.f32 %v2630, %v2631
        %v2633 = vand.u32 %v2632, 4294901760
        %2634 = vmatpush1.xpose.msra.mxu0 %v2633
        %2635 = vmatprep.subr.mxu0 0.0
        %v2636 = vand.u32 %v2411, 4294901760
        %v2637 = vsub.f32 %v2411, %v2636
        %v2638 = vand.u32 %v2637, 4294901760
        %v2639 = vsub.f32 %v2637, %v2638
        %v2640 = vand.u32 %v2639, 4294901760
        %2641 = vmatpush1.xpose.msra.mxu0 %v2640
        %2642 = vmatprep.subr.mxu0 0.0
        %v2643 = vand.u32 %v2410, 4294901760
        %v2644 = vsub.f32 %v2410, %v2643
        %v2645 = vand.u32 %v2644, 4294901760
        %v2646 = vsub.f32 %v2644, %v2645
        %v2647 = vand.u32 %v2646, 4294901760
        %2648 = vmatpush1.xpose.msra.mxu0 %v2647
        %2649 = vmatprep.subr.mxu0 0.0
        %2650 = vmatpush2.xpose.msra.mxu0 0.0
        %2651 = vmatprep.subr.mxu0 0.0
        %2652 = vmatpush2.xpose.msra.mxu0 0.0
        %2653 = vmatprep.subr.mxu0 0.0
        %2654 = vmatpush2.xpose.msra.mxu0 0.0
        %2655 = vmatprep.subr.mxu0 0.0
        %2656 = vmatpush2.xpose.msra.mxu0 0.0
        %2657 = vmatprep.subr.mxu0 0.0
        %2658 = vmatpush2.xpose.msra.mxu0 0.0
        %2659 = vmatprep.subr.mxu0 0.0
        %2660 = vmatpush2.xpose.msra.mxu0 0.0
        %2661 = vmatprep.subr.mxu0 0.0
        %2662 = vmatpush2.xpose.msra.mxu0 0.0
        %2663 = vmatprep.subr.mxu0 0.0
        %2664 = vmatpush2.xpose.msra.mxu0 0.0
        %2665 = vmatprep.subr.mxu0 0.0
        %2666 = vmatpush2.xpose.msra.mxu0 0.0
        %2667 = vmatprep.subr.mxu0 0.0
        %2668 = vmatpush2.xpose.msra.mxu0 0.0
        %2669 = vmatprep.subr.mxu0 0.0
        %2670 = vmatpush2.xpose.msra.mxu0 0.0
        %2671 = vmatprep.subr.mxu0 0.0
        %2672 = vmatpush2.xpose.msra.mxu0 0.0
        %2673 = vmatprep.subr.mxu0 0.0
        %2674 = vmatpush2.xpose.msra.mxu0 0.0
        %2675 = vmatprep.subr.mxu0 0.0
        %2676 = vmatpush2.xpose.msra.mxu0 0.0
        %2677 = vmatprep.subr.mxu0 0.0
        %2678 = vmatpush2.xpose.msra.mxu0 0.0
        %2679 = vmatprep.subr.mxu0 0.0
        %2680 = vmatpush2.xpose.msra.mxu0 0.0
        %2681 = vmatprep.mubr.f32.mxu0 0.0
        %v2682 = vand.u32 %v293, 4294901760
        %2683 = vmatmul.mubr.f32.gmra.mxu0 %v2682
        %v2684 = vpop.f32.mrf.mxu0
        %v2685 = vadd.f32 %v2514, %v2684
        %v2686 = vpop.f32.mrf.mxu0
        %2687 = vmatprep.mubr.f32.mxu0 0.0
        %v2688 = vand.u32 %v294, 4294901760
        %2689 = vmatmul.mubr.f32.gmra.mxu0 %v2688
        %v2690 = vpop.f32.mrf.mxu0
        %v2691 = vadd.f32 %v2524, %v2690
        %v2692 = vpop.f32.mrf.mxu0
        %2693 = vmatprep.mubr.f32.mxu0 0.0
        %v2694 = vand.u32 %v295, 4294901760
        %2695 = vmatmul.mubr.f32.gmra.mxu0 %v2694
        %v2696 = vpop.f32.mrf.mxu0
        %v2697 = vadd.f32 %v2534, %v2696
        %v2698 = vpop.f32.mrf.mxu0
        %2699 = vdwg.mxu0
        %2700 = vmatprep.subr.mxu0 0.0
        %v2701 = vand.u32 %v2425, 4294901760
        %v2702 = vsub.f32 %v2425, %v2701
        %2703 = vmatpush1.xpose.msra.mxu0 %v2702
        %2704 = vmatprep.subr.mxu0 0.0
        %v2705 = vand.u32 %v2424, 4294901760
        %v2706 = vsub.f32 %v2424, %v2705
        %2707 = vmatpush1.xpose.msra.mxu0 %v2706
        %2708 = vmatprep.subr.mxu0 0.0
        %v2709 = vand.u32 %v2423, 4294901760
        %v2710 = vsub.f32 %v2423, %v2709
        %2711 = vmatpush1.xpose.msra.mxu0 %v2710
        %2712 = vmatprep.subr.mxu0 0.0
        %v2713 = vand.u32 %v2422, 4294901760
        %v2714 = vsub.f32 %v2422, %v2713
        %2715 = vmatpush1.xpose.msra.mxu0 %v2714
        %2716 = vmatprep.subr.mxu0 0.0
        %v2717 = vand.u32 %v2421, 4294901760
        %v2718 = vsub.f32 %v2421, %v2717
        %2719 = vmatpush1.xpose.msra.mxu0 %v2718
        %2720 = vmatprep.subr.mxu0 0.0
        %v2721 = vand.u32 %v2420, 4294901760
        %v2722 = vsub.f32 %v2420, %v2721
        %2723 = vmatpush1.xpose.msra.mxu0 %v2722
        %2724 = vmatprep.subr.mxu0 0.0
        %v2725 = vand.u32 %v2419, 4294901760
        %v2726 = vsub.f32 %v2419, %v2725
        %2727 = vmatpush1.xpose.msra.mxu0 %v2726
        %2728 = vmatprep.subr.mxu0 0.0
        %v2729 = vand.u32 %v2418, 4294901760
        %v2730 = vsub.f32 %v2418, %v2729
        %2731 = vmatpush1.xpose.msra.mxu0 %v2730
        %2732 = vmatprep.subr.mxu0 0.0
        %v2733 = vand.u32 %v2417, 4294901760
        %v2734 = vsub.f32 %v2417, %v2733
        %2735 = vmatpush1.xpose.msra.mxu0 %v2734
        %2736 = vmatprep.subr.mxu0 0.0
        %v2737 = vand.u32 %v2416, 4294901760
        %v2738 = vsub.f32 %v2416, %v2737
        %2739 = vmatpush1.xpose.msra.mxu0 %v2738
        %2740 = vmatprep.subr.mxu0 0.0
        %v2741 = vand.u32 %v2415, 4294901760
        %v2742 = vsub.f32 %v2415, %v2741
        %2743 = vmatpush1.xpose.msra.mxu0 %v2742
        %2744 = vmatprep.subr.mxu0 0.0
        %v2745 = vand.u32 %v2414, 4294901760
        %v2746 = vsub.f32 %v2414, %v2745
        %2747 = vmatpush1.xpose.msra.mxu0 %v2746
        %2748 = vmatprep.subr.mxu0 0.0
        %v2749 = vand.u32 %v2413, 4294901760
        %v2750 = vsub.f32 %v2413, %v2749
        %2751 = vmatpush1.xpose.msra.mxu0 %v2750
        %2752 = vmatprep.subr.mxu0 0.0
        %v2753 = vand.u32 %v2412, 4294901760
        %v2754 = vsub.f32 %v2412, %v2753
        %2755 = vmatpush1.xpose.msra.mxu0 %v2754
        %2756 = vmatprep.subr.mxu0 0.0
        %v2757 = vand.u32 %v2411, 4294901760
        %v2758 = vsub.f32 %v2411, %v2757
        %2759 = vmatpush1.xpose.msra.mxu0 %v2758
        %2760 = vmatprep.subr.mxu0 0.0
        %v2761 = vand.u32 %v2410, 4294901760
        %v2762 = vsub.f32 %v2410, %v2761
        %2763 = vmatpush1.xpose.msra.mxu0 %v2762
        %2764 = vmatprep.subr.mxu0 0.0
        %2765 = vmatpush2.xpose.msra.mxu0 0.0
        %2766 = vmatprep.subr.mxu0 0.0
        %2767 = vmatpush2.xpose.msra.mxu0 0.0
        %2768 = vmatprep.subr.mxu0 0.0
        %2769 = vmatpush2.xpose.msra.mxu0 0.0
        %2770 = vmatprep.subr.mxu0 0.0
        %2771 = vmatpush2.xpose.msra.mxu0 0.0
        %2772 = vmatprep.subr.mxu0 0.0
        %2773 = vmatpush2.xpose.msra.mxu0 0.0
        %2774 = vmatprep.subr.mxu0 0.0
        %2775 = vmatpush2.xpose.msra.mxu0 0.0
        %2776 = vmatprep.subr.mxu0 0.0
        %2777 = vmatpush2.xpose.msra.mxu0 0.0
        %2778 = vmatprep.subr.mxu0 0.0
        %2779 = vmatpush2.xpose.msra.mxu0 0.0
        %2780 = vmatprep.subr.mxu0 0.0
        %2781 = vmatpush2.xpose.msra.mxu0 0.0
        %2782 = vmatprep.subr.mxu0 0.0
        %2783 = vmatpush2.xpose.msra.mxu0 0.0
        %2784 = vmatprep.subr.mxu0 0.0
        %2785 = vmatpush2.xpose.msra.mxu0 0.0
        %2786 = vmatprep.subr.mxu0 0.0
        %2787 = vmatpush2.xpose.msra.mxu0 0.0
        %2788 = vmatprep.subr.mxu0 0.0
        %2789 = vmatpush2.xpose.msra.mxu0 0.0
        %2790 = vmatprep.subr.mxu0 0.0
        %2791 = vmatpush2.xpose.msra.mxu0 0.0
        %2792 = vmatprep.subr.mxu0 0.0
        %2793 = vmatpush2.xpose.msra.mxu0 0.0
        %2794 = vmatprep.subr.mxu0 0.0
        %2795 = vmatpush2.xpose.msra.mxu0 0.0
        %2796 = vmatprep.mubr.f32.mxu0 0.0
        %v2797 = vand.u32 %v293, 4294901760
        %v2798 = vsub.f32 %v293, %v2797
        %2799 = vmatmul.mubr.f32.gmra.mxu0 %v2798
        %v2800 = vpop.f32.mrf.mxu0
        %v2801 = vadd.f32 %v2685, %v2800
        %v2802 = vpop.f32.mrf.mxu0
        %2803 = vmatprep.mubr.f32.mxu0 0.0
        %v2804 = vand.u32 %v294, 4294901760
        %v2805 = vsub.f32 %v294, %v2804
        %2806 = vmatmul.mubr.f32.gmra.mxu0 %v2805
        %v2807 = vpop.f32.mrf.mxu0
        %v2808 = vadd.f32 %v2691, %v2807
        %v2809 = vpop.f32.mrf.mxu0
        %2810 = vmatprep.mubr.f32.mxu0 0.0
        %v2811 = vand.u32 %v295, 4294901760
        %v2812 = vsub.f32 %v295, %v2811
        %2813 = vmatmul.mubr.f32.gmra.mxu0 %v2812
        %v2814 = vpop.f32.mrf.mxu0
        %v2815 = vadd.f32 %v2697, %v2814
        %v2816 = vpop.f32.mrf.mxu0
        %2817 = vdwg.mxu0
        %2818 = vmatprep.subr.mxu0 0.0
        %v2819 = vand.u32 %v2425, 4294901760
        %2820 = vmatpush1.xpose.msra.mxu0 %v2819
        %2821 = vmatprep.subr.mxu0 0.0
        %v2822 = vand.u32 %v2424, 4294901760
        %2823 = vmatpush1.xpose.msra.mxu0 %v2822
        %2824 = vmatprep.subr.mxu0 0.0
        %v2825 = vand.u32 %v2423, 4294901760
        %2826 = vmatpush1.xpose.msra.mxu0 %v2825
        %2827 = vmatprep.subr.mxu0 0.0
        %v2828 = vand.u32 %v2422, 4294901760
        %2829 = vmatpush1.xpose.msra.mxu0 %v2828
        %2830 = vmatprep.subr.mxu0 0.0
        %v2831 = vand.u32 %v2421, 4294901760
        %2832 = vmatpush1.xpose.msra.mxu0 %v2831
        %2833 = vmatprep.subr.mxu0 0.0
        %v2834 = vand.u32 %v2420, 4294901760
        %2835 = vmatpush1.xpose.msra.mxu0 %v2834
        %2836 = vmatprep.subr.mxu0 0.0
        %v2837 = vand.u32 %v2419, 4294901760
        %2838 = vmatpush1.xpose.msra.mxu0 %v2837
        %2839 = vmatprep.subr.mxu0 0.0
        %v2840 = vand.u32 %v2418, 4294901760
        %2841 = vmatpush1.xpose.msra.mxu0 %v2840
        %2842 = vmatprep.subr.mxu0 0.0
        %v2843 = vand.u32 %v2417, 4294901760
        %2844 = vmatpush1.xpose.msra.mxu0 %v2843
        %2845 = vmatprep.subr.mxu0 0.0
        %v2846 = vand.u32 %v2416, 4294901760
        %2847 = vmatpush1.xpose.msra.mxu0 %v2846
        %2848 = vmatprep.subr.mxu0 0.0
        %v2849 = vand.u32 %v2415, 4294901760
        %2850 = vmatpush1.xpose.msra.mxu0 %v2849
        %2851 = vmatprep.subr.mxu0 0.0
        %v2852 = vand.u32 %v2414, 4294901760
        %2853 = vmatpush1.xpose.msra.mxu0 %v2852
        %2854 = vmatprep.subr.mxu0 0.0
        %v2855 = vand.u32 %v2413, 4294901760
        %2856 = vmatpush1.xpose.msra.mxu0 %v2855
        %2857 = vmatprep.subr.mxu0 0.0
        %v2858 = vand.u32 %v2412, 4294901760
        %2859 = vmatpush1.xpose.msra.mxu0 %v2858
        %2860 = vmatprep.subr.mxu0 0.0
        %v2861 = vand.u32 %v2411, 4294901760
        %2862 = vmatpush1.xpose.msra.mxu0 %v2861
        %2863 = vmatprep.subr.mxu0 0.0
        %v2864 = vand.u32 %v2410, 4294901760
        %2865 = vmatpush1.xpose.msra.mxu0 %v2864
        %2866 = vmatprep.subr.mxu0 0.0
        %2867 = vmatpush2.xpose.msra.mxu0 0.0
        %2868 = vmatprep.subr.mxu0 0.0
        %2869 = vmatpush2.xpose.msra.mxu0 0.0
        %2870 = vmatprep.subr.mxu0 0.0
        %2871 = vmatpush2.xpose.msra.mxu0 0.0
        %2872 = vmatprep.subr.mxu0 0.0
        %2873 = vmatpush2.xpose.msra.mxu0 0.0
        %2874 = vmatprep.subr.mxu0 0.0
        %2875 = vmatpush2.xpose.msra.mxu0 0.0
        %2876 = vmatprep.subr.mxu0 0.0
        %2877 = vmatpush2.xpose.msra.mxu0 0.0
        %2878 = vmatprep.subr.mxu0 0.0
        %2879 = vmatpush2.xpose.msra.mxu0 0.0
        %2880 = vmatprep.subr.mxu0 0.0
        %2881 = vmatpush2.xpose.msra.mxu0 0.0
        %2882 = vmatprep.subr.mxu0 0.0
        %2883 = vmatpush2.xpose.msra.mxu0 0.0
        %2884 = vmatprep.subr.mxu0 0.0
        %2885 = vmatpush2.xpose.msra.mxu0 0.0
        %2886 = vmatprep.subr.mxu0 0.0
        %2887 = vmatpush2.xpose.msra.mxu0 0.0
        %2888 = vmatprep.subr.mxu0 0.0
        %2889 = vmatpush2.xpose.msra.mxu0 0.0
        %2890 = vmatprep.subr.mxu0 0.0
        %2891 = vmatpush2.xpose.msra.mxu0 0.0
        %2892 = vmatprep.subr.mxu0 0.0
        %2893 = vmatpush2.xpose.msra.mxu0 0.0
        %2894 = vmatprep.subr.mxu0 0.0
        %2895 = vmatpush2.xpose.msra.mxu0 0.0
        %2896 = vmatprep.subr.mxu0 0.0
        %2897 = vmatpush2.xpose.msra.mxu0 0.0
        %2898 = vmatprep.mubr.f32.mxu0 0.0
        %v2899 = vand.u32 %v293, 4294901760
        %v2900 = vsub.f32 %v293, %v2899
        %v2901 = vand.u32 %v2900, 4294901760
        %2902 = vmatmul.mubr.f32.gmra.mxu0 %v2901
        %v2903 = vpop.f32.mrf.mxu0
        %v2904 = vadd.f32 %v2801, %v2903
        %v2905 = vpop.f32.mrf.mxu0
        %2906 = vmatprep.mubr.f32.mxu0 0.0
        %v2907 = vand.u32 %v294, 4294901760
        %v2908 = vsub.f32 %v294, %v2907
        %v2909 = vand.u32 %v2908, 4294901760
        %2910 = vmatmul.mubr.f32.gmra.mxu0 %v2909
        %v2911 = vpop.f32.mrf.mxu0
        %v2912 = vadd.f32 %v2808, %v2911
        %v2913 = vpop.f32.mrf.mxu0
        %2914 = vmatprep.mubr.f32.mxu0 0.0
        %v2915 = vand.u32 %v295, 4294901760
        %v2916 = vsub.f32 %v295, %v2915
        %v2917 = vand.u32 %v2916, 4294901760
        %2918 = vmatmul.mubr.f32.gmra.mxu0 %v2917
        %v2919 = vpop.f32.mrf.mxu0
        %v2920 = vadd.f32 %v2815, %v2919
        %v2921 = vpop.f32.mrf.mxu0
        %2922 = vdwg.mxu0
        %2923 = vmatprep.subr.mxu0 0.0
        %v2924 = vand.u32 %v2425, 4294901760
        %v2925 = vsub.f32 %v2425, %v2924
        %v2926 = vand.u32 %v2925, 4294901760
        %2927 = vmatpush1.xpose.msra.mxu0 %v2926
        %2928 = vmatprep.subr.mxu0 0.0
        %v2929 = vand.u32 %v2424, 4294901760
        %v2930 = vsub.f32 %v2424, %v2929
        %v2931 = vand.u32 %v2930, 4294901760
        %2932 = vmatpush1.xpose.msra.mxu0 %v2931
        %2933 = vmatprep.subr.mxu0 0.0
        %v2934 = vand.u32 %v2423, 4294901760
        %v2935 = vsub.f32 %v2423, %v2934
        %v2936 = vand.u32 %v2935, 4294901760
        %2937 = vmatpush1.xpose.msra.mxu0 %v2936
        %2938 = vmatprep.subr.mxu0 0.0
        %v2939 = vand.u32 %v2422, 4294901760
        %v2940 = vsub.f32 %v2422, %v2939
        %v2941 = vand.u32 %v2940, 4294901760
        %2942 = vmatpush1.xpose.msra.mxu0 %v2941
        %2943 = vmatprep.subr.mxu0 0.0
        %v2944 = vand.u32 %v2421, 4294901760
        %v2945 = vsub.f32 %v2421, %v2944
        %v2946 = vand.u32 %v2945, 4294901760
        %2947 = vmatpush1.xpose.msra.mxu0 %v2946
        %2948 = vmatprep.subr.mxu0 0.0
        %v2949 = vand.u32 %v2420, 4294901760
        %v2950 = vsub.f32 %v2420, %v2949
        %v2951 = vand.u32 %v2950, 4294901760
        %2952 = vmatpush1.xpose.msra.mxu0 %v2951
        %2953 = vmatprep.subr.mxu0 0.0
        %v2954 = vand.u32 %v2419, 4294901760
        %v2955 = vsub.f32 %v2419, %v2954
        %v2956 = vand.u32 %v2955, 4294901760
        %2957 = vmatpush1.xpose.msra.mxu0 %v2956
        %2958 = vmatprep.subr.mxu0 0.0
        %v2959 = vand.u32 %v2418, 4294901760
        %v2960 = vsub.f32 %v2418, %v2959
        %v2961 = vand.u32 %v2960, 4294901760
        %2962 = vmatpush1.xpose.msra.mxu0 %v2961
        %2963 = vmatprep.subr.mxu0 0.0
        %v2964 = vand.u32 %v2417, 4294901760
        %v2965 = vsub.f32 %v2417, %v2964
        %v2966 = vand.u32 %v2965, 4294901760
        %2967 = vmatpush1.xpose.msra.mxu0 %v2966
        %2968 = vmatprep.subr.mxu0 0.0
        %v2969 = vand.u32 %v2416, 4294901760
        %v2970 = vsub.f32 %v2416, %v2969
        %v2971 = vand.u32 %v2970, 4294901760
        %2972 = vmatpush1.xpose.msra.mxu0 %v2971
        %2973 = vmatprep.subr.mxu0 0.0
        %v2974 = vand.u32 %v2415, 4294901760
        %v2975 = vsub.f32 %v2415, %v2974
        %v2976 = vand.u32 %v2975, 4294901760
        %2977 = vmatpush1.xpose.msra.mxu0 %v2976
        %2978 = vmatprep.subr.mxu0 0.0
        %v2979 = vand.u32 %v2414, 4294901760
        %v2980 = vsub.f32 %v2414, %v2979
        %v2981 = vand.u32 %v2980, 4294901760
        %2982 = vmatpush1.xpose.msra.mxu0 %v2981
        %2983 = vmatprep.subr.mxu0 0.0
        %v2984 = vand.u32 %v2413, 4294901760
        %v2985 = vsub.f32 %v2413, %v2984
        %v2986 = vand.u32 %v2985, 4294901760
        %2987 = vmatpush1.xpose.msra.mxu0 %v2986
        %2988 = vmatprep.subr.mxu0 0.0
        %v2989 = vand.u32 %v2412, 4294901760
        %v2990 = vsub.f32 %v2412, %v2989
        %v2991 = vand.u32 %v2990, 4294901760
        %2992 = vmatpush1.xpose.msra.mxu0 %v2991
        %2993 = vmatprep.subr.mxu0 0.0
        %v2994 = vand.u32 %v2411, 4294901760
        %v2995 = vsub.f32 %v2411, %v2994
        %v2996 = vand.u32 %v2995, 4294901760
        %2997 = vmatpush1.xpose.msra.mxu0 %v2996
        %2998 = vmatprep.subr.mxu0 0.0
        %v2999 = vand.u32 %v2410, 4294901760
        %v3000 = vsub.f32 %v2410, %v2999
        %v3001 = vand.u32 %v3000, 4294901760
        %3002 = vmatpush1.xpose.msra.mxu0 %v3001
        %3003 = vmatprep.subr.mxu0 0.0
        %3004 = vmatpush2.xpose.msra.mxu0 0.0
        %3005 = vmatprep.subr.mxu0 0.0
        %3006 = vmatpush2.xpose.msra.mxu0 0.0
        %3007 = vmatprep.subr.mxu0 0.0
        %3008 = vmatpush2.xpose.msra.mxu0 0.0
        %3009 = vmatprep.subr.mxu0 0.0
        %3010 = vmatpush2.xpose.msra.mxu0 0.0
        %3011 = vmatprep.subr.mxu0 0.0
        %3012 = vmatpush2.xpose.msra.mxu0 0.0
        %3013 = vmatprep.subr.mxu0 0.0
        %3014 = vmatpush2.xpose.msra.mxu0 0.0
        %3015 = vmatprep.subr.mxu0 0.0
        %3016 = vmatpush2.xpose.msra.mxu0 0.0
        %3017 = vmatprep.subr.mxu0 0.0
        %3018 = vmatpush2.xpose.msra.mxu0 0.0
        %3019 = vmatprep.subr.mxu0 0.0
        %3020 = vmatpush2.xpose.msra.mxu0 0.0
        %3021 = vmatprep.subr.mxu0 0.0
        %3022 = vmatpush2.xpose.msra.mxu0 0.0
        %3023 = vmatprep.subr.mxu0 0.0
        %3024 = vmatpush2.xpose.msra.mxu0 0.0
        %3025 = vmatprep.subr.mxu0 0.0
        %3026 = vmatpush2.xpose.msra.mxu0 0.0
        %3027 = vmatprep.subr.mxu0 0.0
        %3028 = vmatpush2.xpose.msra.mxu0 0.0
        %3029 = vmatprep.subr.mxu0 0.0
        %3030 = vmatpush2.xpose.msra.mxu0 0.0
        %3031 = vmatprep.subr.mxu0 0.0
        %3032 = vmatpush2.xpose.msra.mxu0 0.0
        %3033 = vmatprep.subr.mxu0 0.0
        %3034 = vmatpush2.xpose.msra.mxu0 0.0
        %3035 = vmatprep.mubr.f32.mxu0 0.0
        %v3036 = vand.u32 %v293, 4294901760
        %3037 = vmatmul.mubr.f32.gmra.mxu0 %v3036
        %v3038 = vpop.f32.mrf.mxu0
        %v3039 = vadd.f32 %v2904, %v3038
        %v3040 = vpop.f32.mrf.mxu0
        %3041 = vmatprep.mubr.f32.mxu0 0.0
        %v3042 = vand.u32 %v294, 4294901760
        %3043 = vmatmul.mubr.f32.gmra.mxu0 %v3042
        %v3044 = vpop.f32.mrf.mxu0
        %v3045 = vadd.f32 %v2912, %v3044
        %v3046 = vpop.f32.mrf.mxu0
        %3047 = vmatprep.mubr.f32.mxu0 0.0
        %v3048 = vand.u32 %v295, 4294901760
        %3049 = vmatmul.mubr.f32.gmra.mxu0 %v3048
        %v3050 = vpop.f32.mrf.mxu0
        %v3051 = vadd.f32 %v2920, %v3050
        %v3052 = vpop.f32.mrf.mxu0
        %3053 = vdwg.mxu0
        %3054 = vmatprep.subr.mxu0 0.0
        %v3055 = vand.u32 %v2425, 4294901760
        %3056 = vmatpush1.xpose.msra.mxu0 %v3055
        %3057 = vmatprep.subr.mxu0 0.0
        %v3058 = vand.u32 %v2424, 4294901760
        %3059 = vmatpush1.xpose.msra.mxu0 %v3058
        %3060 = vmatprep.subr.mxu0 0.0
        %v3061 = vand.u32 %v2423, 4294901760
        %3062 = vmatpush1.xpose.msra.mxu0 %v3061
        %3063 = vmatprep.subr.mxu0 0.0
        %v3064 = vand.u32 %v2422, 4294901760
        %3065 = vmatpush1.xpose.msra.mxu0 %v3064
        %3066 = vmatprep.subr.mxu0 0.0
        %v3067 = vand.u32 %v2421, 4294901760
        %3068 = vmatpush1.xpose.msra.mxu0 %v3067
        %3069 = vmatprep.subr.mxu0 0.0
        %v3070 = vand.u32 %v2420, 4294901760
        %3071 = vmatpush1.xpose.msra.mxu0 %v3070
        %3072 = vmatprep.subr.mxu0 0.0
        %v3073 = vand.u32 %v2419, 4294901760
        %3074 = vmatpush1.xpose.msra.mxu0 %v3073
        %3075 = vmatprep.subr.mxu0 0.0
        %v3076 = vand.u32 %v2418, 4294901760
        %3077 = vmatpush1.xpose.msra.mxu0 %v3076
        %3078 = vmatprep.subr.mxu0 0.0
        %v3079 = vand.u32 %v2417, 4294901760
        %3080 = vmatpush1.xpose.msra.mxu0 %v3079
        %3081 = vmatprep.subr.mxu0 0.0
        %v3082 = vand.u32 %v2416, 4294901760
        %3083 = vmatpush1.xpose.msra.mxu0 %v3082
        %3084 = vmatprep.subr.mxu0 0.0
        %v3085 = vand.u32 %v2415, 4294901760
        %3086 = vmatpush1.xpose.msra.mxu0 %v3085
        %3087 = vmatprep.subr.mxu0 0.0
        %v3088 = vand.u32 %v2414, 4294901760
        %3089 = vmatpush1.xpose.msra.mxu0 %v3088
        %3090 = vmatprep.subr.mxu0 0.0
        %v3091 = vand.u32 %v2413, 4294901760
        %3092 = vmatpush1.xpose.msra.mxu0 %v3091
        %3093 = vmatprep.subr.mxu0 0.0
        %v3094 = vand.u32 %v2412, 4294901760
        %3095 = vmatpush1.xpose.msra.mxu0 %v3094
        %3096 = vmatprep.subr.mxu0 0.0
        %v3097 = vand.u32 %v2411, 4294901760
        %3098 = vmatpush1.xpose.msra.mxu0 %v3097
        %3099 = vmatprep.subr.mxu0 0.0
        %v3100 = vand.u32 %v2410, 4294901760
        %3101 = vmatpush1.xpose.msra.mxu0 %v3100
        %3102 = vmatprep.subr.mxu0 0.0
        %3103 = vmatpush2.xpose.msra.mxu0 0.0
        %3104 = vmatprep.subr.mxu0 0.0
        %3105 = vmatpush2.xpose.msra.mxu0 0.0
        %3106 = vmatprep.subr.mxu0 0.0
        %3107 = vmatpush2.xpose.msra.mxu0 0.0
        %3108 = vmatprep.subr.mxu0 0.0
        %3109 = vmatpush2.xpose.msra.mxu0 0.0
        %3110 = vmatprep.subr.mxu0 0.0
        %3111 = vmatpush2.xpose.msra.mxu0 0.0
        %3112 = vmatprep.subr.mxu0 0.0
        %3113 = vmatpush2.xpose.msra.mxu0 0.0
        %3114 = vmatprep.subr.mxu0 0.0
        %3115 = vmatpush2.xpose.msra.mxu0 0.0
        %3116 = vmatprep.subr.mxu0 0.0
        %3117 = vmatpush2.xpose.msra.mxu0 0.0
        %3118 = vmatprep.subr.mxu0 0.0
        %3119 = vmatpush2.xpose.msra.mxu0 0.0
        %3120 = vmatprep.subr.mxu0 0.0
        %3121 = vmatpush2.xpose.msra.mxu0 0.0
        %3122 = vmatprep.subr.mxu0 0.0
        %3123 = vmatpush2.xpose.msra.mxu0 0.0
        %3124 = vmatprep.subr.mxu0 0.0
        %3125 = vmatpush2.xpose.msra.mxu0 0.0
        %3126 = vmatprep.subr.mxu0 0.0
        %3127 = vmatpush2.xpose.msra.mxu0 0.0
        %3128 = vmatprep.subr.mxu0 0.0
        %3129 = vmatpush2.xpose.msra.mxu0 0.0
        %3130 = vmatprep.subr.mxu0 0.0
        %3131 = vmatpush2.xpose.msra.mxu0 0.0
        %3132 = vmatprep.subr.mxu0 0.0
        %3133 = vmatpush2.xpose.msra.mxu0 0.0
        %3134 = vmatprep.mubr.f32.mxu0 0.0
        %v3135 = vand.u32 %v293, 4294901760
        %3136 = vmatmul.mubr.f32.gmra.mxu0 %v3135
        %v3137 = vpop.f32.mrf.mxu0
        %v3138 = vadd.f32 %v3039, %v3137
        %v3139 = vpop.f32.mrf.mxu0
        %3140 = vmatprep.mubr.f32.mxu0 0.0
        %v3141 = vand.u32 %v294, 4294901760
        %3142 = vmatmul.mubr.f32.gmra.mxu0 %v3141
        %v3143 = vpop.f32.mrf.mxu0
        %v3144 = vadd.f32 %v3045, %v3143
        %v3145 = vpop.f32.mrf.mxu0
        %3146 = vmatprep.mubr.f32.mxu0 0.0
        %v3147 = vand.u32 %v295, 4294901760
        %3148 = vmatmul.mubr.f32.gmra.mxu0 %v3147
        %v3149 = vpop.f32.mrf.mxu0
        %v3150 = vadd.f32 %v3051, %v3149
        %v3151 = vpop.f32.mrf.mxu0
        %3152 = vdwg.mxu0
        %s3153 = scalar_lea.vmem %s249, 24 [#allocation2]
        %3154 = vst [vmem:[%s3153] sm:$0xff] %v3138
        %3155 = vst [vmem:[%s3153 + $0x8] sm:$0xff] %v3144
        %3156 = vst [vmem:[%s3153 + $0x10] sm:$0xff] %v3150
        %v3157 = vadd.f32 %v3150, 0.5
        %v3158 = vcvt.f32.s32.to.zero.pseudo %v3157
        %v3159 = vsel %vm2378, 3.4028235e+38, %v2330
        %v3160 = vsel %vm2379, 3.4028235e+38, %v2331
        %v3161 = vsel %vm2380, 3.4028235e+38, %v2332
        %v3162 = vsel %vm2381, 3.4028235e+38, %v2333
        %v3163 = vsel %vm2382, 3.4028235e+38, %v2334
        %v3164 = vsel %vm2383, 3.4028235e+38, %v2335
        %v3165 = vsel %vm2384, 3.4028235e+38, %v2336
        %v3166 = vsel %vm2385, 3.4028235e+38, %v2337
        %v3167 = vsel %vm2386, 3.4028235e+38, %v2338
        %v3168 = vsel %vm2387, 3.4028235e+38, %v2339
        %v3169 = vsel %vm2388, 3.4028235e+38, %v2340
        %v3170 = vsel %vm2389, 3.4028235e+38, %v2341
        %v3171 = vsel %vm2390, 3.4028235e+38, %v2342
        %v3172 = vsel %vm2391, 3.4028235e+38, %v2343
        %v3173 = vsel %vm2392, 3.4028235e+38, %v2344
        %v3174 = vsel %vm2393, 3.4028235e+38, %v2345
        %3175 = vmin.xlane.f32.xlu0 %v3159
        %v3176 = vpop.xlane.xlu0 %3175
        %3177 = vmin.xlane.f32.xlu0 %v3160
        %v3178 = vpop.xlane.xlu0 %3177
        %3179 = vmin.xlane.f32.xlu0 %v3161
        %v3180 = vpop.xlane.xlu0 %3179
        %3181 = vmin.xlane.f32.xlu0 %v3162
        %v3182 = vpop.xlane.xlu0 %3181
        %3183 = vmin.xlane.f32.xlu0 %v3163
        %v3184 = vpop.xlane.xlu0 %3183
        %3185 = vmin.xlane.f32.xlu0 %v3164
        %v3186 = vpop.xlane.xlu0 %3185
        %3187 = vmin.xlane.f32.xlu0 %v3165
        %v3188 = vpop.xlane.xlu0 %3187
        %3189 = vmin.xlane.f32.xlu0 %v3166
        %v3190 = vpop.xlane.xlu0 %3189
        %3191 = vmin.xlane.f32.xlu0 %v3167
        %v3192 = vpop.xlane.xlu0 %3191
        %3193 = vmin.xlane.f32.xlu0 %v3168
        %v3194 = vpop.xlane.xlu0 %3193
        %3195 = vmin.xlane.f32.xlu0 %v3169
        %v3196 = vpop.xlane.xlu0 %3195
        %3197 = vmin.xlane.f32.xlu0 %v3170
        %v3198 = vpop.xlane.xlu0 %3197
        %3199 = vmin.xlane.f32.xlu0 %v3171
        %v3200 = vpop.xlane.xlu0 %3199
        %3201 = vmin.xlane.f32.xlu0 %v3172
        %v3202 = vpop.xlane.xlu0 %3201
        %3203 = vmin.xlane.f32.xlu0 %v3173
        %v3204 = vpop.xlane.xlu0 %3203
        %3205 = vmin.xlane.f32.xlu0 %v3174
        %v3206 = vpop.xlane.xlu0 %3205
        %vm3207 = vcmp.eq.f32.partialorder %v3159, %v3176
        %vm3208 = vcmp.eq.f32.partialorder %v3160, %v3178
        %vm3209 = vcmp.eq.f32.partialorder %v3161, %v3180
        %vm3210 = vcmp.eq.f32.partialorder %v3162, %v3182
        %vm3211 = vcmp.eq.f32.partialorder %v3163, %v3184
        %vm3212 = vcmp.eq.f32.partialorder %v3164, %v3186
        %vm3213 = vcmp.eq.f32.partialorder %v3165, %v3188
        %vm3214 = vcmp.eq.f32.partialorder %v3166, %v3190
        %vm3215 = vcmp.eq.f32.partialorder %v3167, %v3192
        %vm3216 = vcmp.eq.f32.partialorder %v3168, %v3194
        %vm3217 = vcmp.eq.f32.partialorder %v3169, %v3196
        %vm3218 = vcmp.eq.f32.partialorder %v3170, %v3198
        %vm3219 = vcmp.eq.f32.partialorder %v3171, %v3200
        %vm3220 = vcmp.eq.f32.partialorder %v3172, %v3202
        %vm3221 = vcmp.eq.f32.partialorder %v3173, %v3204
        %vm3222 = vcmp.eq.f32.partialorder %v3174, %v3206
        %v3223 = vsel %vm3207, 1, 0
        %v3224 = vsel %vm3208, 1, 0
        %v3225 = vsel %vm3209, 1, 0
        %v3226 = vsel %vm3210, 1, 0
        %v3227 = vsel %vm3211, 1, 0
        %v3228 = vsel %vm3212, 1, 0
        %v3229 = vsel %vm3213, 1, 0
        %v3230 = vsel %vm3214, 1, 0
        %v3231 = vsel %vm3215, 1, 0
        %v3232 = vsel %vm3216, 1, 0
        %v3233 = vsel %vm3217, 1, 0
        %v3234 = vsel %vm3218, 1, 0
        %v3235 = vsel %vm3219, 1, 0
        %v3236 = vsel %vm3220, 1, 0
        %v3237 = vsel %vm3221, 1, 0
        %v3238 = vsel %vm3222, 1, 0
        %v3239 = vcvt.s32.f32 %v3223
        %v3240 = vcvt.s32.f32 %v3224
        %v3241 = vcvt.s32.f32 %v3225
        %v3242 = vcvt.s32.f32 %v3226
        %v3243 = vcvt.s32.f32 %v3227
        %v3244 = vcvt.s32.f32 %v3228
        %v3245 = vcvt.s32.f32 %v3229
        %v3246 = vcvt.s32.f32 %v3230
        %v3247 = vcvt.s32.f32 %v3231
        %v3248 = vcvt.s32.f32 %v3232
        %v3249 = vcvt.s32.f32 %v3233
        %v3250 = vcvt.s32.f32 %v3234
        %v3251 = vcvt.s32.f32 %v3235
        %v3252 = vcvt.s32.f32 %v3236
        %v3253 = vcvt.s32.f32 %v3237
        %v3254 = vcvt.s32.f32 %v3238
        %3255 = vmatprep.subr.mxu0 0.0
        %v3256 = vand.u32 %v3254, 4294901760
        %3257 = vmatpush1.xpose.msra.mxu0 %v3256
        %3258 = vmatprep.subr.mxu0 0.0
        %v3259 = vand.u32 %v3253, 4294901760
        %3260 = vmatpush1.xpose.msra.mxu0 %v3259
        %3261 = vmatprep.subr.mxu0 0.0
        %v3262 = vand.u32 %v3252, 4294901760
        %3263 = vmatpush1.xpose.msra.mxu0 %v3262
        %3264 = vmatprep.subr.mxu0 0.0
        %v3265 = vand.u32 %v3251, 4294901760
        %3266 = vmatpush1.xpose.msra.mxu0 %v3265
        %3267 = vmatprep.subr.mxu0 0.0
        %v3268 = vand.u32 %v3250, 4294901760
        %3269 = vmatpush1.xpose.msra.mxu0 %v3268
        %3270 = vmatprep.subr.mxu0 0.0
        %v3271 = vand.u32 %v3249, 4294901760
        %3272 = vmatpush1.xpose.msra.mxu0 %v3271
        %3273 = vmatprep.subr.mxu0 0.0
        %v3274 = vand.u32 %v3248, 4294901760
        %3275 = vmatpush1.xpose.msra.mxu0 %v3274
        %3276 = vmatprep.subr.mxu0 0.0
        %v3277 = vand.u32 %v3247, 4294901760
        %3278 = vmatpush1.xpose.msra.mxu0 %v3277
        %3279 = vmatprep.subr.mxu0 0.0
        %v3280 = vand.u32 %v3246, 4294901760
        %3281 = vmatpush1.xpose.msra.mxu0 %v3280
        %3282 = vmatprep.subr.mxu0 0.0
        %v3283 = vand.u32 %v3245, 4294901760
        %3284 = vmatpush1.xpose.msra.mxu0 %v3283
        %3285 = vmatprep.subr.mxu0 0.0
        %v3286 = vand.u32 %v3244, 4294901760
        %3287 = vmatpush1.xpose.msra.mxu0 %v3286
        %3288 = vmatprep.subr.mxu0 0.0
        %v3289 = vand.u32 %v3243, 4294901760
        %3290 = vmatpush1.xpose.msra.mxu0 %v3289
        %3291 = vmatprep.subr.mxu0 0.0
        %v3292 = vand.u32 %v3242, 4294901760
        %3293 = vmatpush1.xpose.msra.mxu0 %v3292
        %3294 = vmatprep.subr.mxu0 0.0
        %v3295 = vand.u32 %v3241, 4294901760
        %3296 = vmatpush1.xpose.msra.mxu0 %v3295
        %3297 = vmatprep.subr.mxu0 0.0
        %v3298 = vand.u32 %v3240, 4294901760
        %3299 = vmatpush1.xpose.msra.mxu0 %v3298
        %3300 = vmatprep.subr.mxu0 0.0
        %v3301 = vand.u32 %v3239, 4294901760
        %3302 = vmatpush1.xpose.msra.mxu0 %v3301
        %3303 = vmatprep.subr.mxu0 0.0
        %3304 = vmatpush2.xpose.msra.mxu0 0.0
        %3305 = vmatprep.subr.mxu0 0.0
        %3306 = vmatpush2.xpose.msra.mxu0 0.0
        %3307 = vmatprep.subr.mxu0 0.0
        %3308 = vmatpush2.xpose.msra.mxu0 0.0
        %3309 = vmatprep.subr.mxu0 0.0
        %3310 = vmatpush2.xpose.msra.mxu0 0.0
        %3311 = vmatprep.subr.mxu0 0.0
        %3312 = vmatpush2.xpose.msra.mxu0 0.0
        %3313 = vmatprep.subr.mxu0 0.0
        %3314 = vmatpush2.xpose.msra.mxu0 0.0
        %3315 = vmatprep.subr.mxu0 0.0
        %3316 = vmatpush2.xpose.msra.mxu0 0.0
        %3317 = vmatprep.subr.mxu0 0.0
        %3318 = vmatpush2.xpose.msra.mxu0 0.0
        %3319 = vmatprep.subr.mxu0 0.0
        %3320 = vmatpush2.xpose.msra.mxu0 0.0
        %3321 = vmatprep.subr.mxu0 0.0
        %3322 = vmatpush2.xpose.msra.mxu0 0.0
        %3323 = vmatprep.subr.mxu0 0.0
        %3324 = vmatpush2.xpose.msra.mxu0 0.0
        %3325 = vmatprep.subr.mxu0 0.0
        %3326 = vmatpush2.xpose.msra.mxu0 0.0
        %3327 = vmatprep.subr.mxu0 0.0
        %3328 = vmatpush2.xpose.msra.mxu0 0.0
        %3329 = vmatprep.subr.mxu0 0.0
        %3330 = vmatpush2.xpose.msra.mxu0 0.0
        %3331 = vmatprep.subr.mxu0 0.0
        %3332 = vmatpush2.xpose.msra.mxu0 0.0
        %3333 = vmatprep.subr.mxu0 0.0
        %3334 = vmatpush2.xpose.msra.mxu0 0.0
        %3335 = vmatprep.mubr.f32.mxu0 0.0
        %v3336 = vand.u32 %v293, 4294901760
        %v3337 = vsub.f32 %v293, %v3336
        %v3338 = vand.u32 %v3337, 4294901760
        %v3339 = vsub.f32 %v3337, %v3338
        %v3340 = vand.u32 %v3339, 4294901760
        %3341 = vmatmul.mubr.f32.gmra.mxu0 %v3340
        %v3342 = vpop.f32.mrf.mxu0
        %v3343 = vadd.f32 0.0, %v3342
        %v3344 = vpop.f32.mrf.mxu0
        %3345 = vmatprep.mubr.f32.mxu0 0.0
        %v3346 = vand.u32 %v294, 4294901760
        %v3347 = vsub.f32 %v294, %v3346
        %v3348 = vand.u32 %v3347, 4294901760
        %v3349 = vsub.f32 %v3347, %v3348
        %v3350 = vand.u32 %v3349, 4294901760
        %3351 = vmatmul.mubr.f32.gmra.mxu0 %v3350
        %v3352 = vpop.f32.mrf.mxu0
        %v3353 = vadd.f32 0.0, %v3352
        %v3354 = vpop.f32.mrf.mxu0
        %3355 = vmatprep.mubr.f32.mxu0 0.0
        %v3356 = vand.u32 %v295, 4294901760
        %v3357 = vsub.f32 %v295, %v3356
        %v3358 = vand.u32 %v3357, 4294901760
        %v3359 = vsub.f32 %v3357, %v3358
        %v3360 = vand.u32 %v3359, 4294901760
        %3361 = vmatmul.mubr.f32.gmra.mxu0 %v3360
        %v3362 = vpop.f32.mrf.mxu0
        %v3363 = vadd.f32 0.0, %v3362
        %v3364 = vpop.f32.mrf.mxu0
        %3365 = vdwg.mxu0
        %3366 = vmatprep.subr.mxu0 0.0
        %v3367 = vand.u32 %v3254, 4294901760
        %v3368 = vsub.f32 %v3254, %v3367
        %v3369 = vand.u32 %v3368, 4294901760
        %v3370 = vsub.f32 %v3368, %v3369
        %v3371 = vand.u32 %v3370, 4294901760
        %3372 = vmatpush1.xpose.msra.mxu0 %v3371
        %3373 = vmatprep.subr.mxu0 0.0
        %v3374 = vand.u32 %v3253, 4294901760
        %v3375 = vsub.f32 %v3253, %v3374
        %v3376 = vand.u32 %v3375, 4294901760
        %v3377 = vsub.f32 %v3375, %v3376
        %v3378 = vand.u32 %v3377, 4294901760
        %3379 = vmatpush1.xpose.msra.mxu0 %v3378
        %3380 = vmatprep.subr.mxu0 0.0
        %v3381 = vand.u32 %v3252, 4294901760
        %v3382 = vsub.f32 %v3252, %v3381
        %v3383 = vand.u32 %v3382, 4294901760
        %v3384 = vsub.f32 %v3382, %v3383
        %v3385 = vand.u32 %v3384, 4294901760
        %3386 = vmatpush1.xpose.msra.mxu0 %v3385
        %3387 = vmatprep.subr.mxu0 0.0
        %v3388 = vand.u32 %v3251, 4294901760
        %v3389 = vsub.f32 %v3251, %v3388
        %v3390 = vand.u32 %v3389, 4294901760
        %v3391 = vsub.f32 %v3389, %v3390
        %v3392 = vand.u32 %v3391, 4294901760
        %3393 = vmatpush1.xpose.msra.mxu0 %v3392
        %3394 = vmatprep.subr.mxu0 0.0
        %v3395 = vand.u32 %v3250, 4294901760
        %v3396 = vsub.f32 %v3250, %v3395
        %v3397 = vand.u32 %v3396, 4294901760
        %v3398 = vsub.f32 %v3396, %v3397
        %v3399 = vand.u32 %v3398, 4294901760
        %3400 = vmatpush1.xpose.msra.mxu0 %v3399
        %3401 = vmatprep.subr.mxu0 0.0
        %v3402 = vand.u32 %v3249, 4294901760
        %v3403 = vsub.f32 %v3249, %v3402
        %v3404 = vand.u32 %v3403, 4294901760
        %v3405 = vsub.f32 %v3403, %v3404
        %v3406 = vand.u32 %v3405, 4294901760
        %3407 = vmatpush1.xpose.msra.mxu0 %v3406
        %3408 = vmatprep.subr.mxu0 0.0
        %v3409 = vand.u32 %v3248, 4294901760
        %v3410 = vsub.f32 %v3248, %v3409
        %v3411 = vand.u32 %v3410, 4294901760
        %v3412 = vsub.f32 %v3410, %v3411
        %v3413 = vand.u32 %v3412, 4294901760
        %3414 = vmatpush1.xpose.msra.mxu0 %v3413
        %3415 = vmatprep.subr.mxu0 0.0
        %v3416 = vand.u32 %v3247, 4294901760
        %v3417 = vsub.f32 %v3247, %v3416
        %v3418 = vand.u32 %v3417, 4294901760
        %v3419 = vsub.f32 %v3417, %v3418
        %v3420 = vand.u32 %v3419, 4294901760
        %3421 = vmatpush1.xpose.msra.mxu0 %v3420
        %3422 = vmatprep.subr.mxu0 0.0
        %v3423 = vand.u32 %v3246, 4294901760
        %v3424 = vsub.f32 %v3246, %v3423
        %v3425 = vand.u32 %v3424, 4294901760
        %v3426 = vsub.f32 %v3424, %v3425
        %v3427 = vand.u32 %v3426, 4294901760
        %3428 = vmatpush1.xpose.msra.mxu0 %v3427
        %3429 = vmatprep.subr.mxu0 0.0
        %v3430 = vand.u32 %v3245, 4294901760
        %v3431 = vsub.f32 %v3245, %v3430
        %v3432 = vand.u32 %v3431, 4294901760
        %v3433 = vsub.f32 %v3431, %v3432
        %v3434 = vand.u32 %v3433, 4294901760
        %3435 = vmatpush1.xpose.msra.mxu0 %v3434
        %3436 = vmatprep.subr.mxu0 0.0
        %v3437 = vand.u32 %v3244, 4294901760
        %v3438 = vsub.f32 %v3244, %v3437
        %v3439 = vand.u32 %v3438, 4294901760
        %v3440 = vsub.f32 %v3438, %v3439
        %v3441 = vand.u32 %v3440, 4294901760
        %3442 = vmatpush1.xpose.msra.mxu0 %v3441
        %3443 = vmatprep.subr.mxu0 0.0
        %v3444 = vand.u32 %v3243, 4294901760
        %v3445 = vsub.f32 %v3243, %v3444
        %v3446 = vand.u32 %v3445, 4294901760
        %v3447 = vsub.f32 %v3445, %v3446
        %v3448 = vand.u32 %v3447, 4294901760
        %3449 = vmatpush1.xpose.msra.mxu0 %v3448
        %3450 = vmatprep.subr.mxu0 0.0
        %v3451 = vand.u32 %v3242, 4294901760
        %v3452 = vsub.f32 %v3242, %v3451
        %v3453 = vand.u32 %v3452, 4294901760
        %v3454 = vsub.f32 %v3452, %v3453
        %v3455 = vand.u32 %v3454, 4294901760
        %3456 = vmatpush1.xpose.msra.mxu0 %v3455
        %3457 = vmatprep.subr.mxu0 0.0
        %v3458 = vand.u32 %v3241, 4294901760
        %v3459 = vsub.f32 %v3241, %v3458
        %v3460 = vand.u32 %v3459, 4294901760
        %v3461 = vsub.f32 %v3459, %v3460
        %v3462 = vand.u32 %v3461, 4294901760
        %3463 = vmatpush1.xpose.msra.mxu0 %v3462
        %3464 = vmatprep.subr.mxu0 0.0
        %v3465 = vand.u32 %v3240, 4294901760
        %v3466 = vsub.f32 %v3240, %v3465
        %v3467 = vand.u32 %v3466, 4294901760
        %v3468 = vsub.f32 %v3466, %v3467
        %v3469 = vand.u32 %v3468, 4294901760
        %3470 = vmatpush1.xpose.msra.mxu0 %v3469
        %3471 = vmatprep.subr.mxu0 0.0
        %v3472 = vand.u32 %v3239, 4294901760
        %v3473 = vsub.f32 %v3239, %v3472
        %v3474 = vand.u32 %v3473, 4294901760
        %v3475 = vsub.f32 %v3473, %v3474
        %v3476 = vand.u32 %v3475, 4294901760
        %3477 = vmatpush1.xpose.msra.mxu0 %v3476
        %3478 = vmatprep.subr.mxu0 0.0
        %3479 = vmatpush2.xpose.msra.mxu0 0.0
        %3480 = vmatprep.subr.mxu0 0.0
        %3481 = vmatpush2.xpose.msra.mxu0 0.0
        %3482 = vmatprep.subr.mxu0 0.0
        %3483 = vmatpush2.xpose.msra.mxu0 0.0
        %3484 = vmatprep.subr.mxu0 0.0
        %3485 = vmatpush2.xpose.msra.mxu0 0.0
        %3486 = vmatprep.subr.mxu0 0.0
        %3487 = vmatpush2.xpose.msra.mxu0 0.0
        %3488 = vmatprep.subr.mxu0 0.0
        %3489 = vmatpush2.xpose.msra.mxu0 0.0
        %3490 = vmatprep.subr.mxu0 0.0
        %3491 = vmatpush2.xpose.msra.mxu0 0.0
        %3492 = vmatprep.subr.mxu0 0.0
        %3493 = vmatpush2.xpose.msra.mxu0 0.0
        %3494 = vmatprep.subr.mxu0 0.0
        %3495 = vmatpush2.xpose.msra.mxu0 0.0
        %3496 = vmatprep.subr.mxu0 0.0
        %3497 = vmatpush2.xpose.msra.mxu0 0.0
        %3498 = vmatprep.subr.mxu0 0.0
        %3499 = vmatpush2.xpose.msra.mxu0 0.0
        %3500 = vmatprep.subr.mxu0 0.0
        %3501 = vmatpush2.xpose.msra.mxu0 0.0
        %3502 = vmatprep.subr.mxu0 0.0
        %3503 = vmatpush2.xpose.msra.mxu0 0.0
        %3504 = vmatprep.subr.mxu0 0.0
        %3505 = vmatpush2.xpose.msra.mxu0 0.0
        %3506 = vmatprep.subr.mxu0 0.0
        %3507 = vmatpush2.xpose.msra.mxu0 0.0
        %3508 = vmatprep.subr.mxu0 0.0
        %3509 = vmatpush2.xpose.msra.mxu0 0.0
        %3510 = vmatprep.mubr.f32.mxu0 0.0
        %v3511 = vand.u32 %v293, 4294901760
        %3512 = vmatmul.mubr.f32.gmra.mxu0 %v3511
        %v3513 = vpop.f32.mrf.mxu0
        %v3514 = vadd.f32 %v3343, %v3513
        %v3515 = vpop.f32.mrf.mxu0
        %3516 = vmatprep.mubr.f32.mxu0 0.0
        %v3517 = vand.u32 %v294, 4294901760
        %3518 = vmatmul.mubr.f32.gmra.mxu0 %v3517
        %v3519 = vpop.f32.mrf.mxu0
        %v3520 = vadd.f32 %v3353, %v3519
        %v3521 = vpop.f32.mrf.mxu0
        %3522 = vmatprep.mubr.f32.mxu0 0.0
        %v3523 = vand.u32 %v295, 4294901760
        %3524 = vmatmul.mubr.f32.gmra.mxu0 %v3523
        %v3525 = vpop.f32.mrf.mxu0
        %v3526 = vadd.f32 %v3363, %v3525
        %v3527 = vpop.f32.mrf.mxu0
        %3528 = vdwg.mxu0
        %3529 = vmatprep.subr.mxu0 0.0
        %v3530 = vand.u32 %v3254, 4294901760
        %v3531 = vsub.f32 %v3254, %v3530
        %3532 = vmatpush1.xpose.msra.mxu0 %v3531
        %3533 = vmatprep.subr.mxu0 0.0
        %v3534 = vand.u32 %v3253, 4294901760
        %v3535 = vsub.f32 %v3253, %v3534
        %3536 = vmatpush1.xpose.msra.mxu0 %v3535
        %3537 = vmatprep.subr.mxu0 0.0
        %v3538 = vand.u32 %v3252, 4294901760
        %v3539 = vsub.f32 %v3252, %v3538
        %3540 = vmatpush1.xpose.msra.mxu0 %v3539
        %3541 = vmatprep.subr.mxu0 0.0
        %v3542 = vand.u32 %v3251, 4294901760
        %v3543 = vsub.f32 %v3251, %v3542
        %3544 = vmatpush1.xpose.msra.mxu0 %v3543
        %3545 = vmatprep.subr.mxu0 0.0
        %v3546 = vand.u32 %v3250, 4294901760
        %v3547 = vsub.f32 %v3250, %v3546
        %3548 = vmatpush1.xpose.msra.mxu0 %v3547
        %3549 = vmatprep.subr.mxu0 0.0
        %v3550 = vand.u32 %v3249, 4294901760
        %v3551 = vsub.f32 %v3249, %v3550
        %3552 = vmatpush1.xpose.msra.mxu0 %v3551
        %3553 = vmatprep.subr.mxu0 0.0
        %v3554 = vand.u32 %v3248, 4294901760
        %v3555 = vsub.f32 %v3248, %v3554
        %3556 = vmatpush1.xpose.msra.mxu0 %v3555
        %3557 = vmatprep.subr.mxu0 0.0
        %v3558 = vand.u32 %v3247, 4294901760
        %v3559 = vsub.f32 %v3247, %v3558
        %3560 = vmatpush1.xpose.msra.mxu0 %v3559
        %3561 = vmatprep.subr.mxu0 0.0
        %v3562 = vand.u32 %v3246, 4294901760
        %v3563 = vsub.f32 %v3246, %v3562
        %3564 = vmatpush1.xpose.msra.mxu0 %v3563
        %3565 = vmatprep.subr.mxu0 0.0
        %v3566 = vand.u32 %v3245, 4294901760
        %v3567 = vsub.f32 %v3245, %v3566
        %3568 = vmatpush1.xpose.msra.mxu0 %v3567
        %3569 = vmatprep.subr.mxu0 0.0
        %v3570 = vand.u32 %v3244, 4294901760
        %v3571 = vsub.f32 %v3244, %v3570
        %3572 = vmatpush1.xpose.msra.mxu0 %v3571
        %3573 = vmatprep.subr.mxu0 0.0
        %v3574 = vand.u32 %v3243, 4294901760
        %v3575 = vsub.f32 %v3243, %v3574
        %3576 = vmatpush1.xpose.msra.mxu0 %v3575
        %3577 = vmatprep.subr.mxu0 0.0
        %v3578 = vand.u32 %v3242, 4294901760
        %v3579 = vsub.f32 %v3242, %v3578
        %3580 = vmatpush1.xpose.msra.mxu0 %v3579
        %3581 = vmatprep.subr.mxu0 0.0
        %v3582 = vand.u32 %v3241, 4294901760
        %v3583 = vsub.f32 %v3241, %v3582
        %3584 = vmatpush1.xpose.msra.mxu0 %v3583
        %3585 = vmatprep.subr.mxu0 0.0
        %v3586 = vand.u32 %v3240, 4294901760
        %v3587 = vsub.f32 %v3240, %v3586
        %3588 = vmatpush1.xpose.msra.mxu0 %v3587
        %3589 = vmatprep.subr.mxu0 0.0
        %v3590 = vand.u32 %v3239, 4294901760
        %v3591 = vsub.f32 %v3239, %v3590
        %3592 = vmatpush1.xpose.msra.mxu0 %v3591
        %3593 = vmatprep.subr.mxu0 0.0
        %3594 = vmatpush2.xpose.msra.mxu0 0.0
        %3595 = vmatprep.subr.mxu0 0.0
        %3596 = vmatpush2.xpose.msra.mxu0 0.0
        %3597 = vmatprep.subr.mxu0 0.0
        %3598 = vmatpush2.xpose.msra.mxu0 0.0
        %3599 = vmatprep.subr.mxu0 0.0
        %3600 = vmatpush2.xpose.msra.mxu0 0.0
        %3601 = vmatprep.subr.mxu0 0.0
        %3602 = vmatpush2.xpose.msra.mxu0 0.0
        %3603 = vmatprep.subr.mxu0 0.0
        %3604 = vmatpush2.xpose.msra.mxu0 0.0
        %3605 = vmatprep.subr.mxu0 0.0
        %3606 = vmatpush2.xpose.msra.mxu0 0.0
        %3607 = vmatprep.subr.mxu0 0.0
        %3608 = vmatpush2.xpose.msra.mxu0 0.0
        %3609 = vmatprep.subr.mxu0 0.0
        %3610 = vmatpush2.xpose.msra.mxu0 0.0
        %3611 = vmatprep.subr.mxu0 0.0
        %3612 = vmatpush2.xpose.msra.mxu0 0.0
        %3613 = vmatprep.subr.mxu0 0.0
        %3614 = vmatpush2.xpose.msra.mxu0 0.0
        %3615 = vmatprep.subr.mxu0 0.0
        %3616 = vmatpush2.xpose.msra.mxu0 0.0
        %3617 = vmatprep.subr.mxu0 0.0
        %3618 = vmatpush2.xpose.msra.mxu0 0.0
        %3619 = vmatprep.subr.mxu0 0.0
        %3620 = vmatpush2.xpose.msra.mxu0 0.0
        %3621 = vmatprep.subr.mxu0 0.0
        %3622 = vmatpush2.xpose.msra.mxu0 0.0
        %3623 = vmatprep.subr.mxu0 0.0
        %3624 = vmatpush2.xpose.msra.mxu0 0.0
        %3625 = vmatprep.mubr.f32.mxu0 0.0
        %v3626 = vand.u32 %v293, 4294901760
        %v3627 = vsub.f32 %v293, %v3626
        %3628 = vmatmul.mubr.f32.gmra.mxu0 %v3627
        %v3629 = vpop.f32.mrf.mxu0
        %v3630 = vadd.f32 %v3514, %v3629
        %v3631 = vpop.f32.mrf.mxu0
        %3632 = vmatprep.mubr.f32.mxu0 0.0
        %v3633 = vand.u32 %v294, 4294901760
        %v3634 = vsub.f32 %v294, %v3633
        %3635 = vmatmul.mubr.f32.gmra.mxu0 %v3634
        %v3636 = vpop.f32.mrf.mxu0
        %v3637 = vadd.f32 %v3520, %v3636
        %v3638 = vpop.f32.mrf.mxu0
        %3639 = vmatprep.mubr.f32.mxu0 0.0
        %v3640 = vand.u32 %v295, 4294901760
        %v3641 = vsub.f32 %v295, %v3640
        %3642 = vmatmul.mubr.f32.gmra.mxu0 %v3641
        %v3643 = vpop.f32.mrf.mxu0
        %v3644 = vadd.f32 %v3526, %v3643
        %v3645 = vpop.f32.mrf.mxu0
        %3646 = vdwg.mxu0
        %3647 = vmatprep.subr.mxu0 0.0
        %v3648 = vand.u32 %v3254, 4294901760
        %3649 = vmatpush1.xpose.msra.mxu0 %v3648
        %3650 = vmatprep.subr.mxu0 0.0
        %v3651 = vand.u32 %v3253, 4294901760
        %3652 = vmatpush1.xpose.msra.mxu0 %v3651
        %3653 = vmatprep.subr.mxu0 0.0
        %v3654 = vand.u32 %v3252, 4294901760
        %3655 = vmatpush1.xpose.msra.mxu0 %v3654
        %3656 = vmatprep.subr.mxu0 0.0
        %v3657 = vand.u32 %v3251, 4294901760
        %3658 = vmatpush1.xpose.msra.mxu0 %v3657
        %3659 = vmatprep.subr.mxu0 0.0
        %v3660 = vand.u32 %v3250, 4294901760
        %3661 = vmatpush1.xpose.msra.mxu0 %v3660
        %3662 = vmatprep.subr.mxu0 0.0
        %v3663 = vand.u32 %v3249, 4294901760
        %3664 = vmatpush1.xpose.msra.mxu0 %v3663
        %3665 = vmatprep.subr.mxu0 0.0
        %v3666 = vand.u32 %v3248, 4294901760
        %3667 = vmatpush1.xpose.msra.mxu0 %v3666
        %3668 = vmatprep.subr.mxu0 0.0
        %v3669 = vand.u32 %v3247, 4294901760
        %3670 = vmatpush1.xpose.msra.mxu0 %v3669
        %3671 = vmatprep.subr.mxu0 0.0
        %v3672 = vand.u32 %v3246, 4294901760
        %3673 = vmatpush1.xpose.msra.mxu0 %v3672
        %3674 = vmatprep.subr.mxu0 0.0
        %v3675 = vand.u32 %v3245, 4294901760
        %3676 = vmatpush1.xpose.msra.mxu0 %v3675
        %3677 = vmatprep.subr.mxu0 0.0
        %v3678 = vand.u32 %v3244, 4294901760
        %3679 = vmatpush1.xpose.msra.mxu0 %v3678
        %3680 = vmatprep.subr.mxu0 0.0
        %v3681 = vand.u32 %v3243, 4294901760
        %3682 = vmatpush1.xpose.msra.mxu0 %v3681
        %3683 = vmatprep.subr.mxu0 0.0
        %v3684 = vand.u32 %v3242, 4294901760
        %3685 = vmatpush1.xpose.msra.mxu0 %v3684
        %3686 = vmatprep.subr.mxu0 0.0
        %v3687 = vand.u32 %v3241, 4294901760
        %3688 = vmatpush1.xpose.msra.mxu0 %v3687
        %3689 = vmatprep.subr.mxu0 0.0
        %v3690 = vand.u32 %v3240, 4294901760
        %3691 = vmatpush1.xpose.msra.mxu0 %v3690
        %3692 = vmatprep.subr.mxu0 0.0
        %v3693 = vand.u32 %v3239, 4294901760
        %3694 = vmatpush1.xpose.msra.mxu0 %v3693
        %3695 = vmatprep.subr.mxu0 0.0
        %3696 = vmatpush2.xpose.msra.mxu0 0.0
        %3697 = vmatprep.subr.mxu0 0.0
        %3698 = vmatpush2.xpose.msra.mxu0 0.0
        %3699 = vmatprep.subr.mxu0 0.0
        %3700 = vmatpush2.xpose.msra.mxu0 0.0
        %3701 = vmatprep.subr.mxu0 0.0
        %3702 = vmatpush2.xpose.msra.mxu0 0.0
        %3703 = vmatprep.subr.mxu0 0.0
        %3704 = vmatpush2.xpose.msra.mxu0 0.0
        %3705 = vmatprep.subr.mxu0 0.0
        %3706 = vmatpush2.xpose.msra.mxu0 0.0
        %3707 = vmatprep.subr.mxu0 0.0
        %3708 = vmatpush2.xpose.msra.mxu0 0.0
        %3709 = vmatprep.subr.mxu0 0.0
        %3710 = vmatpush2.xpose.msra.mxu0 0.0
        %3711 = vmatprep.subr.mxu0 0.0
        %3712 = vmatpush2.xpose.msra.mxu0 0.0
        %3713 = vmatprep.subr.mxu0 0.0
        %3714 = vmatpush2.xpose.msra.mxu0 0.0
        %3715 = vmatprep.subr.mxu0 0.0
        %3716 = vmatpush2.xpose.msra.mxu0 0.0
        %3717 = vmatprep.subr.mxu0 0.0
        %3718 = vmatpush2.xpose.msra.mxu0 0.0
        %3719 = vmatprep.subr.mxu0 0.0
        %3720 = vmatpush2.xpose.msra.mxu0 0.0
        %3721 = vmatprep.subr.mxu0 0.0
        %3722 = vmatpush2.xpose.msra.mxu0 0.0
        %3723 = vmatprep.subr.mxu0 0.0
        %3724 = vmatpush2.xpose.msra.mxu0 0.0
        %3725 = vmatprep.subr.mxu0 0.0
        %3726 = vmatpush2.xpose.msra.mxu0 0.0
        %3727 = vmatprep.mubr.f32.mxu0 0.0
        %v3728 = vand.u32 %v293, 4294901760
        %v3729 = vsub.f32 %v293, %v3728
        %v3730 = vand.u32 %v3729, 4294901760
        %3731 = vmatmul.mubr.f32.gmra.mxu0 %v3730
        %v3732 = vpop.f32.mrf.mxu0
        %v3733 = vadd.f32 %v3630, %v3732
        %v3734 = vpop.f32.mrf.mxu0
        %3735 = vmatprep.mubr.f32.mxu0 0.0
        %v3736 = vand.u32 %v294, 4294901760
        %v3737 = vsub.f32 %v294, %v3736
        %v3738 = vand.u32 %v3737, 4294901760
        %3739 = vmatmul.mubr.f32.gmra.mxu0 %v3738
        %v3740 = vpop.f32.mrf.mxu0
        %v3741 = vadd.f32 %v3637, %v3740
        %v3742 = vpop.f32.mrf.mxu0
        %3743 = vmatprep.mubr.f32.mxu0 0.0
        %v3744 = vand.u32 %v295, 4294901760
        %v3745 = vsub.f32 %v295, %v3744
        %v3746 = vand.u32 %v3745, 4294901760
        %3747 = vmatmul.mubr.f32.gmra.mxu0 %v3746
        %v3748 = vpop.f32.mrf.mxu0
        %v3749 = vadd.f32 %v3644, %v3748
        %v3750 = vpop.f32.mrf.mxu0
        %3751 = vdwg.mxu0
        %3752 = vmatprep.subr.mxu0 0.0
        %v3753 = vand.u32 %v3254, 4294901760
        %v3754 = vsub.f32 %v3254, %v3753
        %v3755 = vand.u32 %v3754, 4294901760
        %3756 = vmatpush1.xpose.msra.mxu0 %v3755
        %3757 = vmatprep.subr.mxu0 0.0
        %v3758 = vand.u32 %v3253, 4294901760
        %v3759 = vsub.f32 %v3253, %v3758
        %v3760 = vand.u32 %v3759, 4294901760
        %3761 = vmatpush1.xpose.msra.mxu0 %v3760
        %3762 = vmatprep.subr.mxu0 0.0
        %v3763 = vand.u32 %v3252, 4294901760
        %v3764 = vsub.f32 %v3252, %v3763
        %v3765 = vand.u32 %v3764, 4294901760
        %3766 = vmatpush1.xpose.msra.mxu0 %v3765
        %3767 = vmatprep.subr.mxu0 0.0
        %v3768 = vand.u32 %v3251, 4294901760
        %v3769 = vsub.f32 %v3251, %v3768
        %v3770 = vand.u32 %v3769, 4294901760
        %3771 = vmatpush1.xpose.msra.mxu0 %v3770
        %3772 = vmatprep.subr.mxu0 0.0
        %v3773 = vand.u32 %v3250, 4294901760
        %v3774 = vsub.f32 %v3250, %v3773
        %v3775 = vand.u32 %v3774, 4294901760
        %3776 = vmatpush1.xpose.msra.mxu0 %v3775
        %3777 = vmatprep.subr.mxu0 0.0
        %v3778 = vand.u32 %v3249, 4294901760
        %v3779 = vsub.f32 %v3249, %v3778
        %v3780 = vand.u32 %v3779, 4294901760
        %3781 = vmatpush1.xpose.msra.mxu0 %v3780
        %3782 = vmatprep.subr.mxu0 0.0
        %v3783 = vand.u32 %v3248, 4294901760
        %v3784 = vsub.f32 %v3248, %v3783
        %v3785 = vand.u32 %v3784, 4294901760
        %3786 = vmatpush1.xpose.msra.mxu0 %v3785
        %3787 = vmatprep.subr.mxu0 0.0
        %v3788 = vand.u32 %v3247, 4294901760
        %v3789 = vsub.f32 %v3247, %v3788
        %v3790 = vand.u32 %v3789, 4294901760
        %3791 = vmatpush1.xpose.msra.mxu0 %v3790
        %3792 = vmatprep.subr.mxu0 0.0
        %v3793 = vand.u32 %v3246, 4294901760
        %v3794 = vsub.f32 %v3246, %v3793
        %v3795 = vand.u32 %v3794, 4294901760
        %3796 = vmatpush1.xpose.msra.mxu0 %v3795
        %3797 = vmatprep.subr.mxu0 0.0
        %v3798 = vand.u32 %v3245, 4294901760
        %v3799 = vsub.f32 %v3245, %v3798
        %v3800 = vand.u32 %v3799, 4294901760
        %3801 = vmatpush1.xpose.msra.mxu0 %v3800
        %3802 = vmatprep.subr.mxu0 0.0
        %v3803 = vand.u32 %v3244, 4294901760
        %v3804 = vsub.f32 %v3244, %v3803
        %v3805 = vand.u32 %v3804, 4294901760
        %3806 = vmatpush1.xpose.msra.mxu0 %v3805
        %3807 = vmatprep.subr.mxu0 0.0
        %v3808 = vand.u32 %v3243, 4294901760
        %v3809 = vsub.f32 %v3243, %v3808
        %v3810 = vand.u32 %v3809, 4294901760
        %3811 = vmatpush1.xpose.msra.mxu0 %v3810
        %3812 = vmatprep.subr.mxu0 0.0
        %v3813 = vand.u32 %v3242, 4294901760
        %v3814 = vsub.f32 %v3242, %v3813
        %v3815 = vand.u32 %v3814, 4294901760
        %3816 = vmatpush1.xpose.msra.mxu0 %v3815
        %3817 = vmatprep.subr.mxu0 0.0
        %v3818 = vand.u32 %v3241, 4294901760
        %v3819 = vsub.f32 %v3241, %v3818
        %v3820 = vand.u32 %v3819, 4294901760
        %3821 = vmatpush1.xpose.msra.mxu0 %v3820
        %3822 = vmatprep.subr.mxu0 0.0
        %v3823 = vand.u32 %v3240, 4294901760
        %v3824 = vsub.f32 %v3240, %v3823
        %v3825 = vand.u32 %v3824, 4294901760
        %3826 = vmatpush1.xpose.msra.mxu0 %v3825
        %3827 = vmatprep.subr.mxu0 0.0
        %v3828 = vand.u32 %v3239, 4294901760
        %v3829 = vsub.f32 %v3239, %v3828
        %v3830 = vand.u32 %v3829, 4294901760
        %3831 = vmatpush1.xpose.msra.mxu0 %v3830
        %3832 = vmatprep.subr.mxu0 0.0
        %3833 = vmatpush2.xpose.msra.mxu0 0.0
        %3834 = vmatprep.subr.mxu0 0.0
        %3835 = vmatpush2.xpose.msra.mxu0 0.0
        %3836 = vmatprep.subr.mxu0 0.0
        %3837 = vmatpush2.xpose.msra.mxu0 0.0
        %3838 = vmatprep.subr.mxu0 0.0
        %3839 = vmatpush2.xpose.msra.mxu0 0.0
        %3840 = vmatprep.subr.mxu0 0.0
        %3841 = vmatpush2.xpose.msra.mxu0 0.0
        %3842 = vmatprep.subr.mxu0 0.0
        %3843 = vmatpush2.xpose.msra.mxu0 0.0
        %3844 = vmatprep.subr.mxu0 0.0
        %3845 = vmatpush2.xpose.msra.mxu0 0.0
        %3846 = vmatprep.subr.mxu0 0.0
        %3847 = vmatpush2.xpose.msra.mxu0 0.0
        %3848 = vmatprep.subr.mxu0 0.0
        %3849 = vmatpush2.xpose.msra.mxu0 0.0
        %3850 = vmatprep.subr.mxu0 0.0
        %3851 = vmatpush2.xpose.msra.mxu0 0.0
        %3852 = vmatprep.subr.mxu0 0.0
        %3853 = vmatpush2.xpose.msra.mxu0 0.0
        %3854 = vmatprep.subr.mxu0 0.0
        %3855 = vmatpush2.xpose.msra.mxu0 0.0
        %3856 = vmatprep.subr.mxu0 0.0
        %3857 = vmatpush2.xpose.msra.mxu0 0.0
        %3858 = vmatprep.subr.mxu0 0.0
        %3859 = vmatpush2.xpose.msra.mxu0 0.0
        %3860 = vmatprep.subr.mxu0 0.0
        %3861 = vmatpush2.xpose.msra.mxu0 0.0
        %3862 = vmatprep.subr.mxu0 0.0
        %3863 = vmatpush2.xpose.msra.mxu0 0.0
        %3864 = vmatprep.mubr.f32.mxu0 0.0
        %v3865 = vand.u32 %v293, 4294901760
        %3866 = vmatmul.mubr.f32.gmra.mxu0 %v3865
        %v3867 = vpop.f32.mrf.mxu0
        %v3868 = vadd.f32 %v3733, %v3867
        %v3869 = vpop.f32.mrf.mxu0
        %3870 = vmatprep.mubr.f32.mxu0 0.0
        %v3871 = vand.u32 %v294, 4294901760
        %3872 = vmatmul.mubr.f32.gmra.mxu0 %v3871
        %v3873 = vpop.f32.mrf.mxu0
        %v3874 = vadd.f32 %v3741, %v3873
        %v3875 = vpop.f32.mrf.mxu0
        %3876 = vmatprep.mubr.f32.mxu0 0.0
        %v3877 = vand.u32 %v295, 4294901760
        %3878 = vmatmul.mubr.f32.gmra.mxu0 %v3877
        %v3879 = vpop.f32.mrf.mxu0
        %v3880 = vadd.f32 %v3749, %v3879
        %v3881 = vpop.f32.mrf.mxu0
        %3882 = vdwg.mxu0
        %3883 = vmatprep.subr.mxu0 0.0
        %v3884 = vand.u32 %v3254, 4294901760
        %3885 = vmatpush1.xpose.msra.mxu0 %v3884
        %3886 = vmatprep.subr.mxu0 0.0
        %v3887 = vand.u32 %v3253, 4294901760
        %3888 = vmatpush1.xpose.msra.mxu0 %v3887
        %3889 = vmatprep.subr.mxu0 0.0
        %v3890 = vand.u32 %v3252, 4294901760
        %3891 = vmatpush1.xpose.msra.mxu0 %v3890
        %3892 = vmatprep.subr.mxu0 0.0
        %v3893 = vand.u32 %v3251, 4294901760
        %3894 = vmatpush1.xpose.msra.mxu0 %v3893
        %3895 = vmatprep.subr.mxu0 0.0
        %v3896 = vand.u32 %v3250, 4294901760
        %3897 = vmatpush1.xpose.msra.mxu0 %v3896
        %3898 = vmatprep.subr.mxu0 0.0
        %v3899 = vand.u32 %v3249, 4294901760
        %3900 = vmatpush1.xpose.msra.mxu0 %v3899
        %3901 = vmatprep.subr.mxu0 0.0
        %v3902 = vand.u32 %v3248, 4294901760
        %3903 = vmatpush1.xpose.msra.mxu0 %v3902
        %3904 = vmatprep.subr.mxu0 0.0
        %v3905 = vand.u32 %v3247, 4294901760
        %3906 = vmatpush1.xpose.msra.mxu0 %v3905
        %3907 = vmatprep.subr.mxu0 0.0
        %v3908 = vand.u32 %v3246, 4294901760
        %3909 = vmatpush1.xpose.msra.mxu0 %v3908
        %3910 = vmatprep.subr.mxu0 0.0
        %v3911 = vand.u32 %v3245, 4294901760
        %3912 = vmatpush1.xpose.msra.mxu0 %v3911
        %3913 = vmatprep.subr.mxu0 0.0
        %v3914 = vand.u32 %v3244, 4294901760
        %3915 = vmatpush1.xpose.msra.mxu0 %v3914
        %3916 = vmatprep.subr.mxu0 0.0
        %v3917 = vand.u32 %v3243, 4294901760
        %3918 = vmatpush1.xpose.msra.mxu0 %v3917
        %3919 = vmatprep.subr.mxu0 0.0
        %v3920 = vand.u32 %v3242, 4294901760
        %3921 = vmatpush1.xpose.msra.mxu0 %v3920
        %3922 = vmatprep.subr.mxu0 0.0
        %v3923 = vand.u32 %v3241, 4294901760
        %3924 = vmatpush1.xpose.msra.mxu0 %v3923
        %3925 = vmatprep.subr.mxu0 0.0
        %v3926 = vand.u32 %v3240, 4294901760
        %3927 = vmatpush1.xpose.msra.mxu0 %v3926
        %3928 = vmatprep.subr.mxu0 0.0
        %v3929 = vand.u32 %v3239, 4294901760
        %3930 = vmatpush1.xpose.msra.mxu0 %v3929
        %3931 = vmatprep.subr.mxu0 0.0
        %3932 = vmatpush2.xpose.msra.mxu0 0.0
        %3933 = vmatprep.subr.mxu0 0.0
        %3934 = vmatpush2.xpose.msra.mxu0 0.0
        %3935 = vmatprep.subr.mxu0 0.0
        %3936 = vmatpush2.xpose.msra.mxu0 0.0
        %3937 = vmatprep.subr.mxu0 0.0
        %3938 = vmatpush2.xpose.msra.mxu0 0.0
        %3939 = vmatprep.subr.mxu0 0.0
        %3940 = vmatpush2.xpose.msra.mxu0 0.0
        %3941 = vmatprep.subr.mxu0 0.0
        %3942 = vmatpush2.xpose.msra.mxu0 0.0
        %3943 = vmatprep.subr.mxu0 0.0
        %3944 = vmatpush2.xpose.msra.mxu0 0.0
        %3945 = vmatprep.subr.mxu0 0.0
        %3946 = vmatpush2.xpose.msra.mxu0 0.0
        %3947 = vmatprep.subr.mxu0 0.0
        %3948 = vmatpush2.xpose.msra.mxu0 0.0
        %3949 = vmatprep.subr.mxu0 0.0
        %3950 = vmatpush2.xpose.msra.mxu0 0.0
        %3951 = vmatprep.subr.mxu0 0.0
        %3952 = vmatpush2.xpose.msra.mxu0 0.0
        %3953 = vmatprep.subr.mxu0 0.0
        %3954 = vmatpush2.xpose.msra.mxu0 0.0
        %3955 = vmatprep.subr.mxu0 0.0
        %3956 = vmatpush2.xpose.msra.mxu0 0.0
        %3957 = vmatprep.subr.mxu0 0.0
        %3958 = vmatpush2.xpose.msra.mxu0 0.0
        %3959 = vmatprep.subr.mxu0 0.0
        %3960 = vmatpush2.xpose.msra.mxu0 0.0
        %3961 = vmatprep.subr.mxu0 0.0
        %3962 = vmatpush2.xpose.msra.mxu0 0.0
        %3963 = vmatprep.mubr.f32.mxu0 0.0
        %v3964 = vand.u32 %v293, 4294901760
        %3965 = vmatmul.mubr.f32.gmra.mxu0 %v3964
        %v3966 = vpop.f32.mrf.mxu0
        %v3967 = vadd.f32 %v3868, %v3966
        %v3968 = vpop.f32.mrf.mxu0
        %3969 = vmatprep.mubr.f32.mxu0 0.0
        %v3970 = vand.u32 %v294, 4294901760
        %3971 = vmatmul.mubr.f32.gmra.mxu0 %v3970
        %v3972 = vpop.f32.mrf.mxu0
        %v3973 = vadd.f32 %v3874, %v3972
        %v3974 = vpop.f32.mrf.mxu0
        %3975 = vmatprep.mubr.f32.mxu0 0.0
        %v3976 = vand.u32 %v295, 4294901760
        %3977 = vmatmul.mubr.f32.gmra.mxu0 %v3976
        %v3978 = vpop.f32.mrf.mxu0
        %v3979 = vadd.f32 %v3880, %v3978
        %v3980 = vpop.f32.mrf.mxu0
        %3981 = vdwg.mxu0
        %s3982 = scalar_lea.vmem %s249, 48 [#allocation2]
        %3983 = vst [vmem:[%s3982] sm:$0xff] %v3967
        %3984 = vst [vmem:[%s3982 + $0x8] sm:$0xff] %v3973
        %3985 = vst [vmem:[%s3982 + $0x10] sm:$0xff] %v3979
        %v3986 = vadd.f32 %v3979, 0.5
        %v3987 = vcvt.f32.s32.to.zero.pseudo %v3986
        %v3988 = vsel %vm3207, 3.4028235e+38, %v3159
        %v3989 = vsel %vm3208, 3.4028235e+38, %v3160
        %v3990 = vsel %vm3209, 3.4028235e+38, %v3161
        %v3991 = vsel %vm3210, 3.4028235e+38, %v3162
        %v3992 = vsel %vm3211, 3.4028235e+38, %v3163
        %v3993 = vsel %vm3212, 3.4028235e+38, %v3164
        %v3994 = vsel %vm3213, 3.4028235e+38, %v3165
        %v3995 = vsel %vm3214, 3.4028235e+38, %v3166
        %v3996 = vsel %vm3215, 3.4028235e+38, %v3167
        %v3997 = vsel %vm3216, 3.4028235e+38, %v3168
        %v3998 = vsel %vm3217, 3.4028235e+38, %v3169
        %v3999 = vsel %vm3218, 3.4028235e+38, %v3170
        %v4000 = vsel %vm3219, 3.4028235e+38, %v3171
        %v4001 = vsel %vm3220, 3.4028235e+38, %v3172
        %v4002 = vsel %vm3221, 3.4028235e+38, %v3173
        %v4003 = vsel %vm3222, 3.4028235e+38, %v3174
        %4004 = vmin.xlane.f32.xlu0 %v3988
        %v4005 = vpop.xlane.xlu0 %4004
        %4006 = vmin.xlane.f32.xlu0 %v3989
        %v4007 = vpop.xlane.xlu0 %4006
        %4008 = vmin.xlane.f32.xlu0 %v3990
        %v4009 = vpop.xlane.xlu0 %4008
        %4010 = vmin.xlane.f32.xlu0 %v3991
        %v4011 = vpop.xlane.xlu0 %4010
        %4012 = vmin.xlane.f32.xlu0 %v3992
        %v4013 = vpop.xlane.xlu0 %4012
        %4014 = vmin.xlane.f32.xlu0 %v3993
        %v4015 = vpop.xlane.xlu0 %4014
        %4016 = vmin.xlane.f32.xlu0 %v3994
        %v4017 = vpop.xlane.xlu0 %4016
        %4018 = vmin.xlane.f32.xlu0 %v3995
        %v4019 = vpop.xlane.xlu0 %4018
        %4020 = vmin.xlane.f32.xlu0 %v3996
        %v4021 = vpop.xlane.xlu0 %4020
        %4022 = vmin.xlane.f32.xlu0 %v3997
        %v4023 = vpop.xlane.xlu0 %4022
        %4024 = vmin.xlane.f32.xlu0 %v3998
        %v4025 = vpop.xlane.xlu0 %4024
        %4026 = vmin.xlane.f32.xlu0 %v3999
        %v4027 = vpop.xlane.xlu0 %4026
        %4028 = vmin.xlane.f32.xlu0 %v4000
        %v4029 = vpop.xlane.xlu0 %4028
        %4030 = vmin.xlane.f32.xlu0 %v4001
        %v4031 = vpop.xlane.xlu0 %4030
        %4032 = vmin.xlane.f32.xlu0 %v4002
        %v4033 = vpop.xlane.xlu0 %4032
        %4034 = vmin.xlane.f32.xlu0 %v4003
        %v4035 = vpop.xlane.xlu0 %4034
        %vm4036 = vcmp.eq.f32.partialorder %v3988, %v4005
        %vm4037 = vcmp.eq.f32.partialorder %v3989, %v4007
        %vm4038 = vcmp.eq.f32.partialorder %v3990, %v4009
        %vm4039 = vcmp.eq.f32.partialorder %v3991, %v4011
        %vm4040 = vcmp.eq.f32.partialorder %v3992, %v4013
        %vm4041 = vcmp.eq.f32.partialorder %v3993, %v4015
        %vm4042 = vcmp.eq.f32.partialorder %v3994, %v4017
        %vm4043 = vcmp.eq.f32.partialorder %v3995, %v4019
        %vm4044 = vcmp.eq.f32.partialorder %v3996, %v4021
        %vm4045 = vcmp.eq.f32.partialorder %v3997, %v4023
        %vm4046 = vcmp.eq.f32.partialorder %v3998, %v4025
        %vm4047 = vcmp.eq.f32.partialorder %v3999, %v4027
        %vm4048 = vcmp.eq.f32.partialorder %v4000, %v4029
        %vm4049 = vcmp.eq.f32.partialorder %v4001, %v4031
        %vm4050 = vcmp.eq.f32.partialorder %v4002, %v4033
        %vm4051 = vcmp.eq.f32.partialorder %v4003, %v4035
        %v4052 = vsel %vm4036, 1, 0
        %v4053 = vsel %vm4037, 1, 0
        %v4054 = vsel %vm4038, 1, 0
        %v4055 = vsel %vm4039, 1, 0
        %v4056 = vsel %vm4040, 1, 0
        %v4057 = vsel %vm4041, 1, 0
        %v4058 = vsel %vm4042, 1, 0
        %v4059 = vsel %vm4043, 1, 0
        %v4060 = vsel %vm4044, 1, 0
        %v4061 = vsel %vm4045, 1, 0
        %v4062 = vsel %vm4046, 1, 0
        %v4063 = vsel %vm4047, 1, 0
        %v4064 = vsel %vm4048, 1, 0
        %v4065 = vsel %vm4049, 1, 0
        %v4066 = vsel %vm4050, 1, 0
        %v4067 = vsel %vm4051, 1, 0
        %v4068 = vcvt.s32.f32 %v4052
        %v4069 = vcvt.s32.f32 %v4053
        %v4070 = vcvt.s32.f32 %v4054
        %v4071 = vcvt.s32.f32 %v4055
        %v4072 = vcvt.s32.f32 %v4056
        %v4073 = vcvt.s32.f32 %v4057
        %v4074 = vcvt.s32.f32 %v4058
        %v4075 = vcvt.s32.f32 %v4059
        %v4076 = vcvt.s32.f32 %v4060
        %v4077 = vcvt.s32.f32 %v4061
        %v4078 = vcvt.s32.f32 %v4062
        %v4079 = vcvt.s32.f32 %v4063
        %v4080 = vcvt.s32.f32 %v4064
        %v4081 = vcvt.s32.f32 %v4065
        %v4082 = vcvt.s32.f32 %v4066
        %v4083 = vcvt.s32.f32 %v4067
        %4084 = vmatprep.subr.mxu0 0.0
        %v4085 = vand.u32 %v4083, 4294901760
        %4086 = vmatpush1.xpose.msra.mxu0 %v4085
        %4087 = vmatprep.subr.mxu0 0.0
        %v4088 = vand.u32 %v4082, 4294901760
        %4089 = vmatpush1.xpose.msra.mxu0 %v4088
        %4090 = vmatprep.subr.mxu0 0.0
        %v4091 = vand.u32 %v4081, 4294901760
        %4092 = vmatpush1.xpose.msra.mxu0 %v4091
        %4093 = vmatprep.subr.mxu0 0.0
        %v4094 = vand.u32 %v4080, 4294901760
        %4095 = vmatpush1.xpose.msra.mxu0 %v4094
        %4096 = vmatprep.subr.mxu0 0.0
        %v4097 = vand.u32 %v4079, 4294901760
        %4098 = vmatpush1.xpose.msra.mxu0 %v4097
        %4099 = vmatprep.subr.mxu0 0.0
        %v4100 = vand.u32 %v4078, 4294901760
        %4101 = vmatpush1.xpose.msra.mxu0 %v4100
        %4102 = vmatprep.subr.mxu0 0.0
        %v4103 = vand.u32 %v4077, 4294901760
        %4104 = vmatpush1.xpose.msra.mxu0 %v4103
        %4105 = vmatprep.subr.mxu0 0.0
        %v4106 = vand.u32 %v4076, 4294901760
        %4107 = vmatpush1.xpose.msra.mxu0 %v4106
        %4108 = vmatprep.subr.mxu0 0.0
        %v4109 = vand.u32 %v4075, 4294901760
        %4110 = vmatpush1.xpose.msra.mxu0 %v4109
        %4111 = vmatprep.subr.mxu0 0.0
        %v4112 = vand.u32 %v4074, 4294901760
        %4113 = vmatpush1.xpose.msra.mxu0 %v4112
        %4114 = vmatprep.subr.mxu0 0.0
        %v4115 = vand.u32 %v4073, 4294901760
        %4116 = vmatpush1.xpose.msra.mxu0 %v4115
        %4117 = vmatprep.subr.mxu0 0.0
        %v4118 = vand.u32 %v4072, 4294901760
        %4119 = vmatpush1.xpose.msra.mxu0 %v4118
        %4120 = vmatprep.subr.mxu0 0.0
        %v4121 = vand.u32 %v4071, 4294901760
        %4122 = vmatpush1.xpose.msra.mxu0 %v4121
        %4123 = vmatprep.subr.mxu0 0.0
        %v4124 = vand.u32 %v4070, 4294901760
        %4125 = vmatpush1.xpose.msra.mxu0 %v4124
        %4126 = vmatprep.subr.mxu0 0.0
        %v4127 = vand.u32 %v4069, 4294901760
        %4128 = vmatpush1.xpose.msra.mxu0 %v4127
        %4129 = vmatprep.subr.mxu0 0.0
        %v4130 = vand.u32 %v4068, 4294901760
        %4131 = vmatpush1.xpose.msra.mxu0 %v4130
        %4132 = vmatprep.subr.mxu0 0.0
        %4133 = vmatpush2.xpose.msra.mxu0 0.0
        %4134 = vmatprep.subr.mxu0 0.0
        %4135 = vmatpush2.xpose.msra.mxu0 0.0
        %4136 = vmatprep.subr.mxu0 0.0
        %4137 = vmatpush2.xpose.msra.mxu0 0.0
        %4138 = vmatprep.subr.mxu0 0.0
        %4139 = vmatpush2.xpose.msra.mxu0 0.0
        %4140 = vmatprep.subr.mxu0 0.0
        %4141 = vmatpush2.xpose.msra.mxu0 0.0
        %4142 = vmatprep.subr.mxu0 0.0
        %4143 = vmatpush2.xpose.msra.mxu0 0.0
        %4144 = vmatprep.subr.mxu0 0.0
        %4145 = vmatpush2.xpose.msra.mxu0 0.0
        %4146 = vmatprep.subr.mxu0 0.0
        %4147 = vmatpush2.xpose.msra.mxu0 0.0
        %4148 = vmatprep.subr.mxu0 0.0
        %4149 = vmatpush2.xpose.msra.mxu0 0.0
        %4150 = vmatprep.subr.mxu0 0.0
        %4151 = vmatpush2.xpose.msra.mxu0 0.0
        %4152 = vmatprep.subr.mxu0 0.0
        %4153 = vmatpush2.xpose.msra.mxu0 0.0
        %4154 = vmatprep.subr.mxu0 0.0
        %4155 = vmatpush2.xpose.msra.mxu0 0.0
        %4156 = vmatprep.subr.mxu0 0.0
        %4157 = vmatpush2.xpose.msra.mxu0 0.0
        %4158 = vmatprep.subr.mxu0 0.0
        %4159 = vmatpush2.xpose.msra.mxu0 0.0
        %4160 = vmatprep.subr.mxu0 0.0
        %4161 = vmatpush2.xpose.msra.mxu0 0.0
        %4162 = vmatprep.subr.mxu0 0.0
        %4163 = vmatpush2.xpose.msra.mxu0 0.0
        %4164 = vmatprep.mubr.f32.mxu0 0.0
        %v4165 = vand.u32 %v293, 4294901760
        %v4166 = vsub.f32 %v293, %v4165
        %v4167 = vand.u32 %v4166, 4294901760
        %v4168 = vsub.f32 %v4166, %v4167
        %v4169 = vand.u32 %v4168, 4294901760
        %4170 = vmatmul.mubr.f32.gmra.mxu0 %v4169
        %v4171 = vpop.f32.mrf.mxu0
        %v4172 = vadd.f32 0.0, %v4171
        %v4173 = vpop.f32.mrf.mxu0
        %4174 = vmatprep.mubr.f32.mxu0 0.0
        %v4175 = vand.u32 %v294, 4294901760
        %v4176 = vsub.f32 %v294, %v4175
        %v4177 = vand.u32 %v4176, 4294901760
        %v4178 = vsub.f32 %v4176, %v4177
        %v4179 = vand.u32 %v4178, 4294901760
        %4180 = vmatmul.mubr.f32.gmra.mxu0 %v4179
        %v4181 = vpop.f32.mrf.mxu0
        %v4182 = vadd.f32 0.0, %v4181
        %v4183 = vpop.f32.mrf.mxu0
        %4184 = vmatprep.mubr.f32.mxu0 0.0
        %v4185 = vand.u32 %v295, 4294901760
        %v4186 = vsub.f32 %v295, %v4185
        %v4187 = vand.u32 %v4186, 4294901760
        %v4188 = vsub.f32 %v4186, %v4187
        %v4189 = vand.u32 %v4188, 4294901760
        %4190 = vmatmul.mubr.f32.gmra.mxu0 %v4189
        %v4191 = vpop.f32.mrf.mxu0
        %v4192 = vadd.f32 0.0, %v4191
        %v4193 = vpop.f32.mrf.mxu0
        %4194 = vdwg.mxu0
        %4195 = vmatprep.subr.mxu0 0.0
        %v4196 = vand.u32 %v4083, 4294901760
        %v4197 = vsub.f32 %v4083, %v4196
        %v4198 = vand.u32 %v4197, 4294901760
        %v4199 = vsub.f32 %v4197, %v4198
        %v4200 = vand.u32 %v4199, 4294901760
        %4201 = vmatpush1.xpose.msra.mxu0 %v4200
        %4202 = vmatprep.subr.mxu0 0.0
        %v4203 = vand.u32 %v4082, 4294901760
        %v4204 = vsub.f32 %v4082, %v4203
        %v4205 = vand.u32 %v4204, 4294901760
        %v4206 = vsub.f32 %v4204, %v4205
        %v4207 = vand.u32 %v4206, 4294901760
        %4208 = vmatpush1.xpose.msra.mxu0 %v4207
        %4209 = vmatprep.subr.mxu0 0.0
        %v4210 = vand.u32 %v4081, 4294901760
        %v4211 = vsub.f32 %v4081, %v4210
        %v4212 = vand.u32 %v4211, 4294901760
        %v4213 = vsub.f32 %v4211, %v4212
        %v4214 = vand.u32 %v4213, 4294901760
        %4215 = vmatpush1.xpose.msra.mxu0 %v4214
        %4216 = vmatprep.subr.mxu0 0.0
        %v4217 = vand.u32 %v4080, 4294901760
        %v4218 = vsub.f32 %v4080, %v4217
        %v4219 = vand.u32 %v4218, 4294901760
        %v4220 = vsub.f32 %v4218, %v4219
        %v4221 = vand.u32 %v4220, 4294901760
        %4222 = vmatpush1.xpose.msra.mxu0 %v4221
        %4223 = vmatprep.subr.mxu0 0.0
        %v4224 = vand.u32 %v4079, 4294901760
        %v4225 = vsub.f32 %v4079, %v4224
        %v4226 = vand.u32 %v4225, 4294901760
        %v4227 = vsub.f32 %v4225, %v4226
        %v4228 = vand.u32 %v4227, 4294901760
        %4229 = vmatpush1.xpose.msra.mxu0 %v4228
        %4230 = vmatprep.subr.mxu0 0.0
        %v4231 = vand.u32 %v4078, 4294901760
        %v4232 = vsub.f32 %v4078, %v4231
        %v4233 = vand.u32 %v4232, 4294901760
        %v4234 = vsub.f32 %v4232, %v4233
        %v4235 = vand.u32 %v4234, 4294901760
        %4236 = vmatpush1.xpose.msra.mxu0 %v4235
        %4237 = vmatprep.subr.mxu0 0.0
        %v4238 = vand.u32 %v4077, 4294901760
        %v4239 = vsub.f32 %v4077, %v4238
        %v4240 = vand.u32 %v4239, 4294901760
        %v4241 = vsub.f32 %v4239, %v4240
        %v4242 = vand.u32 %v4241, 4294901760
        %4243 = vmatpush1.xpose.msra.mxu0 %v4242
        %4244 = vmatprep.subr.mxu0 0.0
        %v4245 = vand.u32 %v4076, 4294901760
        %v4246 = vsub.f32 %v4076, %v4245
        %v4247 = vand.u32 %v4246, 4294901760
        %v4248 = vsub.f32 %v4246, %v4247
        %v4249 = vand.u32 %v4248, 4294901760
        %4250 = vmatpush1.xpose.msra.mxu0 %v4249
        %4251 = vmatprep.subr.mxu0 0.0
        %v4252 = vand.u32 %v4075, 4294901760
        %v4253 = vsub.f32 %v4075, %v4252
        %v4254 = vand.u32 %v4253, 4294901760
        %v4255 = vsub.f32 %v4253, %v4254
        %v4256 = vand.u32 %v4255, 4294901760
        %4257 = vmatpush1.xpose.msra.mxu0 %v4256
        %4258 = vmatprep.subr.mxu0 0.0
        %v4259 = vand.u32 %v4074, 4294901760
        %v4260 = vsub.f32 %v4074, %v4259
        %v4261 = vand.u32 %v4260, 4294901760
        %v4262 = vsub.f32 %v4260, %v4261
        %v4263 = vand.u32 %v4262, 4294901760
        %4264 = vmatpush1.xpose.msra.mxu0 %v4263
        %4265 = vmatprep.subr.mxu0 0.0
        %v4266 = vand.u32 %v4073, 4294901760
        %v4267 = vsub.f32 %v4073, %v4266
        %v4268 = vand.u32 %v4267, 4294901760
        %v4269 = vsub.f32 %v4267, %v4268
        %v4270 = vand.u32 %v4269, 4294901760
        %4271 = vmatpush1.xpose.msra.mxu0 %v4270
        %4272 = vmatprep.subr.mxu0 0.0
        %v4273 = vand.u32 %v4072, 4294901760
        %v4274 = vsub.f32 %v4072, %v4273
        %v4275 = vand.u32 %v4274, 4294901760
        %v4276 = vsub.f32 %v4274, %v4275
        %v4277 = vand.u32 %v4276, 4294901760
        %4278 = vmatpush1.xpose.msra.mxu0 %v4277
        %4279 = vmatprep.subr.mxu0 0.0
        %v4280 = vand.u32 %v4071, 4294901760
        %v4281 = vsub.f32 %v4071, %v4280
        %v4282 = vand.u32 %v4281, 4294901760
        %v4283 = vsub.f32 %v4281, %v4282
        %v4284 = vand.u32 %v4283, 4294901760
        %4285 = vmatpush1.xpose.msra.mxu0 %v4284
        %4286 = vmatprep.subr.mxu0 0.0
        %v4287 = vand.u32 %v4070, 4294901760
        %v4288 = vsub.f32 %v4070, %v4287
        %v4289 = vand.u32 %v4288, 4294901760
        %v4290 = vsub.f32 %v4288, %v4289
        %v4291 = vand.u32 %v4290, 4294901760
        %4292 = vmatpush1.xpose.msra.mxu0 %v4291
        %4293 = vmatprep.subr.mxu0 0.0
        %v4294 = vand.u32 %v4069, 4294901760
        %v4295 = vsub.f32 %v4069, %v4294
        %v4296 = vand.u32 %v4295, 4294901760
        %v4297 = vsub.f32 %v4295, %v4296
        %v4298 = vand.u32 %v4297, 4294901760
        %4299 = vmatpush1.xpose.msra.mxu0 %v4298
        %4300 = vmatprep.subr.mxu0 0.0
        %v4301 = vand.u32 %v4068, 4294901760
        %v4302 = vsub.f32 %v4068, %v4301
        %v4303 = vand.u32 %v4302, 4294901760
        %v4304 = vsub.f32 %v4302, %v4303
        %v4305 = vand.u32 %v4304, 4294901760
        %4306 = vmatpush1.xpose.msra.mxu0 %v4305
        %4307 = vmatprep.subr.mxu0 0.0
        %4308 = vmatpush2.xpose.msra.mxu0 0.0
        %4309 = vmatprep.subr.mxu0 0.0
        %4310 = vmatpush2.xpose.msra.mxu0 0.0
        %4311 = vmatprep.subr.mxu0 0.0
        %4312 = vmatpush2.xpose.msra.mxu0 0.0
        %4313 = vmatprep.subr.mxu0 0.0
        %4314 = vmatpush2.xpose.msra.mxu0 0.0
        %4315 = vmatprep.subr.mxu0 0.0
        %4316 = vmatpush2.xpose.msra.mxu0 0.0
        %4317 = vmatprep.subr.mxu0 0.0
        %4318 = vmatpush2.xpose.msra.mxu0 0.0
        %4319 = vmatprep.subr.mxu0 0.0
        %4320 = vmatpush2.xpose.msra.mxu0 0.0
        %4321 = vmatprep.subr.mxu0 0.0
        %4322 = vmatpush2.xpose.msra.mxu0 0.0
        %4323 = vmatprep.subr.mxu0 0.0
        %4324 = vmatpush2.xpose.msra.mxu0 0.0
        %4325 = vmatprep.subr.mxu0 0.0
        %4326 = vmatpush2.xpose.msra.mxu0 0.0
        %4327 = vmatprep.subr.mxu0 0.0
        %4328 = vmatpush2.xpose.msra.mxu0 0.0
        %4329 = vmatprep.subr.mxu0 0.0
        %4330 = vmatpush2.xpose.msra.mxu0 0.0
        %4331 = vmatprep.subr.mxu0 0.0
        %4332 = vmatpush2.xpose.msra.mxu0 0.0
        %4333 = vmatprep.subr.mxu0 0.0
        %4334 = vmatpush2.xpose.msra.mxu0 0.0
        %4335 = vmatprep.subr.mxu0 0.0
        %4336 = vmatpush2.xpose.msra.mxu0 0.0
        %4337 = vmatprep.subr.mxu0 0.0
        %4338 = vmatpush2.xpose.msra.mxu0 0.0
        %4339 = vmatprep.mubr.f32.mxu0 0.0
        %v4340 = vand.u32 %v293, 4294901760
        %4341 = vmatmul.mubr.f32.gmra.mxu0 %v4340
        %v4342 = vpop.f32.mrf.mxu0
        %v4343 = vadd.f32 %v4172, %v4342
        %v4344 = vpop.f32.mrf.mxu0
        %4345 = vmatprep.mubr.f32.mxu0 0.0
        %v4346 = vand.u32 %v294, 4294901760
        %4347 = vmatmul.mubr.f32.gmra.mxu0 %v4346
        %v4348 = vpop.f32.mrf.mxu0
        %v4349 = vadd.f32 %v4182, %v4348
        %v4350 = vpop.f32.mrf.mxu0
        %4351 = vmatprep.mubr.f32.mxu0 0.0
        %v4352 = vand.u32 %v295, 4294901760
        %4353 = vmatmul.mubr.f32.gmra.mxu0 %v4352
        %v4354 = vpop.f32.mrf.mxu0
        %v4355 = vadd.f32 %v4192, %v4354
        %v4356 = vpop.f32.mrf.mxu0
        %4357 = vdwg.mxu0
        %4358 = vmatprep.subr.mxu0 0.0
        %v4359 = vand.u32 %v4083, 4294901760
        %v4360 = vsub.f32 %v4083, %v4359
        %4361 = vmatpush1.xpose.msra.mxu0 %v4360
        %4362 = vmatprep.subr.mxu0 0.0
        %v4363 = vand.u32 %v4082, 4294901760
        %v4364 = vsub.f32 %v4082, %v4363
        %4365 = vmatpush1.xpose.msra.mxu0 %v4364
        %4366 = vmatprep.subr.mxu0 0.0
        %v4367 = vand.u32 %v4081, 4294901760
        %v4368 = vsub.f32 %v4081, %v4367
        %4369 = vmatpush1.xpose.msra.mxu0 %v4368
        %4370 = vmatprep.subr.mxu0 0.0
        %v4371 = vand.u32 %v4080, 4294901760
        %v4372 = vsub.f32 %v4080, %v4371
        %4373 = vmatpush1.xpose.msra.mxu0 %v4372
        %4374 = vmatprep.subr.mxu0 0.0
        %v4375 = vand.u32 %v4079, 4294901760
        %v4376 = vsub.f32 %v4079, %v4375
        %4377 = vmatpush1.xpose.msra.mxu0 %v4376
        %4378 = vmatprep.subr.mxu0 0.0
        %v4379 = vand.u32 %v4078, 4294901760
        %v4380 = vsub.f32 %v4078, %v4379
        %4381 = vmatpush1.xpose.msra.mxu0 %v4380
        %4382 = vmatprep.subr.mxu0 0.0
        %v4383 = vand.u32 %v4077, 4294901760
        %v4384 = vsub.f32 %v4077, %v4383
        %4385 = vmatpush1.xpose.msra.mxu0 %v4384
        %4386 = vmatprep.subr.mxu0 0.0
        %v4387 = vand.u32 %v4076, 4294901760
        %v4388 = vsub.f32 %v4076, %v4387
        %4389 = vmatpush1.xpose.msra.mxu0 %v4388
        %4390 = vmatprep.subr.mxu0 0.0
        %v4391 = vand.u32 %v4075, 4294901760
        %v4392 = vsub.f32 %v4075, %v4391
        %4393 = vmatpush1.xpose.msra.mxu0 %v4392
        %4394 = vmatprep.subr.mxu0 0.0
        %v4395 = vand.u32 %v4074, 4294901760
        %v4396 = vsub.f32 %v4074, %v4395
        %4397 = vmatpush1.xpose.msra.mxu0 %v4396
        %4398 = vmatprep.subr.mxu0 0.0
        %v4399 = vand.u32 %v4073, 4294901760
        %v4400 = vsub.f32 %v4073, %v4399
        %4401 = vmatpush1.xpose.msra.mxu0 %v4400
        %4402 = vmatprep.subr.mxu0 0.0
        %v4403 = vand.u32 %v4072, 4294901760
        %v4404 = vsub.f32 %v4072, %v4403
        %4405 = vmatpush1.xpose.msra.mxu0 %v4404
        %4406 = vmatprep.subr.mxu0 0.0
        %v4407 = vand.u32 %v4071, 4294901760
        %v4408 = vsub.f32 %v4071, %v4407
        %4409 = vmatpush1.xpose.msra.mxu0 %v4408
        %4410 = vmatprep.subr.mxu0 0.0
        %v4411 = vand.u32 %v4070, 4294901760
        %v4412 = vsub.f32 %v4070, %v4411
        %4413 = vmatpush1.xpose.msra.mxu0 %v4412
        %4414 = vmatprep.subr.mxu0 0.0
        %v4415 = vand.u32 %v4069, 4294901760
        %v4416 = vsub.f32 %v4069, %v4415
        %4417 = vmatpush1.xpose.msra.mxu0 %v4416
        %4418 = vmatprep.subr.mxu0 0.0
        %v4419 = vand.u32 %v4068, 4294901760
        %v4420 = vsub.f32 %v4068, %v4419
        %4421 = vmatpush1.xpose.msra.mxu0 %v4420
        %4422 = vmatprep.subr.mxu0 0.0
        %4423 = vmatpush2.xpose.msra.mxu0 0.0
        %4424 = vmatprep.subr.mxu0 0.0
        %4425 = vmatpush2.xpose.msra.mxu0 0.0
        %4426 = vmatprep.subr.mxu0 0.0
        %4427 = vmatpush2.xpose.msra.mxu0 0.0
        %4428 = vmatprep.subr.mxu0 0.0
        %4429 = vmatpush2.xpose.msra.mxu0 0.0
        %4430 = vmatprep.subr.mxu0 0.0
        %4431 = vmatpush2.xpose.msra.mxu0 0.0
        %4432 = vmatprep.subr.mxu0 0.0
        %4433 = vmatpush2.xpose.msra.mxu0 0.0
        %4434 = vmatprep.subr.mxu0 0.0
        %4435 = vmatpush2.xpose.msra.mxu0 0.0
        %4436 = vmatprep.subr.mxu0 0.0
        %4437 = vmatpush2.xpose.msra.mxu0 0.0
        %4438 = vmatprep.subr.mxu0 0.0
        %4439 = vmatpush2.xpose.msra.mxu0 0.0
        %4440 = vmatprep.subr.mxu0 0.0
        %4441 = vmatpush2.xpose.msra.mxu0 0.0
        %4442 = vmatprep.subr.mxu0 0.0
        %4443 = vmatpush2.xpose.msra.mxu0 0.0
        %4444 = vmatprep.subr.mxu0 0.0
        %4445 = vmatpush2.xpose.msra.mxu0 0.0
        %4446 = vmatprep.subr.mxu0 0.0
        %4447 = vmatpush2.xpose.msra.mxu0 0.0
        %4448 = vmatprep.subr.mxu0 0.0
        %4449 = vmatpush2.xpose.msra.mxu0 0.0
        %4450 = vmatprep.subr.mxu0 0.0
        %4451 = vmatpush2.xpose.msra.mxu0 0.0
        %4452 = vmatprep.subr.mxu0 0.0
        %4453 = vmatpush2.xpose.msra.mxu0 0.0
        %4454 = vmatprep.mubr.f32.mxu0 0.0
        %v4455 = vand.u32 %v293, 4294901760
        %v4456 = vsub.f32 %v293, %v4455
        %4457 = vmatmul.mubr.f32.gmra.mxu0 %v4456
        %v4458 = vpop.f32.mrf.mxu0
        %v4459 = vadd.f32 %v4343, %v4458
        %v4460 = vpop.f32.mrf.mxu0
        %4461 = vmatprep.mubr.f32.mxu0 0.0
        %v4462 = vand.u32 %v294, 4294901760
        %v4463 = vsub.f32 %v294, %v4462
        %4464 = vmatmul.mubr.f32.gmra.mxu0 %v4463
        %v4465 = vpop.f32.mrf.mxu0
        %v4466 = vadd.f32 %v4349, %v4465
        %v4467 = vpop.f32.mrf.mxu0
        %4468 = vmatprep.mubr.f32.mxu0 0.0
        %v4469 = vand.u32 %v295, 4294901760
        %v4470 = vsub.f32 %v295, %v4469
        %4471 = vmatmul.mubr.f32.gmra.mxu0 %v4470
        %v4472 = vpop.f32.mrf.mxu0
        %v4473 = vadd.f32 %v4355, %v4472
        %v4474 = vpop.f32.mrf.mxu0
        %4475 = vdwg.mxu0
        %4476 = vmatprep.subr.mxu0 0.0
        %v4477 = vand.u32 %v4083, 4294901760
        %4478 = vmatpush1.xpose.msra.mxu0 %v4477
        %4479 = vmatprep.subr.mxu0 0.0
        %v4480 = vand.u32 %v4082, 4294901760
        %4481 = vmatpush1.xpose.msra.mxu0 %v4480
        %4482 = vmatprep.subr.mxu0 0.0
        %v4483 = vand.u32 %v4081, 4294901760
        %4484 = vmatpush1.xpose.msra.mxu0 %v4483
        %4485 = vmatprep.subr.mxu0 0.0
        %v4486 = vand.u32 %v4080, 4294901760
        %4487 = vmatpush1.xpose.msra.mxu0 %v4486
        %4488 = vmatprep.subr.mxu0 0.0
        %v4489 = vand.u32 %v4079, 4294901760
        %4490 = vmatpush1.xpose.msra.mxu0 %v4489
        %4491 = vmatprep.subr.mxu0 0.0
        %v4492 = vand.u32 %v4078, 4294901760
        %4493 = vmatpush1.xpose.msra.mxu0 %v4492
        %4494 = vmatprep.subr.mxu0 0.0
        %v4495 = vand.u32 %v4077, 4294901760
        %4496 = vmatpush1.xpose.msra.mxu0 %v4495
        %4497 = vmatprep.subr.mxu0 0.0
        %v4498 = vand.u32 %v4076, 4294901760
        %4499 = vmatpush1.xpose.msra.mxu0 %v4498
        %4500 = vmatprep.subr.mxu0 0.0
        %v4501 = vand.u32 %v4075, 4294901760
        %4502 = vmatpush1.xpose.msra.mxu0 %v4501
        %4503 = vmatprep.subr.mxu0 0.0
        %v4504 = vand.u32 %v4074, 4294901760
        %4505 = vmatpush1.xpose.msra.mxu0 %v4504
        %4506 = vmatprep.subr.mxu0 0.0
        %v4507 = vand.u32 %v4073, 4294901760
        %4508 = vmatpush1.xpose.msra.mxu0 %v4507
        %4509 = vmatprep.subr.mxu0 0.0
        %v4510 = vand.u32 %v4072, 4294901760
        %4511 = vmatpush1.xpose.msra.mxu0 %v4510
        %4512 = vmatprep.subr.mxu0 0.0
        %v4513 = vand.u32 %v4071, 4294901760
        %4514 = vmatpush1.xpose.msra.mxu0 %v4513
        %4515 = vmatprep.subr.mxu0 0.0
        %v4516 = vand.u32 %v4070, 4294901760
        %4517 = vmatpush1.xpose.msra.mxu0 %v4516
        %4518 = vmatprep.subr.mxu0 0.0
        %v4519 = vand.u32 %v4069, 4294901760
        %4520 = vmatpush1.xpose.msra.mxu0 %v4519
        %4521 = vmatprep.subr.mxu0 0.0
        %v4522 = vand.u32 %v4068, 4294901760
        %4523 = vmatpush1.xpose.msra.mxu0 %v4522
        %4524 = vmatprep.subr.mxu0 0.0
        %4525 = vmatpush2.xpose.msra.mxu0 0.0
        %4526 = vmatprep.subr.mxu0 0.0
        %4527 = vmatpush2.xpose.msra.mxu0 0.0
        %4528 = vmatprep.subr.mxu0 0.0
        %4529 = vmatpush2.xpose.msra.mxu0 0.0
        %4530 = vmatprep.subr.mxu0 0.0
        %4531 = vmatpush2.xpose.msra.mxu0 0.0
        %4532 = vmatprep.subr.mxu0 0.0
        %4533 = vmatpush2.xpose.msra.mxu0 0.0
        %4534 = vmatprep.subr.mxu0 0.0
        %4535 = vmatpush2.xpose.msra.mxu0 0.0
        %4536 = vmatprep.subr.mxu0 0.0
        %4537 = vmatpush2.xpose.msra.mxu0 0.0
        %4538 = vmatprep.subr.mxu0 0.0
        %4539 = vmatpush2.xpose.msra.mxu0 0.0
        %4540 = vmatprep.subr.mxu0 0.0
        %4541 = vmatpush2.xpose.msra.mxu0 0.0
        %4542 = vmatprep.subr.mxu0 0.0
        %4543 = vmatpush2.xpose.msra.mxu0 0.0
        %4544 = vmatprep.subr.mxu0 0.0
        %4545 = vmatpush2.xpose.msra.mxu0 0.0
        %4546 = vmatprep.subr.mxu0 0.0
        %4547 = vmatpush2.xpose.msra.mxu0 0.0
        %4548 = vmatprep.subr.mxu0 0.0
        %4549 = vmatpush2.xpose.msra.mxu0 0.0
        %4550 = vmatprep.subr.mxu0 0.0
        %4551 = vmatpush2.xpose.msra.mxu0 0.0
        %4552 = vmatprep.subr.mxu0 0.0
        %4553 = vmatpush2.xpose.msra.mxu0 0.0
        %4554 = vmatprep.subr.mxu0 0.0
        %4555 = vmatpush2.xpose.msra.mxu0 0.0
        %4556 = vmatprep.mubr.f32.mxu0 0.0
        %v4557 = vand.u32 %v293, 4294901760
        %v4558 = vsub.f32 %v293, %v4557
        %v4559 = vand.u32 %v4558, 4294901760
        %4560 = vmatmul.mubr.f32.gmra.mxu0 %v4559
        %v4561 = vpop.f32.mrf.mxu0
        %v4562 = vadd.f32 %v4459, %v4561
        %v4563 = vpop.f32.mrf.mxu0
        %4564 = vmatprep.mubr.f32.mxu0 0.0
        %v4565 = vand.u32 %v294, 4294901760
        %v4566 = vsub.f32 %v294, %v4565
        %v4567 = vand.u32 %v4566, 4294901760
        %4568 = vmatmul.mubr.f32.gmra.mxu0 %v4567
        %v4569 = vpop.f32.mrf.mxu0
        %v4570 = vadd.f32 %v4466, %v4569
        %v4571 = vpop.f32.mrf.mxu0
        %4572 = vmatprep.mubr.f32.mxu0 0.0
        %v4573 = vand.u32 %v295, 4294901760
        %v4574 = vsub.f32 %v295, %v4573
        %v4575 = vand.u32 %v4574, 4294901760
        %4576 = vmatmul.mubr.f32.gmra.mxu0 %v4575
        %v4577 = vpop.f32.mrf.mxu0
        %v4578 = vadd.f32 %v4473, %v4577
        %v4579 = vpop.f32.mrf.mxu0
        %4580 = vdwg.mxu0
        %4581 = vmatprep.subr.mxu0 0.0
        %v4582 = vand.u32 %v4083, 4294901760
        %v4583 = vsub.f32 %v4083, %v4582
        %v4584 = vand.u32 %v4583, 4294901760
        %4585 = vmatpush1.xpose.msra.mxu0 %v4584
        %4586 = vmatprep.subr.mxu0 0.0
        %v4587 = vand.u32 %v4082, 4294901760
        %v4588 = vsub.f32 %v4082, %v4587
        %v4589 = vand.u32 %v4588, 4294901760
        %4590 = vmatpush1.xpose.msra.mxu0 %v4589
        %4591 = vmatprep.subr.mxu0 0.0
        %v4592 = vand.u32 %v4081, 4294901760
        %v4593 = vsub.f32 %v4081, %v4592
        %v4594 = vand.u32 %v4593, 4294901760
        %4595 = vmatpush1.xpose.msra.mxu0 %v4594
        %4596 = vmatprep.subr.mxu0 0.0
        %v4597 = vand.u32 %v4080, 4294901760
        %v4598 = vsub.f32 %v4080, %v4597
        %v4599 = vand.u32 %v4598, 4294901760
        %4600 = vmatpush1.xpose.msra.mxu0 %v4599
        %4601 = vmatprep.subr.mxu0 0.0
        %v4602 = vand.u32 %v4079, 4294901760
        %v4603 = vsub.f32 %v4079, %v4602
        %v4604 = vand.u32 %v4603, 4294901760
        %4605 = vmatpush1.xpose.msra.mxu0 %v4604
        %4606 = vmatprep.subr.mxu0 0.0
        %v4607 = vand.u32 %v4078, 4294901760
        %v4608 = vsub.f32 %v4078, %v4607
        %v4609 = vand.u32 %v4608, 4294901760
        %4610 = vmatpush1.xpose.msra.mxu0 %v4609
        %4611 = vmatprep.subr.mxu0 0.0
        %v4612 = vand.u32 %v4077, 4294901760
        %v4613 = vsub.f32 %v4077, %v4612
        %v4614 = vand.u32 %v4613, 4294901760
        %4615 = vmatpush1.xpose.msra.mxu0 %v4614
        %4616 = vmatprep.subr.mxu0 0.0
        %v4617 = vand.u32 %v4076, 4294901760
        %v4618 = vsub.f32 %v4076, %v4617
        %v4619 = vand.u32 %v4618, 4294901760
        %4620 = vmatpush1.xpose.msra.mxu0 %v4619
        %4621 = vmatprep.subr.mxu0 0.0
        %v4622 = vand.u32 %v4075, 4294901760
        %v4623 = vsub.f32 %v4075, %v4622
        %v4624 = vand.u32 %v4623, 4294901760
        %4625 = vmatpush1.xpose.msra.mxu0 %v4624
        %4626 = vmatprep.subr.mxu0 0.0
        %v4627 = vand.u32 %v4074, 4294901760
        %v4628 = vsub.f32 %v4074, %v4627
        %v4629 = vand.u32 %v4628, 4294901760
        %4630 = vmatpush1.xpose.msra.mxu0 %v4629
        %4631 = vmatprep.subr.mxu0 0.0
        %v4632 = vand.u32 %v4073, 4294901760
        %v4633 = vsub.f32 %v4073, %v4632
        %v4634 = vand.u32 %v4633, 4294901760
        %4635 = vmatpush1.xpose.msra.mxu0 %v4634
        %4636 = vmatprep.subr.mxu0 0.0
        %v4637 = vand.u32 %v4072, 4294901760
        %v4638 = vsub.f32 %v4072, %v4637
        %v4639 = vand.u32 %v4638, 4294901760
        %4640 = vmatpush1.xpose.msra.mxu0 %v4639
        %4641 = vmatprep.subr.mxu0 0.0
        %v4642 = vand.u32 %v4071, 4294901760
        %v4643 = vsub.f32 %v4071, %v4642
        %v4644 = vand.u32 %v4643, 4294901760
        %4645 = vmatpush1.xpose.msra.mxu0 %v4644
        %4646 = vmatprep.subr.mxu0 0.0
        %v4647 = vand.u32 %v4070, 4294901760
        %v4648 = vsub.f32 %v4070, %v4647
        %v4649 = vand.u32 %v4648, 4294901760
        %4650 = vmatpush1.xpose.msra.mxu0 %v4649
        %4651 = vmatprep.subr.mxu0 0.0
        %v4652 = vand.u32 %v4069, 4294901760
        %v4653 = vsub.f32 %v4069, %v4652
        %v4654 = vand.u32 %v4653, 4294901760
        %4655 = vmatpush1.xpose.msra.mxu0 %v4654
        %4656 = vmatprep.subr.mxu0 0.0
        %v4657 = vand.u32 %v4068, 4294901760
        %v4658 = vsub.f32 %v4068, %v4657
        %v4659 = vand.u32 %v4658, 4294901760
        %4660 = vmatpush1.xpose.msra.mxu0 %v4659
        %4661 = vmatprep.subr.mxu0 0.0
        %4662 = vmatpush2.xpose.msra.mxu0 0.0
        %4663 = vmatprep.subr.mxu0 0.0
        %4664 = vmatpush2.xpose.msra.mxu0 0.0
        %4665 = vmatprep.subr.mxu0 0.0
        %4666 = vmatpush2.xpose.msra.mxu0 0.0
        %4667 = vmatprep.subr.mxu0 0.0
        %4668 = vmatpush2.xpose.msra.mxu0 0.0
        %4669 = vmatprep.subr.mxu0 0.0
        %4670 = vmatpush2.xpose.msra.mxu0 0.0
        %4671 = vmatprep.subr.mxu0 0.0
        %4672 = vmatpush2.xpose.msra.mxu0 0.0
        %4673 = vmatprep.subr.mxu0 0.0
        %4674 = vmatpush2.xpose.msra.mxu0 0.0
        %4675 = vmatprep.subr.mxu0 0.0
        %4676 = vmatpush2.xpose.msra.mxu0 0.0
        %4677 = vmatprep.subr.mxu0 0.0
        %4678 = vmatpush2.xpose.msra.mxu0 0.0
        %4679 = vmatprep.subr.mxu0 0.0
        %4680 = vmatpush2.xpose.msra.mxu0 0.0
        %4681 = vmatprep.subr.mxu0 0.0
        %4682 = vmatpush2.xpose.msra.mxu0 0.0
        %4683 = vmatprep.subr.mxu0 0.0
        %4684 = vmatpush2.xpose.msra.mxu0 0.0
        %4685 = vmatprep.subr.mxu0 0.0
        %4686 = vmatpush2.xpose.msra.mxu0 0.0
        %4687 = vmatprep.subr.mxu0 0.0
        %4688 = vmatpush2.xpose.msra.mxu0 0.0
        %4689 = vmatprep.subr.mxu0 0.0
        %4690 = vmatpush2.xpose.msra.mxu0 0.0
        %4691 = vmatprep.subr.mxu0 0.0
        %4692 = vmatpush2.xpose.msra.mxu0 0.0
        %4693 = vmatprep.mubr.f32.mxu0 0.0
        %v4694 = vand.u32 %v293, 4294901760
        %4695 = vmatmul.mubr.f32.gmra.mxu0 %v4694
        %v4696 = vpop.f32.mrf.mxu0
        %v4697 = vadd.f32 %v4562, %v4696
        %v4698 = vpop.f32.mrf.mxu0
        %4699 = vmatprep.mubr.f32.mxu0 0.0
        %v4700 = vand.u32 %v294, 4294901760
        %4701 = vmatmul.mubr.f32.gmra.mxu0 %v4700
        %v4702 = vpop.f32.mrf.mxu0
        %v4703 = vadd.f32 %v4570, %v4702
        %v4704 = vpop.f32.mrf.mxu0
        %4705 = vmatprep.mubr.f32.mxu0 0.0
        %v4706 = vand.u32 %v295, 4294901760
        %4707 = vmatmul.mubr.f32.gmra.mxu0 %v4706
        %v4708 = vpop.f32.mrf.mxu0
        %v4709 = vadd.f32 %v4578, %v4708
        %v4710 = vpop.f32.mrf.mxu0
        %4711 = vdwg.mxu0
        %4712 = vmatprep.subr.mxu0 0.0
        %v4713 = vand.u32 %v4083, 4294901760
        %4714 = vmatpush1.xpose.msra.mxu0 %v4713
        %4715 = vmatprep.subr.mxu0 0.0
        %v4716 = vand.u32 %v4082, 4294901760
        %4717 = vmatpush1.xpose.msra.mxu0 %v4716
        %4718 = vmatprep.subr.mxu0 0.0
        %v4719 = vand.u32 %v4081, 4294901760
        %4720 = vmatpush1.xpose.msra.mxu0 %v4719
        %4721 = vmatprep.subr.mxu0 0.0
        %v4722 = vand.u32 %v4080, 4294901760
        %4723 = vmatpush1.xpose.msra.mxu0 %v4722
        %4724 = vmatprep.subr.mxu0 0.0
        %v4725 = vand.u32 %v4079, 4294901760
        %4726 = vmatpush1.xpose.msra.mxu0 %v4725
        %4727 = vmatprep.subr.mxu0 0.0
        %v4728 = vand.u32 %v4078, 4294901760
        %4729 = vmatpush1.xpose.msra.mxu0 %v4728
        %4730 = vmatprep.subr.mxu0 0.0
        %v4731 = vand.u32 %v4077, 4294901760
        %4732 = vmatpush1.xpose.msra.mxu0 %v4731
        %4733 = vmatprep.subr.mxu0 0.0
        %v4734 = vand.u32 %v4076, 4294901760
        %4735 = vmatpush1.xpose.msra.mxu0 %v4734
        %4736 = vmatprep.subr.mxu0 0.0
        %v4737 = vand.u32 %v4075, 4294901760
        %4738 = vmatpush1.xpose.msra.mxu0 %v4737
        %4739 = vmatprep.subr.mxu0 0.0
        %v4740 = vand.u32 %v4074, 4294901760
        %4741 = vmatpush1.xpose.msra.mxu0 %v4740
        %4742 = vmatprep.subr.mxu0 0.0
        %v4743 = vand.u32 %v4073, 4294901760
        %4744 = vmatpush1.xpose.msra.mxu0 %v4743
        %4745 = vmatprep.subr.mxu0 0.0
        %v4746 = vand.u32 %v4072, 4294901760
        %4747 = vmatpush1.xpose.msra.mxu0 %v4746
        %4748 = vmatprep.subr.mxu0 0.0
        %v4749 = vand.u32 %v4071, 4294901760
        %4750 = vmatpush1.xpose.msra.mxu0 %v4749
        %4751 = vmatprep.subr.mxu0 0.0
        %v4752 = vand.u32 %v4070, 4294901760
        %4753 = vmatpush1.xpose.msra.mxu0 %v4752
        %4754 = vmatprep.subr.mxu0 0.0
        %v4755 = vand.u32 %v4069, 4294901760
        %4756 = vmatpush1.xpose.msra.mxu0 %v4755
        %4757 = vmatprep.subr.mxu0 0.0
        %v4758 = vand.u32 %v4068, 4294901760
        %4759 = vmatpush1.xpose.msra.mxu0 %v4758
        %4760 = vmatprep.subr.mxu0 0.0
        %4761 = vmatpush2.xpose.msra.mxu0 0.0
        %4762 = vmatprep.subr.mxu0 0.0
        %4763 = vmatpush2.xpose.msra.mxu0 0.0
        %4764 = vmatprep.subr.mxu0 0.0
        %4765 = vmatpush2.xpose.msra.mxu0 0.0
        %4766 = vmatprep.subr.mxu0 0.0
        %4767 = vmatpush2.xpose.msra.mxu0 0.0
        %4768 = vmatprep.subr.mxu0 0.0
        %4769 = vmatpush2.xpose.msra.mxu0 0.0
        %4770 = vmatprep.subr.mxu0 0.0
        %4771 = vmatpush2.xpose.msra.mxu0 0.0
        %4772 = vmatprep.subr.mxu0 0.0
        %4773 = vmatpush2.xpose.msra.mxu0 0.0
        %4774 = vmatprep.subr.mxu0 0.0
        %4775 = vmatpush2.xpose.msra.mxu0 0.0
        %4776 = vmatprep.subr.mxu0 0.0
        %4777 = vmatpush2.xpose.msra.mxu0 0.0
        %4778 = vmatprep.subr.mxu0 0.0
        %4779 = vmatpush2.xpose.msra.mxu0 0.0
        %4780 = vmatprep.subr.mxu0 0.0
        %4781 = vmatpush2.xpose.msra.mxu0 0.0
        %4782 = vmatprep.subr.mxu0 0.0
        %4783 = vmatpush2.xpose.msra.mxu0 0.0
        %4784 = vmatprep.subr.mxu0 0.0
        %4785 = vmatpush2.xpose.msra.mxu0 0.0
        %4786 = vmatprep.subr.mxu0 0.0
        %4787 = vmatpush2.xpose.msra.mxu0 0.0
        %4788 = vmatprep.subr.mxu0 0.0
        %4789 = vmatpush2.xpose.msra.mxu0 0.0
        %4790 = vmatprep.subr.mxu0 0.0
        %4791 = vmatpush2.xpose.msra.mxu0 0.0
        %4792 = vmatprep.mubr.f32.mxu0 0.0
        %v4793 = vand.u32 %v293, 4294901760
        %4794 = vmatmul.mubr.f32.gmra.mxu0 %v4793
        %v4795 = vpop.f32.mrf.mxu0
        %v4796 = vadd.f32 %v4697, %v4795
        %v4797 = vpop.f32.mrf.mxu0
        %4798 = vmatprep.mubr.f32.mxu0 0.0
        %v4799 = vand.u32 %v294, 4294901760
        %4800 = vmatmul.mubr.f32.gmra.mxu0 %v4799
        %v4801 = vpop.f32.mrf.mxu0
        %v4802 = vadd.f32 %v4703, %v4801
        %v4803 = vpop.f32.mrf.mxu0
        %4804 = vmatprep.mubr.f32.mxu0 0.0
        %v4805 = vand.u32 %v295, 4294901760
        %4806 = vmatmul.mubr.f32.gmra.mxu0 %v4805
        %v4807 = vpop.f32.mrf.mxu0
        %v4808 = vadd.f32 %v4709, %v4807
        %v4809 = vpop.f32.mrf.mxu0
        %4810 = vdwg.mxu0
        %s4811 = scalar_lea.vmem %s249, 72 [#allocation2]
        %4812 = vst [vmem:[%s4811] sm:$0xff] %v4796
        %4813 = vst [vmem:[%s4811 + $0x8] sm:$0xff] %v4802
        %4814 = vst [vmem:[%s4811 + $0x10] sm:$0xff] %v4808
        %v4815 = vadd.f32 %v4808, 0.5
        %v4816 = vcvt.f32.s32.to.zero.pseudo %v4815
        %v4817 = vsel %vm4036, 3.4028235e+38, %v3988
        %v4818 = vsel %vm4037, 3.4028235e+38, %v3989
        %v4819 = vsel %vm4038, 3.4028235e+38, %v3990
        %v4820 = vsel %vm4039, 3.4028235e+38, %v3991
        %v4821 = vsel %vm4040, 3.4028235e+38, %v3992
        %v4822 = vsel %vm4041, 3.4028235e+38, %v3993
        %v4823 = vsel %vm4042, 3.4028235e+38, %v3994
        %v4824 = vsel %vm4043, 3.4028235e+38, %v3995
        %v4825 = vsel %vm4044, 3.4028235e+38, %v3996
        %v4826 = vsel %vm4045, 3.4028235e+38, %v3997
        %v4827 = vsel %vm4046, 3.4028235e+38, %v3998
        %v4828 = vsel %vm4047, 3.4028235e+38, %v3999
        %v4829 = vsel %vm4048, 3.4028235e+38, %v4000
        %v4830 = vsel %vm4049, 3.4028235e+38, %v4001
        %v4831 = vsel %vm4050, 3.4028235e+38, %v4002
        %v4832 = vsel %vm4051, 3.4028235e+38, %v4003
        %4833 = vmin.xlane.f32.xlu0 %v4817
        %v4834 = vpop.xlane.xlu0 %4833
        %4835 = vmin.xlane.f32.xlu0 %v4818
        %v4836 = vpop.xlane.xlu0 %4835
        %4837 = vmin.xlane.f32.xlu0 %v4819
        %v4838 = vpop.xlane.xlu0 %4837
        %4839 = vmin.xlane.f32.xlu0 %v4820
        %v4840 = vpop.xlane.xlu0 %4839
        %4841 = vmin.xlane.f32.xlu0 %v4821
        %v4842 = vpop.xlane.xlu0 %4841
        %4843 = vmin.xlane.f32.xlu0 %v4822
        %v4844 = vpop.xlane.xlu0 %4843
        %4845 = vmin.xlane.f32.xlu0 %v4823
        %v4846 = vpop.xlane.xlu0 %4845
        %4847 = vmin.xlane.f32.xlu0 %v4824
        %v4848 = vpop.xlane.xlu0 %4847
        %4849 = vmin.xlane.f32.xlu0 %v4825
        %v4850 = vpop.xlane.xlu0 %4849
        %4851 = vmin.xlane.f32.xlu0 %v4826
        %v4852 = vpop.xlane.xlu0 %4851
        %4853 = vmin.xlane.f32.xlu0 %v4827
        %v4854 = vpop.xlane.xlu0 %4853
        %4855 = vmin.xlane.f32.xlu0 %v4828
        %v4856 = vpop.xlane.xlu0 %4855
        %4857 = vmin.xlane.f32.xlu0 %v4829
        %v4858 = vpop.xlane.xlu0 %4857
        %4859 = vmin.xlane.f32.xlu0 %v4830
        %v4860 = vpop.xlane.xlu0 %4859
        %4861 = vmin.xlane.f32.xlu0 %v4831
        %v4862 = vpop.xlane.xlu0 %4861
        %4863 = vmin.xlane.f32.xlu0 %v4832
        %v4864 = vpop.xlane.xlu0 %4863
        %vm4865 = vcmp.eq.f32.partialorder %v4817, %v4834
        %vm4866 = vcmp.eq.f32.partialorder %v4818, %v4836
        %vm4867 = vcmp.eq.f32.partialorder %v4819, %v4838
        %vm4868 = vcmp.eq.f32.partialorder %v4820, %v4840
        %vm4869 = vcmp.eq.f32.partialorder %v4821, %v4842
        %vm4870 = vcmp.eq.f32.partialorder %v4822, %v4844
        %vm4871 = vcmp.eq.f32.partialorder %v4823, %v4846
        %vm4872 = vcmp.eq.f32.partialorder %v4824, %v4848
        %vm4873 = vcmp.eq.f32.partialorder %v4825, %v4850
        %vm4874 = vcmp.eq.f32.partialorder %v4826, %v4852
        %vm4875 = vcmp.eq.f32.partialorder %v4827, %v4854
        %vm4876 = vcmp.eq.f32.partialorder %v4828, %v4856
        %vm4877 = vcmp.eq.f32.partialorder %v4829, %v4858
        %vm4878 = vcmp.eq.f32.partialorder %v4830, %v4860
        %vm4879 = vcmp.eq.f32.partialorder %v4831, %v4862
        %vm4880 = vcmp.eq.f32.partialorder %v4832, %v4864
        %v4881 = vsel %vm4865, 1, 0
        %v4882 = vsel %vm4866, 1, 0
        %v4883 = vsel %vm4867, 1, 0
        %v4884 = vsel %vm4868, 1, 0
        %v4885 = vsel %vm4869, 1, 0
        %v4886 = vsel %vm4870, 1, 0
        %v4887 = vsel %vm4871, 1, 0
        %v4888 = vsel %vm4872, 1, 0
        %v4889 = vsel %vm4873, 1, 0
        %v4890 = vsel %vm4874, 1, 0
        %v4891 = vsel %vm4875, 1, 0
        %v4892 = vsel %vm4876, 1, 0
        %v4893 = vsel %vm4877, 1, 0
        %v4894 = vsel %vm4878, 1, 0
        %v4895 = vsel %vm4879, 1, 0
        %v4896 = vsel %vm4880, 1, 0
        %v4897 = vcvt.s32.f32 %v4881
        %v4898 = vcvt.s32.f32 %v4882
        %v4899 = vcvt.s32.f32 %v4883
        %v4900 = vcvt.s32.f32 %v4884
        %v4901 = vcvt.s32.f32 %v4885
        %v4902 = vcvt.s32.f32 %v4886
        %v4903 = vcvt.s32.f32 %v4887
        %v4904 = vcvt.s32.f32 %v4888
        %v4905 = vcvt.s32.f32 %v4889
        %v4906 = vcvt.s32.f32 %v4890
        %v4907 = vcvt.s32.f32 %v4891
        %v4908 = vcvt.s32.f32 %v4892
        %v4909 = vcvt.s32.f32 %v4893
        %v4910 = vcvt.s32.f32 %v4894
        %v4911 = vcvt.s32.f32 %v4895
        %v4912 = vcvt.s32.f32 %v4896
        %4913 = vmatprep.subr.mxu0 0.0
        %v4914 = vand.u32 %v4912, 4294901760
        %4915 = vmatpush1.xpose.msra.mxu0 %v4914
        %4916 = vmatprep.subr.mxu0 0.0
        %v4917 = vand.u32 %v4911, 4294901760
        %4918 = vmatpush1.xpose.msra.mxu0 %v4917
        %4919 = vmatprep.subr.mxu0 0.0
        %v4920 = vand.u32 %v4910, 4294901760
        %4921 = vmatpush1.xpose.msra.mxu0 %v4920
        %4922 = vmatprep.subr.mxu0 0.0
        %v4923 = vand.u32 %v4909, 4294901760
        %4924 = vmatpush1.xpose.msra.mxu0 %v4923
        %4925 = vmatprep.subr.mxu0 0.0
        %v4926 = vand.u32 %v4908, 4294901760
        %4927 = vmatpush1.xpose.msra.mxu0 %v4926
        %4928 = vmatprep.subr.mxu0 0.0
        %v4929 = vand.u32 %v4907, 4294901760
        %4930 = vmatpush1.xpose.msra.mxu0 %v4929
        %4931 = vmatprep.subr.mxu0 0.0
        %v4932 = vand.u32 %v4906, 4294901760
        %4933 = vmatpush1.xpose.msra.mxu0 %v4932
        %4934 = vmatprep.subr.mxu0 0.0
        %v4935 = vand.u32 %v4905, 4294901760
        %4936 = vmatpush1.xpose.msra.mxu0 %v4935
        %4937 = vmatprep.subr.mxu0 0.0
        %v4938 = vand.u32 %v4904, 4294901760
        %4939 = vmatpush1.xpose.msra.mxu0 %v4938
        %4940 = vmatprep.subr.mxu0 0.0
        %v4941 = vand.u32 %v4903, 4294901760
        %4942 = vmatpush1.xpose.msra.mxu0 %v4941
        %4943 = vmatprep.subr.mxu0 0.0
        %v4944 = vand.u32 %v4902, 4294901760
        %4945 = vmatpush1.xpose.msra.mxu0 %v4944
        %4946 = vmatprep.subr.mxu0 0.0
        %v4947 = vand.u32 %v4901, 4294901760
        %4948 = vmatpush1.xpose.msra.mxu0 %v4947
        %4949 = vmatprep.subr.mxu0 0.0
        %v4950 = vand.u32 %v4900, 4294901760
        %4951 = vmatpush1.xpose.msra.mxu0 %v4950
        %4952 = vmatprep.subr.mxu0 0.0
        %v4953 = vand.u32 %v4899, 4294901760
        %4954 = vmatpush1.xpose.msra.mxu0 %v4953
        %4955 = vmatprep.subr.mxu0 0.0
        %v4956 = vand.u32 %v4898, 4294901760
        %4957 = vmatpush1.xpose.msra.mxu0 %v4956
        %4958 = vmatprep.subr.mxu0 0.0
        %v4959 = vand.u32 %v4897, 4294901760
        %4960 = vmatpush1.xpose.msra.mxu0 %v4959
        %4961 = vmatprep.subr.mxu0 0.0
        %4962 = vmatpush2.xpose.msra.mxu0 0.0
        %4963 = vmatprep.subr.mxu0 0.0
        %4964 = vmatpush2.xpose.msra.mxu0 0.0
        %4965 = vmatprep.subr.mxu0 0.0
        %4966 = vmatpush2.xpose.msra.mxu0 0.0
        %4967 = vmatprep.subr.mxu0 0.0
        %4968 = vmatpush2.xpose.msra.mxu0 0.0
        %4969 = vmatprep.subr.mxu0 0.0
        %4970 = vmatpush2.xpose.msra.mxu0 0.0
        %4971 = vmatprep.subr.mxu0 0.0
        %4972 = vmatpush2.xpose.msra.mxu0 0.0
        %4973 = vmatprep.subr.mxu0 0.0
        %4974 = vmatpush2.xpose.msra.mxu0 0.0
        %4975 = vmatprep.subr.mxu0 0.0
        %4976 = vmatpush2.xpose.msra.mxu0 0.0
        %4977 = vmatprep.subr.mxu0 0.0
        %4978 = vmatpush2.xpose.msra.mxu0 0.0
        %4979 = vmatprep.subr.mxu0 0.0
        %4980 = vmatpush2.xpose.msra.mxu0 0.0
        %4981 = vmatprep.subr.mxu0 0.0
        %4982 = vmatpush2.xpose.msra.mxu0 0.0
        %4983 = vmatprep.subr.mxu0 0.0
        %4984 = vmatpush2.xpose.msra.mxu0 0.0
        %4985 = vmatprep.subr.mxu0 0.0
        %4986 = vmatpush2.xpose.msra.mxu0 0.0
        %4987 = vmatprep.subr.mxu0 0.0
        %4988 = vmatpush2.xpose.msra.mxu0 0.0
        %4989 = vmatprep.subr.mxu0 0.0
        %4990 = vmatpush2.xpose.msra.mxu0 0.0
        %4991 = vmatprep.subr.mxu0 0.0
        %4992 = vmatpush2.xpose.msra.mxu0 0.0
        %4993 = vmatprep.mubr.f32.mxu0 0.0
        %v4994 = vand.u32 %v293, 4294901760
        %v4995 = vsub.f32 %v293, %v4994
        %v4996 = vand.u32 %v4995, 4294901760
        %v4997 = vsub.f32 %v4995, %v4996
        %v4998 = vand.u32 %v4997, 4294901760
        %4999 = vmatmul.mubr.f32.gmra.mxu0 %v4998
        %v5000 = vpop.f32.mrf.mxu0
        %v5001 = vadd.f32 0.0, %v5000
        %v5002 = vpop.f32.mrf.mxu0
        %5003 = vmatprep.mubr.f32.mxu0 0.0
        %v5004 = vand.u32 %v294, 4294901760
        %v5005 = vsub.f32 %v294, %v5004
        %v5006 = vand.u32 %v5005, 4294901760
        %v5007 = vsub.f32 %v5005, %v5006
        %v5008 = vand.u32 %v5007, 4294901760
        %5009 = vmatmul.mubr.f32.gmra.mxu0 %v5008
        %v5010 = vpop.f32.mrf.mxu0
        %v5011 = vadd.f32 0.0, %v5010
        %v5012 = vpop.f32.mrf.mxu0
        %5013 = vmatprep.mubr.f32.mxu0 0.0
        %v5014 = vand.u32 %v295, 4294901760
        %v5015 = vsub.f32 %v295, %v5014
        %v5016 = vand.u32 %v5015, 4294901760
        %v5017 = vsub.f32 %v5015, %v5016
        %v5018 = vand.u32 %v5017, 4294901760
        %5019 = vmatmul.mubr.f32.gmra.mxu0 %v5018
        %v5020 = vpop.f32.mrf.mxu0
        %v5021 = vadd.f32 0.0, %v5020
        %v5022 = vpop.f32.mrf.mxu0
        %5023 = vdwg.mxu0
        %5024 = vmatprep.subr.mxu0 0.0
        %v5025 = vand.u32 %v4912, 4294901760
        %v5026 = vsub.f32 %v4912, %v5025
        %v5027 = vand.u32 %v5026, 4294901760
        %v5028 = vsub.f32 %v5026, %v5027
        %v5029 = vand.u32 %v5028, 4294901760
        %5030 = vmatpush1.xpose.msra.mxu0 %v5029
        %5031 = vmatprep.subr.mxu0 0.0
        %v5032 = vand.u32 %v4911, 4294901760
        %v5033 = vsub.f32 %v4911, %v5032
        %v5034 = vand.u32 %v5033, 4294901760
        %v5035 = vsub.f32 %v5033, %v5034
        %v5036 = vand.u32 %v5035, 4294901760
        %5037 = vmatpush1.xpose.msra.mxu0 %v5036
        %5038 = vmatprep.subr.mxu0 0.0
        %v5039 = vand.u32 %v4910, 4294901760
        %v5040 = vsub.f32 %v4910, %v5039
        %v5041 = vand.u32 %v5040, 4294901760
        %v5042 = vsub.f32 %v5040, %v5041
        %v5043 = vand.u32 %v5042, 4294901760
        %5044 = vmatpush1.xpose.msra.mxu0 %v5043
        %5045 = vmatprep.subr.mxu0 0.0
        %v5046 = vand.u32 %v4909, 4294901760
        %v5047 = vsub.f32 %v4909, %v5046
        %v5048 = vand.u32 %v5047, 4294901760
        %v5049 = vsub.f32 %v5047, %v5048
        %v5050 = vand.u32 %v5049, 4294901760
        %5051 = vmatpush1.xpose.msra.mxu0 %v5050
        %5052 = vmatprep.subr.mxu0 0.0
        %v5053 = vand.u32 %v4908, 4294901760
        %v5054 = vsub.f32 %v4908, %v5053
        %v5055 = vand.u32 %v5054, 4294901760
        %v5056 = vsub.f32 %v5054, %v5055
        %v5057 = vand.u32 %v5056, 4294901760
        %5058 = vmatpush1.xpose.msra.mxu0 %v5057
        %5059 = vmatprep.subr.mxu0 0.0
        %v5060 = vand.u32 %v4907, 4294901760
        %v5061 = vsub.f32 %v4907, %v5060
        %v5062 = vand.u32 %v5061, 4294901760
        %v5063 = vsub.f32 %v5061, %v5062
        %v5064 = vand.u32 %v5063, 4294901760
        %5065 = vmatpush1.xpose.msra.mxu0 %v5064
        %5066 = vmatprep.subr.mxu0 0.0
        %v5067 = vand.u32 %v4906, 4294901760
        %v5068 = vsub.f32 %v4906, %v5067
        %v5069 = vand.u32 %v5068, 4294901760
        %v5070 = vsub.f32 %v5068, %v5069
        %v5071 = vand.u32 %v5070, 4294901760
        %5072 = vmatpush1.xpose.msra.mxu0 %v5071
        %5073 = vmatprep.subr.mxu0 0.0
        %v5074 = vand.u32 %v4905, 4294901760
        %v5075 = vsub.f32 %v4905, %v5074
        %v5076 = vand.u32 %v5075, 4294901760
        %v5077 = vsub.f32 %v5075, %v5076
        %v5078 = vand.u32 %v5077, 4294901760
        %5079 = vmatpush1.xpose.msra.mxu0 %v5078
        %5080 = vmatprep.subr.mxu0 0.0
        %v5081 = vand.u32 %v4904, 4294901760
        %v5082 = vsub.f32 %v4904, %v5081
        %v5083 = vand.u32 %v5082, 4294901760
        %v5084 = vsub.f32 %v5082, %v5083
        %v5085 = vand.u32 %v5084, 4294901760
        %5086 = vmatpush1.xpose.msra.mxu0 %v5085
        %5087 = vmatprep.subr.mxu0 0.0
        %v5088 = vand.u32 %v4903, 4294901760
        %v5089 = vsub.f32 %v4903, %v5088
        %v5090 = vand.u32 %v5089, 4294901760
        %v5091 = vsub.f32 %v5089, %v5090
        %v5092 = vand.u32 %v5091, 4294901760
        %5093 = vmatpush1.xpose.msra.mxu0 %v5092
        %5094 = vmatprep.subr.mxu0 0.0
        %v5095 = vand.u32 %v4902, 4294901760
        %v5096 = vsub.f32 %v4902, %v5095
        %v5097 = vand.u32 %v5096, 4294901760
        %v5098 = vsub.f32 %v5096, %v5097
        %v5099 = vand.u32 %v5098, 4294901760
        %5100 = vmatpush1.xpose.msra.mxu0 %v5099
        %5101 = vmatprep.subr.mxu0 0.0
        %v5102 = vand.u32 %v4901, 4294901760
        %v5103 = vsub.f32 %v4901, %v5102
        %v5104 = vand.u32 %v5103, 4294901760
        %v5105 = vsub.f32 %v5103, %v5104
        %v5106 = vand.u32 %v5105, 4294901760
        %5107 = vmatpush1.xpose.msra.mxu0 %v5106
        %5108 = vmatprep.subr.mxu0 0.0
        %v5109 = vand.u32 %v4900, 4294901760
        %v5110 = vsub.f32 %v4900, %v5109
        %v5111 = vand.u32 %v5110, 4294901760
        %v5112 = vsub.f32 %v5110, %v5111
        %v5113 = vand.u32 %v5112, 4294901760
        %5114 = vmatpush1.xpose.msra.mxu0 %v5113
        %5115 = vmatprep.subr.mxu0 0.0
        %v5116 = vand.u32 %v4899, 4294901760
        %v5117 = vsub.f32 %v4899, %v5116
        %v5118 = vand.u32 %v5117, 4294901760
        %v5119 = vsub.f32 %v5117, %v5118
        %v5120 = vand.u32 %v5119, 4294901760
        %5121 = vmatpush1.xpose.msra.mxu0 %v5120
        %5122 = vmatprep.subr.mxu0 0.0
        %v5123 = vand.u32 %v4898, 4294901760
        %v5124 = vsub.f32 %v4898, %v5123
        %v5125 = vand.u32 %v5124, 4294901760
        %v5126 = vsub.f32 %v5124, %v5125
        %v5127 = vand.u32 %v5126, 4294901760
        %5128 = vmatpush1.xpose.msra.mxu0 %v5127
        %5129 = vmatprep.subr.mxu0 0.0
        %v5130 = vand.u32 %v4897, 4294901760
        %v5131 = vsub.f32 %v4897, %v5130
        %v5132 = vand.u32 %v5131, 4294901760
        %v5133 = vsub.f32 %v5131, %v5132
        %v5134 = vand.u32 %v5133, 4294901760
        %5135 = vmatpush1.xpose.msra.mxu0 %v5134
        %5136 = vmatprep.subr.mxu0 0.0
        %5137 = vmatpush2.xpose.msra.mxu0 0.0
        %5138 = vmatprep.subr.mxu0 0.0
        %5139 = vmatpush2.xpose.msra.mxu0 0.0
        %5140 = vmatprep.subr.mxu0 0.0
        %5141 = vmatpush2.xpose.msra.mxu0 0.0
        %5142 = vmatprep.subr.mxu0 0.0
        %5143 = vmatpush2.xpose.msra.mxu0 0.0
        %5144 = vmatprep.subr.mxu0 0.0
        %5145 = vmatpush2.xpose.msra.mxu0 0.0
        %5146 = vmatprep.subr.mxu0 0.0
        %5147 = vmatpush2.xpose.msra.mxu0 0.0
        %5148 = vmatprep.subr.mxu0 0.0
        %5149 = vmatpush2.xpose.msra.mxu0 0.0
        %5150 = vmatprep.subr.mxu0 0.0
        %5151 = vmatpush2.xpose.msra.mxu0 0.0
        %5152 = vmatprep.subr.mxu0 0.0
        %5153 = vmatpush2.xpose.msra.mxu0 0.0
        %5154 = vmatprep.subr.mxu0 0.0
        %5155 = vmatpush2.xpose.msra.mxu0 0.0
        %5156 = vmatprep.subr.mxu0 0.0
        %5157 = vmatpush2.xpose.msra.mxu0 0.0
        %5158 = vmatprep.subr.mxu0 0.0
        %5159 = vmatpush2.xpose.msra.mxu0 0.0
        %5160 = vmatprep.subr.mxu0 0.0
        %5161 = vmatpush2.xpose.msra.mxu0 0.0
        %5162 = vmatprep.subr.mxu0 0.0
        %5163 = vmatpush2.xpose.msra.mxu0 0.0
        %5164 = vmatprep.subr.mxu0 0.0
        %5165 = vmatpush2.xpose.msra.mxu0 0.0
        %5166 = vmatprep.subr.mxu0 0.0
        %5167 = vmatpush2.xpose.msra.mxu0 0.0
        %5168 = vmatprep.mubr.f32.mxu0 0.0
        %v5169 = vand.u32 %v293, 4294901760
        %5170 = vmatmul.mubr.f32.gmra.mxu0 %v5169
        %v5171 = vpop.f32.mrf.mxu0
        %v5172 = vadd.f32 %v5001, %v5171
        %v5173 = vpop.f32.mrf.mxu0
        %5174 = vmatprep.mubr.f32.mxu0 0.0
        %v5175 = vand.u32 %v294, 4294901760
        %5176 = vmatmul.mubr.f32.gmra.mxu0 %v5175
        %v5177 = vpop.f32.mrf.mxu0
        %v5178 = vadd.f32 %v5011, %v5177
        %v5179 = vpop.f32.mrf.mxu0
        %5180 = vmatprep.mubr.f32.mxu0 0.0
        %v5181 = vand.u32 %v295, 4294901760
        %5182 = vmatmul.mubr.f32.gmra.mxu0 %v5181
        %v5183 = vpop.f32.mrf.mxu0
        %v5184 = vadd.f32 %v5021, %v5183
        %v5185 = vpop.f32.mrf.mxu0
        %5186 = vdwg.mxu0
        %5187 = vmatprep.subr.mxu0 0.0
        %v5188 = vand.u32 %v4912, 4294901760
        %v5189 = vsub.f32 %v4912, %v5188
        %5190 = vmatpush1.xpose.msra.mxu0 %v5189
        %5191 = vmatprep.subr.mxu0 0.0
        %v5192 = vand.u32 %v4911, 4294901760
        %v5193 = vsub.f32 %v4911, %v5192
        %5194 = vmatpush1.xpose.msra.mxu0 %v5193
        %5195 = vmatprep.subr.mxu0 0.0
        %v5196 = vand.u32 %v4910, 4294901760
        %v5197 = vsub.f32 %v4910, %v5196
        %5198 = vmatpush1.xpose.msra.mxu0 %v5197
        %5199 = vmatprep.subr.mxu0 0.0
        %v5200 = vand.u32 %v4909, 4294901760
        %v5201 = vsub.f32 %v4909, %v5200
        %5202 = vmatpush1.xpose.msra.mxu0 %v5201
        %5203 = vmatprep.subr.mxu0 0.0
        %v5204 = vand.u32 %v4908, 4294901760
        %v5205 = vsub.f32 %v4908, %v5204
        %5206 = vmatpush1.xpose.msra.mxu0 %v5205
        %5207 = vmatprep.subr.mxu0 0.0
        %v5208 = vand.u32 %v4907, 4294901760
        %v5209 = vsub.f32 %v4907, %v5208
        %5210 = vmatpush1.xpose.msra.mxu0 %v5209
        %5211 = vmatprep.subr.mxu0 0.0
        %v5212 = vand.u32 %v4906, 4294901760
        %v5213 = vsub.f32 %v4906, %v5212
        %5214 = vmatpush1.xpose.msra.mxu0 %v5213
        %5215 = vmatprep.subr.mxu0 0.0
        %v5216 = vand.u32 %v4905, 4294901760
        %v5217 = vsub.f32 %v4905, %v5216
        %5218 = vmatpush1.xpose.msra.mxu0 %v5217
        %5219 = vmatprep.subr.mxu0 0.0
        %v5220 = vand.u32 %v4904, 4294901760
        %v5221 = vsub.f32 %v4904, %v5220
        %5222 = vmatpush1.xpose.msra.mxu0 %v5221
        %5223 = vmatprep.subr.mxu0 0.0
        %v5224 = vand.u32 %v4903, 4294901760
        %v5225 = vsub.f32 %v4903, %v5224
        %5226 = vmatpush1.xpose.msra.mxu0 %v5225
        %5227 = vmatprep.subr.mxu0 0.0
        %v5228 = vand.u32 %v4902, 4294901760
        %v5229 = vsub.f32 %v4902, %v5228
        %5230 = vmatpush1.xpose.msra.mxu0 %v5229
        %5231 = vmatprep.subr.mxu0 0.0
        %v5232 = vand.u32 %v4901, 4294901760
        %v5233 = vsub.f32 %v4901, %v5232
        %5234 = vmatpush1.xpose.msra.mxu0 %v5233
        %5235 = vmatprep.subr.mxu0 0.0
        %v5236 = vand.u32 %v4900, 4294901760
        %v5237 = vsub.f32 %v4900, %v5236
        %5238 = vmatpush1.xpose.msra.mxu0 %v5237
        %5239 = vmatprep.subr.mxu0 0.0
        %v5240 = vand.u32 %v4899, 4294901760
        %v5241 = vsub.f32 %v4899, %v5240
        %5242 = vmatpush1.xpose.msra.mxu0 %v5241
        %5243 = vmatprep.subr.mxu0 0.0
        %v5244 = vand.u32 %v4898, 4294901760
        %v5245 = vsub.f32 %v4898, %v5244
        %5246 = vmatpush1.xpose.msra.mxu0 %v5245
        %5247 = vmatprep.subr.mxu0 0.0
        %v5248 = vand.u32 %v4897, 4294901760
        %v5249 = vsub.f32 %v4897, %v5248
        %5250 = vmatpush1.xpose.msra.mxu0 %v5249
        %5251 = vmatprep.subr.mxu0 0.0
        %5252 = vmatpush2.xpose.msra.mxu0 0.0
        %5253 = vmatprep.subr.mxu0 0.0
        %5254 = vmatpush2.xpose.msra.mxu0 0.0
        %5255 = vmatprep.subr.mxu0 0.0
        %5256 = vmatpush2.xpose.msra.mxu0 0.0
        %5257 = vmatprep.subr.mxu0 0.0
        %5258 = vmatpush2.xpose.msra.mxu0 0.0
        %5259 = vmatprep.subr.mxu0 0.0
        %5260 = vmatpush2.xpose.msra.mxu0 0.0
        %5261 = vmatprep.subr.mxu0 0.0
        %5262 = vmatpush2.xpose.msra.mxu0 0.0
        %5263 = vmatprep.subr.mxu0 0.0
        %5264 = vmatpush2.xpose.msra.mxu0 0.0
        %5265 = vmatprep.subr.mxu0 0.0
        %5266 = vmatpush2.xpose.msra.mxu0 0.0
        %5267 = vmatprep.subr.mxu0 0.0
        %5268 = vmatpush2.xpose.msra.mxu0 0.0
        %5269 = vmatprep.subr.mxu0 0.0
        %5270 = vmatpush2.xpose.msra.mxu0 0.0
        %5271 = vmatprep.subr.mxu0 0.0
        %5272 = vmatpush2.xpose.msra.mxu0 0.0
        %5273 = vmatprep.subr.mxu0 0.0
        %5274 = vmatpush2.xpose.msra.mxu0 0.0
        %5275 = vmatprep.subr.mxu0 0.0
        %5276 = vmatpush2.xpose.msra.mxu0 0.0
        %5277 = vmatprep.subr.mxu0 0.0
        %5278 = vmatpush2.xpose.msra.mxu0 0.0
        %5279 = vmatprep.subr.mxu0 0.0
        %5280 = vmatpush2.xpose.msra.mxu0 0.0
        %5281 = vmatprep.subr.mxu0 0.0
        %5282 = vmatpush2.xpose.msra.mxu0 0.0
        %5283 = vmatprep.mubr.f32.mxu0 0.0
        %v5284 = vand.u32 %v293, 4294901760
        %v5285 = vsub.f32 %v293, %v5284
        %5286 = vmatmul.mubr.f32.gmra.mxu0 %v5285
        %v5287 = vpop.f32.mrf.mxu0
        %v5288 = vadd.f32 %v5172, %v5287
        %v5289 = vpop.f32.mrf.mxu0
        %5290 = vmatprep.mubr.f32.mxu0 0.0
        %v5291 = vand.u32 %v294, 4294901760
        %v5292 = vsub.f32 %v294, %v5291
        %5293 = vmatmul.mubr.f32.gmra.mxu0 %v5292
        %v5294 = vpop.f32.mrf.mxu0
        %v5295 = vadd.f32 %v5178, %v5294
        %v5296 = vpop.f32.mrf.mxu0
        %5297 = vmatprep.mubr.f32.mxu0 0.0
        %v5298 = vand.u32 %v295, 4294901760
        %v5299 = vsub.f32 %v295, %v5298
        %5300 = vmatmul.mubr.f32.gmra.mxu0 %v5299
        %v5301 = vpop.f32.mrf.mxu0
        %v5302 = vadd.f32 %v5184, %v5301
        %v5303 = vpop.f32.mrf.mxu0
        %5304 = vdwg.mxu0
        %5305 = vmatprep.subr.mxu0 0.0
        %v5306 = vand.u32 %v4912, 4294901760
        %5307 = vmatpush1.xpose.msra.mxu0 %v5306
        %5308 = vmatprep.subr.mxu0 0.0
        %v5309 = vand.u32 %v4911, 4294901760
        %5310 = vmatpush1.xpose.msra.mxu0 %v5309
        %5311 = vmatprep.subr.mxu0 0.0
        %v5312 = vand.u32 %v4910, 4294901760
        %5313 = vmatpush1.xpose.msra.mxu0 %v5312
        %5314 = vmatprep.subr.mxu0 0.0
        %v5315 = vand.u32 %v4909, 4294901760
        %5316 = vmatpush1.xpose.msra.mxu0 %v5315
        %5317 = vmatprep.subr.mxu0 0.0
        %v5318 = vand.u32 %v4908, 4294901760
        %5319 = vmatpush1.xpose.msra.mxu0 %v5318
        %5320 = vmatprep.subr.mxu0 0.0
        %v5321 = vand.u32 %v4907, 4294901760
        %5322 = vmatpush1.xpose.msra.mxu0 %v5321
        %5323 = vmatprep.subr.mxu0 0.0
        %v5324 = vand.u32 %v4906, 4294901760
        %5325 = vmatpush1.xpose.msra.mxu0 %v5324
        %5326 = vmatprep.subr.mxu0 0.0
        %v5327 = vand.u32 %v4905, 4294901760
        %5328 = vmatpush1.xpose.msra.mxu0 %v5327
        %5329 = vmatprep.subr.mxu0 0.0
        %v5330 = vand.u32 %v4904, 4294901760
        %5331 = vmatpush1.xpose.msra.mxu0 %v5330
        %5332 = vmatprep.subr.mxu0 0.0
        %v5333 = vand.u32 %v4903, 4294901760
        %5334 = vmatpush1.xpose.msra.mxu0 %v5333
        %5335 = vmatprep.subr.mxu0 0.0
        %v5336 = vand.u32 %v4902, 4294901760
        %5337 = vmatpush1.xpose.msra.mxu0 %v5336
        %5338 = vmatprep.subr.mxu0 0.0
        %v5339 = vand.u32 %v4901, 4294901760
        %5340 = vmatpush1.xpose.msra.mxu0 %v5339
        %5341 = vmatprep.subr.mxu0 0.0
        %v5342 = vand.u32 %v4900, 4294901760
        %5343 = vmatpush1.xpose.msra.mxu0 %v5342
        %5344 = vmatprep.subr.mxu0 0.0
        %v5345 = vand.u32 %v4899, 4294901760
        %5346 = vmatpush1.xpose.msra.mxu0 %v5345
        %5347 = vmatprep.subr.mxu0 0.0
        %v5348 = vand.u32 %v4898, 4294901760
        %5349 = vmatpush1.xpose.msra.mxu0 %v5348
        %5350 = vmatprep.subr.mxu0 0.0
        %v5351 = vand.u32 %v4897, 4294901760
        %5352 = vmatpush1.xpose.msra.mxu0 %v5351
        %5353 = vmatprep.subr.mxu0 0.0
        %5354 = vmatpush2.xpose.msra.mxu0 0.0
        %5355 = vmatprep.subr.mxu0 0.0
        %5356 = vmatpush2.xpose.msra.mxu0 0.0
        %5357 = vmatprep.subr.mxu0 0.0
        %5358 = vmatpush2.xpose.msra.mxu0 0.0
        %5359 = vmatprep.subr.mxu0 0.0
        %5360 = vmatpush2.xpose.msra.mxu0 0.0
        %5361 = vmatprep.subr.mxu0 0.0
        %5362 = vmatpush2.xpose.msra.mxu0 0.0
        %5363 = vmatprep.subr.mxu0 0.0
        %5364 = vmatpush2.xpose.msra.mxu0 0.0
        %5365 = vmatprep.subr.mxu0 0.0
        %5366 = vmatpush2.xpose.msra.mxu0 0.0
        %5367 = vmatprep.subr.mxu0 0.0
        %5368 = vmatpush2.xpose.msra.mxu0 0.0
        %5369 = vmatprep.subr.mxu0 0.0
        %5370 = vmatpush2.xpose.msra.mxu0 0.0
        %5371 = vmatprep.subr.mxu0 0.0
        %5372 = vmatpush2.xpose.msra.mxu0 0.0
        %5373 = vmatprep.subr.mxu0 0.0
        %5374 = vmatpush2.xpose.msra.mxu0 0.0
        %5375 = vmatprep.subr.mxu0 0.0
        %5376 = vmatpush2.xpose.msra.mxu0 0.0
        %5377 = vmatprep.subr.mxu0 0.0
        %5378 = vmatpush2.xpose.msra.mxu0 0.0
        %5379 = vmatprep.subr.mxu0 0.0
        %5380 = vmatpush2.xpose.msra.mxu0 0.0
        %5381 = vmatprep.subr.mxu0 0.0
        %5382 = vmatpush2.xpose.msra.mxu0 0.0
        %5383 = vmatprep.subr.mxu0 0.0
        %5384 = vmatpush2.xpose.msra.mxu0 0.0
        %5385 = vmatprep.mubr.f32.mxu0 0.0
        %v5386 = vand.u32 %v293, 4294901760
        %v5387 = vsub.f32 %v293, %v5386
        %v5388 = vand.u32 %v5387, 4294901760
        %5389 = vmatmul.mubr.f32.gmra.mxu0 %v5388
        %v5390 = vpop.f32.mrf.mxu0
        %v5391 = vadd.f32 %v5288, %v5390
        %v5392 = vpop.f32.mrf.mxu0
        %5393 = vmatprep.mubr.f32.mxu0 0.0
        %v5394 = vand.u32 %v294, 4294901760
        %v5395 = vsub.f32 %v294, %v5394
        %v5396 = vand.u32 %v5395, 4294901760
        %5397 = vmatmul.mubr.f32.gmra.mxu0 %v5396
        %v5398 = vpop.f32.mrf.mxu0
        %v5399 = vadd.f32 %v5295, %v5398
        %v5400 = vpop.f32.mrf.mxu0
        %5401 = vmatprep.mubr.f32.mxu0 0.0
        %v5402 = vand.u32 %v295, 4294901760
        %v5403 = vsub.f32 %v295, %v5402
        %v5404 = vand.u32 %v5403, 4294901760
        %5405 = vmatmul.mubr.f32.gmra.mxu0 %v5404
        %v5406 = vpop.f32.mrf.mxu0
        %v5407 = vadd.f32 %v5302, %v5406
        %v5408 = vpop.f32.mrf.mxu0
        %5409 = vdwg.mxu0
        %5410 = vmatprep.subr.mxu0 0.0
        %v5411 = vand.u32 %v4912, 4294901760
        %v5412 = vsub.f32 %v4912, %v5411
        %v5413 = vand.u32 %v5412, 4294901760
        %5414 = vmatpush1.xpose.msra.mxu0 %v5413
        %5415 = vmatprep.subr.mxu0 0.0
        %v5416 = vand.u32 %v4911, 4294901760
        %v5417 = vsub.f32 %v4911, %v5416
        %v5418 = vand.u32 %v5417, 4294901760
        %5419 = vmatpush1.xpose.msra.mxu0 %v5418
        %5420 = vmatprep.subr.mxu0 0.0
        %v5421 = vand.u32 %v4910, 4294901760
        %v5422 = vsub.f32 %v4910, %v5421
        %v5423 = vand.u32 %v5422, 4294901760
        %5424 = vmatpush1.xpose.msra.mxu0 %v5423
        %5425 = vmatprep.subr.mxu0 0.0
        %v5426 = vand.u32 %v4909, 4294901760
        %v5427 = vsub.f32 %v4909, %v5426
        %v5428 = vand.u32 %v5427, 4294901760
        %5429 = vmatpush1.xpose.msra.mxu0 %v5428
        %5430 = vmatprep.subr.mxu0 0.0
        %v5431 = vand.u32 %v4908, 4294901760
        %v5432 = vsub.f32 %v4908, %v5431
        %v5433 = vand.u32 %v5432, 4294901760
        %5434 = vmatpush1.xpose.msra.mxu0 %v5433
        %5435 = vmatprep.subr.mxu0 0.0
        %v5436 = vand.u32 %v4907, 4294901760
        %v5437 = vsub.f32 %v4907, %v5436
        %v5438 = vand.u32 %v5437, 4294901760
        %5439 = vmatpush1.xpose.msra.mxu0 %v5438
        %5440 = vmatprep.subr.mxu0 0.0
        %v5441 = vand.u32 %v4906, 4294901760
        %v5442 = vsub.f32 %v4906, %v5441
        %v5443 = vand.u32 %v5442, 4294901760
        %5444 = vmatpush1.xpose.msra.mxu0 %v5443
        %5445 = vmatprep.subr.mxu0 0.0
        %v5446 = vand.u32 %v4905, 4294901760
        %v5447 = vsub.f32 %v4905, %v5446
        %v5448 = vand.u32 %v5447, 4294901760
        %5449 = vmatpush1.xpose.msra.mxu0 %v5448
        %5450 = vmatprep.subr.mxu0 0.0
        %v5451 = vand.u32 %v4904, 4294901760
        %v5452 = vsub.f32 %v4904, %v5451
        %v5453 = vand.u32 %v5452, 4294901760
        %5454 = vmatpush1.xpose.msra.mxu0 %v5453
        %5455 = vmatprep.subr.mxu0 0.0
        %v5456 = vand.u32 %v4903, 4294901760
        %v5457 = vsub.f32 %v4903, %v5456
        %v5458 = vand.u32 %v5457, 4294901760
        %5459 = vmatpush1.xpose.msra.mxu0 %v5458
        %5460 = vmatprep.subr.mxu0 0.0
        %v5461 = vand.u32 %v4902, 4294901760
        %v5462 = vsub.f32 %v4902, %v5461
        %v5463 = vand.u32 %v5462, 4294901760
        %5464 = vmatpush1.xpose.msra.mxu0 %v5463
        %5465 = vmatprep.subr.mxu0 0.0
        %v5466 = vand.u32 %v4901, 4294901760
        %v5467 = vsub.f32 %v4901, %v5466
        %v5468 = vand.u32 %v5467, 4294901760
        %5469 = vmatpush1.xpose.msra.mxu0 %v5468
        %5470 = vmatprep.subr.mxu0 0.0
        %v5471 = vand.u32 %v4900, 4294901760
        %v5472 = vsub.f32 %v4900, %v5471
        %v5473 = vand.u32 %v5472, 4294901760
        %5474 = vmatpush1.xpose.msra.mxu0 %v5473
        %5475 = vmatprep.subr.mxu0 0.0
        %v5476 = vand.u32 %v4899, 4294901760
        %v5477 = vsub.f32 %v4899, %v5476
        %v5478 = vand.u32 %v5477, 4294901760
        %5479 = vmatpush1.xpose.msra.mxu0 %v5478
        %5480 = vmatprep.subr.mxu0 0.0
        %v5481 = vand.u32 %v4898, 4294901760
        %v5482 = vsub.f32 %v4898, %v5481
        %v5483 = vand.u32 %v5482, 4294901760
        %5484 = vmatpush1.xpose.msra.mxu0 %v5483
        %5485 = vmatprep.subr.mxu0 0.0
        %v5486 = vand.u32 %v4897, 4294901760
        %v5487 = vsub.f32 %v4897, %v5486
        %v5488 = vand.u32 %v5487, 4294901760
        %5489 = vmatpush1.xpose.msra.mxu0 %v5488
        %5490 = vmatprep.subr.mxu0 0.0
        %5491 = vmatpush2.xpose.msra.mxu0 0.0
        %5492 = vmatprep.subr.mxu0 0.0
        %5493 = vmatpush2.xpose.msra.mxu0 0.0
        %5494 = vmatprep.subr.mxu0 0.0
        %5495 = vmatpush2.xpose.msra.mxu0 0.0
        %5496 = vmatprep.subr.mxu0 0.0
        %5497 = vmatpush2.xpose.msra.mxu0 0.0
        %5498 = vmatprep.subr.mxu0 0.0
        %5499 = vmatpush2.xpose.msra.mxu0 0.0
        %5500 = vmatprep.subr.mxu0 0.0
        %5501 = vmatpush2.xpose.msra.mxu0 0.0
        %5502 = vmatprep.subr.mxu0 0.0
        %5503 = vmatpush2.xpose.msra.mxu0 0.0
        %5504 = vmatprep.subr.mxu0 0.0
        %5505 = vmatpush2.xpose.msra.mxu0 0.0
        %5506 = vmatprep.subr.mxu0 0.0
        %5507 = vmatpush2.xpose.msra.mxu0 0.0
        %5508 = vmatprep.subr.mxu0 0.0
        %5509 = vmatpush2.xpose.msra.mxu0 0.0
        %5510 = vmatprep.subr.mxu0 0.0
        %5511 = vmatpush2.xpose.msra.mxu0 0.0
        %5512 = vmatprep.subr.mxu0 0.0
        %5513 = vmatpush2.xpose.msra.mxu0 0.0
        %5514 = vmatprep.subr.mxu0 0.0
        %5515 = vmatpush2.xpose.msra.mxu0 0.0
        %5516 = vmatprep.subr.mxu0 0.0
        %5517 = vmatpush2.xpose.msra.mxu0 0.0
        %5518 = vmatprep.subr.mxu0 0.0
        %5519 = vmatpush2.xpose.msra.mxu0 0.0
        %5520 = vmatprep.subr.mxu0 0.0
        %5521 = vmatpush2.xpose.msra.mxu0 0.0
        %5522 = vmatprep.mubr.f32.mxu0 0.0
        %v5523 = vand.u32 %v293, 4294901760
        %5524 = vmatmul.mubr.f32.gmra.mxu0 %v5523
        %v5525 = vpop.f32.mrf.mxu0
        %v5526 = vadd.f32 %v5391, %v5525
        %v5527 = vpop.f32.mrf.mxu0
        %5528 = vmatprep.mubr.f32.mxu0 0.0
        %v5529 = vand.u32 %v294, 4294901760
        %5530 = vmatmul.mubr.f32.gmra.mxu0 %v5529
        %v5531 = vpop.f32.mrf.mxu0
        %v5532 = vadd.f32 %v5399, %v5531
        %v5533 = vpop.f32.mrf.mxu0
        %5534 = vmatprep.mubr.f32.mxu0 0.0
        %v5535 = vand.u32 %v295, 4294901760
        %5536 = vmatmul.mubr.f32.gmra.mxu0 %v5535
        %v5537 = vpop.f32.mrf.mxu0
        %v5538 = vadd.f32 %v5407, %v5537
        %v5539 = vpop.f32.mrf.mxu0
        %5540 = vdwg.mxu0
        %5541 = vmatprep.subr.mxu0 0.0
        %v5542 = vand.u32 %v4912, 4294901760
        %5543 = vmatpush1.xpose.msra.mxu0 %v5542
        %5544 = vmatprep.subr.mxu0 0.0
        %v5545 = vand.u32 %v4911, 4294901760
        %5546 = vmatpush1.xpose.msra.mxu0 %v5545
        %5547 = vmatprep.subr.mxu0 0.0
        %v5548 = vand.u32 %v4910, 4294901760
        %5549 = vmatpush1.xpose.msra.mxu0 %v5548
        %5550 = vmatprep.subr.mxu0 0.0
        %v5551 = vand.u32 %v4909, 4294901760
        %5552 = vmatpush1.xpose.msra.mxu0 %v5551
        %5553 = vmatprep.subr.mxu0 0.0
        %v5554 = vand.u32 %v4908, 4294901760
        %5555 = vmatpush1.xpose.msra.mxu0 %v5554
        %5556 = vmatprep.subr.mxu0 0.0
        %v5557 = vand.u32 %v4907, 4294901760
        %5558 = vmatpush1.xpose.msra.mxu0 %v5557
        %5559 = vmatprep.subr.mxu0 0.0
        %v5560 = vand.u32 %v4906, 4294901760
        %5561 = vmatpush1.xpose.msra.mxu0 %v5560
        %5562 = vmatprep.subr.mxu0 0.0
        %v5563 = vand.u32 %v4905, 4294901760
        %5564 = vmatpush1.xpose.msra.mxu0 %v5563
        %5565 = vmatprep.subr.mxu0 0.0
        %v5566 = vand.u32 %v4904, 4294901760
        %5567 = vmatpush1.xpose.msra.mxu0 %v5566
        %5568 = vmatprep.subr.mxu0 0.0
        %v5569 = vand.u32 %v4903, 4294901760
        %5570 = vmatpush1.xpose.msra.mxu0 %v5569
        %5571 = vmatprep.subr.mxu0 0.0
        %v5572 = vand.u32 %v4902, 4294901760
        %5573 = vmatpush1.xpose.msra.mxu0 %v5572
        %5574 = vmatprep.subr.mxu0 0.0
        %v5575 = vand.u32 %v4901, 4294901760
        %5576 = vmatpush1.xpose.msra.mxu0 %v5575
        %5577 = vmatprep.subr.mxu0 0.0
        %v5578 = vand.u32 %v4900, 4294901760
        %5579 = vmatpush1.xpose.msra.mxu0 %v5578
        %5580 = vmatprep.subr.mxu0 0.0
        %v5581 = vand.u32 %v4899, 4294901760
        %5582 = vmatpush1.xpose.msra.mxu0 %v5581
        %5583 = vmatprep.subr.mxu0 0.0
        %v5584 = vand.u32 %v4898, 4294901760
        %5585 = vmatpush1.xpose.msra.mxu0 %v5584
        %5586 = vmatprep.subr.mxu0 0.0
        %v5587 = vand.u32 %v4897, 4294901760
        %5588 = vmatpush1.xpose.msra.mxu0 %v5587
        %5589 = vmatprep.subr.mxu0 0.0
        %5590 = vmatpush2.xpose.msra.mxu0 0.0
        %5591 = vmatprep.subr.mxu0 0.0
        %5592 = vmatpush2.xpose.msra.mxu0 0.0
        %5593 = vmatprep.subr.mxu0 0.0
        %5594 = vmatpush2.xpose.msra.mxu0 0.0
        %5595 = vmatprep.subr.mxu0 0.0
        %5596 = vmatpush2.xpose.msra.mxu0 0.0
        %5597 = vmatprep.subr.mxu0 0.0
        %5598 = vmatpush2.xpose.msra.mxu0 0.0
        %5599 = vmatprep.subr.mxu0 0.0
        %5600 = vmatpush2.xpose.msra.mxu0 0.0
        %5601 = vmatprep.subr.mxu0 0.0
        %5602 = vmatpush2.xpose.msra.mxu0 0.0
        %5603 = vmatprep.subr.mxu0 0.0
        %5604 = vmatpush2.xpose.msra.mxu0 0.0
        %5605 = vmatprep.subr.mxu0 0.0
        %5606 = vmatpush2.xpose.msra.mxu0 0.0
        %5607 = vmatprep.subr.mxu0 0.0
        %5608 = vmatpush2.xpose.msra.mxu0 0.0
        %5609 = vmatprep.subr.mxu0 0.0
        %5610 = vmatpush2.xpose.msra.mxu0 0.0
        %5611 = vmatprep.subr.mxu0 0.0
        %5612 = vmatpush2.xpose.msra.mxu0 0.0
        %5613 = vmatprep.subr.mxu0 0.0
        %5614 = vmatpush2.xpose.msra.mxu0 0.0
        %5615 = vmatprep.subr.mxu0 0.0
        %5616 = vmatpush2.xpose.msra.mxu0 0.0
        %5617 = vmatprep.subr.mxu0 0.0
        %5618 = vmatpush2.xpose.msra.mxu0 0.0
        %5619 = vmatprep.subr.mxu0 0.0
        %5620 = vmatpush2.xpose.msra.mxu0 0.0
        %5621 = vmatprep.mubr.f32.mxu0 0.0
        %v5622 = vand.u32 %v293, 4294901760
        %5623 = vmatmul.mubr.f32.gmra.mxu0 %v5622
        %v5624 = vpop.f32.mrf.mxu0
        %v5625 = vadd.f32 %v5526, %v5624
        %v5626 = vpop.f32.mrf.mxu0
        %5627 = vmatprep.mubr.f32.mxu0 0.0
        %v5628 = vand.u32 %v294, 4294901760
        %5629 = vmatmul.mubr.f32.gmra.mxu0 %v5628
        %v5630 = vpop.f32.mrf.mxu0
        %v5631 = vadd.f32 %v5532, %v5630
        %v5632 = vpop.f32.mrf.mxu0
        %5633 = vmatprep.mubr.f32.mxu0 0.0
        %v5634 = vand.u32 %v295, 4294901760
        %5635 = vmatmul.mubr.f32.gmra.mxu0 %v5634
        %v5636 = vpop.f32.mrf.mxu0
        %v5637 = vadd.f32 %v5538, %v5636
        %v5638 = vpop.f32.mrf.mxu0
        %5639 = vdwg.mxu0
        %s5640 = scalar_lea.vmem %s249, 96 [#allocation2]
        %5641 = vst [vmem:[%s5640] sm:$0xff] %v5625
        %5642 = vst [vmem:[%s5640 + $0x8] sm:$0xff] %v5631
        %5643 = vst [vmem:[%s5640 + $0x10] sm:$0xff] %v5637
        %v5644 = vadd.f32 %v5637, 0.5
        %v5645 = vcvt.f32.s32.to.zero.pseudo %v5644
        %v5646 = vsel %vm4865, 3.4028235e+38, %v4817
        %v5647 = vsel %vm4866, 3.4028235e+38, %v4818
        %v5648 = vsel %vm4867, 3.4028235e+38, %v4819
        %v5649 = vsel %vm4868, 3.4028235e+38, %v4820
        %v5650 = vsel %vm4869, 3.4028235e+38, %v4821
        %v5651 = vsel %vm4870, 3.4028235e+38, %v4822
        %v5652 = vsel %vm4871, 3.4028235e+38, %v4823
        %v5653 = vsel %vm4872, 3.4028235e+38, %v4824
        %v5654 = vsel %vm4873, 3.4028235e+38, %v4825
        %v5655 = vsel %vm4874, 3.4028235e+38, %v4826
        %v5656 = vsel %vm4875, 3.4028235e+38, %v4827
        %v5657 = vsel %vm4876, 3.4028235e+38, %v4828
        %v5658 = vsel %vm4877, 3.4028235e+38, %v4829
        %v5659 = vsel %vm4878, 3.4028235e+38, %v4830
        %v5660 = vsel %vm4879, 3.4028235e+38, %v4831
        %v5661 = vsel %vm4880, 3.4028235e+38, %v4832
        %5662 = vmin.xlane.f32.xlu0 %v5646
        %v5663 = vpop.xlane.xlu0 %5662
        %5664 = vmin.xlane.f32.xlu0 %v5647
        %v5665 = vpop.xlane.xlu0 %5664
        %5666 = vmin.xlane.f32.xlu0 %v5648
        %v5667 = vpop.xlane.xlu0 %5666
        %5668 = vmin.xlane.f32.xlu0 %v5649
        %v5669 = vpop.xlane.xlu0 %5668
        %5670 = vmin.xlane.f32.xlu0 %v5650
        %v5671 = vpop.xlane.xlu0 %5670
        %5672 = vmin.xlane.f32.xlu0 %v5651
        %v5673 = vpop.xlane.xlu0 %5672
        %5674 = vmin.xlane.f32.xlu0 %v5652
        %v5675 = vpop.xlane.xlu0 %5674
        %5676 = vmin.xlane.f32.xlu0 %v5653
        %v5677 = vpop.xlane.xlu0 %5676
        %5678 = vmin.xlane.f32.xlu0 %v5654
        %v5679 = vpop.xlane.xlu0 %5678
        %5680 = vmin.xlane.f32.xlu0 %v5655
        %v5681 = vpop.xlane.xlu0 %5680
        %5682 = vmin.xlane.f32.xlu0 %v5656
        %v5683 = vpop.xlane.xlu0 %5682
        %5684 = vmin.xlane.f32.xlu0 %v5657
        %v5685 = vpop.xlane.xlu0 %5684
        %5686 = vmin.xlane.f32.xlu0 %v5658
        %v5687 = vpop.xlane.xlu0 %5686
        %5688 = vmin.xlane.f32.xlu0 %v5659
        %v5689 = vpop.xlane.xlu0 %5688
        %5690 = vmin.xlane.f32.xlu0 %v5660
        %v5691 = vpop.xlane.xlu0 %5690
        %5692 = vmin.xlane.f32.xlu0 %v5661
        %v5693 = vpop.xlane.xlu0 %5692
        %vm5694 = vcmp.eq.f32.partialorder %v5646, %v5663
        %vm5695 = vcmp.eq.f32.partialorder %v5647, %v5665
        %vm5696 = vcmp.eq.f32.partialorder %v5648, %v5667
        %vm5697 = vcmp.eq.f32.partialorder %v5649, %v5669
        %vm5698 = vcmp.eq.f32.partialorder %v5650, %v5671
        %vm5699 = vcmp.eq.f32.partialorder %v5651, %v5673
        %vm5700 = vcmp.eq.f32.partialorder %v5652, %v5675
        %vm5701 = vcmp.eq.f32.partialorder %v5653, %v5677
        %vm5702 = vcmp.eq.f32.partialorder %v5654, %v5679
        %vm5703 = vcmp.eq.f32.partialorder %v5655, %v5681
        %vm5704 = vcmp.eq.f32.partialorder %v5656, %v5683
        %vm5705 = vcmp.eq.f32.partialorder %v5657, %v5685
        %vm5706 = vcmp.eq.f32.partialorder %v5658, %v5687
        %vm5707 = vcmp.eq.f32.partialorder %v5659, %v5689
        %vm5708 = vcmp.eq.f32.partialorder %v5660, %v5691
        %vm5709 = vcmp.eq.f32.partialorder %v5661, %v5693
        %v5710 = vsel %vm5694, 1, 0
        %v5711 = vsel %vm5695, 1, 0
        %v5712 = vsel %vm5696, 1, 0
        %v5713 = vsel %vm5697, 1, 0
        %v5714 = vsel %vm5698, 1, 0
        %v5715 = vsel %vm5699, 1, 0
        %v5716 = vsel %vm5700, 1, 0
        %v5717 = vsel %vm5701, 1, 0
        %v5718 = vsel %vm5702, 1, 0
        %v5719 = vsel %vm5703, 1, 0
        %v5720 = vsel %vm5704, 1, 0
        %v5721 = vsel %vm5705, 1, 0
        %v5722 = vsel %vm5706, 1, 0
        %v5723 = vsel %vm5707, 1, 0
        %v5724 = vsel %vm5708, 1, 0
        %v5725 = vsel %vm5709, 1, 0
        %v5726 = vcvt.s32.f32 %v5710
        %v5727 = vcvt.s32.f32 %v5711
        %v5728 = vcvt.s32.f32 %v5712
        %v5729 = vcvt.s32.f32 %v5713
        %v5730 = vcvt.s32.f32 %v5714
        %v5731 = vcvt.s32.f32 %v5715
        %v5732 = vcvt.s32.f32 %v5716
        %v5733 = vcvt.s32.f32 %v5717
        %v5734 = vcvt.s32.f32 %v5718
        %v5735 = vcvt.s32.f32 %v5719
        %v5736 = vcvt.s32.f32 %v5720
        %v5737 = vcvt.s32.f32 %v5721
        %v5738 = vcvt.s32.f32 %v5722
        %v5739 = vcvt.s32.f32 %v5723
        %v5740 = vcvt.s32.f32 %v5724
        %v5741 = vcvt.s32.f32 %v5725
        %5742 = vmatprep.subr.mxu0 0.0
        %v5743 = vand.u32 %v5741, 4294901760
        %5744 = vmatpush1.xpose.msra.mxu0 %v5743
        %5745 = vmatprep.subr.mxu0 0.0
        %v5746 = vand.u32 %v5740, 4294901760
        %5747 = vmatpush1.xpose.msra.mxu0 %v5746
        %5748 = vmatprep.subr.mxu0 0.0
        %v5749 = vand.u32 %v5739, 4294901760
        %5750 = vmatpush1.xpose.msra.mxu0 %v5749
        %5751 = vmatprep.subr.mxu0 0.0
        %v5752 = vand.u32 %v5738, 4294901760
        %5753 = vmatpush1.xpose.msra.mxu0 %v5752
        %5754 = vmatprep.subr.mxu0 0.0
        %v5755 = vand.u32 %v5737, 4294901760
        %5756 = vmatpush1.xpose.msra.mxu0 %v5755
        %5757 = vmatprep.subr.mxu0 0.0
        %v5758 = vand.u32 %v5736, 4294901760
        %5759 = vmatpush1.xpose.msra.mxu0 %v5758
        %5760 = vmatprep.subr.mxu0 0.0
        %v5761 = vand.u32 %v5735, 4294901760
        %5762 = vmatpush1.xpose.msra.mxu0 %v5761
        %5763 = vmatprep.subr.mxu0 0.0
        %v5764 = vand.u32 %v5734, 4294901760
        %5765 = vmatpush1.xpose.msra.mxu0 %v5764
        %5766 = vmatprep.subr.mxu0 0.0
        %v5767 = vand.u32 %v5733, 4294901760
        %5768 = vmatpush1.xpose.msra.mxu0 %v5767
        %5769 = vmatprep.subr.mxu0 0.0
        %v5770 = vand.u32 %v5732, 4294901760
        %5771 = vmatpush1.xpose.msra.mxu0 %v5770
        %5772 = vmatprep.subr.mxu0 0.0
        %v5773 = vand.u32 %v5731, 4294901760
        %5774 = vmatpush1.xpose.msra.mxu0 %v5773
        %5775 = vmatprep.subr.mxu0 0.0
        %v5776 = vand.u32 %v5730, 4294901760
        %5777 = vmatpush1.xpose.msra.mxu0 %v5776
        %5778 = vmatprep.subr.mxu0 0.0
        %v5779 = vand.u32 %v5729, 4294901760
        %5780 = vmatpush1.xpose.msra.mxu0 %v5779
        %5781 = vmatprep.subr.mxu0 0.0
        %v5782 = vand.u32 %v5728, 4294901760
        %5783 = vmatpush1.xpose.msra.mxu0 %v5782
        %5784 = vmatprep.subr.mxu0 0.0
        %v5785 = vand.u32 %v5727, 4294901760
        %5786 = vmatpush1.xpose.msra.mxu0 %v5785
        %5787 = vmatprep.subr.mxu0 0.0
        %v5788 = vand.u32 %v5726, 4294901760
        %5789 = vmatpush1.xpose.msra.mxu0 %v5788
        %5790 = vmatprep.subr.mxu0 0.0
        %5791 = vmatpush2.xpose.msra.mxu0 0.0
        %5792 = vmatprep.subr.mxu0 0.0
        %5793 = vmatpush2.xpose.msra.mxu0 0.0
        %5794 = vmatprep.subr.mxu0 0.0
        %5795 = vmatpush2.xpose.msra.mxu0 0.0
        %5796 = vmatprep.subr.mxu0 0.0
        %5797 = vmatpush2.xpose.msra.mxu0 0.0
        %5798 = vmatprep.subr.mxu0 0.0
        %5799 = vmatpush2.xpose.msra.mxu0 0.0
        %5800 = vmatprep.subr.mxu0 0.0
        %5801 = vmatpush2.xpose.msra.mxu0 0.0
        %5802 = vmatprep.subr.mxu0 0.0
        %5803 = vmatpush2.xpose.msra.mxu0 0.0
        %5804 = vmatprep.subr.mxu0 0.0
        %5805 = vmatpush2.xpose.msra.mxu0 0.0
        %5806 = vmatprep.subr.mxu0 0.0
        %5807 = vmatpush2.xpose.msra.mxu0 0.0
        %5808 = vmatprep.subr.mxu0 0.0
        %5809 = vmatpush2.xpose.msra.mxu0 0.0
        %5810 = vmatprep.subr.mxu0 0.0
        %5811 = vmatpush2.xpose.msra.mxu0 0.0
        %5812 = vmatprep.subr.mxu0 0.0
        %5813 = vmatpush2.xpose.msra.mxu0 0.0
        %5814 = vmatprep.subr.mxu0 0.0
        %5815 = vmatpush2.xpose.msra.mxu0 0.0
        %5816 = vmatprep.subr.mxu0 0.0
        %5817 = vmatpush2.xpose.msra.mxu0 0.0
        %5818 = vmatprep.subr.mxu0 0.0
        %5819 = vmatpush2.xpose.msra.mxu0 0.0
        %5820 = vmatprep.subr.mxu0 0.0
        %5821 = vmatpush2.xpose.msra.mxu0 0.0
        %5822 = vmatprep.mubr.f32.mxu0 0.0
        %v5823 = vand.u32 %v293, 4294901760
        %v5824 = vsub.f32 %v293, %v5823
        %v5825 = vand.u32 %v5824, 4294901760
        %v5826 = vsub.f32 %v5824, %v5825
        %v5827 = vand.u32 %v5826, 4294901760
        %5828 = vmatmul.mubr.f32.gmra.mxu0 %v5827
        %v5829 = vpop.f32.mrf.mxu0
        %v5830 = vadd.f32 0.0, %v5829
        %v5831 = vpop.f32.mrf.mxu0
        %5832 = vmatprep.mubr.f32.mxu0 0.0
        %v5833 = vand.u32 %v294, 4294901760
        %v5834 = vsub.f32 %v294, %v5833
        %v5835 = vand.u32 %v5834, 4294901760
        %v5836 = vsub.f32 %v5834, %v5835
        %v5837 = vand.u32 %v5836, 4294901760
        %5838 = vmatmul.mubr.f32.gmra.mxu0 %v5837
        %v5839 = vpop.f32.mrf.mxu0
        %v5840 = vadd.f32 0.0, %v5839
        %v5841 = vpop.f32.mrf.mxu0
        %5842 = vmatprep.mubr.f32.mxu0 0.0
        %v5843 = vand.u32 %v295, 4294901760
        %v5844 = vsub.f32 %v295, %v5843
        %v5845 = vand.u32 %v5844, 4294901760
        %v5846 = vsub.f32 %v5844, %v5845
        %v5847 = vand.u32 %v5846, 4294901760
        %5848 = vmatmul.mubr.f32.gmra.mxu0 %v5847
        %v5849 = vpop.f32.mrf.mxu0
        %v5850 = vadd.f32 0.0, %v5849
        %v5851 = vpop.f32.mrf.mxu0
        %5852 = vdwg.mxu0
        %5853 = vmatprep.subr.mxu0 0.0
        %v5854 = vand.u32 %v5741, 4294901760
        %v5855 = vsub.f32 %v5741, %v5854
        %v5856 = vand.u32 %v5855, 4294901760
        %v5857 = vsub.f32 %v5855, %v5856
        %v5858 = vand.u32 %v5857, 4294901760
        %5859 = vmatpush1.xpose.msra.mxu0 %v5858
        %5860 = vmatprep.subr.mxu0 0.0
        %v5861 = vand.u32 %v5740, 4294901760
        %v5862 = vsub.f32 %v5740, %v5861
        %v5863 = vand.u32 %v5862, 4294901760
        %v5864 = vsub.f32 %v5862, %v5863
        %v5865 = vand.u32 %v5864, 4294901760
        %5866 = vmatpush1.xpose.msra.mxu0 %v5865
        %5867 = vmatprep.subr.mxu0 0.0
        %v5868 = vand.u32 %v5739, 4294901760
        %v5869 = vsub.f32 %v5739, %v5868
        %v5870 = vand.u32 %v5869, 4294901760
        %v5871 = vsub.f32 %v5869, %v5870
        %v5872 = vand.u32 %v5871, 4294901760
        %5873 = vmatpush1.xpose.msra.mxu0 %v5872
        %5874 = vmatprep.subr.mxu0 0.0
        %v5875 = vand.u32 %v5738, 4294901760
        %v5876 = vsub.f32 %v5738, %v5875
        %v5877 = vand.u32 %v5876, 4294901760
        %v5878 = vsub.f32 %v5876, %v5877
        %v5879 = vand.u32 %v5878, 4294901760
        %5880 = vmatpush1.xpose.msra.mxu0 %v5879
        %5881 = vmatprep.subr.mxu0 0.0
        %v5882 = vand.u32 %v5737, 4294901760
        %v5883 = vsub.f32 %v5737, %v5882
        %v5884 = vand.u32 %v5883, 4294901760
        %v5885 = vsub.f32 %v5883, %v5884
        %v5886 = vand.u32 %v5885, 4294901760
        %5887 = vmatpush1.xpose.msra.mxu0 %v5886
        %5888 = vmatprep.subr.mxu0 0.0
        %v5889 = vand.u32 %v5736, 4294901760
        %v5890 = vsub.f32 %v5736, %v5889
        %v5891 = vand.u32 %v5890, 4294901760
        %v5892 = vsub.f32 %v5890, %v5891
        %v5893 = vand.u32 %v5892, 4294901760
        %5894 = vmatpush1.xpose.msra.mxu0 %v5893
        %5895 = vmatprep.subr.mxu0 0.0
        %v5896 = vand.u32 %v5735, 4294901760
        %v5897 = vsub.f32 %v5735, %v5896
        %v5898 = vand.u32 %v5897, 4294901760
        %v5899 = vsub.f32 %v5897, %v5898
        %v5900 = vand.u32 %v5899, 4294901760
        %5901 = vmatpush1.xpose.msra.mxu0 %v5900
        %5902 = vmatprep.subr.mxu0 0.0
        %v5903 = vand.u32 %v5734, 4294901760
        %v5904 = vsub.f32 %v5734, %v5903
        %v5905 = vand.u32 %v5904, 4294901760
        %v5906 = vsub.f32 %v5904, %v5905
        %v5907 = vand.u32 %v5906, 4294901760
        %5908 = vmatpush1.xpose.msra.mxu0 %v5907
        %5909 = vmatprep.subr.mxu0 0.0
        %v5910 = vand.u32 %v5733, 4294901760
        %v5911 = vsub.f32 %v5733, %v5910
        %v5912 = vand.u32 %v5911, 4294901760
        %v5913 = vsub.f32 %v5911, %v5912
        %v5914 = vand.u32 %v5913, 4294901760
        %5915 = vmatpush1.xpose.msra.mxu0 %v5914
        %5916 = vmatprep.subr.mxu0 0.0
        %v5917 = vand.u32 %v5732, 4294901760
        %v5918 = vsub.f32 %v5732, %v5917
        %v5919 = vand.u32 %v5918, 4294901760
        %v5920 = vsub.f32 %v5918, %v5919
        %v5921 = vand.u32 %v5920, 4294901760
        %5922 = vmatpush1.xpose.msra.mxu0 %v5921
        %5923 = vmatprep.subr.mxu0 0.0
        %v5924 = vand.u32 %v5731, 4294901760
        %v5925 = vsub.f32 %v5731, %v5924
        %v5926 = vand.u32 %v5925, 4294901760
        %v5927 = vsub.f32 %v5925, %v5926
        %v5928 = vand.u32 %v5927, 4294901760
        %5929 = vmatpush1.xpose.msra.mxu0 %v5928
        %5930 = vmatprep.subr.mxu0 0.0
        %v5931 = vand.u32 %v5730, 4294901760
        %v5932 = vsub.f32 %v5730, %v5931
        %v5933 = vand.u32 %v5932, 4294901760
        %v5934 = vsub.f32 %v5932, %v5933
        %v5935 = vand.u32 %v5934, 4294901760
        %5936 = vmatpush1.xpose.msra.mxu0 %v5935
        %5937 = vmatprep.subr.mxu0 0.0
        %v5938 = vand.u32 %v5729, 4294901760
        %v5939 = vsub.f32 %v5729, %v5938
        %v5940 = vand.u32 %v5939, 4294901760
        %v5941 = vsub.f32 %v5939, %v5940
        %v5942 = vand.u32 %v5941, 4294901760
        %5943 = vmatpush1.xpose.msra.mxu0 %v5942
        %5944 = vmatprep.subr.mxu0 0.0
        %v5945 = vand.u32 %v5728, 4294901760
        %v5946 = vsub.f32 %v5728, %v5945
        %v5947 = vand.u32 %v5946, 4294901760
        %v5948 = vsub.f32 %v5946, %v5947
        %v5949 = vand.u32 %v5948, 4294901760
        %5950 = vmatpush1.xpose.msra.mxu0 %v5949
        %5951 = vmatprep.subr.mxu0 0.0
        %v5952 = vand.u32 %v5727, 4294901760
        %v5953 = vsub.f32 %v5727, %v5952
        %v5954 = vand.u32 %v5953, 4294901760
        %v5955 = vsub.f32 %v5953, %v5954
        %v5956 = vand.u32 %v5955, 4294901760
        %5957 = vmatpush1.xpose.msra.mxu0 %v5956
        %5958 = vmatprep.subr.mxu0 0.0
        %v5959 = vand.u32 %v5726, 4294901760
        %v5960 = vsub.f32 %v5726, %v5959
        %v5961 = vand.u32 %v5960, 4294901760
        %v5962 = vsub.f32 %v5960, %v5961
        %v5963 = vand.u32 %v5962, 4294901760
        %5964 = vmatpush1.xpose.msra.mxu0 %v5963
        %5965 = vmatprep.subr.mxu0 0.0
        %5966 = vmatpush2.xpose.msra.mxu0 0.0
        %5967 = vmatprep.subr.mxu0 0.0
        %5968 = vmatpush2.xpose.msra.mxu0 0.0
        %5969 = vmatprep.subr.mxu0 0.0
        %5970 = vmatpush2.xpose.msra.mxu0 0.0
        %5971 = vmatprep.subr.mxu0 0.0
        %5972 = vmatpush2.xpose.msra.mxu0 0.0
        %5973 = vmatprep.subr.mxu0 0.0
        %5974 = vmatpush2.xpose.msra.mxu0 0.0
        %5975 = vmatprep.subr.mxu0 0.0
        %5976 = vmatpush2.xpose.msra.mxu0 0.0
        %5977 = vmatprep.subr.mxu0 0.0
        %5978 = vmatpush2.xpose.msra.mxu0 0.0
        %5979 = vmatprep.subr.mxu0 0.0
        %5980 = vmatpush2.xpose.msra.mxu0 0.0
        %5981 = vmatprep.subr.mxu0 0.0
        %5982 = vmatpush2.xpose.msra.mxu0 0.0
        %5983 = vmatprep.subr.mxu0 0.0
        %5984 = vmatpush2.xpose.msra.mxu0 0.0
        %5985 = vmatprep.subr.mxu0 0.0
        %5986 = vmatpush2.xpose.msra.mxu0 0.0
        %5987 = vmatprep.subr.mxu0 0.0
        %5988 = vmatpush2.xpose.msra.mxu0 0.0
        %5989 = vmatprep.subr.mxu0 0.0
        %5990 = vmatpush2.xpose.msra.mxu0 0.0
        %5991 = vmatprep.subr.mxu0 0.0
        %5992 = vmatpush2.xpose.msra.mxu0 0.0
        %5993 = vmatprep.subr.mxu0 0.0
        %5994 = vmatpush2.xpose.msra.mxu0 0.0
        %5995 = vmatprep.subr.mxu0 0.0
        %5996 = vmatpush2.xpose.msra.mxu0 0.0
        %5997 = vmatprep.mubr.f32.mxu0 0.0
        %v5998 = vand.u32 %v293, 4294901760
        %5999 = vmatmul.mubr.f32.gmra.mxu0 %v5998
        %v6000 = vpop.f32.mrf.mxu0
        %v6001 = vadd.f32 %v5830, %v6000
        %v6002 = vpop.f32.mrf.mxu0
        %6003 = vmatprep.mubr.f32.mxu0 0.0
        %v6004 = vand.u32 %v294, 4294901760
        %6005 = vmatmul.mubr.f32.gmra.mxu0 %v6004
        %v6006 = vpop.f32.mrf.mxu0
        %v6007 = vadd.f32 %v5840, %v6006
        %v6008 = vpop.f32.mrf.mxu0
        %6009 = vmatprep.mubr.f32.mxu0 0.0
        %v6010 = vand.u32 %v295, 4294901760
        %6011 = vmatmul.mubr.f32.gmra.mxu0 %v6010
        %v6012 = vpop.f32.mrf.mxu0
        %v6013 = vadd.f32 %v5850, %v6012
        %v6014 = vpop.f32.mrf.mxu0
        %6015 = vdwg.mxu0
        %6016 = vmatprep.subr.mxu0 0.0
        %v6017 = vand.u32 %v5741, 4294901760
        %v6018 = vsub.f32 %v5741, %v6017
        %6019 = vmatpush1.xpose.msra.mxu0 %v6018
        %6020 = vmatprep.subr.mxu0 0.0
        %v6021 = vand.u32 %v5740, 4294901760
        %v6022 = vsub.f32 %v5740, %v6021
        %6023 = vmatpush1.xpose.msra.mxu0 %v6022
        %6024 = vmatprep.subr.mxu0 0.0
        %v6025 = vand.u32 %v5739, 4294901760
        %v6026 = vsub.f32 %v5739, %v6025
        %6027 = vmatpush1.xpose.msra.mxu0 %v6026
        %6028 = vmatprep.subr.mxu0 0.0
        %v6029 = vand.u32 %v5738, 4294901760
        %v6030 = vsub.f32 %v5738, %v6029
        %6031 = vmatpush1.xpose.msra.mxu0 %v6030
        %6032 = vmatprep.subr.mxu0 0.0
        %v6033 = vand.u32 %v5737, 4294901760
        %v6034 = vsub.f32 %v5737, %v6033
        %6035 = vmatpush1.xpose.msra.mxu0 %v6034
        %6036 = vmatprep.subr.mxu0 0.0
        %v6037 = vand.u32 %v5736, 4294901760
        %v6038 = vsub.f32 %v5736, %v6037
        %6039 = vmatpush1.xpose.msra.mxu0 %v6038
        %6040 = vmatprep.subr.mxu0 0.0
        %v6041 = vand.u32 %v5735, 4294901760
        %v6042 = vsub.f32 %v5735, %v6041
        %6043 = vmatpush1.xpose.msra.mxu0 %v6042
        %6044 = vmatprep.subr.mxu0 0.0
        %v6045 = vand.u32 %v5734, 4294901760
        %v6046 = vsub.f32 %v5734, %v6045
        %6047 = vmatpush1.xpose.msra.mxu0 %v6046
        %6048 = vmatprep.subr.mxu0 0.0
        %v6049 = vand.u32 %v5733, 4294901760
        %v6050 = vsub.f32 %v5733, %v6049
        %6051 = vmatpush1.xpose.msra.mxu0 %v6050
        %6052 = vmatprep.subr.mxu0 0.0
        %v6053 = vand.u32 %v5732, 4294901760
        %v6054 = vsub.f32 %v5732, %v6053
        %6055 = vmatpush1.xpose.msra.mxu0 %v6054
        %6056 = vmatprep.subr.mxu0 0.0
        %v6057 = vand.u32 %v5731, 4294901760
        %v6058 = vsub.f32 %v5731, %v6057
        %6059 = vmatpush1.xpose.msra.mxu0 %v6058
        %6060 = vmatprep.subr.mxu0 0.0
        %v6061 = vand.u32 %v5730, 4294901760
        %v6062 = vsub.f32 %v5730, %v6061
        %6063 = vmatpush1.xpose.msra.mxu0 %v6062
        %6064 = vmatprep.subr.mxu0 0.0
        %v6065 = vand.u32 %v5729, 4294901760
        %v6066 = vsub.f32 %v5729, %v6065
        %6067 = vmatpush1.xpose.msra.mxu0 %v6066
        %6068 = vmatprep.subr.mxu0 0.0
        %v6069 = vand.u32 %v5728, 4294901760
        %v6070 = vsub.f32 %v5728, %v6069
        %6071 = vmatpush1.xpose.msra.mxu0 %v6070
        %6072 = vmatprep.subr.mxu0 0.0
        %v6073 = vand.u32 %v5727, 4294901760
        %v6074 = vsub.f32 %v5727, %v6073
        %6075 = vmatpush1.xpose.msra.mxu0 %v6074
        %6076 = vmatprep.subr.mxu0 0.0
        %v6077 = vand.u32 %v5726, 4294901760
        %v6078 = vsub.f32 %v5726, %v6077
        %6079 = vmatpush1.xpose.msra.mxu0 %v6078
        %6080 = vmatprep.subr.mxu0 0.0
        %6081 = vmatpush2.xpose.msra.mxu0 0.0
        %6082 = vmatprep.subr.mxu0 0.0
        %6083 = vmatpush2.xpose.msra.mxu0 0.0
        %6084 = vmatprep.subr.mxu0 0.0
        %6085 = vmatpush2.xpose.msra.mxu0 0.0
        %6086 = vmatprep.subr.mxu0 0.0
        %6087 = vmatpush2.xpose.msra.mxu0 0.0
        %6088 = vmatprep.subr.mxu0 0.0
        %6089 = vmatpush2.xpose.msra.mxu0 0.0
        %6090 = vmatprep.subr.mxu0 0.0
        %6091 = vmatpush2.xpose.msra.mxu0 0.0
        %6092 = vmatprep.subr.mxu0 0.0
        %6093 = vmatpush2.xpose.msra.mxu0 0.0
        %6094 = vmatprep.subr.mxu0 0.0
        %6095 = vmatpush2.xpose.msra.mxu0 0.0
        %6096 = vmatprep.subr.mxu0 0.0
        %6097 = vmatpush2.xpose.msra.mxu0 0.0
        %6098 = vmatprep.subr.mxu0 0.0
        %6099 = vmatpush2.xpose.msra.mxu0 0.0
        %6100 = vmatprep.subr.mxu0 0.0
        %6101 = vmatpush2.xpose.msra.mxu0 0.0
        %6102 = vmatprep.subr.mxu0 0.0
        %6103 = vmatpush2.xpose.msra.mxu0 0.0
        %6104 = vmatprep.subr.mxu0 0.0
        %6105 = vmatpush2.xpose.msra.mxu0 0.0
        %6106 = vmatprep.subr.mxu0 0.0
        %6107 = vmatpush2.xpose.msra.mxu0 0.0
        %6108 = vmatprep.subr.mxu0 0.0
        %6109 = vmatpush2.xpose.msra.mxu0 0.0
        %6110 = vmatprep.subr.mxu0 0.0
        %6111 = vmatpush2.xpose.msra.mxu0 0.0
        %6112 = vmatprep.mubr.f32.mxu0 0.0
        %v6113 = vand.u32 %v293, 4294901760
        %v6114 = vsub.f32 %v293, %v6113
        %6115 = vmatmul.mubr.f32.gmra.mxu0 %v6114
        %v6116 = vpop.f32.mrf.mxu0
        %v6117 = vadd.f32 %v6001, %v6116
        %v6118 = vpop.f32.mrf.mxu0
        %6119 = vmatprep.mubr.f32.mxu0 0.0
        %v6120 = vand.u32 %v294, 4294901760
        %v6121 = vsub.f32 %v294, %v6120
        %6122 = vmatmul.mubr.f32.gmra.mxu0 %v6121
        %v6123 = vpop.f32.mrf.mxu0
        %v6124 = vadd.f32 %v6007, %v6123
        %v6125 = vpop.f32.mrf.mxu0
        %6126 = vmatprep.mubr.f32.mxu0 0.0
        %v6127 = vand.u32 %v295, 4294901760
        %v6128 = vsub.f32 %v295, %v6127
        %6129 = vmatmul.mubr.f32.gmra.mxu0 %v6128
        %v6130 = vpop.f32.mrf.mxu0
        %v6131 = vadd.f32 %v6013, %v6130
        %v6132 = vpop.f32.mrf.mxu0
        %6133 = vdwg.mxu0
        %6134 = vmatprep.subr.mxu0 0.0
        %v6135 = vand.u32 %v5741, 4294901760
        %6136 = vmatpush1.xpose.msra.mxu0 %v6135
        %6137 = vmatprep.subr.mxu0 0.0
        %v6138 = vand.u32 %v5740, 4294901760
        %6139 = vmatpush1.xpose.msra.mxu0 %v6138
        %6140 = vmatprep.subr.mxu0 0.0
        %v6141 = vand.u32 %v5739, 4294901760
        %6142 = vmatpush1.xpose.msra.mxu0 %v6141
        %6143 = vmatprep.subr.mxu0 0.0
        %v6144 = vand.u32 %v5738, 4294901760
        %6145 = vmatpush1.xpose.msra.mxu0 %v6144
        %6146 = vmatprep.subr.mxu0 0.0
        %v6147 = vand.u32 %v5737, 4294901760
        %6148 = vmatpush1.xpose.msra.mxu0 %v6147
        %6149 = vmatprep.subr.mxu0 0.0
        %v6150 = vand.u32 %v5736, 4294901760
        %6151 = vmatpush1.xpose.msra.mxu0 %v6150
        %6152 = vmatprep.subr.mxu0 0.0
        %v6153 = vand.u32 %v5735, 4294901760
        %6154 = vmatpush1.xpose.msra.mxu0 %v6153
        %6155 = vmatprep.subr.mxu0 0.0
        %v6156 = vand.u32 %v5734, 4294901760
        %6157 = vmatpush1.xpose.msra.mxu0 %v6156
        %6158 = vmatprep.subr.mxu0 0.0
        %v6159 = vand.u32 %v5733, 4294901760
        %6160 = vmatpush1.xpose.msra.mxu0 %v6159
        %6161 = vmatprep.subr.mxu0 0.0
        %v6162 = vand.u32 %v5732, 4294901760
        %6163 = vmatpush1.xpose.msra.mxu0 %v6162
        %6164 = vmatprep.subr.mxu0 0.0
        %v6165 = vand.u32 %v5731, 4294901760
        %6166 = vmatpush1.xpose.msra.mxu0 %v6165
        %6167 = vmatprep.subr.mxu0 0.0
        %v6168 = vand.u32 %v5730, 4294901760
        %6169 = vmatpush1.xpose.msra.mxu0 %v6168
        %6170 = vmatprep.subr.mxu0 0.0
        %v6171 = vand.u32 %v5729, 4294901760
        %6172 = vmatpush1.xpose.msra.mxu0 %v6171
        %6173 = vmatprep.subr.mxu0 0.0
        %v6174 = vand.u32 %v5728, 4294901760
        %6175 = vmatpush1.xpose.msra.mxu0 %v6174
        %6176 = vmatprep.subr.mxu0 0.0
        %v6177 = vand.u32 %v5727, 4294901760
        %6178 = vmatpush1.xpose.msra.mxu0 %v6177
        %6179 = vmatprep.subr.mxu0 0.0
        %v6180 = vand.u32 %v5726, 4294901760
        %6181 = vmatpush1.xpose.msra.mxu0 %v6180
        %6182 = vmatprep.subr.mxu0 0.0
        %6183 = vmatpush2.xpose.msra.mxu0 0.0
        %6184 = vmatprep.subr.mxu0 0.0
        %6185 = vmatpush2.xpose.msra.mxu0 0.0
        %6186 = vmatprep.subr.mxu0 0.0
        %6187 = vmatpush2.xpose.msra.mxu0 0.0
        %6188 = vmatprep.subr.mxu0 0.0
        %6189 = vmatpush2.xpose.msra.mxu0 0.0
        %6190 = vmatprep.subr.mxu0 0.0
        %6191 = vmatpush2.xpose.msra.mxu0 0.0
        %6192 = vmatprep.subr.mxu0 0.0
        %6193 = vmatpush2.xpose.msra.mxu0 0.0
        %6194 = vmatprep.subr.mxu0 0.0
        %6195 = vmatpush2.xpose.msra.mxu0 0.0
        %6196 = vmatprep.subr.mxu0 0.0
        %6197 = vmatpush2.xpose.msra.mxu0 0.0
        %6198 = vmatprep.subr.mxu0 0.0
        %6199 = vmatpush2.xpose.msra.mxu0 0.0
        %6200 = vmatprep.subr.mxu0 0.0
        %6201 = vmatpush2.xpose.msra.mxu0 0.0
        %6202 = vmatprep.subr.mxu0 0.0
        %6203 = vmatpush2.xpose.msra.mxu0 0.0
        %6204 = vmatprep.subr.mxu0 0.0
        %6205 = vmatpush2.xpose.msra.mxu0 0.0
        %6206 = vmatprep.subr.mxu0 0.0
        %6207 = vmatpush2.xpose.msra.mxu0 0.0
        %6208 = vmatprep.subr.mxu0 0.0
        %6209 = vmatpush2.xpose.msra.mxu0 0.0
        %6210 = vmatprep.subr.mxu0 0.0
        %6211 = vmatpush2.xpose.msra.mxu0 0.0
        %6212 = vmatprep.subr.mxu0 0.0
        %6213 = vmatpush2.xpose.msra.mxu0 0.0
        %6214 = vmatprep.mubr.f32.mxu0 0.0
        %v6215 = vand.u32 %v293, 4294901760
        %v6216 = vsub.f32 %v293, %v6215
        %v6217 = vand.u32 %v6216, 4294901760
        %6218 = vmatmul.mubr.f32.gmra.mxu0 %v6217
        %v6219 = vpop.f32.mrf.mxu0
        %v6220 = vadd.f32 %v6117, %v6219
        %v6221 = vpop.f32.mrf.mxu0
        %6222 = vmatprep.mubr.f32.mxu0 0.0
        %v6223 = vand.u32 %v294, 4294901760
        %v6224 = vsub.f32 %v294, %v6223
        %v6225 = vand.u32 %v6224, 4294901760
        %6226 = vmatmul.mubr.f32.gmra.mxu0 %v6225
        %v6227 = vpop.f32.mrf.mxu0
        %v6228 = vadd.f32 %v6124, %v6227
        %v6229 = vpop.f32.mrf.mxu0
        %6230 = vmatprep.mubr.f32.mxu0 0.0
        %v6231 = vand.u32 %v295, 4294901760
        %v6232 = vsub.f32 %v295, %v6231
        %v6233 = vand.u32 %v6232, 4294901760
        %6234 = vmatmul.mubr.f32.gmra.mxu0 %v6233
        %v6235 = vpop.f32.mrf.mxu0
        %v6236 = vadd.f32 %v6131, %v6235
        %v6237 = vpop.f32.mrf.mxu0
        %6238 = vdwg.mxu0
        %6239 = vmatprep.subr.mxu0 0.0
        %v6240 = vand.u32 %v5741, 4294901760
        %v6241 = vsub.f32 %v5741, %v6240
        %v6242 = vand.u32 %v6241, 4294901760
        %6243 = vmatpush1.xpose.msra.mxu0 %v6242
        %6244 = vmatprep.subr.mxu0 0.0
        %v6245 = vand.u32 %v5740, 4294901760
        %v6246 = vsub.f32 %v5740, %v6245
        %v6247 = vand.u32 %v6246, 4294901760
        %6248 = vmatpush1.xpose.msra.mxu0 %v6247
        %6249 = vmatprep.subr.mxu0 0.0
        %v6250 = vand.u32 %v5739, 4294901760
        %v6251 = vsub.f32 %v5739, %v6250
        %v6252 = vand.u32 %v6251, 4294901760
        %6253 = vmatpush1.xpose.msra.mxu0 %v6252
        %6254 = vmatprep.subr.mxu0 0.0
        %v6255 = vand.u32 %v5738, 4294901760
        %v6256 = vsub.f32 %v5738, %v6255
        %v6257 = vand.u32 %v6256, 4294901760
        %6258 = vmatpush1.xpose.msra.mxu0 %v6257
        %6259 = vmatprep.subr.mxu0 0.0
        %v6260 = vand.u32 %v5737, 4294901760
        %v6261 = vsub.f32 %v5737, %v6260
        %v6262 = vand.u32 %v6261, 4294901760
        %6263 = vmatpush1.xpose.msra.mxu0 %v6262
        %6264 = vmatprep.subr.mxu0 0.0
        %v6265 = vand.u32 %v5736, 4294901760
        %v6266 = vsub.f32 %v5736, %v6265
        %v6267 = vand.u32 %v6266, 4294901760
        %6268 = vmatpush1.xpose.msra.mxu0 %v6267
        %6269 = vmatprep.subr.mxu0 0.0
        %v6270 = vand.u32 %v5735, 4294901760
        %v6271 = vsub.f32 %v5735, %v6270
        %v6272 = vand.u32 %v6271, 4294901760
        %6273 = vmatpush1.xpose.msra.mxu0 %v6272
        %6274 = vmatprep.subr.mxu0 0.0
        %v6275 = vand.u32 %v5734, 4294901760
        %v6276 = vsub.f32 %v5734, %v6275
        %v6277 = vand.u32 %v6276, 4294901760
        %6278 = vmatpush1.xpose.msra.mxu0 %v6277
        %6279 = vmatprep.subr.mxu0 0.0
        %v6280 = vand.u32 %v5733, 4294901760
        %v6281 = vsub.f32 %v5733, %v6280
        %v6282 = vand.u32 %v6281, 4294901760
        %6283 = vmatpush1.xpose.msra.mxu0 %v6282
        %6284 = vmatprep.subr.mxu0 0.0
        %v6285 = vand.u32 %v5732, 4294901760
        %v6286 = vsub.f32 %v5732, %v6285
        %v6287 = vand.u32 %v6286, 4294901760
        %6288 = vmatpush1.xpose.msra.mxu0 %v6287
        %6289 = vmatprep.subr.mxu0 0.0
        %v6290 = vand.u32 %v5731, 4294901760
        %v6291 = vsub.f32 %v5731, %v6290
        %v6292 = vand.u32 %v6291, 4294901760
        %6293 = vmatpush1.xpose.msra.mxu0 %v6292
        %6294 = vmatprep.subr.mxu0 0.0
        %v6295 = vand.u32 %v5730, 4294901760
        %v6296 = vsub.f32 %v5730, %v6295
        %v6297 = vand.u32 %v6296, 4294901760
        %6298 = vmatpush1.xpose.msra.mxu0 %v6297
        %6299 = vmatprep.subr.mxu0 0.0
        %v6300 = vand.u32 %v5729, 4294901760
        %v6301 = vsub.f32 %v5729, %v6300
        %v6302 = vand.u32 %v6301, 4294901760
        %6303 = vmatpush1.xpose.msra.mxu0 %v6302
        %6304 = vmatprep.subr.mxu0 0.0
        %v6305 = vand.u32 %v5728, 4294901760
        %v6306 = vsub.f32 %v5728, %v6305
        %v6307 = vand.u32 %v6306, 4294901760
        %6308 = vmatpush1.xpose.msra.mxu0 %v6307
        %6309 = vmatprep.subr.mxu0 0.0
        %v6310 = vand.u32 %v5727, 4294901760
        %v6311 = vsub.f32 %v5727, %v6310
        %v6312 = vand.u32 %v6311, 4294901760
        %6313 = vmatpush1.xpose.msra.mxu0 %v6312
        %6314 = vmatprep.subr.mxu0 0.0
        %v6315 = vand.u32 %v5726, 4294901760
        %v6316 = vsub.f32 %v5726, %v6315
        %v6317 = vand.u32 %v6316, 4294901760
        %6318 = vmatpush1.xpose.msra.mxu0 %v6317
        %6319 = vmatprep.subr.mxu0 0.0
        %6320 = vmatpush2.xpose.msra.mxu0 0.0
        %6321 = vmatprep.subr.mxu0 0.0
        %6322 = vmatpush2.xpose.msra.mxu0 0.0
        %6323 = vmatprep.subr.mxu0 0.0
        %6324 = vmatpush2.xpose.msra.mxu0 0.0
        %6325 = vmatprep.subr.mxu0 0.0
        %6326 = vmatpush2.xpose.msra.mxu0 0.0
        %6327 = vmatprep.subr.mxu0 0.0
        %6328 = vmatpush2.xpose.msra.mxu0 0.0
        %6329 = vmatprep.subr.mxu0 0.0
        %6330 = vmatpush2.xpose.msra.mxu0 0.0
        %6331 = vmatprep.subr.mxu0 0.0
        %6332 = vmatpush2.xpose.msra.mxu0 0.0
        %6333 = vmatprep.subr.mxu0 0.0
        %6334 = vmatpush2.xpose.msra.mxu0 0.0
        %6335 = vmatprep.subr.mxu0 0.0
        %6336 = vmatpush2.xpose.msra.mxu0 0.0
        %6337 = vmatprep.subr.mxu0 0.0
        %6338 = vmatpush2.xpose.msra.mxu0 0.0
        %6339 = vmatprep.subr.mxu0 0.0
        %6340 = vmatpush2.xpose.msra.mxu0 0.0
        %6341 = vmatprep.subr.mxu0 0.0
        %6342 = vmatpush2.xpose.msra.mxu0 0.0
        %6343 = vmatprep.subr.mxu0 0.0
        %6344 = vmatpush2.xpose.msra.mxu0 0.0
        %6345 = vmatprep.subr.mxu0 0.0
        %6346 = vmatpush2.xpose.msra.mxu0 0.0
        %6347 = vmatprep.subr.mxu0 0.0
        %6348 = vmatpush2.xpose.msra.mxu0 0.0
        %6349 = vmatprep.subr.mxu0 0.0
        %6350 = vmatpush2.xpose.msra.mxu0 0.0
        %6351 = vmatprep.mubr.f32.mxu0 0.0
        %v6352 = vand.u32 %v293, 4294901760
        %6353 = vmatmul.mubr.f32.gmra.mxu0 %v6352
        %v6354 = vpop.f32.mrf.mxu0
        %v6355 = vadd.f32 %v6220, %v6354
        %v6356 = vpop.f32.mrf.mxu0
        %6357 = vmatprep.mubr.f32.mxu0 0.0
        %v6358 = vand.u32 %v294, 4294901760
        %6359 = vmatmul.mubr.f32.gmra.mxu0 %v6358
        %v6360 = vpop.f32.mrf.mxu0
        %v6361 = vadd.f32 %v6228, %v6360
        %v6362 = vpop.f32.mrf.mxu0
        %6363 = vmatprep.mubr.f32.mxu0 0.0
        %v6364 = vand.u32 %v295, 4294901760
        %6365 = vmatmul.mubr.f32.gmra.mxu0 %v6364
        %v6366 = vpop.f32.mrf.mxu0
        %v6367 = vadd.f32 %v6236, %v6366
        %v6368 = vpop.f32.mrf.mxu0
        %6369 = vdwg.mxu0
        %6370 = vmatprep.subr.mxu0 0.0
        %v6371 = vand.u32 %v5741, 4294901760
        %6372 = vmatpush1.xpose.msra.mxu0 %v6371
        %6373 = vmatprep.subr.mxu0 0.0
        %v6374 = vand.u32 %v5740, 4294901760
        %6375 = vmatpush1.xpose.msra.mxu0 %v6374
        %6376 = vmatprep.subr.mxu0 0.0
        %v6377 = vand.u32 %v5739, 4294901760
        %6378 = vmatpush1.xpose.msra.mxu0 %v6377
        %6379 = vmatprep.subr.mxu0 0.0
        %v6380 = vand.u32 %v5738, 4294901760
        %6381 = vmatpush1.xpose.msra.mxu0 %v6380
        %6382 = vmatprep.subr.mxu0 0.0
        %v6383 = vand.u32 %v5737, 4294901760
        %6384 = vmatpush1.xpose.msra.mxu0 %v6383
        %6385 = vmatprep.subr.mxu0 0.0
        %v6386 = vand.u32 %v5736, 4294901760
        %6387 = vmatpush1.xpose.msra.mxu0 %v6386
        %6388 = vmatprep.subr.mxu0 0.0
        %v6389 = vand.u32 %v5735, 4294901760
        %6390 = vmatpush1.xpose.msra.mxu0 %v6389
        %6391 = vmatprep.subr.mxu0 0.0
        %v6392 = vand.u32 %v5734, 4294901760
        %6393 = vmatpush1.xpose.msra.mxu0 %v6392
        %6394 = vmatprep.subr.mxu0 0.0
        %v6395 = vand.u32 %v5733, 4294901760
        %6396 = vmatpush1.xpose.msra.mxu0 %v6395
        %6397 = vmatprep.subr.mxu0 0.0
        %v6398 = vand.u32 %v5732, 4294901760
        %6399 = vmatpush1.xpose.msra.mxu0 %v6398
        %6400 = vmatprep.subr.mxu0 0.0
        %v6401 = vand.u32 %v5731, 4294901760
        %6402 = vmatpush1.xpose.msra.mxu0 %v6401
        %6403 = vmatprep.subr.mxu0 0.0
        %v6404 = vand.u32 %v5730, 4294901760
        %6405 = vmatpush1.xpose.msra.mxu0 %v6404
        %6406 = vmatprep.subr.mxu0 0.0
        %v6407 = vand.u32 %v5729, 4294901760
        %6408 = vmatpush1.xpose.msra.mxu0 %v6407
        %6409 = vmatprep.subr.mxu0 0.0
        %v6410 = vand.u32 %v5728, 4294901760
        %6411 = vmatpush1.xpose.msra.mxu0 %v6410
        %6412 = vmatprep.subr.mxu0 0.0
        %v6413 = vand.u32 %v5727, 4294901760
        %6414 = vmatpush1.xpose.msra.mxu0 %v6413
        %6415 = vmatprep.subr.mxu0 0.0
        %v6416 = vand.u32 %v5726, 4294901760
        %6417 = vmatpush1.xpose.msra.mxu0 %v6416
        %6418 = vmatprep.subr.mxu0 0.0
        %6419 = vmatpush2.xpose.msra.mxu0 0.0
        %6420 = vmatprep.subr.mxu0 0.0
        %6421 = vmatpush2.xpose.msra.mxu0 0.0
        %6422 = vmatprep.subr.mxu0 0.0
        %6423 = vmatpush2.xpose.msra.mxu0 0.0
        %6424 = vmatprep.subr.mxu0 0.0
        %6425 = vmatpush2.xpose.msra.mxu0 0.0
        %6426 = vmatprep.subr.mxu0 0.0
        %6427 = vmatpush2.xpose.msra.mxu0 0.0
        %6428 = vmatprep.subr.mxu0 0.0
        %6429 = vmatpush2.xpose.msra.mxu0 0.0
        %6430 = vmatprep.subr.mxu0 0.0
        %6431 = vmatpush2.xpose.msra.mxu0 0.0
        %6432 = vmatprep.subr.mxu0 0.0
        %6433 = vmatpush2.xpose.msra.mxu0 0.0
        %6434 = vmatprep.subr.mxu0 0.0
        %6435 = vmatpush2.xpose.msra.mxu0 0.0
        %6436 = vmatprep.subr.mxu0 0.0
        %6437 = vmatpush2.xpose.msra.mxu0 0.0
        %6438 = vmatprep.subr.mxu0 0.0
        %6439 = vmatpush2.xpose.msra.mxu0 0.0
        %6440 = vmatprep.subr.mxu0 0.0
        %6441 = vmatpush2.xpose.msra.mxu0 0.0
        %6442 = vmatprep.subr.mxu0 0.0
        %6443 = vmatpush2.xpose.msra.mxu0 0.0
        %6444 = vmatprep.subr.mxu0 0.0
        %6445 = vmatpush2.xpose.msra.mxu0 0.0
        %6446 = vmatprep.subr.mxu0 0.0
        %6447 = vmatpush2.xpose.msra.mxu0 0.0
        %6448 = vmatprep.subr.mxu0 0.0
        %6449 = vmatpush2.xpose.msra.mxu0 0.0
        %6450 = vmatprep.mubr.f32.mxu0 0.0
        %v6451 = vand.u32 %v293, 4294901760
        %6452 = vmatmul.mubr.f32.gmra.mxu0 %v6451
        %v6453 = vpop.f32.mrf.mxu0
        %v6454 = vadd.f32 %v6355, %v6453
        %v6455 = vpop.f32.mrf.mxu0
        %6456 = vmatprep.mubr.f32.mxu0 0.0
        %v6457 = vand.u32 %v294, 4294901760
        %6458 = vmatmul.mubr.f32.gmra.mxu0 %v6457
        %v6459 = vpop.f32.mrf.mxu0
        %v6460 = vadd.f32 %v6361, %v6459
        %v6461 = vpop.f32.mrf.mxu0
        %6462 = vmatprep.mubr.f32.mxu0 0.0
        %v6463 = vand.u32 %v295, 4294901760
        %6464 = vmatmul.mubr.f32.gmra.mxu0 %v6463
        %v6465 = vpop.f32.mrf.mxu0
        %v6466 = vadd.f32 %v6367, %v6465
        %v6467 = vpop.f32.mrf.mxu0
        %6468 = vdwg.mxu0
        %s6469 = scalar_lea.vmem %s249, 120 [#allocation2]
        %6470 = vst [vmem:[%s6469] sm:$0xff] %v6454
        %6471 = vst [vmem:[%s6469 + $0x8] sm:$0xff] %v6460
        %6472 = vst [vmem:[%s6469 + $0x10] sm:$0xff] %v6466
        %v6473 = vadd.f32 %v6466, 0.5
        %v6474 = vcvt.f32.s32.to.zero.pseudo %v6473
        %v6475 = vsel %vm5694, 3.4028235e+38, %v5646
        %v6476 = vsel %vm5695, 3.4028235e+38, %v5647
        %v6477 = vsel %vm5696, 3.4028235e+38, %v5648
        %v6478 = vsel %vm5697, 3.4028235e+38, %v5649
        %v6479 = vsel %vm5698, 3.4028235e+38, %v5650
        %v6480 = vsel %vm5699, 3.4028235e+38, %v5651
        %v6481 = vsel %vm5700, 3.4028235e+38, %v5652
        %v6482 = vsel %vm5701, 3.4028235e+38, %v5653
        %v6483 = vsel %vm5702, 3.4028235e+38, %v5654
        %v6484 = vsel %vm5703, 3.4028235e+38, %v5655
        %v6485 = vsel %vm5704, 3.4028235e+38, %v5656
        %v6486 = vsel %vm5705, 3.4028235e+38, %v5657
        %v6487 = vsel %vm5706, 3.4028235e+38, %v5658
        %v6488 = vsel %vm5707, 3.4028235e+38, %v5659
        %v6489 = vsel %vm5708, 3.4028235e+38, %v5660
        %v6490 = vsel %vm5709, 3.4028235e+38, %v5661
        %6491 = vmin.xlane.f32.xlu0 %v6475
        %v6492 = vpop.xlane.xlu0 %6491
        %6493 = vmin.xlane.f32.xlu0 %v6476
        %v6494 = vpop.xlane.xlu0 %6493
        %6495 = vmin.xlane.f32.xlu0 %v6477
        %v6496 = vpop.xlane.xlu0 %6495
        %6497 = vmin.xlane.f32.xlu0 %v6478
        %v6498 = vpop.xlane.xlu0 %6497
        %6499 = vmin.xlane.f32.xlu0 %v6479
        %v6500 = vpop.xlane.xlu0 %6499
        %6501 = vmin.xlane.f32.xlu0 %v6480
        %v6502 = vpop.xlane.xlu0 %6501
        %6503 = vmin.xlane.f32.xlu0 %v6481
        %v6504 = vpop.xlane.xlu0 %6503
        %6505 = vmin.xlane.f32.xlu0 %v6482
        %v6506 = vpop.xlane.xlu0 %6505
        %6507 = vmin.xlane.f32.xlu0 %v6483
        %v6508 = vpop.xlane.xlu0 %6507
        %6509 = vmin.xlane.f32.xlu0 %v6484
        %v6510 = vpop.xlane.xlu0 %6509
        %6511 = vmin.xlane.f32.xlu0 %v6485
        %v6512 = vpop.xlane.xlu0 %6511
        %6513 = vmin.xlane.f32.xlu0 %v6486
        %v6514 = vpop.xlane.xlu0 %6513
        %6515 = vmin.xlane.f32.xlu0 %v6487
        %v6516 = vpop.xlane.xlu0 %6515
        %6517 = vmin.xlane.f32.xlu0 %v6488
        %v6518 = vpop.xlane.xlu0 %6517
        %6519 = vmin.xlane.f32.xlu0 %v6489
        %v6520 = vpop.xlane.xlu0 %6519
        %6521 = vmin.xlane.f32.xlu0 %v6490
        %v6522 = vpop.xlane.xlu0 %6521
        %vm6523 = vcmp.eq.f32.partialorder %v6475, %v6492
        %vm6524 = vcmp.eq.f32.partialorder %v6476, %v6494
        %vm6525 = vcmp.eq.f32.partialorder %v6477, %v6496
        %vm6526 = vcmp.eq.f32.partialorder %v6478, %v6498
        %vm6527 = vcmp.eq.f32.partialorder %v6479, %v6500
        %vm6528 = vcmp.eq.f32.partialorder %v6480, %v6502
        %vm6529 = vcmp.eq.f32.partialorder %v6481, %v6504
        %vm6530 = vcmp.eq.f32.partialorder %v6482, %v6506
        %vm6531 = vcmp.eq.f32.partialorder %v6483, %v6508
        %vm6532 = vcmp.eq.f32.partialorder %v6484, %v6510
        %vm6533 = vcmp.eq.f32.partialorder %v6485, %v6512
        %vm6534 = vcmp.eq.f32.partialorder %v6486, %v6514
        %vm6535 = vcmp.eq.f32.partialorder %v6487, %v6516
        %vm6536 = vcmp.eq.f32.partialorder %v6488, %v6518
        %vm6537 = vcmp.eq.f32.partialorder %v6489, %v6520
        %vm6538 = vcmp.eq.f32.partialorder %v6490, %v6522
        %v6539 = vsel %vm6523, 1, 0
        %v6540 = vsel %vm6524, 1, 0
        %v6541 = vsel %vm6525, 1, 0
        %v6542 = vsel %vm6526, 1, 0
        %v6543 = vsel %vm6527, 1, 0
        %v6544 = vsel %vm6528, 1, 0
        %v6545 = vsel %vm6529, 1, 0
        %v6546 = vsel %vm6530, 1, 0
        %v6547 = vsel %vm6531, 1, 0
        %v6548 = vsel %vm6532, 1, 0
        %v6549 = vsel %vm6533, 1, 0
        %v6550 = vsel %vm6534, 1, 0
        %v6551 = vsel %vm6535, 1, 0
        %v6552 = vsel %vm6536, 1, 0
        %v6553 = vsel %vm6537, 1, 0
        %v6554 = vsel %vm6538, 1, 0
        %v6555 = vcvt.s32.f32 %v6539
        %v6556 = vcvt.s32.f32 %v6540
        %v6557 = vcvt.s32.f32 %v6541
        %v6558 = vcvt.s32.f32 %v6542
        %v6559 = vcvt.s32.f32 %v6543
        %v6560 = vcvt.s32.f32 %v6544
        %v6561 = vcvt.s32.f32 %v6545
        %v6562 = vcvt.s32.f32 %v6546
        %v6563 = vcvt.s32.f32 %v6547
        %v6564 = vcvt.s32.f32 %v6548
        %v6565 = vcvt.s32.f32 %v6549
        %v6566 = vcvt.s32.f32 %v6550
        %v6567 = vcvt.s32.f32 %v6551
        %v6568 = vcvt.s32.f32 %v6552
        %v6569 = vcvt.s32.f32 %v6553
        %v6570 = vcvt.s32.f32 %v6554
        %6571 = vmatprep.subr.mxu0 0.0
        %v6572 = vand.u32 %v6570, 4294901760
        %6573 = vmatpush1.xpose.msra.mxu0 %v6572
        %6574 = vmatprep.subr.mxu0 0.0
        %v6575 = vand.u32 %v6569, 4294901760
        %6576 = vmatpush1.xpose.msra.mxu0 %v6575
        %6577 = vmatprep.subr.mxu0 0.0
        %v6578 = vand.u32 %v6568, 4294901760
        %6579 = vmatpush1.xpose.msra.mxu0 %v6578
        %6580 = vmatprep.subr.mxu0 0.0
        %v6581 = vand.u32 %v6567, 4294901760
        %6582 = vmatpush1.xpose.msra.mxu0 %v6581
        %6583 = vmatprep.subr.mxu0 0.0
        %v6584 = vand.u32 %v6566, 4294901760
        %6585 = vmatpush1.xpose.msra.mxu0 %v6584
        %6586 = vmatprep.subr.mxu0 0.0
        %v6587 = vand.u32 %v6565, 4294901760
        %6588 = vmatpush1.xpose.msra.mxu0 %v6587
        %6589 = vmatprep.subr.mxu0 0.0
        %v6590 = vand.u32 %v6564, 4294901760
        %6591 = vmatpush1.xpose.msra.mxu0 %v6590
        %6592 = vmatprep.subr.mxu0 0.0
        %v6593 = vand.u32 %v6563, 4294901760
        %6594 = vmatpush1.xpose.msra.mxu0 %v6593
        %6595 = vmatprep.subr.mxu0 0.0
        %v6596 = vand.u32 %v6562, 4294901760
        %6597 = vmatpush1.xpose.msra.mxu0 %v6596
        %6598 = vmatprep.subr.mxu0 0.0
        %v6599 = vand.u32 %v6561, 4294901760
        %6600 = vmatpush1.xpose.msra.mxu0 %v6599
        %6601 = vmatprep.subr.mxu0 0.0
        %v6602 = vand.u32 %v6560, 4294901760
        %6603 = vmatpush1.xpose.msra.mxu0 %v6602
        %6604 = vmatprep.subr.mxu0 0.0
        %v6605 = vand.u32 %v6559, 4294901760
        %6606 = vmatpush1.xpose.msra.mxu0 %v6605
        %6607 = vmatprep.subr.mxu0 0.0
        %v6608 = vand.u32 %v6558, 4294901760
        %6609 = vmatpush1.xpose.msra.mxu0 %v6608
        %6610 = vmatprep.subr.mxu0 0.0
        %v6611 = vand.u32 %v6557, 4294901760
        %6612 = vmatpush1.xpose.msra.mxu0 %v6611
        %6613 = vmatprep.subr.mxu0 0.0
        %v6614 = vand.u32 %v6556, 4294901760
        %6615 = vmatpush1.xpose.msra.mxu0 %v6614
        %6616 = vmatprep.subr.mxu0 0.0
        %v6617 = vand.u32 %v6555, 4294901760
        %6618 = vmatpush1.xpose.msra.mxu0 %v6617
        %6619 = vmatprep.subr.mxu0 0.0
        %6620 = vmatpush2.xpose.msra.mxu0 0.0
        %6621 = vmatprep.subr.mxu0 0.0
        %6622 = vmatpush2.xpose.msra.mxu0 0.0
        %6623 = vmatprep.subr.mxu0 0.0
        %6624 = vmatpush2.xpose.msra.mxu0 0.0
        %6625 = vmatprep.subr.mxu0 0.0
        %6626 = vmatpush2.xpose.msra.mxu0 0.0
        %6627 = vmatprep.subr.mxu0 0.0
        %6628 = vmatpush2.xpose.msra.mxu0 0.0
        %6629 = vmatprep.subr.mxu0 0.0
        %6630 = vmatpush2.xpose.msra.mxu0 0.0
        %6631 = vmatprep.subr.mxu0 0.0
        %6632 = vmatpush2.xpose.msra.mxu0 0.0
        %6633 = vmatprep.subr.mxu0 0.0
        %6634 = vmatpush2.xpose.msra.mxu0 0.0
        %6635 = vmatprep.subr.mxu0 0.0
        %6636 = vmatpush2.xpose.msra.mxu0 0.0
        %6637 = vmatprep.subr.mxu0 0.0
        %6638 = vmatpush2.xpose.msra.mxu0 0.0
        %6639 = vmatprep.subr.mxu0 0.0
        %6640 = vmatpush2.xpose.msra.mxu0 0.0
        %6641 = vmatprep.subr.mxu0 0.0
        %6642 = vmatpush2.xpose.msra.mxu0 0.0
        %6643 = vmatprep.subr.mxu0 0.0
        %6644 = vmatpush2.xpose.msra.mxu0 0.0
        %6645 = vmatprep.subr.mxu0 0.0
        %6646 = vmatpush2.xpose.msra.mxu0 0.0
        %6647 = vmatprep.subr.mxu0 0.0
        %6648 = vmatpush2.xpose.msra.mxu0 0.0
        %6649 = vmatprep.subr.mxu0 0.0
        %6650 = vmatpush2.xpose.msra.mxu0 0.0
        %6651 = vmatprep.mubr.f32.mxu0 0.0
        %v6652 = vand.u32 %v293, 4294901760
        %v6653 = vsub.f32 %v293, %v6652
        %v6654 = vand.u32 %v6653, 4294901760
        %v6655 = vsub.f32 %v6653, %v6654
        %v6656 = vand.u32 %v6655, 4294901760
        %6657 = vmatmul.mubr.f32.gmra.mxu0 %v6656
        %v6658 = vpop.f32.mrf.mxu0
        %v6659 = vadd.f32 0.0, %v6658
        %v6660 = vpop.f32.mrf.mxu0
        %6661 = vmatprep.mubr.f32.mxu0 0.0
        %v6662 = vand.u32 %v294, 4294901760
        %v6663 = vsub.f32 %v294, %v6662
        %v6664 = vand.u32 %v6663, 4294901760
        %v6665 = vsub.f32 %v6663, %v6664
        %v6666 = vand.u32 %v6665, 4294901760
        %6667 = vmatmul.mubr.f32.gmra.mxu0 %v6666
        %v6668 = vpop.f32.mrf.mxu0
        %v6669 = vadd.f32 0.0, %v6668
        %v6670 = vpop.f32.mrf.mxu0
        %6671 = vmatprep.mubr.f32.mxu0 0.0
        %v6672 = vand.u32 %v295, 4294901760
        %v6673 = vsub.f32 %v295, %v6672
        %v6674 = vand.u32 %v6673, 4294901760
        %v6675 = vsub.f32 %v6673, %v6674
        %v6676 = vand.u32 %v6675, 4294901760
        %6677 = vmatmul.mubr.f32.gmra.mxu0 %v6676
        %v6678 = vpop.f32.mrf.mxu0
        %v6679 = vadd.f32 0.0, %v6678
        %v6680 = vpop.f32.mrf.mxu0
        %6681 = vdwg.mxu0
        %6682 = vmatprep.subr.mxu0 0.0
        %v6683 = vand.u32 %v6570, 4294901760
        %v6684 = vsub.f32 %v6570, %v6683
        %v6685 = vand.u32 %v6684, 4294901760
        %v6686 = vsub.f32 %v6684, %v6685
        %v6687 = vand.u32 %v6686, 4294901760
        %6688 = vmatpush1.xpose.msra.mxu0 %v6687
        %6689 = vmatprep.subr.mxu0 0.0
        %v6690 = vand.u32 %v6569, 4294901760
        %v6691 = vsub.f32 %v6569, %v6690
        %v6692 = vand.u32 %v6691, 4294901760
        %v6693 = vsub.f32 %v6691, %v6692
        %v6694 = vand.u32 %v6693, 4294901760
        %6695 = vmatpush1.xpose.msra.mxu0 %v6694
        %6696 = vmatprep.subr.mxu0 0.0
        %v6697 = vand.u32 %v6568, 4294901760
        %v6698 = vsub.f32 %v6568, %v6697
        %v6699 = vand.u32 %v6698, 4294901760
        %v6700 = vsub.f32 %v6698, %v6699
        %v6701 = vand.u32 %v6700, 4294901760
        %6702 = vmatpush1.xpose.msra.mxu0 %v6701
        %6703 = vmatprep.subr.mxu0 0.0
        %v6704 = vand.u32 %v6567, 4294901760
        %v6705 = vsub.f32 %v6567, %v6704
        %v6706 = vand.u32 %v6705, 4294901760
        %v6707 = vsub.f32 %v6705, %v6706
        %v6708 = vand.u32 %v6707, 4294901760
        %6709 = vmatpush1.xpose.msra.mxu0 %v6708
        %6710 = vmatprep.subr.mxu0 0.0
        %v6711 = vand.u32 %v6566, 4294901760
        %v6712 = vsub.f32 %v6566, %v6711
        %v6713 = vand.u32 %v6712, 4294901760
        %v6714 = vsub.f32 %v6712, %v6713
        %v6715 = vand.u32 %v6714, 4294901760
        %6716 = vmatpush1.xpose.msra.mxu0 %v6715
        %6717 = vmatprep.subr.mxu0 0.0
        %v6718 = vand.u32 %v6565, 4294901760
        %v6719 = vsub.f32 %v6565, %v6718
        %v6720 = vand.u32 %v6719, 4294901760
        %v6721 = vsub.f32 %v6719, %v6720
        %v6722 = vand.u32 %v6721, 4294901760
        %6723 = vmatpush1.xpose.msra.mxu0 %v6722
        %6724 = vmatprep.subr.mxu0 0.0
        %v6725 = vand.u32 %v6564, 4294901760
        %v6726 = vsub.f32 %v6564, %v6725
        %v6727 = vand.u32 %v6726, 4294901760
        %v6728 = vsub.f32 %v6726, %v6727
        %v6729 = vand.u32 %v6728, 4294901760
        %6730 = vmatpush1.xpose.msra.mxu0 %v6729
        %6731 = vmatprep.subr.mxu0 0.0
        %v6732 = vand.u32 %v6563, 4294901760
        %v6733 = vsub.f32 %v6563, %v6732
        %v6734 = vand.u32 %v6733, 4294901760
        %v6735 = vsub.f32 %v6733, %v6734
        %v6736 = vand.u32 %v6735, 4294901760
        %6737 = vmatpush1.xpose.msra.mxu0 %v6736
        %6738 = vmatprep.subr.mxu0 0.0
        %v6739 = vand.u32 %v6562, 4294901760
        %v6740 = vsub.f32 %v6562, %v6739
        %v6741 = vand.u32 %v6740, 4294901760
        %v6742 = vsub.f32 %v6740, %v6741
        %v6743 = vand.u32 %v6742, 4294901760
        %6744 = vmatpush1.xpose.msra.mxu0 %v6743
        %6745 = vmatprep.subr.mxu0 0.0
        %v6746 = vand.u32 %v6561, 4294901760
        %v6747 = vsub.f32 %v6561, %v6746
        %v6748 = vand.u32 %v6747, 4294901760
        %v6749 = vsub.f32 %v6747, %v6748
        %v6750 = vand.u32 %v6749, 4294901760
        %6751 = vmatpush1.xpose.msra.mxu0 %v6750
        %6752 = vmatprep.subr.mxu0 0.0
        %v6753 = vand.u32 %v6560, 4294901760
        %v6754 = vsub.f32 %v6560, %v6753
        %v6755 = vand.u32 %v6754, 4294901760
        %v6756 = vsub.f32 %v6754, %v6755
        %v6757 = vand.u32 %v6756, 4294901760
        %6758 = vmatpush1.xpose.msra.mxu0 %v6757
        %6759 = vmatprep.subr.mxu0 0.0
        %v6760 = vand.u32 %v6559, 4294901760
        %v6761 = vsub.f32 %v6559, %v6760
        %v6762 = vand.u32 %v6761, 4294901760
        %v6763 = vsub.f32 %v6761, %v6762
        %v6764 = vand.u32 %v6763, 4294901760
        %6765 = vmatpush1.xpose.msra.mxu0 %v6764
        %6766 = vmatprep.subr.mxu0 0.0
        %v6767 = vand.u32 %v6558, 4294901760
        %v6768 = vsub.f32 %v6558, %v6767
        %v6769 = vand.u32 %v6768, 4294901760
        %v6770 = vsub.f32 %v6768, %v6769
        %v6771 = vand.u32 %v6770, 4294901760
        %6772 = vmatpush1.xpose.msra.mxu0 %v6771
        %6773 = vmatprep.subr.mxu0 0.0
        %v6774 = vand.u32 %v6557, 4294901760
        %v6775 = vsub.f32 %v6557, %v6774
        %v6776 = vand.u32 %v6775, 4294901760
        %v6777 = vsub.f32 %v6775, %v6776
        %v6778 = vand.u32 %v6777, 4294901760
        %6779 = vmatpush1.xpose.msra.mxu0 %v6778
        %6780 = vmatprep.subr.mxu0 0.0
        %v6781 = vand.u32 %v6556, 4294901760
        %v6782 = vsub.f32 %v6556, %v6781
        %v6783 = vand.u32 %v6782, 4294901760
        %v6784 = vsub.f32 %v6782, %v6783
        %v6785 = vand.u32 %v6784, 4294901760
        %6786 = vmatpush1.xpose.msra.mxu0 %v6785
        %6787 = vmatprep.subr.mxu0 0.0
        %v6788 = vand.u32 %v6555, 4294901760
        %v6789 = vsub.f32 %v6555, %v6788
        %v6790 = vand.u32 %v6789, 4294901760
        %v6791 = vsub.f32 %v6789, %v6790
        %v6792 = vand.u32 %v6791, 4294901760
        %6793 = vmatpush1.xpose.msra.mxu0 %v6792
        %6794 = vmatprep.subr.mxu0 0.0
        %6795 = vmatpush2.xpose.msra.mxu0 0.0
        %6796 = vmatprep.subr.mxu0 0.0
        %6797 = vmatpush2.xpose.msra.mxu0 0.0
        %6798 = vmatprep.subr.mxu0 0.0
        %6799 = vmatpush2.xpose.msra.mxu0 0.0
        %6800 = vmatprep.subr.mxu0 0.0
        %6801 = vmatpush2.xpose.msra.mxu0 0.0
        %6802 = vmatprep.subr.mxu0 0.0
        %6803 = vmatpush2.xpose.msra.mxu0 0.0
        %6804 = vmatprep.subr.mxu0 0.0
        %6805 = vmatpush2.xpose.msra.mxu0 0.0
        %6806 = vmatprep.subr.mxu0 0.0
        %6807 = vmatpush2.xpose.msra.mxu0 0.0
        %6808 = vmatprep.subr.mxu0 0.0
        %6809 = vmatpush2.xpose.msra.mxu0 0.0
        %6810 = vmatprep.subr.mxu0 0.0
        %6811 = vmatpush2.xpose.msra.mxu0 0.0
        %6812 = vmatprep.subr.mxu0 0.0
        %6813 = vmatpush2.xpose.msra.mxu0 0.0
        %6814 = vmatprep.subr.mxu0 0.0
        %6815 = vmatpush2.xpose.msra.mxu0 0.0
        %6816 = vmatprep.subr.mxu0 0.0
        %6817 = vmatpush2.xpose.msra.mxu0 0.0
        %6818 = vmatprep.subr.mxu0 0.0
        %6819 = vmatpush2.xpose.msra.mxu0 0.0
        %6820 = vmatprep.subr.mxu0 0.0
        %6821 = vmatpush2.xpose.msra.mxu0 0.0
        %6822 = vmatprep.subr.mxu0 0.0
        %6823 = vmatpush2.xpose.msra.mxu0 0.0
        %6824 = vmatprep.subr.mxu0 0.0
        %6825 = vmatpush2.xpose.msra.mxu0 0.0
        %6826 = vmatprep.mubr.f32.mxu0 0.0
        %v6827 = vand.u32 %v293, 4294901760
        %6828 = vmatmul.mubr.f32.gmra.mxu0 %v6827
        %v6829 = vpop.f32.mrf.mxu0
        %v6830 = vadd.f32 %v6659, %v6829
        %v6831 = vpop.f32.mrf.mxu0
        %6832 = vmatprep.mubr.f32.mxu0 0.0
        %v6833 = vand.u32 %v294, 4294901760
        %6834 = vmatmul.mubr.f32.gmra.mxu0 %v6833
        %v6835 = vpop.f32.mrf.mxu0
        %v6836 = vadd.f32 %v6669, %v6835
        %v6837 = vpop.f32.mrf.mxu0
        %6838 = vmatprep.mubr.f32.mxu0 0.0
        %v6839 = vand.u32 %v295, 4294901760
        %6840 = vmatmul.mubr.f32.gmra.mxu0 %v6839
        %v6841 = vpop.f32.mrf.mxu0
        %v6842 = vadd.f32 %v6679, %v6841
        %v6843 = vpop.f32.mrf.mxu0
        %6844 = vdwg.mxu0
        %6845 = vmatprep.subr.mxu0 0.0
        %v6846 = vand.u32 %v6570, 4294901760
        %v6847 = vsub.f32 %v6570, %v6846
        %6848 = vmatpush1.xpose.msra.mxu0 %v6847
        %6849 = vmatprep.subr.mxu0 0.0
        %v6850 = vand.u32 %v6569, 4294901760
        %v6851 = vsub.f32 %v6569, %v6850
        %6852 = vmatpush1.xpose.msra.mxu0 %v6851
        %6853 = vmatprep.subr.mxu0 0.0
        %v6854 = vand.u32 %v6568, 4294901760
        %v6855 = vsub.f32 %v6568, %v6854
        %6856 = vmatpush1.xpose.msra.mxu0 %v6855
        %6857 = vmatprep.subr.mxu0 0.0
        %v6858 = vand.u32 %v6567, 4294901760
        %v6859 = vsub.f32 %v6567, %v6858
        %6860 = vmatpush1.xpose.msra.mxu0 %v6859
        %6861 = vmatprep.subr.mxu0 0.0
        %v6862 = vand.u32 %v6566, 4294901760
        %v6863 = vsub.f32 %v6566, %v6862
        %6864 = vmatpush1.xpose.msra.mxu0 %v6863
        %6865 = vmatprep.subr.mxu0 0.0
        %v6866 = vand.u32 %v6565, 4294901760
        %v6867 = vsub.f32 %v6565, %v6866
        %6868 = vmatpush1.xpose.msra.mxu0 %v6867
        %6869 = vmatprep.subr.mxu0 0.0
        %v6870 = vand.u32 %v6564, 4294901760
        %v6871 = vsub.f32 %v6564, %v6870
        %6872 = vmatpush1.xpose.msra.mxu0 %v6871
        %6873 = vmatprep.subr.mxu0 0.0
        %v6874 = vand.u32 %v6563, 4294901760
        %v6875 = vsub.f32 %v6563, %v6874
        %6876 = vmatpush1.xpose.msra.mxu0 %v6875
        %6877 = vmatprep.subr.mxu0 0.0
        %v6878 = vand.u32 %v6562, 4294901760
        %v6879 = vsub.f32 %v6562, %v6878
        %6880 = vmatpush1.xpose.msra.mxu0 %v6879
        %6881 = vmatprep.subr.mxu0 0.0
        %v6882 = vand.u32 %v6561, 4294901760
        %v6883 = vsub.f32 %v6561, %v6882
        %6884 = vmatpush1.xpose.msra.mxu0 %v6883
        %6885 = vmatprep.subr.mxu0 0.0
        %v6886 = vand.u32 %v6560, 4294901760
        %v6887 = vsub.f32 %v6560, %v6886
        %6888 = vmatpush1.xpose.msra.mxu0 %v6887
        %6889 = vmatprep.subr.mxu0 0.0
        %v6890 = vand.u32 %v6559, 4294901760
        %v6891 = vsub.f32 %v6559, %v6890
        %6892 = vmatpush1.xpose.msra.mxu0 %v6891
        %6893 = vmatprep.subr.mxu0 0.0
        %v6894 = vand.u32 %v6558, 4294901760
        %v6895 = vsub.f32 %v6558, %v6894
        %6896 = vmatpush1.xpose.msra.mxu0 %v6895
        %6897 = vmatprep.subr.mxu0 0.0
        %v6898 = vand.u32 %v6557, 4294901760
        %v6899 = vsub.f32 %v6557, %v6898
        %6900 = vmatpush1.xpose.msra.mxu0 %v6899
        %6901 = vmatprep.subr.mxu0 0.0
        %v6902 = vand.u32 %v6556, 4294901760
        %v6903 = vsub.f32 %v6556, %v6902
        %6904 = vmatpush1.xpose.msra.mxu0 %v6903
        %6905 = vmatprep.subr.mxu0 0.0
        %v6906 = vand.u32 %v6555, 4294901760
        %v6907 = vsub.f32 %v6555, %v6906
        %6908 = vmatpush1.xpose.msra.mxu0 %v6907
        %6909 = vmatprep.subr.mxu0 0.0
        %6910 = vmatpush2.xpose.msra.mxu0 0.0
        %6911 = vmatprep.subr.mxu0 0.0
        %6912 = vmatpush2.xpose.msra.mxu0 0.0
        %6913 = vmatprep.subr.mxu0 0.0
        %6914 = vmatpush2.xpose.msra.mxu0 0.0
        %6915 = vmatprep.subr.mxu0 0.0
        %6916 = vmatpush2.xpose.msra.mxu0 0.0
        %6917 = vmatprep.subr.mxu0 0.0
        %6918 = vmatpush2.xpose.msra.mxu0 0.0
        %6919 = vmatprep.subr.mxu0 0.0
        %6920 = vmatpush2.xpose.msra.mxu0 0.0
        %6921 = vmatprep.subr.mxu0 0.0
        %6922 = vmatpush2.xpose.msra.mxu0 0.0
        %6923 = vmatprep.subr.mxu0 0.0
        %6924 = vmatpush2.xpose.msra.mxu0 0.0
        %6925 = vmatprep.subr.mxu0 0.0
        %6926 = vmatpush2.xpose.msra.mxu0 0.0
        %6927 = vmatprep.subr.mxu0 0.0
        %6928 = vmatpush2.xpose.msra.mxu0 0.0
        %6929 = vmatprep.subr.mxu0 0.0
        %6930 = vmatpush2.xpose.msra.mxu0 0.0
        %6931 = vmatprep.subr.mxu0 0.0
        %6932 = vmatpush2.xpose.msra.mxu0 0.0
        %6933 = vmatprep.subr.mxu0 0.0
        %6934 = vmatpush2.xpose.msra.mxu0 0.0
        %6935 = vmatprep.subr.mxu0 0.0
        %6936 = vmatpush2.xpose.msra.mxu0 0.0
        %6937 = vmatprep.subr.mxu0 0.0
        %6938 = vmatpush2.xpose.msra.mxu0 0.0
        %6939 = vmatprep.subr.mxu0 0.0
        %6940 = vmatpush2.xpose.msra.mxu0 0.0
        %6941 = vmatprep.mubr.f32.mxu0 0.0
        %v6942 = vand.u32 %v293, 4294901760
        %v6943 = vsub.f32 %v293, %v6942
        %6944 = vmatmul.mubr.f32.gmra.mxu0 %v6943
        %v6945 = vpop.f32.mrf.mxu0
        %v6946 = vadd.f32 %v6830, %v6945
        %v6947 = vpop.f32.mrf.mxu0
        %6948 = vmatprep.mubr.f32.mxu0 0.0
        %v6949 = vand.u32 %v294, 4294901760
        %v6950 = vsub.f32 %v294, %v6949
        %6951 = vmatmul.mubr.f32.gmra.mxu0 %v6950
        %v6952 = vpop.f32.mrf.mxu0
        %v6953 = vadd.f32 %v6836, %v6952
        %v6954 = vpop.f32.mrf.mxu0
        %6955 = vmatprep.mubr.f32.mxu0 0.0
        %v6956 = vand.u32 %v295, 4294901760
        %v6957 = vsub.f32 %v295, %v6956
        %6958 = vmatmul.mubr.f32.gmra.mxu0 %v6957
        %v6959 = vpop.f32.mrf.mxu0
        %v6960 = vadd.f32 %v6842, %v6959
        %v6961 = vpop.f32.mrf.mxu0
        %6962 = vdwg.mxu0
        %6963 = vmatprep.subr.mxu0 0.0
        %v6964 = vand.u32 %v6570, 4294901760
        %6965 = vmatpush1.xpose.msra.mxu0 %v6964
        %6966 = vmatprep.subr.mxu0 0.0
        %v6967 = vand.u32 %v6569, 4294901760
        %6968 = vmatpush1.xpose.msra.mxu0 %v6967
        %6969 = vmatprep.subr.mxu0 0.0
        %v6970 = vand.u32 %v6568, 4294901760
        %6971 = vmatpush1.xpose.msra.mxu0 %v6970
        %6972 = vmatprep.subr.mxu0 0.0
        %v6973 = vand.u32 %v6567, 4294901760
        %6974 = vmatpush1.xpose.msra.mxu0 %v6973
        %6975 = vmatprep.subr.mxu0 0.0
        %v6976 = vand.u32 %v6566, 4294901760
        %6977 = vmatpush1.xpose.msra.mxu0 %v6976
        %6978 = vmatprep.subr.mxu0 0.0
        %v6979 = vand.u32 %v6565, 4294901760
        %6980 = vmatpush1.xpose.msra.mxu0 %v6979
        %6981 = vmatprep.subr.mxu0 0.0
        %v6982 = vand.u32 %v6564, 4294901760
        %6983 = vmatpush1.xpose.msra.mxu0 %v6982
        %6984 = vmatprep.subr.mxu0 0.0
        %v6985 = vand.u32 %v6563, 4294901760
        %6986 = vmatpush1.xpose.msra.mxu0 %v6985
        %6987 = vmatprep.subr.mxu0 0.0
        %v6988 = vand.u32 %v6562, 4294901760
        %6989 = vmatpush1.xpose.msra.mxu0 %v6988
        %6990 = vmatprep.subr.mxu0 0.0
        %v6991 = vand.u32 %v6561, 4294901760
        %6992 = vmatpush1.xpose.msra.mxu0 %v6991
        %6993 = vmatprep.subr.mxu0 0.0
        %v6994 = vand.u32 %v6560, 4294901760
        %6995 = vmatpush1.xpose.msra.mxu0 %v6994
        %6996 = vmatprep.subr.mxu0 0.0
        %v6997 = vand.u32 %v6559, 4294901760
        %6998 = vmatpush1.xpose.msra.mxu0 %v6997
        %6999 = vmatprep.subr.mxu0 0.0
        %v7000 = vand.u32 %v6558, 4294901760
        %7001 = vmatpush1.xpose.msra.mxu0 %v7000
        %7002 = vmatprep.subr.mxu0 0.0
        %v7003 = vand.u32 %v6557, 4294901760
        %7004 = vmatpush1.xpose.msra.mxu0 %v7003
        %7005 = vmatprep.subr.mxu0 0.0
        %v7006 = vand.u32 %v6556, 4294901760
        %7007 = vmatpush1.xpose.msra.mxu0 %v7006
        %7008 = vmatprep.subr.mxu0 0.0
        %v7009 = vand.u32 %v6555, 4294901760
        %7010 = vmatpush1.xpose.msra.mxu0 %v7009
        %7011 = vmatprep.subr.mxu0 0.0
        %7012 = vmatpush2.xpose.msra.mxu0 0.0
        %7013 = vmatprep.subr.mxu0 0.0
        %7014 = vmatpush2.xpose.msra.mxu0 0.0
        %7015 = vmatprep.subr.mxu0 0.0
        %7016 = vmatpush2.xpose.msra.mxu0 0.0
        %7017 = vmatprep.subr.mxu0 0.0
        %7018 = vmatpush2.xpose.msra.mxu0 0.0
        %7019 = vmatprep.subr.mxu0 0.0
        %7020 = vmatpush2.xpose.msra.mxu0 0.0
        %7021 = vmatprep.subr.mxu0 0.0
        %7022 = vmatpush2.xpose.msra.mxu0 0.0
        %7023 = vmatprep.subr.mxu0 0.0
        %7024 = vmatpush2.xpose.msra.mxu0 0.0
        %7025 = vmatprep.subr.mxu0 0.0
        %7026 = vmatpush2.xpose.msra.mxu0 0.0
        %7027 = vmatprep.subr.mxu0 0.0
        %7028 = vmatpush2.xpose.msra.mxu0 0.0
        %7029 = vmatprep.subr.mxu0 0.0
        %7030 = vmatpush2.xpose.msra.mxu0 0.0
        %7031 = vmatprep.subr.mxu0 0.0
        %7032 = vmatpush2.xpose.msra.mxu0 0.0
        %7033 = vmatprep.subr.mxu0 0.0
        %7034 = vmatpush2.xpose.msra.mxu0 0.0
        %7035 = vmatprep.subr.mxu0 0.0
        %7036 = vmatpush2.xpose.msra.mxu0 0.0
        %7037 = vmatprep.subr.mxu0 0.0
        %7038 = vmatpush2.xpose.msra.mxu0 0.0
        %7039 = vmatprep.subr.mxu0 0.0
        %7040 = vmatpush2.xpose.msra.mxu0 0.0
        %7041 = vmatprep.subr.mxu0 0.0
        %7042 = vmatpush2.xpose.msra.mxu0 0.0
        %7043 = vmatprep.mubr.f32.mxu0 0.0
        %v7044 = vand.u32 %v293, 4294901760
        %v7045 = vsub.f32 %v293, %v7044
        %v7046 = vand.u32 %v7045, 4294901760
        %7047 = vmatmul.mubr.f32.gmra.mxu0 %v7046
        %v7048 = vpop.f32.mrf.mxu0
        %v7049 = vadd.f32 %v6946, %v7048
        %v7050 = vpop.f32.mrf.mxu0
        %7051 = vmatprep.mubr.f32.mxu0 0.0
        %v7052 = vand.u32 %v294, 4294901760
        %v7053 = vsub.f32 %v294, %v7052
        %v7054 = vand.u32 %v7053, 4294901760
        %7055 = vmatmul.mubr.f32.gmra.mxu0 %v7054
        %v7056 = vpop.f32.mrf.mxu0
        %v7057 = vadd.f32 %v6953, %v7056
        %v7058 = vpop.f32.mrf.mxu0
        %7059 = vmatprep.mubr.f32.mxu0 0.0
        %v7060 = vand.u32 %v295, 4294901760
        %v7061 = vsub.f32 %v295, %v7060
        %v7062 = vand.u32 %v7061, 4294901760
        %7063 = vmatmul.mubr.f32.gmra.mxu0 %v7062
        %v7064 = vpop.f32.mrf.mxu0
        %v7065 = vadd.f32 %v6960, %v7064
        %v7066 = vpop.f32.mrf.mxu0
        %7067 = vdwg.mxu0
        %7068 = vmatprep.subr.mxu0 0.0
        %v7069 = vand.u32 %v6570, 4294901760
        %v7070 = vsub.f32 %v6570, %v7069
        %v7071 = vand.u32 %v7070, 4294901760
        %7072 = vmatpush1.xpose.msra.mxu0 %v7071
        %7073 = vmatprep.subr.mxu0 0.0
        %v7074 = vand.u32 %v6569, 4294901760
        %v7075 = vsub.f32 %v6569, %v7074
        %v7076 = vand.u32 %v7075, 4294901760
        %7077 = vmatpush1.xpose.msra.mxu0 %v7076
        %7078 = vmatprep.subr.mxu0 0.0
        %v7079 = vand.u32 %v6568, 4294901760
        %v7080 = vsub.f32 %v6568, %v7079
        %v7081 = vand.u32 %v7080, 4294901760
        %7082 = vmatpush1.xpose.msra.mxu0 %v7081
        %7083 = vmatprep.subr.mxu0 0.0
        %v7084 = vand.u32 %v6567, 4294901760
        %v7085 = vsub.f32 %v6567, %v7084
        %v7086 = vand.u32 %v7085, 4294901760
        %7087 = vmatpush1.xpose.msra.mxu0 %v7086
        %7088 = vmatprep.subr.mxu0 0.0
        %v7089 = vand.u32 %v6566, 4294901760
        %v7090 = vsub.f32 %v6566, %v7089
        %v7091 = vand.u32 %v7090, 4294901760
        %7092 = vmatpush1.xpose.msra.mxu0 %v7091
        %7093 = vmatprep.subr.mxu0 0.0
        %v7094 = vand.u32 %v6565, 4294901760
        %v7095 = vsub.f32 %v6565, %v7094
        %v7096 = vand.u32 %v7095, 4294901760
        %7097 = vmatpush1.xpose.msra.mxu0 %v7096
        %7098 = vmatprep.subr.mxu0 0.0
        %v7099 = vand.u32 %v6564, 4294901760
        %v7100 = vsub.f32 %v6564, %v7099
        %v7101 = vand.u32 %v7100, 4294901760
        %7102 = vmatpush1.xpose.msra.mxu0 %v7101
        %7103 = vmatprep.subr.mxu0 0.0
        %v7104 = vand.u32 %v6563, 4294901760
        %v7105 = vsub.f32 %v6563, %v7104
        %v7106 = vand.u32 %v7105, 4294901760
        %7107 = vmatpush1.xpose.msra.mxu0 %v7106
        %7108 = vmatprep.subr.mxu0 0.0
        %v7109 = vand.u32 %v6562, 4294901760
        %v7110 = vsub.f32 %v6562, %v7109
        %v7111 = vand.u32 %v7110, 4294901760
        %7112 = vmatpush1.xpose.msra.mxu0 %v7111
        %7113 = vmatprep.subr.mxu0 0.0
        %v7114 = vand.u32 %v6561, 4294901760
        %v7115 = vsub.f32 %v6561, %v7114
        %v7116 = vand.u32 %v7115, 4294901760
        %7117 = vmatpush1.xpose.msra.mxu0 %v7116
        %7118 = vmatprep.subr.mxu0 0.0
        %v7119 = vand.u32 %v6560, 4294901760
        %v7120 = vsub.f32 %v6560, %v7119
        %v7121 = vand.u32 %v7120, 4294901760
        %7122 = vmatpush1.xpose.msra.mxu0 %v7121
        %7123 = vmatprep.subr.mxu0 0.0
        %v7124 = vand.u32 %v6559, 4294901760
        %v7125 = vsub.f32 %v6559, %v7124
        %v7126 = vand.u32 %v7125, 4294901760
        %7127 = vmatpush1.xpose.msra.mxu0 %v7126
        %7128 = vmatprep.subr.mxu0 0.0
        %v7129 = vand.u32 %v6558, 4294901760
        %v7130 = vsub.f32 %v6558, %v7129
        %v7131 = vand.u32 %v7130, 4294901760
        %7132 = vmatpush1.xpose.msra.mxu0 %v7131
        %7133 = vmatprep.subr.mxu0 0.0
        %v7134 = vand.u32 %v6557, 4294901760
        %v7135 = vsub.f32 %v6557, %v7134
        %v7136 = vand.u32 %v7135, 4294901760
        %7137 = vmatpush1.xpose.msra.mxu0 %v7136
        %7138 = vmatprep.subr.mxu0 0.0
        %v7139 = vand.u32 %v6556, 4294901760
        %v7140 = vsub.f32 %v6556, %v7139
        %v7141 = vand.u32 %v7140, 4294901760
        %7142 = vmatpush1.xpose.msra.mxu0 %v7141
        %7143 = vmatprep.subr.mxu0 0.0
        %v7144 = vand.u32 %v6555, 4294901760
        %v7145 = vsub.f32 %v6555, %v7144
        %v7146 = vand.u32 %v7145, 4294901760
        %7147 = vmatpush1.xpose.msra.mxu0 %v7146
        %7148 = vmatprep.subr.mxu0 0.0
        %7149 = vmatpush2.xpose.msra.mxu0 0.0
        %7150 = vmatprep.subr.mxu0 0.0
        %7151 = vmatpush2.xpose.msra.mxu0 0.0
        %7152 = vmatprep.subr.mxu0 0.0
        %7153 = vmatpush2.xpose.msra.mxu0 0.0
        %7154 = vmatprep.subr.mxu0 0.0
        %7155 = vmatpush2.xpose.msra.mxu0 0.0
        %7156 = vmatprep.subr.mxu0 0.0
        %7157 = vmatpush2.xpose.msra.mxu0 0.0
        %7158 = vmatprep.subr.mxu0 0.0
        %7159 = vmatpush2.xpose.msra.mxu0 0.0
        %7160 = vmatprep.subr.mxu0 0.0
        %7161 = vmatpush2.xpose.msra.mxu0 0.0
        %7162 = vmatprep.subr.mxu0 0.0
        %7163 = vmatpush2.xpose.msra.mxu0 0.0
        %7164 = vmatprep.subr.mxu0 0.0
        %7165 = vmatpush2.xpose.msra.mxu0 0.0
        %7166 = vmatprep.subr.mxu0 0.0
        %7167 = vmatpush2.xpose.msra.mxu0 0.0
        %7168 = vmatprep.subr.mxu0 0.0
        %7169 = vmatpush2.xpose.msra.mxu0 0.0
        %7170 = vmatprep.subr.mxu0 0.0
        %7171 = vmatpush2.xpose.msra.mxu0 0.0
        %7172 = vmatprep.subr.mxu0 0.0
        %7173 = vmatpush2.xpose.msra.mxu0 0.0
        %7174 = vmatprep.subr.mxu0 0.0
        %7175 = vmatpush2.xpose.msra.mxu0 0.0
        %7176 = vmatprep.subr.mxu0 0.0
        %7177 = vmatpush2.xpose.msra.mxu0 0.0
        %7178 = vmatprep.subr.mxu0 0.0
        %7179 = vmatpush2.xpose.msra.mxu0 0.0
        %7180 = vmatprep.mubr.f32.mxu0 0.0
        %v7181 = vand.u32 %v293, 4294901760
        %7182 = vmatmul.mubr.f32.gmra.mxu0 %v7181
        %v7183 = vpop.f32.mrf.mxu0
        %v7184 = vadd.f32 %v7049, %v7183
        %v7185 = vpop.f32.mrf.mxu0
        %7186 = vmatprep.mubr.f32.mxu0 0.0
        %v7187 = vand.u32 %v294, 4294901760
        %7188 = vmatmul.mubr.f32.gmra.mxu0 %v7187
        %v7189 = vpop.f32.mrf.mxu0
        %v7190 = vadd.f32 %v7057, %v7189
        %v7191 = vpop.f32.mrf.mxu0
        %7192 = vmatprep.mubr.f32.mxu0 0.0
        %v7193 = vand.u32 %v295, 4294901760
        %7194 = vmatmul.mubr.f32.gmra.mxu0 %v7193
        %v7195 = vpop.f32.mrf.mxu0
        %v7196 = vadd.f32 %v7065, %v7195
        %v7197 = vpop.f32.mrf.mxu0
        %7198 = vdwg.mxu0
        %7199 = vmatprep.subr.mxu0 0.0
        %v7200 = vand.u32 %v6570, 4294901760
        %7201 = vmatpush1.xpose.msra.mxu0 %v7200
        %7202 = vmatprep.subr.mxu0 0.0
        %v7203 = vand.u32 %v6569, 4294901760
        %7204 = vmatpush1.xpose.msra.mxu0 %v7203
        %7205 = vmatprep.subr.mxu0 0.0
        %v7206 = vand.u32 %v6568, 4294901760
        %7207 = vmatpush1.xpose.msra.mxu0 %v7206
        %7208 = vmatprep.subr.mxu0 0.0
        %v7209 = vand.u32 %v6567, 4294901760
        %7210 = vmatpush1.xpose.msra.mxu0 %v7209
        %7211 = vmatprep.subr.mxu0 0.0
        %v7212 = vand.u32 %v6566, 4294901760
        %7213 = vmatpush1.xpose.msra.mxu0 %v7212
        %7214 = vmatprep.subr.mxu0 0.0
        %v7215 = vand.u32 %v6565, 4294901760
        %7216 = vmatpush1.xpose.msra.mxu0 %v7215
        %7217 = vmatprep.subr.mxu0 0.0
        %v7218 = vand.u32 %v6564, 4294901760
        %7219 = vmatpush1.xpose.msra.mxu0 %v7218
        %7220 = vmatprep.subr.mxu0 0.0
        %v7221 = vand.u32 %v6563, 4294901760
        %7222 = vmatpush1.xpose.msra.mxu0 %v7221
        %7223 = vmatprep.subr.mxu0 0.0
        %v7224 = vand.u32 %v6562, 4294901760
        %7225 = vmatpush1.xpose.msra.mxu0 %v7224
        %7226 = vmatprep.subr.mxu0 0.0
        %v7227 = vand.u32 %v6561, 4294901760
        %7228 = vmatpush1.xpose.msra.mxu0 %v7227
        %7229 = vmatprep.subr.mxu0 0.0
        %v7230 = vand.u32 %v6560, 4294901760
        %7231 = vmatpush1.xpose.msra.mxu0 %v7230
        %7232 = vmatprep.subr.mxu0 0.0
        %v7233 = vand.u32 %v6559, 4294901760
        %7234 = vmatpush1.xpose.msra.mxu0 %v7233
        %7235 = vmatprep.subr.mxu0 0.0
        %v7236 = vand.u32 %v6558, 4294901760
        %7237 = vmatpush1.xpose.msra.mxu0 %v7236
        %7238 = vmatprep.subr.mxu0 0.0
        %v7239 = vand.u32 %v6557, 4294901760
        %7240 = vmatpush1.xpose.msra.mxu0 %v7239
        %7241 = vmatprep.subr.mxu0 0.0
        %v7242 = vand.u32 %v6556, 4294901760
        %7243 = vmatpush1.xpose.msra.mxu0 %v7242
        %7244 = vmatprep.subr.mxu0 0.0
        %v7245 = vand.u32 %v6555, 4294901760
        %7246 = vmatpush1.xpose.msra.mxu0 %v7245
        %7247 = vmatprep.subr.mxu0 0.0
        %7248 = vmatpush2.xpose.msra.mxu0 0.0
        %7249 = vmatprep.subr.mxu0 0.0
        %7250 = vmatpush2.xpose.msra.mxu0 0.0
        %7251 = vmatprep.subr.mxu0 0.0
        %7252 = vmatpush2.xpose.msra.mxu0 0.0
        %7253 = vmatprep.subr.mxu0 0.0
        %7254 = vmatpush2.xpose.msra.mxu0 0.0
        %7255 = vmatprep.subr.mxu0 0.0
        %7256 = vmatpush2.xpose.msra.mxu0 0.0
        %7257 = vmatprep.subr.mxu0 0.0
        %7258 = vmatpush2.xpose.msra.mxu0 0.0
        %7259 = vmatprep.subr.mxu0 0.0
        %7260 = vmatpush2.xpose.msra.mxu0 0.0
        %7261 = vmatprep.subr.mxu0 0.0
        %7262 = vmatpush2.xpose.msra.mxu0 0.0
        %7263 = vmatprep.subr.mxu0 0.0
        %7264 = vmatpush2.xpose.msra.mxu0 0.0
        %7265 = vmatprep.subr.mxu0 0.0
        %7266 = vmatpush2.xpose.msra.mxu0 0.0
        %7267 = vmatprep.subr.mxu0 0.0
        %7268 = vmatpush2.xpose.msra.mxu0 0.0
        %7269 = vmatprep.subr.mxu0 0.0
        %7270 = vmatpush2.xpose.msra.mxu0 0.0
        %7271 = vmatprep.subr.mxu0 0.0
        %7272 = vmatpush2.xpose.msra.mxu0 0.0
        %7273 = vmatprep.subr.mxu0 0.0
        %7274 = vmatpush2.xpose.msra.mxu0 0.0
        %7275 = vmatprep.subr.mxu0 0.0
        %7276 = vmatpush2.xpose.msra.mxu0 0.0
        %7277 = vmatprep.subr.mxu0 0.0
        %7278 = vmatpush2.xpose.msra.mxu0 0.0
        %7279 = vmatprep.mubr.f32.mxu0 0.0
        %v7280 = vand.u32 %v293, 4294901760
        %7281 = vmatmul.mubr.f32.gmra.mxu0 %v7280
        %v7282 = vpop.f32.mrf.mxu0
        %v7283 = vadd.f32 %v7184, %v7282
        %v7284 = vpop.f32.mrf.mxu0
        %7285 = vmatprep.mubr.f32.mxu0 0.0
        %v7286 = vand.u32 %v294, 4294901760
        %7287 = vmatmul.mubr.f32.gmra.mxu0 %v7286
        %v7288 = vpop.f32.mrf.mxu0
        %v7289 = vadd.f32 %v7190, %v7288
        %v7290 = vpop.f32.mrf.mxu0
        %7291 = vmatprep.mubr.f32.mxu0 0.0
        %v7292 = vand.u32 %v295, 4294901760
        %7293 = vmatmul.mubr.f32.gmra.mxu0 %v7292
        %v7294 = vpop.f32.mrf.mxu0
        %v7295 = vadd.f32 %v7196, %v7294
        %v7296 = vpop.f32.mrf.mxu0
        %7297 = vdwg.mxu0
        %s7298 = scalar_lea.vmem %s249, 144 [#allocation2]
        %7299 = vst [vmem:[%s7298] sm:$0xff] %v7283
        %7300 = vst [vmem:[%s7298 + $0x8] sm:$0xff] %v7289
        %7301 = vst [vmem:[%s7298 + $0x10] sm:$0xff] %v7295
        %v7302 = vadd.f32 %v7295, 0.5
        %v7303 = vcvt.f32.s32.to.zero.pseudo %v7302
        %v7304 = vsel %vm6523, 3.4028235e+38, %v6475
        %v7305 = vsel %vm6524, 3.4028235e+38, %v6476
        %v7306 = vsel %vm6525, 3.4028235e+38, %v6477
        %v7307 = vsel %vm6526, 3.4028235e+38, %v6478
        %v7308 = vsel %vm6527, 3.4028235e+38, %v6479
        %v7309 = vsel %vm6528, 3.4028235e+38, %v6480
        %v7310 = vsel %vm6529, 3.4028235e+38, %v6481
        %v7311 = vsel %vm6530, 3.4028235e+38, %v6482
        %v7312 = vsel %vm6531, 3.4028235e+38, %v6483
        %v7313 = vsel %vm6532, 3.4028235e+38, %v6484
        %v7314 = vsel %vm6533, 3.4028235e+38, %v6485
        %v7315 = vsel %vm6534, 3.4028235e+38, %v6486
        %v7316 = vsel %vm6535, 3.4028235e+38, %v6487
        %v7317 = vsel %vm6536, 3.4028235e+38, %v6488
        %v7318 = vsel %vm6537, 3.4028235e+38, %v6489
        %v7319 = vsel %vm6538, 3.4028235e+38, %v6490
        %7320 = vmin.xlane.f32.xlu0 %v7304
        %v7321 = vpop.xlane.xlu0 %7320
        %7322 = vmin.xlane.f32.xlu0 %v7305
        %v7323 = vpop.xlane.xlu0 %7322
        %7324 = vmin.xlane.f32.xlu0 %v7306
        %v7325 = vpop.xlane.xlu0 %7324
        %7326 = vmin.xlane.f32.xlu0 %v7307
        %v7327 = vpop.xlane.xlu0 %7326
        %7328 = vmin.xlane.f32.xlu0 %v7308
        %v7329 = vpop.xlane.xlu0 %7328
        %7330 = vmin.xlane.f32.xlu0 %v7309
        %v7331 = vpop.xlane.xlu0 %7330
        %7332 = vmin.xlane.f32.xlu0 %v7310
        %v7333 = vpop.xlane.xlu0 %7332
        %7334 = vmin.xlane.f32.xlu0 %v7311
        %v7335 = vpop.xlane.xlu0 %7334
        %7336 = vmin.xlane.f32.xlu0 %v7312
        %v7337 = vpop.xlane.xlu0 %7336
        %7338 = vmin.xlane.f32.xlu0 %v7313
        %v7339 = vpop.xlane.xlu0 %7338
        %7340 = vmin.xlane.f32.xlu0 %v7314
        %v7341 = vpop.xlane.xlu0 %7340
        %7342 = vmin.xlane.f32.xlu0 %v7315
        %v7343 = vpop.xlane.xlu0 %7342
        %7344 = vmin.xlane.f32.xlu0 %v7316
        %v7345 = vpop.xlane.xlu0 %7344
        %7346 = vmin.xlane.f32.xlu0 %v7317
        %v7347 = vpop.xlane.xlu0 %7346
        %7348 = vmin.xlane.f32.xlu0 %v7318
        %v7349 = vpop.xlane.xlu0 %7348
        %7350 = vmin.xlane.f32.xlu0 %v7319
        %v7351 = vpop.xlane.xlu0 %7350
        %vm7352 = vcmp.eq.f32.partialorder %v7304, %v7321
        %vm7353 = vcmp.eq.f32.partialorder %v7305, %v7323
        %vm7354 = vcmp.eq.f32.partialorder %v7306, %v7325
        %vm7355 = vcmp.eq.f32.partialorder %v7307, %v7327
        %vm7356 = vcmp.eq.f32.partialorder %v7308, %v7329
        %vm7357 = vcmp.eq.f32.partialorder %v7309, %v7331
        %vm7358 = vcmp.eq.f32.partialorder %v7310, %v7333
        %vm7359 = vcmp.eq.f32.partialorder %v7311, %v7335
        %vm7360 = vcmp.eq.f32.partialorder %v7312, %v7337
        %vm7361 = vcmp.eq.f32.partialorder %v7313, %v7339
        %vm7362 = vcmp.eq.f32.partialorder %v7314, %v7341
        %vm7363 = vcmp.eq.f32.partialorder %v7315, %v7343
        %vm7364 = vcmp.eq.f32.partialorder %v7316, %v7345
        %vm7365 = vcmp.eq.f32.partialorder %v7317, %v7347
        %vm7366 = vcmp.eq.f32.partialorder %v7318, %v7349
        %vm7367 = vcmp.eq.f32.partialorder %v7319, %v7351
        %v7368 = vsel %vm7352, 1, 0
        %v7369 = vsel %vm7353, 1, 0
        %v7370 = vsel %vm7354, 1, 0
        %v7371 = vsel %vm7355, 1, 0
        %v7372 = vsel %vm7356, 1, 0
        %v7373 = vsel %vm7357, 1, 0
        %v7374 = vsel %vm7358, 1, 0
        %v7375 = vsel %vm7359, 1, 0
        %v7376 = vsel %vm7360, 1, 0
        %v7377 = vsel %vm7361, 1, 0
        %v7378 = vsel %vm7362, 1, 0
        %v7379 = vsel %vm7363, 1, 0
        %v7380 = vsel %vm7364, 1, 0
        %v7381 = vsel %vm7365, 1, 0
        %v7382 = vsel %vm7366, 1, 0
        %v7383 = vsel %vm7367, 1, 0
        %v7384 = vcvt.s32.f32 %v7368
        %v7385 = vcvt.s32.f32 %v7369
        %v7386 = vcvt.s32.f32 %v7370
        %v7387 = vcvt.s32.f32 %v7371
        %v7388 = vcvt.s32.f32 %v7372
        %v7389 = vcvt.s32.f32 %v7373
        %v7390 = vcvt.s32.f32 %v7374
        %v7391 = vcvt.s32.f32 %v7375
        %v7392 = vcvt.s32.f32 %v7376
        %v7393 = vcvt.s32.f32 %v7377
        %v7394 = vcvt.s32.f32 %v7378
        %v7395 = vcvt.s32.f32 %v7379
        %v7396 = vcvt.s32.f32 %v7380
        %v7397 = vcvt.s32.f32 %v7381
        %v7398 = vcvt.s32.f32 %v7382
        %v7399 = vcvt.s32.f32 %v7383
        %7400 = vmatprep.subr.mxu0 0.0
        %v7401 = vand.u32 %v7399, 4294901760
        %7402 = vmatpush1.xpose.msra.mxu0 %v7401
        %7403 = vmatprep.subr.mxu0 0.0
        %v7404 = vand.u32 %v7398, 4294901760
        %7405 = vmatpush1.xpose.msra.mxu0 %v7404
        %7406 = vmatprep.subr.mxu0 0.0
        %v7407 = vand.u32 %v7397, 4294901760
        %7408 = vmatpush1.xpose.msra.mxu0 %v7407
        %7409 = vmatprep.subr.mxu0 0.0
        %v7410 = vand.u32 %v7396, 4294901760
        %7411 = vmatpush1.xpose.msra.mxu0 %v7410
        %7412 = vmatprep.subr.mxu0 0.0
        %v7413 = vand.u32 %v7395, 4294901760
        %7414 = vmatpush1.xpose.msra.mxu0 %v7413
        %7415 = vmatprep.subr.mxu0 0.0
        %v7416 = vand.u32 %v7394, 4294901760
        %7417 = vmatpush1.xpose.msra.mxu0 %v7416
        %7418 = vmatprep.subr.mxu0 0.0
        %v7419 = vand.u32 %v7393, 4294901760
        %7420 = vmatpush1.xpose.msra.mxu0 %v7419
        %7421 = vmatprep.subr.mxu0 0.0
        %v7422 = vand.u32 %v7392, 4294901760
        %7423 = vmatpush1.xpose.msra.mxu0 %v7422
        %7424 = vmatprep.subr.mxu0 0.0
        %v7425 = vand.u32 %v7391, 4294901760
        %7426 = vmatpush1.xpose.msra.mxu0 %v7425
        %7427 = vmatprep.subr.mxu0 0.0
        %v7428 = vand.u32 %v7390, 4294901760
        %7429 = vmatpush1.xpose.msra.mxu0 %v7428
        %7430 = vmatprep.subr.mxu0 0.0
        %v7431 = vand.u32 %v7389, 4294901760
        %7432 = vmatpush1.xpose.msra.mxu0 %v7431
        %7433 = vmatprep.subr.mxu0 0.0
        %v7434 = vand.u32 %v7388, 4294901760
        %7435 = vmatpush1.xpose.msra.mxu0 %v7434
        %7436 = vmatprep.subr.mxu0 0.0
        %v7437 = vand.u32 %v7387, 4294901760
        %7438 = vmatpush1.xpose.msra.mxu0 %v7437
        %7439 = vmatprep.subr.mxu0 0.0
        %v7440 = vand.u32 %v7386, 4294901760
        %7441 = vmatpush1.xpose.msra.mxu0 %v7440
        %7442 = vmatprep.subr.mxu0 0.0
        %v7443 = vand.u32 %v7385, 4294901760
        %7444 = vmatpush1.xpose.msra.mxu0 %v7443
        %7445 = vmatprep.subr.mxu0 0.0
        %v7446 = vand.u32 %v7384, 4294901760
        %7447 = vmatpush1.xpose.msra.mxu0 %v7446
        %7448 = vmatprep.subr.mxu0 0.0
        %7449 = vmatpush2.xpose.msra.mxu0 0.0
        %7450 = vmatprep.subr.mxu0 0.0
        %7451 = vmatpush2.xpose.msra.mxu0 0.0
        %7452 = vmatprep.subr.mxu0 0.0
        %7453 = vmatpush2.xpose.msra.mxu0 0.0
        %7454 = vmatprep.subr.mxu0 0.0
        %7455 = vmatpush2.xpose.msra.mxu0 0.0
        %7456 = vmatprep.subr.mxu0 0.0
        %7457 = vmatpush2.xpose.msra.mxu0 0.0
        %7458 = vmatprep.subr.mxu0 0.0
        %7459 = vmatpush2.xpose.msra.mxu0 0.0
        %7460 = vmatprep.subr.mxu0 0.0
        %7461 = vmatpush2.xpose.msra.mxu0 0.0
        %7462 = vmatprep.subr.mxu0 0.0
        %7463 = vmatpush2.xpose.msra.mxu0 0.0
        %7464 = vmatprep.subr.mxu0 0.0
        %7465 = vmatpush2.xpose.msra.mxu0 0.0
        %7466 = vmatprep.subr.mxu0 0.0
        %7467 = vmatpush2.xpose.msra.mxu0 0.0
        %7468 = vmatprep.subr.mxu0 0.0
        %7469 = vmatpush2.xpose.msra.mxu0 0.0
        %7470 = vmatprep.subr.mxu0 0.0
        %7471 = vmatpush2.xpose.msra.mxu0 0.0
        %7472 = vmatprep.subr.mxu0 0.0
        %7473 = vmatpush2.xpose.msra.mxu0 0.0
        %7474 = vmatprep.subr.mxu0 0.0
        %7475 = vmatpush2.xpose.msra.mxu0 0.0
        %7476 = vmatprep.subr.mxu0 0.0
        %7477 = vmatpush2.xpose.msra.mxu0 0.0
        %7478 = vmatprep.subr.mxu0 0.0
        %7479 = vmatpush2.xpose.msra.mxu0 0.0
        %7480 = vmatprep.mubr.f32.mxu0 0.0
        %v7481 = vand.u32 %v293, 4294901760
        %v7482 = vsub.f32 %v293, %v7481
        %v7483 = vand.u32 %v7482, 4294901760
        %v7484 = vsub.f32 %v7482, %v7483
        %v7485 = vand.u32 %v7484, 4294901760
        %7486 = vmatmul.mubr.f32.gmra.mxu0 %v7485
        %v7487 = vpop.f32.mrf.mxu0
        %v7488 = vadd.f32 0.0, %v7487
        %v7489 = vpop.f32.mrf.mxu0
        %7490 = vmatprep.mubr.f32.mxu0 0.0
        %v7491 = vand.u32 %v294, 4294901760
        %v7492 = vsub.f32 %v294, %v7491
        %v7493 = vand.u32 %v7492, 4294901760
        %v7494 = vsub.f32 %v7492, %v7493
        %v7495 = vand.u32 %v7494, 4294901760
        %7496 = vmatmul.mubr.f32.gmra.mxu0 %v7495
        %v7497 = vpop.f32.mrf.mxu0
        %v7498 = vadd.f32 0.0, %v7497
        %v7499 = vpop.f32.mrf.mxu0
        %7500 = vmatprep.mubr.f32.mxu0 0.0
        %v7501 = vand.u32 %v295, 4294901760
        %v7502 = vsub.f32 %v295, %v7501
        %v7503 = vand.u32 %v7502, 4294901760
        %v7504 = vsub.f32 %v7502, %v7503
        %v7505 = vand.u32 %v7504, 4294901760
        %7506 = vmatmul.mubr.f32.gmra.mxu0 %v7505
        %v7507 = vpop.f32.mrf.mxu0
        %v7508 = vadd.f32 0.0, %v7507
        %v7509 = vpop.f32.mrf.mxu0
        %7510 = vdwg.mxu0
        %7511 = vmatprep.subr.mxu0 0.0
        %v7512 = vand.u32 %v7399, 4294901760
        %v7513 = vsub.f32 %v7399, %v7512
        %v7514 = vand.u32 %v7513, 4294901760
        %v7515 = vsub.f32 %v7513, %v7514
        %v7516 = vand.u32 %v7515, 4294901760
        %7517 = vmatpush1.xpose.msra.mxu0 %v7516
        %7518 = vmatprep.subr.mxu0 0.0
        %v7519 = vand.u32 %v7398, 4294901760
        %v7520 = vsub.f32 %v7398, %v7519
        %v7521 = vand.u32 %v7520, 4294901760
        %v7522 = vsub.f32 %v7520, %v7521
        %v7523 = vand.u32 %v7522, 4294901760
        %7524 = vmatpush1.xpose.msra.mxu0 %v7523
        %7525 = vmatprep.subr.mxu0 0.0
        %v7526 = vand.u32 %v7397, 4294901760
        %v7527 = vsub.f32 %v7397, %v7526
        %v7528 = vand.u32 %v7527, 4294901760
        %v7529 = vsub.f32 %v7527, %v7528
        %v7530 = vand.u32 %v7529, 4294901760
        %7531 = vmatpush1.xpose.msra.mxu0 %v7530
        %7532 = vmatprep.subr.mxu0 0.0
        %v7533 = vand.u32 %v7396, 4294901760
        %v7534 = vsub.f32 %v7396, %v7533
        %v7535 = vand.u32 %v7534, 4294901760
        %v7536 = vsub.f32 %v7534, %v7535
        %v7537 = vand.u32 %v7536, 4294901760
        %7538 = vmatpush1.xpose.msra.mxu0 %v7537
        %7539 = vmatprep.subr.mxu0 0.0
        %v7540 = vand.u32 %v7395, 4294901760
        %v7541 = vsub.f32 %v7395, %v7540
        %v7542 = vand.u32 %v7541, 4294901760
        %v7543 = vsub.f32 %v7541, %v7542
        %v7544 = vand.u32 %v7543, 4294901760
        %7545 = vmatpush1.xpose.msra.mxu0 %v7544
        %7546 = vmatprep.subr.mxu0 0.0
        %v7547 = vand.u32 %v7394, 4294901760
        %v7548 = vsub.f32 %v7394, %v7547
        %v7549 = vand.u32 %v7548, 4294901760
        %v7550 = vsub.f32 %v7548, %v7549
        %v7551 = vand.u32 %v7550, 4294901760
        %7552 = vmatpush1.xpose.msra.mxu0 %v7551
        %7553 = vmatprep.subr.mxu0 0.0
        %v7554 = vand.u32 %v7393, 4294901760
        %v7555 = vsub.f32 %v7393, %v7554
        %v7556 = vand.u32 %v7555, 4294901760
        %v7557 = vsub.f32 %v7555, %v7556
        %v7558 = vand.u32 %v7557, 4294901760
        %7559 = vmatpush1.xpose.msra.mxu0 %v7558
        %7560 = vmatprep.subr.mxu0 0.0
        %v7561 = vand.u32 %v7392, 4294901760
        %v7562 = vsub.f32 %v7392, %v7561
        %v7563 = vand.u32 %v7562, 4294901760
        %v7564 = vsub.f32 %v7562, %v7563
        %v7565 = vand.u32 %v7564, 4294901760
        %7566 = vmatpush1.xpose.msra.mxu0 %v7565
        %7567 = vmatprep.subr.mxu0 0.0
        %v7568 = vand.u32 %v7391, 4294901760
        %v7569 = vsub.f32 %v7391, %v7568
        %v7570 = vand.u32 %v7569, 4294901760
        %v7571 = vsub.f32 %v7569, %v7570
        %v7572 = vand.u32 %v7571, 4294901760
        %7573 = vmatpush1.xpose.msra.mxu0 %v7572
        %7574 = vmatprep.subr.mxu0 0.0
        %v7575 = vand.u32 %v7390, 4294901760
        %v7576 = vsub.f32 %v7390, %v7575
        %v7577 = vand.u32 %v7576, 4294901760
        %v7578 = vsub.f32 %v7576, %v7577
        %v7579 = vand.u32 %v7578, 4294901760
        %7580 = vmatpush1.xpose.msra.mxu0 %v7579
        %7581 = vmatprep.subr.mxu0 0.0
        %v7582 = vand.u32 %v7389, 4294901760
        %v7583 = vsub.f32 %v7389, %v7582
        %v7584 = vand.u32 %v7583, 4294901760
        %v7585 = vsub.f32 %v7583, %v7584
        %v7586 = vand.u32 %v7585, 4294901760
        %7587 = vmatpush1.xpose.msra.mxu0 %v7586
        %7588 = vmatprep.subr.mxu0 0.0
        %v7589 = vand.u32 %v7388, 4294901760
        %v7590 = vsub.f32 %v7388, %v7589
        %v7591 = vand.u32 %v7590, 4294901760
        %v7592 = vsub.f32 %v7590, %v7591
        %v7593 = vand.u32 %v7592, 4294901760
        %7594 = vmatpush1.xpose.msra.mxu0 %v7593
        %7595 = vmatprep.subr.mxu0 0.0
        %v7596 = vand.u32 %v7387, 4294901760
        %v7597 = vsub.f32 %v7387, %v7596
        %v7598 = vand.u32 %v7597, 4294901760
        %v7599 = vsub.f32 %v7597, %v7598
        %v7600 = vand.u32 %v7599, 4294901760
        %7601 = vmatpush1.xpose.msra.mxu0 %v7600
        %7602 = vmatprep.subr.mxu0 0.0
        %v7603 = vand.u32 %v7386, 4294901760
        %v7604 = vsub.f32 %v7386, %v7603
        %v7605 = vand.u32 %v7604, 4294901760
        %v7606 = vsub.f32 %v7604, %v7605
        %v7607 = vand.u32 %v7606, 4294901760
        %7608 = vmatpush1.xpose.msra.mxu0 %v7607
        %7609 = vmatprep.subr.mxu0 0.0
        %v7610 = vand.u32 %v7385, 4294901760
        %v7611 = vsub.f32 %v7385, %v7610
        %v7612 = vand.u32 %v7611, 4294901760
        %v7613 = vsub.f32 %v7611, %v7612
        %v7614 = vand.u32 %v7613, 4294901760
        %7615 = vmatpush1.xpose.msra.mxu0 %v7614
        %7616 = vmatprep.subr.mxu0 0.0
        %v7617 = vand.u32 %v7384, 4294901760
        %v7618 = vsub.f32 %v7384, %v7617
        %v7619 = vand.u32 %v7618, 4294901760
        %v7620 = vsub.f32 %v7618, %v7619
        %v7621 = vand.u32 %v7620, 4294901760
        %7622 = vmatpush1.xpose.msra.mxu0 %v7621
        %7623 = vmatprep.subr.mxu0 0.0
        %7624 = vmatpush2.xpose.msra.mxu0 0.0
        %7625 = vmatprep.subr.mxu0 0.0
        %7626 = vmatpush2.xpose.msra.mxu0 0.0
        %7627 = vmatprep.subr.mxu0 0.0
        %7628 = vmatpush2.xpose.msra.mxu0 0.0
        %7629 = vmatprep.subr.mxu0 0.0
        %7630 = vmatpush2.xpose.msra.mxu0 0.0
        %7631 = vmatprep.subr.mxu0 0.0
        %7632 = vmatpush2.xpose.msra.mxu0 0.0
        %7633 = vmatprep.subr.mxu0 0.0
        %7634 = vmatpush2.xpose.msra.mxu0 0.0
        %7635 = vmatprep.subr.mxu0 0.0
        %7636 = vmatpush2.xpose.msra.mxu0 0.0
        %7637 = vmatprep.subr.mxu0 0.0
        %7638 = vmatpush2.xpose.msra.mxu0 0.0
        %7639 = vmatprep.subr.mxu0 0.0
        %7640 = vmatpush2.xpose.msra.mxu0 0.0
        %7641 = vmatprep.subr.mxu0 0.0
        %7642 = vmatpush2.xpose.msra.mxu0 0.0
        %7643 = vmatprep.subr.mxu0 0.0
        %7644 = vmatpush2.xpose.msra.mxu0 0.0
        %7645 = vmatprep.subr.mxu0 0.0
        %7646 = vmatpush2.xpose.msra.mxu0 0.0
        %7647 = vmatprep.subr.mxu0 0.0
        %7648 = vmatpush2.xpose.msra.mxu0 0.0
        %7649 = vmatprep.subr.mxu0 0.0
        %7650 = vmatpush2.xpose.msra.mxu0 0.0
        %7651 = vmatprep.subr.mxu0 0.0
        %7652 = vmatpush2.xpose.msra.mxu0 0.0
        %7653 = vmatprep.subr.mxu0 0.0
        %7654 = vmatpush2.xpose.msra.mxu0 0.0
        %7655 = vmatprep.mubr.f32.mxu0 0.0
        %v7656 = vand.u32 %v293, 4294901760
        %7657 = vmatmul.mubr.f32.gmra.mxu0 %v7656
        %v7658 = vpop.f32.mrf.mxu0
        %v7659 = vadd.f32 %v7488, %v7658
        %v7660 = vpop.f32.mrf.mxu0
        %7661 = vmatprep.mubr.f32.mxu0 0.0
        %v7662 = vand.u32 %v294, 4294901760
        %7663 = vmatmul.mubr.f32.gmra.mxu0 %v7662
        %v7664 = vpop.f32.mrf.mxu0
        %v7665 = vadd.f32 %v7498, %v7664
        %v7666 = vpop.f32.mrf.mxu0
        %7667 = vmatprep.mubr.f32.mxu0 0.0
        %v7668 = vand.u32 %v295, 4294901760
        %7669 = vmatmul.mubr.f32.gmra.mxu0 %v7668
        %v7670 = vpop.f32.mrf.mxu0
        %v7671 = vadd.f32 %v7508, %v7670
        %v7672 = vpop.f32.mrf.mxu0
        %7673 = vdwg.mxu0
        %7674 = vmatprep.subr.mxu0 0.0
        %v7675 = vand.u32 %v7399, 4294901760
        %v7676 = vsub.f32 %v7399, %v7675
        %7677 = vmatpush1.xpose.msra.mxu0 %v7676
        %7678 = vmatprep.subr.mxu0 0.0
        %v7679 = vand.u32 %v7398, 4294901760
        %v7680 = vsub.f32 %v7398, %v7679
        %7681 = vmatpush1.xpose.msra.mxu0 %v7680
        %7682 = vmatprep.subr.mxu0 0.0
        %v7683 = vand.u32 %v7397, 4294901760
        %v7684 = vsub.f32 %v7397, %v7683
        %7685 = vmatpush1.xpose.msra.mxu0 %v7684
        %7686 = vmatprep.subr.mxu0 0.0
        %v7687 = vand.u32 %v7396, 4294901760
        %v7688 = vsub.f32 %v7396, %v7687
        %7689 = vmatpush1.xpose.msra.mxu0 %v7688
        %7690 = vmatprep.subr.mxu0 0.0
        %v7691 = vand.u32 %v7395, 4294901760
        %v7692 = vsub.f32 %v7395, %v7691
        %7693 = vmatpush1.xpose.msra.mxu0 %v7692
        %7694 = vmatprep.subr.mxu0 0.0
        %v7695 = vand.u32 %v7394, 4294901760
        %v7696 = vsub.f32 %v7394, %v7695
        %7697 = vmatpush1.xpose.msra.mxu0 %v7696
        %7698 = vmatprep.subr.mxu0 0.0
        %v7699 = vand.u32 %v7393, 4294901760
        %v7700 = vsub.f32 %v7393, %v7699
        %7701 = vmatpush1.xpose.msra.mxu0 %v7700
        %7702 = vmatprep.subr.mxu0 0.0
        %v7703 = vand.u32 %v7392, 4294901760
        %v7704 = vsub.f32 %v7392, %v7703
        %7705 = vmatpush1.xpose.msra.mxu0 %v7704
        %7706 = vmatprep.subr.mxu0 0.0
        %v7707 = vand.u32 %v7391, 4294901760
        %v7708 = vsub.f32 %v7391, %v7707
        %7709 = vmatpush1.xpose.msra.mxu0 %v7708
        %7710 = vmatprep.subr.mxu0 0.0
        %v7711 = vand.u32 %v7390, 4294901760
        %v7712 = vsub.f32 %v7390, %v7711
        %7713 = vmatpush1.xpose.msra.mxu0 %v7712
        %7714 = vmatprep.subr.mxu0 0.0
        %v7715 = vand.u32 %v7389, 4294901760
        %v7716 = vsub.f32 %v7389, %v7715
        %7717 = vmatpush1.xpose.msra.mxu0 %v7716
        %7718 = vmatprep.subr.mxu0 0.0
        %v7719 = vand.u32 %v7388, 4294901760
        %v7720 = vsub.f32 %v7388, %v7719
        %7721 = vmatpush1.xpose.msra.mxu0 %v7720
        %7722 = vmatprep.subr.mxu0 0.0
        %v7723 = vand.u32 %v7387, 4294901760
        %v7724 = vsub.f32 %v7387, %v7723
        %7725 = vmatpush1.xpose.msra.mxu0 %v7724
        %7726 = vmatprep.subr.mxu0 0.0
        %v7727 = vand.u32 %v7386, 4294901760
        %v7728 = vsub.f32 %v7386, %v7727
        %7729 = vmatpush1.xpose.msra.mxu0 %v7728
        %7730 = vmatprep.subr.mxu0 0.0
        %v7731 = vand.u32 %v7385, 4294901760
        %v7732 = vsub.f32 %v7385, %v7731
        %7733 = vmatpush1.xpose.msra.mxu0 %v7732
        %7734 = vmatprep.subr.mxu0 0.0
        %v7735 = vand.u32 %v7384, 4294901760
        %v7736 = vsub.f32 %v7384, %v7735
        %7737 = vmatpush1.xpose.msra.mxu0 %v7736
        %7738 = vmatprep.subr.mxu0 0.0
        %7739 = vmatpush2.xpose.msra.mxu0 0.0
        %7740 = vmatprep.subr.mxu0 0.0
        %7741 = vmatpush2.xpose.msra.mxu0 0.0
        %7742 = vmatprep.subr.mxu0 0.0
        %7743 = vmatpush2.xpose.msra.mxu0 0.0
        %7744 = vmatprep.subr.mxu0 0.0
        %7745 = vmatpush2.xpose.msra.mxu0 0.0
        %7746 = vmatprep.subr.mxu0 0.0
        %7747 = vmatpush2.xpose.msra.mxu0 0.0
        %7748 = vmatprep.subr.mxu0 0.0
        %7749 = vmatpush2.xpose.msra.mxu0 0.0
        %7750 = vmatprep.subr.mxu0 0.0
        %7751 = vmatpush2.xpose.msra.mxu0 0.0
        %7752 = vmatprep.subr.mxu0 0.0
        %7753 = vmatpush2.xpose.msra.mxu0 0.0
        %7754 = vmatprep.subr.mxu0 0.0
        %7755 = vmatpush2.xpose.msra.mxu0 0.0
        %7756 = vmatprep.subr.mxu0 0.0
        %7757 = vmatpush2.xpose.msra.mxu0 0.0
        %7758 = vmatprep.subr.mxu0 0.0
        %7759 = vmatpush2.xpose.msra.mxu0 0.0
        %7760 = vmatprep.subr.mxu0 0.0
        %7761 = vmatpush2.xpose.msra.mxu0 0.0
        %7762 = vmatprep.subr.mxu0 0.0
        %7763 = vmatpush2.xpose.msra.mxu0 0.0
        %7764 = vmatprep.subr.mxu0 0.0
        %7765 = vmatpush2.xpose.msra.mxu0 0.0
        %7766 = vmatprep.subr.mxu0 0.0
        %7767 = vmatpush2.xpose.msra.mxu0 0.0
        %7768 = vmatprep.subr.mxu0 0.0
        %7769 = vmatpush2.xpose.msra.mxu0 0.0
        %7770 = vmatprep.mubr.f32.mxu0 0.0
        %v7771 = vand.u32 %v293, 4294901760
        %v7772 = vsub.f32 %v293, %v7771
        %7773 = vmatmul.mubr.f32.gmra.mxu0 %v7772
        %v7774 = vpop.f32.mrf.mxu0
        %v7775 = vadd.f32 %v7659, %v7774
        %v7776 = vpop.f32.mrf.mxu0
        %7777 = vmatprep.mubr.f32.mxu0 0.0
        %v7778 = vand.u32 %v294, 4294901760
        %v7779 = vsub.f32 %v294, %v7778
        %7780 = vmatmul.mubr.f32.gmra.mxu0 %v7779
        %v7781 = vpop.f32.mrf.mxu0
        %v7782 = vadd.f32 %v7665, %v7781
        %v7783 = vpop.f32.mrf.mxu0
        %7784 = vmatprep.mubr.f32.mxu0 0.0
        %v7785 = vand.u32 %v295, 4294901760
        %v7786 = vsub.f32 %v295, %v7785
        %7787 = vmatmul.mubr.f32.gmra.mxu0 %v7786
        %v7788 = vpop.f32.mrf.mxu0
        %v7789 = vadd.f32 %v7671, %v7788
        %v7790 = vpop.f32.mrf.mxu0
        %7791 = vdwg.mxu0
        %7792 = vmatprep.subr.mxu0 0.0
        %v7793 = vand.u32 %v7399, 4294901760
        %7794 = vmatpush1.xpose.msra.mxu0 %v7793
        %7795 = vmatprep.subr.mxu0 0.0
        %v7796 = vand.u32 %v7398, 4294901760
        %7797 = vmatpush1.xpose.msra.mxu0 %v7796
        %7798 = vmatprep.subr.mxu0 0.0
        %v7799 = vand.u32 %v7397, 4294901760
        %7800 = vmatpush1.xpose.msra.mxu0 %v7799
        %7801 = vmatprep.subr.mxu0 0.0
        %v7802 = vand.u32 %v7396, 4294901760
        %7803 = vmatpush1.xpose.msra.mxu0 %v7802
        %7804 = vmatprep.subr.mxu0 0.0
        %v7805 = vand.u32 %v7395, 4294901760
        %7806 = vmatpush1.xpose.msra.mxu0 %v7805
        %7807 = vmatprep.subr.mxu0 0.0
        %v7808 = vand.u32 %v7394, 4294901760
        %7809 = vmatpush1.xpose.msra.mxu0 %v7808
        %7810 = vmatprep.subr.mxu0 0.0
        %v7811 = vand.u32 %v7393, 4294901760
        %7812 = vmatpush1.xpose.msra.mxu0 %v7811
        %7813 = vmatprep.subr.mxu0 0.0
        %v7814 = vand.u32 %v7392, 4294901760
        %7815 = vmatpush1.xpose.msra.mxu0 %v7814
        %7816 = vmatprep.subr.mxu0 0.0
        %v7817 = vand.u32 %v7391, 4294901760
        %7818 = vmatpush1.xpose.msra.mxu0 %v7817
        %7819 = vmatprep.subr.mxu0 0.0
        %v7820 = vand.u32 %v7390, 4294901760
        %7821 = vmatpush1.xpose.msra.mxu0 %v7820
        %7822 = vmatprep.subr.mxu0 0.0
        %v7823 = vand.u32 %v7389, 4294901760
        %7824 = vmatpush1.xpose.msra.mxu0 %v7823
        %7825 = vmatprep.subr.mxu0 0.0
        %v7826 = vand.u32 %v7388, 4294901760
        %7827 = vmatpush1.xpose.msra.mxu0 %v7826
        %7828 = vmatprep.subr.mxu0 0.0
        %v7829 = vand.u32 %v7387, 4294901760
        %7830 = vmatpush1.xpose.msra.mxu0 %v7829
        %7831 = vmatprep.subr.mxu0 0.0
        %v7832 = vand.u32 %v7386, 4294901760
        %7833 = vmatpush1.xpose.msra.mxu0 %v7832
        %7834 = vmatprep.subr.mxu0 0.0
        %v7835 = vand.u32 %v7385, 4294901760
        %7836 = vmatpush1.xpose.msra.mxu0 %v7835
        %7837 = vmatprep.subr.mxu0 0.0
        %v7838 = vand.u32 %v7384, 4294901760
        %7839 = vmatpush1.xpose.msra.mxu0 %v7838
        %7840 = vmatprep.subr.mxu0 0.0
        %7841 = vmatpush2.xpose.msra.mxu0 0.0
        %7842 = vmatprep.subr.mxu0 0.0
        %7843 = vmatpush2.xpose.msra.mxu0 0.0
        %7844 = vmatprep.subr.mxu0 0.0
        %7845 = vmatpush2.xpose.msra.mxu0 0.0
        %7846 = vmatprep.subr.mxu0 0.0
        %7847 = vmatpush2.xpose.msra.mxu0 0.0
        %7848 = vmatprep.subr.mxu0 0.0
        %7849 = vmatpush2.xpose.msra.mxu0 0.0
        %7850 = vmatprep.subr.mxu0 0.0
        %7851 = vmatpush2.xpose.msra.mxu0 0.0
        %7852 = vmatprep.subr.mxu0 0.0
        %7853 = vmatpush2.xpose.msra.mxu0 0.0
        %7854 = vmatprep.subr.mxu0 0.0
        %7855 = vmatpush2.xpose.msra.mxu0 0.0
        %7856 = vmatprep.subr.mxu0 0.0
        %7857 = vmatpush2.xpose.msra.mxu0 0.0
        %7858 = vmatprep.subr.mxu0 0.0
        %7859 = vmatpush2.xpose.msra.mxu0 0.0
        %7860 = vmatprep.subr.mxu0 0.0
        %7861 = vmatpush2.xpose.msra.mxu0 0.0
        %7862 = vmatprep.subr.mxu0 0.0
        %7863 = vmatpush2.xpose.msra.mxu0 0.0
        %7864 = vmatprep.subr.mxu0 0.0
        %7865 = vmatpush2.xpose.msra.mxu0 0.0
        %7866 = vmatprep.subr.mxu0 0.0
        %7867 = vmatpush2.xpose.msra.mxu0 0.0
        %7868 = vmatprep.subr.mxu0 0.0
        %7869 = vmatpush2.xpose.msra.mxu0 0.0
        %7870 = vmatprep.subr.mxu0 0.0
        %7871 = vmatpush2.xpose.msra.mxu0 0.0
        %7872 = vmatprep.mubr.f32.mxu0 0.0
        %v7873 = vand.u32 %v293, 4294901760
        %v7874 = vsub.f32 %v293, %v7873
        %v7875 = vand.u32 %v7874, 4294901760
        %7876 = vmatmul.mubr.f32.gmra.mxu0 %v7875
        %v7877 = vpop.f32.mrf.mxu0
        %v7878 = vadd.f32 %v7775, %v7877
        %v7879 = vpop.f32.mrf.mxu0
        %7880 = vmatprep.mubr.f32.mxu0 0.0
        %v7881 = vand.u32 %v294, 4294901760
        %v7882 = vsub.f32 %v294, %v7881
        %v7883 = vand.u32 %v7882, 4294901760
        %7884 = vmatmul.mubr.f32.gmra.mxu0 %v7883
        %v7885 = vpop.f32.mrf.mxu0
        %v7886 = vadd.f32 %v7782, %v7885
        %v7887 = vpop.f32.mrf.mxu0
        %7888 = vmatprep.mubr.f32.mxu0 0.0
        %v7889 = vand.u32 %v295, 4294901760
        %v7890 = vsub.f32 %v295, %v7889
        %v7891 = vand.u32 %v7890, 4294901760
        %7892 = vmatmul.mubr.f32.gmra.mxu0 %v7891
        %v7893 = vpop.f32.mrf.mxu0
        %v7894 = vadd.f32 %v7789, %v7893
        %v7895 = vpop.f32.mrf.mxu0
        %7896 = vdwg.mxu0
        %7897 = vmatprep.subr.mxu0 0.0
        %v7898 = vand.u32 %v7399, 4294901760
        %v7899 = vsub.f32 %v7399, %v7898
        %v7900 = vand.u32 %v7899, 4294901760
        %7901 = vmatpush1.xpose.msra.mxu0 %v7900
        %7902 = vmatprep.subr.mxu0 0.0
        %v7903 = vand.u32 %v7398, 4294901760
        %v7904 = vsub.f32 %v7398, %v7903
        %v7905 = vand.u32 %v7904, 4294901760
        %7906 = vmatpush1.xpose.msra.mxu0 %v7905
        %7907 = vmatprep.subr.mxu0 0.0
        %v7908 = vand.u32 %v7397, 4294901760
        %v7909 = vsub.f32 %v7397, %v7908
        %v7910 = vand.u32 %v7909, 4294901760
        %7911 = vmatpush1.xpose.msra.mxu0 %v7910
        %7912 = vmatprep.subr.mxu0 0.0
        %v7913 = vand.u32 %v7396, 4294901760
        %v7914 = vsub.f32 %v7396, %v7913
        %v7915 = vand.u32 %v7914, 4294901760
        %7916 = vmatpush1.xpose.msra.mxu0 %v7915
        %7917 = vmatprep.subr.mxu0 0.0
        %v7918 = vand.u32 %v7395, 4294901760
        %v7919 = vsub.f32 %v7395, %v7918
        %v7920 = vand.u32 %v7919, 4294901760
        %7921 = vmatpush1.xpose.msra.mxu0 %v7920
        %7922 = vmatprep.subr.mxu0 0.0
        %v7923 = vand.u32 %v7394, 4294901760
        %v7924 = vsub.f32 %v7394, %v7923
        %v7925 = vand.u32 %v7924, 4294901760
        %7926 = vmatpush1.xpose.msra.mxu0 %v7925
        %7927 = vmatprep.subr.mxu0 0.0
        %v7928 = vand.u32 %v7393, 4294901760
        %v7929 = vsub.f32 %v7393, %v7928
        %v7930 = vand.u32 %v7929, 4294901760
        %7931 = vmatpush1.xpose.msra.mxu0 %v7930
        %7932 = vmatprep.subr.mxu0 0.0
        %v7933 = vand.u32 %v7392, 4294901760
        %v7934 = vsub.f32 %v7392, %v7933
        %v7935 = vand.u32 %v7934, 4294901760
        %7936 = vmatpush1.xpose.msra.mxu0 %v7935
        %7937 = vmatprep.subr.mxu0 0.0
        %v7938 = vand.u32 %v7391, 4294901760
        %v7939 = vsub.f32 %v7391, %v7938
        %v7940 = vand.u32 %v7939, 4294901760
        %7941 = vmatpush1.xpose.msra.mxu0 %v7940
        %7942 = vmatprep.subr.mxu0 0.0
        %v7943 = vand.u32 %v7390, 4294901760
        %v7944 = vsub.f32 %v7390, %v7943
        %v7945 = vand.u32 %v7944, 4294901760
        %7946 = vmatpush1.xpose.msra.mxu0 %v7945
        %7947 = vmatprep.subr.mxu0 0.0
        %v7948 = vand.u32 %v7389, 4294901760
        %v7949 = vsub.f32 %v7389, %v7948
        %v7950 = vand.u32 %v7949, 4294901760
        %7951 = vmatpush1.xpose.msra.mxu0 %v7950
        %7952 = vmatprep.subr.mxu0 0.0
        %v7953 = vand.u32 %v7388, 4294901760
        %v7954 = vsub.f32 %v7388, %v7953
        %v7955 = vand.u32 %v7954, 4294901760
        %7956 = vmatpush1.xpose.msra.mxu0 %v7955
        %7957 = vmatprep.subr.mxu0 0.0
        %v7958 = vand.u32 %v7387, 4294901760
        %v7959 = vsub.f32 %v7387, %v7958
        %v7960 = vand.u32 %v7959, 4294901760
        %7961 = vmatpush1.xpose.msra.mxu0 %v7960
        %7962 = vmatprep.subr.mxu0 0.0
        %v7963 = vand.u32 %v7386, 4294901760
        %v7964 = vsub.f32 %v7386, %v7963
        %v7965 = vand.u32 %v7964, 4294901760
        %7966 = vmatpush1.xpose.msra.mxu0 %v7965
        %7967 = vmatprep.subr.mxu0 0.0
        %v7968 = vand.u32 %v7385, 4294901760
        %v7969 = vsub.f32 %v7385, %v7968
        %v7970 = vand.u32 %v7969, 4294901760
        %7971 = vmatpush1.xpose.msra.mxu0 %v7970
        %7972 = vmatprep.subr.mxu0 0.0
        %v7973 = vand.u32 %v7384, 4294901760
        %v7974 = vsub.f32 %v7384, %v7973
        %v7975 = vand.u32 %v7974, 4294901760
        %7976 = vmatpush1.xpose.msra.mxu0 %v7975
        %7977 = vmatprep.subr.mxu0 0.0
        %7978 = vmatpush2.xpose.msra.mxu0 0.0
        %7979 = vmatprep.subr.mxu0 0.0
        %7980 = vmatpush2.xpose.msra.mxu0 0.0
        %7981 = vmatprep.subr.mxu0 0.0
        %7982 = vmatpush2.xpose.msra.mxu0 0.0
        %7983 = vmatprep.subr.mxu0 0.0
        %7984 = vmatpush2.xpose.msra.mxu0 0.0
        %7985 = vmatprep.subr.mxu0 0.0
        %7986 = vmatpush2.xpose.msra.mxu0 0.0
        %7987 = vmatprep.subr.mxu0 0.0
        %7988 = vmatpush2.xpose.msra.mxu0 0.0
        %7989 = vmatprep.subr.mxu0 0.0
        %7990 = vmatpush2.xpose.msra.mxu0 0.0
        %7991 = vmatprep.subr.mxu0 0.0
        %7992 = vmatpush2.xpose.msra.mxu0 0.0
        %7993 = vmatprep.subr.mxu0 0.0
        %7994 = vmatpush2.xpose.msra.mxu0 0.0
        %7995 = vmatprep.subr.mxu0 0.0
        %7996 = vmatpush2.xpose.msra.mxu0 0.0
        %7997 = vmatprep.subr.mxu0 0.0
        %7998 = vmatpush2.xpose.msra.mxu0 0.0
        %7999 = vmatprep.subr.mxu0 0.0
        %8000 = vmatpush2.xpose.msra.mxu0 0.0
        %8001 = vmatprep.subr.mxu0 0.0
        %8002 = vmatpush2.xpose.msra.mxu0 0.0
        %8003 = vmatprep.subr.mxu0 0.0
        %8004 = vmatpush2.xpose.msra.mxu0 0.0
        %8005 = vmatprep.subr.mxu0 0.0
        %8006 = vmatpush2.xpose.msra.mxu0 0.0
        %8007 = vmatprep.subr.mxu0 0.0
        %8008 = vmatpush2.xpose.msra.mxu0 0.0
        %8009 = vmatprep.mubr.f32.mxu0 0.0
        %v8010 = vand.u32 %v293, 4294901760
        %8011 = vmatmul.mubr.f32.gmra.mxu0 %v8010
        %v8012 = vpop.f32.mrf.mxu0
        %v8013 = vadd.f32 %v7878, %v8012
        %v8014 = vpop.f32.mrf.mxu0
        %8015 = vmatprep.mubr.f32.mxu0 0.0
        %v8016 = vand.u32 %v294, 4294901760
        %8017 = vmatmul.mubr.f32.gmra.mxu0 %v8016
        %v8018 = vpop.f32.mrf.mxu0
        %v8019 = vadd.f32 %v7886, %v8018
        %v8020 = vpop.f32.mrf.mxu0
        %8021 = vmatprep.mubr.f32.mxu0 0.0
        %v8022 = vand.u32 %v295, 4294901760
        %8023 = vmatmul.mubr.f32.gmra.mxu0 %v8022
        %v8024 = vpop.f32.mrf.mxu0
        %v8025 = vadd.f32 %v7894, %v8024
        %v8026 = vpop.f32.mrf.mxu0
        %8027 = vdwg.mxu0
        %8028 = vmatprep.subr.mxu0 0.0
        %v8029 = vand.u32 %v7399, 4294901760
        %8030 = vmatpush1.xpose.msra.mxu0 %v8029
        %8031 = vmatprep.subr.mxu0 0.0
        %v8032 = vand.u32 %v7398, 4294901760
        %8033 = vmatpush1.xpose.msra.mxu0 %v8032
        %8034 = vmatprep.subr.mxu0 0.0
        %v8035 = vand.u32 %v7397, 4294901760
        %8036 = vmatpush1.xpose.msra.mxu0 %v8035
        %8037 = vmatprep.subr.mxu0 0.0
        %v8038 = vand.u32 %v7396, 4294901760
        %8039 = vmatpush1.xpose.msra.mxu0 %v8038
        %8040 = vmatprep.subr.mxu0 0.0
        %v8041 = vand.u32 %v7395, 4294901760
        %8042 = vmatpush1.xpose.msra.mxu0 %v8041
        %8043 = vmatprep.subr.mxu0 0.0
        %v8044 = vand.u32 %v7394, 4294901760
        %8045 = vmatpush1.xpose.msra.mxu0 %v8044
        %8046 = vmatprep.subr.mxu0 0.0
        %v8047 = vand.u32 %v7393, 4294901760
        %8048 = vmatpush1.xpose.msra.mxu0 %v8047
        %8049 = vmatprep.subr.mxu0 0.0
        %v8050 = vand.u32 %v7392, 4294901760
        %8051 = vmatpush1.xpose.msra.mxu0 %v8050
        %8052 = vmatprep.subr.mxu0 0.0
        %v8053 = vand.u32 %v7391, 4294901760
        %8054 = vmatpush1.xpose.msra.mxu0 %v8053
        %8055 = vmatprep.subr.mxu0 0.0
        %v8056 = vand.u32 %v7390, 4294901760
        %8057 = vmatpush1.xpose.msra.mxu0 %v8056
        %8058 = vmatprep.subr.mxu0 0.0
        %v8059 = vand.u32 %v7389, 4294901760
        %8060 = vmatpush1.xpose.msra.mxu0 %v8059
        %8061 = vmatprep.subr.mxu0 0.0
        %v8062 = vand.u32 %v7388, 4294901760
        %8063 = vmatpush1.xpose.msra.mxu0 %v8062
        %8064 = vmatprep.subr.mxu0 0.0
        %v8065 = vand.u32 %v7387, 4294901760
        %8066 = vmatpush1.xpose.msra.mxu0 %v8065
        %8067 = vmatprep.subr.mxu0 0.0
        %v8068 = vand.u32 %v7386, 4294901760
        %8069 = vmatpush1.xpose.msra.mxu0 %v8068
        %8070 = vmatprep.subr.mxu0 0.0
        %v8071 = vand.u32 %v7385, 4294901760
        %8072 = vmatpush1.xpose.msra.mxu0 %v8071
        %8073 = vmatprep.subr.mxu0 0.0
        %v8074 = vand.u32 %v7384, 4294901760
        %8075 = vmatpush1.xpose.msra.mxu0 %v8074
        %8076 = vmatprep.subr.mxu0 0.0
        %8077 = vmatpush2.xpose.msra.mxu0 0.0
        %8078 = vmatprep.subr.mxu0 0.0
        %8079 = vmatpush2.xpose.msra.mxu0 0.0
        %8080 = vmatprep.subr.mxu0 0.0
        %8081 = vmatpush2.xpose.msra.mxu0 0.0
        %8082 = vmatprep.subr.mxu0 0.0
        %8083 = vmatpush2.xpose.msra.mxu0 0.0
        %8084 = vmatprep.subr.mxu0 0.0
        %8085 = vmatpush2.xpose.msra.mxu0 0.0
        %8086 = vmatprep.subr.mxu0 0.0
        %8087 = vmatpush2.xpose.msra.mxu0 0.0
        %8088 = vmatprep.subr.mxu0 0.0
        %8089 = vmatpush2.xpose.msra.mxu0 0.0
        %8090 = vmatprep.subr.mxu0 0.0
        %8091 = vmatpush2.xpose.msra.mxu0 0.0
        %8092 = vmatprep.subr.mxu0 0.0
        %8093 = vmatpush2.xpose.msra.mxu0 0.0
        %8094 = vmatprep.subr.mxu0 0.0
        %8095 = vmatpush2.xpose.msra.mxu0 0.0
        %8096 = vmatprep.subr.mxu0 0.0
        %8097 = vmatpush2.xpose.msra.mxu0 0.0
        %8098 = vmatprep.subr.mxu0 0.0
        %8099 = vmatpush2.xpose.msra.mxu0 0.0
        %8100 = vmatprep.subr.mxu0 0.0
        %8101 = vmatpush2.xpose.msra.mxu0 0.0
        %8102 = vmatprep.subr.mxu0 0.0
        %8103 = vmatpush2.xpose.msra.mxu0 0.0
        %8104 = vmatprep.subr.mxu0 0.0
        %8105 = vmatpush2.xpose.msra.mxu0 0.0
        %8106 = vmatprep.subr.mxu0 0.0
        %8107 = vmatpush2.xpose.msra.mxu0 0.0
        %8108 = vmatprep.mubr.f32.mxu0 0.0
        %v8109 = vand.u32 %v293, 4294901760
        %8110 = vmatmul.mubr.f32.gmra.mxu0 %v8109
        %v8111 = vpop.f32.mrf.mxu0
        %v8112 = vadd.f32 %v8013, %v8111
        %v8113 = vpop.f32.mrf.mxu0
        %8114 = vmatprep.mubr.f32.mxu0 0.0
        %v8115 = vand.u32 %v294, 4294901760
        %8116 = vmatmul.mubr.f32.gmra.mxu0 %v8115
        %v8117 = vpop.f32.mrf.mxu0
        %v8118 = vadd.f32 %v8019, %v8117
        %v8119 = vpop.f32.mrf.mxu0
        %8120 = vmatprep.mubr.f32.mxu0 0.0
        %v8121 = vand.u32 %v295, 4294901760
        %8122 = vmatmul.mubr.f32.gmra.mxu0 %v8121
        %v8123 = vpop.f32.mrf.mxu0
        %v8124 = vadd.f32 %v8025, %v8123
        %v8125 = vpop.f32.mrf.mxu0
        %8126 = vdwg.mxu0
        %s8127 = scalar_lea.vmem %s249, 168 [#allocation2]
        %8128 = vst [vmem:[%s8127] sm:$0xff] %v8112
        %8129 = vst [vmem:[%s8127 + $0x8] sm:$0xff] %v8118
        %8130 = vst [vmem:[%s8127 + $0x10] sm:$0xff] %v8124
        %v8131 = vadd.f32 %v8124, 0.5
        %v8132 = vcvt.f32.s32.to.zero.pseudo %v8131
        %v8133 = vrot.slane %v2329, 3
        %v8134 = vrot.slane %v3158, 2
        %v8135 = vrot.slane %v3987, 1
        %v8136 = vrot.slane %v5645, 7
        %v8137 = vrot.slane %v6474, 6
        %v8138 = vrot.slane %v7303, 5
        %v8139 = vrot.slane %v8132, 4
        %vm8140 = vcmask 1040384
        %v8141 = vsel %vm8140, %v8133, %v8134
        %vm8142 = vcmask 1041408
        %v8143 = vsel %vm8142, %v8141, %v8135
        %vm8144 = vcmask 1042432
        %v8145 = vsel %vm8144, %v8143, %v4816
        %vm8146 = vcmask 1043456
        %v8147 = vsel %vm8146, %v8145, %v8136
        %vm8148 = vcmask 1044480
        %v8149 = vsel %vm8148, %v8147, %v8137
        %vm8150 = vcmask 1045504
        %v8151 = vsel %vm8150, %v8149, %v8138
        %vm8152 = vcmask 1046528
        %v8153 = vsel %vm8152, %v8151, %v8139
        %8154 = vst [vmem:[%s256] sm:$0xff] %v8153
        %s8155 = sand.u32 %s124, 1
        %s8156 = scalar_lea.sflag [#allocation3], %s8155
        %s8157 = sand.u32 %s124, 1
        %s8158 = smul.addr %s8157, 192
        %s8159 = scalar_lea.vmem [#allocation2], %s8158
        %s8160 = sand.u32 %s152, 1
        %s8161 = scalar_lea.sflag [#allocation5], %s8160
        %s8162 = sand.u32 %s152, 1
        %s8163 = smul.addr %s8162, 8
        %s8164 = scalar_lea.vmem [#allocation4], %s8163
        // Predicated region
        $region33: #{tpu_custom_call.1} parent=31 // pred_check
          %p8165 = pneg %p134
        $region34: #{tpu_custom_call.1} parent=31 // pred_check_branch
          %8167 = sbr.rel (%p8165) target = $region36
        $region35: #{tpu_custom_call.1} parent=31 // pred_region
          %s8169 = ssub.s32 3072, 3072
          %8170 = vsyncadd %s8156, %s8169
          %s8171 = smul.addr %s26, 24
          %s8172 = sadd.s32 %s27, %s8171
          %s8173 = smul.addr %s8172, 128
          %s8174 = scalar_lea.hbm %s3, %s8173
          %s8175 = sshll.u32 %s8159, 4
          %s8176 = int_to_ptr.vmem [resolvable:$true] %s8175
          %8181 = dma.vmem_to_hbm [thread:$0]  %s8176, 3072, %s8174, %s8156, 128, 128, 8
        $region36: #{tpu_custom_call.1} parent=31 // pred_fallthru
          _
        // Predicated region
        $region37: #{tpu_custom_call.1} parent=31 // pred_check
          %p8182 = pneg %p162
        $region38: #{tpu_custom_call.1} parent=31 // pred_check_branch
          %8184 = sbr.rel (%p8182) target = $region40
        $region39: #{tpu_custom_call.1} parent=31 // pred_region
          %s8186 = ssub.s32 128, 128
          %8187 = vsyncadd %s8161, %s8186
          %s8188 = sadd.s32 %s27, %s26
          %s8189 = smul.addr %s8188, 128
          %s8190 = scalar_lea.hbm %s4, %s8189
          %s8192 = sshll.u32 %s8164, 4
          %s8193 = int_to_ptr.vmem [resolvable:$true] %s8192
          %8195 = dma.vmem_to_hbm [thread:$0]  %s8193, 128, %s8190, %s8161
        $region40: #{tpu_custom_call.1} parent=31 // pred_fallthru
          _
      $region32: #{tpu_custom_call.1} parent=5 // pred_fallthru
        _
      %p8196 = scmp.le.s32.totalorder 2, %s17
      // Predicated region
      $region41: #{tpu_custom_call.1} parent=5 // pred_check
        %p8197 = pneg %p8196
      $region42: #{tpu_custom_call.1} parent=5 // pred_check_branch
        %8199 = sbr.rel (%p8197) target = $region44
      $region43: #{tpu_custom_call.1} parent=5 // pred_region
        %s8200 = ssub.s32 %s17, 2
        // Predicated region
        $region45: #{tpu_custom_call.1} parent=43 // pred_check
          %p8201 = pneg %p140
        $region46: #{tpu_custom_call.1} parent=43 // pred_check_branch
          %8203 = sbr.rel (%p8201) target = $region48
        $region47: #{tpu_custom_call.1} parent=43 // pred_region
          %s8204 = sand.u32 %s125, 1
          %s8205 = scalar_lea.sflag [#allocation3], %s8204
          %s8206 = sand.u32 %s125, 1
          %s8207 = smul.addr %s8206, 192
          %s8208 = scalar_lea.vmem [#allocation2], %s8207
          %8209 = dma.done %s8205, 3072
        $region48: #{tpu_custom_call.1} parent=43 // pred_fallthru
          _
        // Predicated region
        $region49: #{tpu_custom_call.1} parent=43 // pred_check
          %p8210 = pneg %p168
        $region50: #{tpu_custom_call.1} parent=43 // pred_check_branch
          %8212 = sbr.rel (%p8210) target = $region52
        $region51: #{tpu_custom_call.1} parent=43 // pred_region
          %s8213 = sand.u32 %s153, 1
          %s8214 = scalar_lea.sflag [#allocation5], %s8213
          %s8215 = sand.u32 %s153, 1
          %s8216 = smul.addr %s8215, 8
          %s8217 = scalar_lea.vmem [#allocation4], %s8216
          %8218 = dma.done %s8214, 128
        $region52: #{tpu_custom_call.1} parent=43 // pred_fallthru
          _
      $region44: #{tpu_custom_call.1} parent=5 // pred_fallthru
        _
    $region6: #{tpu_custom_call.1} parent=1 // loop_footer
      %s21 = sadd.s32 1, %s17
    $region7: #{tpu_custom_call.1} parent=1 // loop_footer_branch
      %16 = sbr.rel target = $region3
    $region8: #{tpu_custom_call.1} parent=1 // loop_exit
      _
    %8219 = vsyncpa [#allocation3], 1
    %s8220 = scalar_lea.sflag [#allocation3], 1
    %8221 = vsyncpa %s8220, 1
    %8222 = vsyncpa [#allocation5], 1
    %s8223 = scalar_lea.sflag [#allocation5], 1
    %8224 = vsyncpa %s8223, 1

</llo_original>
